<compile_context>
chip_gen: v7x
topology: tpu7x:2x2x1
jax: 0.10.0
libtpu: 0.0.40
codegen_flags: <defaults>
</compile_context>

<pallas_src>
import numpy as np

import jax
import jax.numpy as jnp
from jax import lax
from jax.experimental import pallas as pl
from jax.experimental.pallas import tpu as pltpu


# ------------------------- static geometry (32x32 input) --------------------
_H1 = 18      # conv1 out  (k2 s2 p2 on 32)
_H2 = 10      # maxpool out (k2 s2 p1)
_H3 = 7       # conv2 / conv4 out
_H4 = 5       # conv3 out
_H5 = 3       # avgpool(3, s1) out
_M1, _M2, _M3, _M4, _M5 = _H1 * _H1, _H2 * _H2, _H3 * _H3, _H4 * _H4, _H5 * _H5

_B = 8        # samples per grid step (block-diag weight waste stays small)


def _conv_tap_mats(h_in, w_in, h_out, w_out, pad):
    """4 stacked (h_in*w_in, h_out*w_out) 0/1 matrices, one per k=2/s=2 tap."""
    mats = []
    for di in (0, 1):
        for dj in (0, 1):
            g = np.zeros((h_in * w_in, h_out * w_out), np.float32)
            for ho in range(h_out):
                hi = 2 * ho + di - pad
                if hi < 0 or hi >= h_in:
                    continue
                for wo in range(w_out):
                    wi = 2 * wo + dj - pad
                    if wi < 0 or wi >= w_in:
                        continue
                    g[hi * w_in + wi, ho * w_out + wo] = 1.0
            mats.append(g)
    return np.stack(mats)


def _avgpool_mat(h_in, w_in, k, stride, h_out, w_out):
    g = np.zeros((h_in * w_in, h_out * w_out), np.float32)
    inv = 1.0 / float(k * k)
    for oi in range(h_out):
        for oj in range(w_out):
            for di in range(k):
                for dj in range(k):
                    g[(oi * stride + di) * w_in + (oj * stride + dj),
                      oi * w_out + oj] = inv
    return g


def _maxpool_wide():
    """(324, 512): the 4 maxpool taps, each padded to a 128-lane slot."""
    mats = _conv_tap_mats(_H1, _H1, _H2, _H2, 1)        # (4, 324, 100)
    g = np.zeros((_M1, 512), np.float32)
    for t in range(4):
        g[:, t * 128: t * 128 + _M2] = mats[t]
    return g


def _padded_taps(h_in, h_out, pad, rows, cols):
    """(4, rows, cols) tap matrices zero-padded to lane/sublane friendly sizes."""
    mats = _conv_tap_mats(h_in, h_in, h_out, h_out, pad)
    g = np.zeros((4, rows, cols), np.float32)
    g[:, :h_in * h_in, :h_out * h_out] = mats
    return g


# ------------------------------ fused kernel --------------------------------

def _fused_kernel(p1_ref, w1_ref, gmx_ref, g2_ref, w2_ref, s2_ref,
                  w4_ref, b4_ref, ada_ref, g3_ref, w3_ref, fcw_ref, fcb_ref,
                  out_ref):
    f32, bf16 = jnp.float32, jnp.bfloat16
    B = _B

    # conv1 + bn1 (scale folded into weights, shift via ones-row) + relu1
    # rows (b, c_out) sample-major; lanes: 18*18 = 324 spatial.
    a1 = jnp.dot(w1_ref[...], p1_ref[...], preferred_element_type=f32)
    a1 = jnp.maximum(a1, 0.0).astype(bf16)                     # (B*32, 324) >= 0

    # maxpool k2 s2 p1: 4 taps fused into one 128-lane-aligned matmul.
    # Zero padding columns are exact ONLY because a1 is post-ReLU (>= 0) and
    # every pooling window holds at least one real element.
    mp = jnp.dot(a1, gmx_ref[...], preferred_element_type=f32)  # (B*32, 512)
    a2 = jnp.maximum(jnp.maximum(mp[:, 0:128], mp[:, 128:256]),
                     jnp.maximum(mp[:, 256:384], mp[:, 384:512]))
    a2 = a2.astype(bf16)                                        # (B*32, 128)

    # conv2 (+bn2) and conv4 share the spatial-tap stage (same geometry).
    acc2 = jnp.zeros((B * 16, 64), f32)          # rows (b, c_out)
    acc4 = jnp.zeros((B * 8, 64), f32)           # rows (c_out, b)  channel-major
    for t in range(4):
        tmp = jnp.dot(a2, g2_ref[t], preferred_element_type=f32).astype(bf16)
        acc2 = acc2 + jnp.dot(w2_ref[t], tmp, preferred_element_type=f32)
        acc4 = acc4 + jnp.dot(w4_ref[t], tmp, preferred_element_type=f32)
    a3 = jnp.maximum(acc2 + s2_ref[...], 0.0).astype(bf16)      # (B*16, 64)
    r = acc4 + b4_ref[...]                                      # (B*8, 64)

    # AdaptiveAvgPool2d(5) folded into a masked lane-sum (top-left 5x5 / 25).
    r_avg = jnp.sum(r * ada_ref[...], axis=1, keepdims=True)    # (B*8, 1)

    # conv3 (relu deferred until after the residual add); rows (c_out, b).
    acc3 = jnp.zeros((B * 8, 32), f32)
    for t in range(4):
        tmp = jnp.dot(a3, g3_ref[t], preferred_element_type=f32).astype(bf16)
        acc3 = acc3 + jnp.dot(w3_ref[t], tmp, preferred_element_type=f32)

    # residual add (broadcast) + relu3
    y = jnp.maximum(acc3 + r_avg, 0.0)           # (B*8, 32) f32; lanes >=25 junk
    # (junk lanes are killed by the zero rows of the folded fc weights)

    # AvgPool2d(3, s=1) folded into fc; per-channel contiguous row slices.
    acc_out = jnp.zeros((B, 16), f32)
    for c in range(8):
        acc_out = acc_out + jnp.dot(y[c * B:(c + 1) * B, :], fcw_ref[c],
                                    preferred_element_type=f32)
    out_ref[...] = acc_out + fcb_ref[...]


# ------------------------------ entry point ----------------------------------

def forward(x_nchw, p):
    n = x_nchw.shape[0]
    assert x_nchw.shape[1:] == (3, 32, 32), "fused kernel is specialized to 3x32x32"
    B = _B
    n_pad = -(-n // B) * B
    x = jnp.transpose(x_nchw, (0, 2, 3, 1)).astype(jnp.float32)     # NHWC
    if n_pad != n:
        x = jnp.pad(x, ((0, n_pad - n), (0, 0), (0, 0), (0, 0)))

    # conv1 im2col^T (once, in XLA, on the raw input) + a per-sample ones row
    # that carries the folded bn1 shift.  rows per sample: 12 taps + 1 ones.
    xp = jnp.pad(x, ((0, 0), (2, 2), (2, 2), (0, 0)))
    taps = [xp[:, di:36:2, dj:36:2, :] for di in (0, 1) for dj in (0, 1)]
    p1 = jnp.stack(taps, axis=1)                                    # (N,4,18,18,3)
    p1 = jnp.transpose(p1, (0, 1, 4, 2, 3)).reshape(n_pad, 12, _M1)
    p1 = jnp.concatenate([p1, jnp.ones((n_pad, 1, _M1), jnp.float32)], axis=1)
    p1 = p1.reshape(n_pad * 13, _M1).astype(jnp.bfloat16)           # (N*13, 324)

    eyeB = jnp.eye(B, dtype=jnp.float32)

    # conv1: bn1 scale folded into weights, shift as an extra column; block-diag
    # over the B samples of the block (rows (b, c_out), cols (b, tap*3+c_in|1)).
    w1m = (jnp.transpose(p['w1'], (0, 2, 3, 1)).reshape(32, 12)
           * p['bn1_scale'][:, None])
    w1aug = jnp.concatenate([w1m, p['bn1_shift'][:, None]], axis=1)   # (32, 13)
    w1bd = jnp.kron(eyeB, w1aug).astype(jnp.bfloat16)                 # (256, 104)

    # conv2 taps: bn2 scale folded; sample-major block-diagonal.
    w2bd = jnp.stack([
        jnp.kron(eyeB, p['w2'][:, :, di, dj] * p['bn2_scale'][:, None])
        for di in (0, 1) for dj in (0, 1)]).astype(jnp.bfloat16)      # (4,128,256)
    s2t = jnp.tile(p['bn2_shift'], B)[:, None].astype(jnp.float32)    # (128, 1)

    # conv3 / conv4 taps: rows channel-major (c_out, b), cols sample-major (b, c_in)
    def chmaj_blockdiag(w):           # w: (c_out, c_in)
        co, ci = w.shape
        return jnp.einsum('oc,ab->oabc', w, eyeB).reshape(co * B, B * ci)

    w4bd = jnp.stack([chmaj_blockdiag(p['w4'][:, :, di, dj])
                      for di in (0, 1) for dj in (0, 1)]).astype(jnp.bfloat16)  # (4,64,256)
    b4t = jnp.repeat(p['b4'], B)[:, None].astype(jnp.float32)                   # (64, 1)
    w3bd = jnp.stack([chmaj_blockdiag(p['w3'][:, :, di, dj])
                      for di in (0, 1) for dj in (0, 1)]).astype(jnp.bfloat16)  # (4,64,128)

    # fc with AvgPool2d(3, s=1) folded in: one (32, 16) matrix per conv3 channel.
    gavg = jnp.asarray(_avgpool_mat(_H4, _H4, 3, 1, _H5, _H5))        # (25, 9)
    fcw3 = p['fc_w'].reshape(10, 8, _M5)
    fcf = jnp.einsum('kcj,sj->csk', fcw3, gavg)                       # (8, 25, 10)
    fcf = jnp.pad(fcf, ((0, 0), (0, 7), (0, 6))).astype(jnp.float32)  # (8, 32, 16)
    fcb = jnp.pad(p['fc_b'], (0, 6))[None, :].astype(jnp.float32)     # (1, 16)

    # constant 0/1 "spatial plumbing" matrices (trace-time numpy constants).
    gmxw = jnp.asarray(_maxpool_wide(), dtype=jnp.bfloat16)           # (324, 512)
    g2w = jnp.asarray(_padded_taps(_H2, _H3, 2, 128, 64), dtype=jnp.bfloat16)
    g3w = jnp.asarray(_padded_taps(_H3, _H4, 2, 64, 32), dtype=jnp.bfloat16)
    adam = np.zeros((1, 64), np.float32)
    for oi in range(5):
        for oj in range(5):
            adam[0, oi * _H3 + oj] = 1.0 / 25.0
    adam = jnp.asarray(adam)

    def const(shape):
        nd = len(shape)
        return pl.BlockSpec(shape, lambda i, _nd=nd: (0,) * _nd)

    out = pl.pallas_call(
        _fused_kernel,
        out_shape=jax.ShapeDtypeStruct((n_pad, 16), jnp.float32),
        grid=(n_pad // B,),
        in_specs=[
            pl.BlockSpec((B * 13, _M1), lambda i: (i, 0)),   # p1 (block of B samples)
            const((B * 32, B * 13)),                         # w1bd
            const((_M1, 512)),                               # gmxw
            const((4, 128, 64)),                             # g2w (conv2/conv4 taps)
            const((4, B * 16, B * 32)),                      # w2bd
            const((B * 16, 1)),                              # s2t
            const((4, B * 8, B * 32)),                       # w4bd
            const((B * 8, 1)),                               # b4t
            const((1, 64)),                                  # ada mask
            const((4, 64, 32)),                              # g3w
            const((4, B * 8, B * 16)),                       # w3bd
            const((8, 32, 16)),                              # folded fc weights
            const((1, 16)),                                  # fc bias
        ],
        out_specs=pl.BlockSpec((B, 16), lambda i: (i, 0)),
        compiler_params=pltpu.CompilerParams(
            dimension_semantics=("parallel",)),
    )(p1, w1bd, gmxw, g2w, w2bd, s2t, w4bd, b4t, adam, g3w, w3bd, fcf, fcb)
    return out[:n, :10]


# ------------------------- pure-JAX reference -------------------------------

def ref_forward(x, p):
    dn = ('NCHW', 'OIHW', 'NCHW')
    hp = lax.Precision.HIGHEST

    def conv(v, w, pad):
        return lax.conv_general_dilated(v, w, (2, 2), ((pad, pad), (pad, pad)),
                                        dimension_numbers=dn, precision=hp)

    y = conv(x, p['w1'], 2)
    y = y * p['bn1_scale'][None, :, None, None] + p['bn1_shift'][None, :, None, None]
    y = jnp.maximum(y, 0.0)
    y = lax.reduce_window(y, -jnp.inf, lax.max, (1, 1, 2, 2), (1, 1, 2, 2),
                          ((0, 0), (0, 0), (1, 1), (1, 1)))
    residual = y
    y = conv(y, p['w2'], 2)
    y = y * p['bn2_scale'][None, :, None, None] + p['bn2_shift'][None, :, None, None]
    y = jnp.maximum(y, 0.0)
    y = conv(y, p['w3'], 2)
    r = conv(residual, p['w4'], 2) + p['b4'][None, :, None, None]
    r = lax.reduce_window(r, 0.0, lax.add, (1, 1, 5, 5), (1, 1, 5, 5),
                          ((0, 0),) * 4) / 25.0
    y = jnp.maximum(y + r, 0.0)
    y = lax.reduce_window(y, 0.0, lax.add, (1, 1, 3, 3), (1, 1, 1, 1),
                          ((0, 0),) * 4) / 9.0
    flat = y.reshape(y.shape[0], -1)
    return jnp.dot(flat, p['fc_w'].T, precision=hp) + p['fc_b']


# ------------------------------ params --------------------------------------

def init_params(key):
    ks = jax.random.split(key, 16)

    def nrm(k, shape, scale=0.1):
        return scale * jax.random.normal(k, shape, dtype=jnp.float32)

    eps = 1e-5
    p = {}
    p['w1'] = nrm(ks[0], (32, 3, 2, 2))
    g1, b1 = 1.0 + nrm(ks[1], (32,)), nrm(ks[2], (32,))
    m1, v1 = nrm(ks[3], (32,)), 1.0 + jnp.abs(nrm(ks[4], (32,)))
    p['bn1_scale'] = g1 / jnp.sqrt(v1 + eps)
    p['bn1_shift'] = b1 - m1 * p['bn1_scale']

    p['w2'] = nrm(ks[5], (16, 32, 2, 2))
    g2, b2 = 1.0 + nrm(ks[6], (16,)), nrm(ks[7], (16,))
    m2, v2 = nrm(ks[8], (16,)), 1.0 + jnp.abs(nrm(ks[9], (16,)))
    p['bn2_scale'] = g2 / jnp.sqrt(v2 + eps)
    p['bn2_shift'] = b2 - m2 * p['bn2_scale']

    p['w3'] = nrm(ks[10], (8, 16, 2, 2))
    p['w4'] = nrm(ks[11], (8, 32, 2, 2))
    p['b4'] = nrm(ks[12], (8,))
    p['fc_w'] = nrm(ks[13], (10, 72))
    p['fc_b'] = nrm(ks[14], (10,))
    return p


if __name__ == "__main__":
    key = jax.random.PRNGKey(0)
    pkey, xkey = jax.random.split(key)
    params = init_params(pkey)

    # fc expects 8*3*3 = 72 features, which pins the input spatial size to 32x32.
    x = jax.random.normal(xkey, (2, 3, 32, 32), dtype=jnp.float32)

    out = jax.block_until_ready(jax.jit(forward)(x, params))
    assert out.shape == (2, 10)

    ref = jax.block_until_ready(ref_forward(x, params))
    err = float(jnp.max(jnp.abs(out - ref)))
    # bf16 matmul operands (f32 accumulation) in the kernel -> looser tolerance
    assert err < 5e-2, f"mismatch vs reference: {err}"

    print("KERNEL_OK")
</pallas_src>

<mosaic_0001>
module attributes {stable_mosaic.version = 11 : i64} {
  func.func @_fused_kernel(%arg0: i32, %arg1: memref<104x324xbf16, #tpu.memory_space<vmem>>, %arg2: memref<256x104xbf16, #tpu.memory_space<vmem>>, %arg3: memref<324x512xbf16, #tpu.memory_space<vmem>>, %arg4: memref<4x128x64xbf16, #tpu.memory_space<vmem>>, %arg5: memref<4x128x256xbf16, #tpu.memory_space<vmem>>, %arg6: memref<128x1xf32, #tpu.memory_space<vmem>>, %arg7: memref<4x64x256xbf16, #tpu.memory_space<vmem>>, %arg8: memref<64x1xf32, #tpu.memory_space<vmem>>, %arg9: memref<1x64xf32, #tpu.memory_space<vmem>>, %arg10: memref<4x64x32xbf16, #tpu.memory_space<vmem>>, %arg11: memref<4x64x128xbf16, #tpu.memory_space<vmem>>, %arg12: memref<8x32x16xf32, #tpu.memory_space<vmem>>, %arg13: memref<1x16xf32, #tpu.memory_space<vmem>>, %arg14: memref<8x16xf32, #tpu.memory_space<vmem>>) attributes {dimension_semantics = [#tpu.dimension_semantics<parallel>], iteration_bounds = array<i64: 1>, scalar_prefetch = 0 : i64, scratch_operands = 0 : i64, tpu.core_type = #tpu.core_type<tc>, window_params = [{transform_indices = @transform_0, window_bounds = array<i64: 104, 324>}, {pipeline_mode = #tpu.pipeline_mode<synchronous>, transform_indices = @transform_1, window_bounds = array<i64: 256, 104>}, {pipeline_mode = #tpu.pipeline_mode<synchronous>, transform_indices = @transform_2, window_bounds = array<i64: 324, 512>}, {pipeline_mode = #tpu.pipeline_mode<synchronous>, transform_indices = @transform_3, window_bounds = array<i64: 4, 128, 64>}, {pipeline_mode = #tpu.pipeline_mode<synchronous>, transform_indices = @transform_4, window_bounds = array<i64: 4, 128, 256>}, {pipeline_mode = #tpu.pipeline_mode<synchronous>, transform_indices = @transform_5, window_bounds = array<i64: 128, 1>}, {pipeline_mode = #tpu.pipeline_mode<synchronous>, transform_indices = @transform_6, window_bounds = array<i64: 4, 64, 256>}, {pipeline_mode = #tpu.pipeline_mode<synchronous>, transform_indices = @transform_7, window_bounds = array<i64: 64, 1>}, {pipeline_mode = #tpu.pipeline_mode<synchronous>, transform_indices = @transform_8, window_bounds = array<i64: 1, 64>}, {pipeline_mode = #tpu.pipeline_mode<synchronous>, transform_indices = @transform_9, window_bounds = array<i64: 4, 64, 32>}, {pipeline_mode = #tpu.pipeline_mode<synchronous>, transform_indices = @transform_10, window_bounds = array<i64: 4, 64, 128>}, {pipeline_mode = #tpu.pipeline_mode<synchronous>, transform_indices = @transform_11, window_bounds = array<i64: 8, 32, 16>}, {pipeline_mode = #tpu.pipeline_mode<synchronous>, transform_indices = @transform_12, window_bounds = array<i64: 1, 16>}, {transform_indices = @transform_13, window_bounds = array<i64: 8, 16>}]} {
    %c0 = arith.constant 0 : index
    %c0_0 = arith.constant 0 : index
    %0 = vector.load %arg2[%c0, %c0_0] : memref<256x104xbf16, #tpu.memory_space<vmem>>, vector<256x104xbf16>
    %c0_1 = arith.constant 0 : index
    %c0_2 = arith.constant 0 : index
    %1 = vector.load %arg1[%c0_1, %c0_2] : memref<104x324xbf16, #tpu.memory_space<vmem>>, vector<104x324xbf16>
    %cst = arith.constant dense<0.000000e+00> : vector<256x324xf32>
    %2 = tpu.matmul %0, %1, %cst {dimension_numbers = #tpu.dot_dimension_numbers<[1], [0], [0], [1], [0, 0, 1, 1], [], []>} : vector<256x104xbf16>, vector<104x324xbf16>, vector<256x324xf32> -> vector<256x324xf32>
    %cst_3 = arith.constant 0.000000e+00 : f32
    %3 = vector.broadcast %cst_3 : f32 to vector<256x324xf32>
    %4 = arith.maximumf %2, %3 : vector<256x324xf32>
    %5 = arith.truncf %4 : vector<256x324xf32> to vector<256x324xbf16>
    %c0_4 = arith.constant 0 : index
    %c0_5 = arith.constant 0 : index
    %6 = vector.load %arg3[%c0_4, %c0_5] : memref<324x512xbf16, #tpu.memory_space<vmem>>, vector<324x512xbf16>
    %cst_6 = arith.constant dense<0.000000e+00> : vector<256x512xf32>
    %7 = tpu.matmul %5, %6, %cst_6 {dimension_numbers = #tpu.dot_dimension_numbers<[1], [0], [0], [1], [0, 0, 1, 1], [], []>} : vector<256x324xbf16>, vector<324x512xbf16>, vector<256x512xf32> -> vector<256x512xf32>
    %8 = vector.extract_strided_slice %7 {offsets = [0, 0], sizes = [256, 128], strides = [1, 1]} : vector<256x512xf32> to vector<256x128xf32>
    %9 = vector.extract_strided_slice %7 {offsets = [0, 128], sizes = [256, 128], strides = [1, 1]} : vector<256x512xf32> to vector<256x128xf32>
    %10 = arith.maximumf %8, %9 : vector<256x128xf32>
    %11 = vector.extract_strided_slice %7 {offsets = [0, 256], sizes = [256, 128], strides = [1, 1]} : vector<256x512xf32> to vector<256x128xf32>
    %12 = vector.extract_strided_slice %7 {offsets = [0, 384], sizes = [256, 128], strides = [1, 1]} : vector<256x512xf32> to vector<256x128xf32>
    %13 = arith.maximumf %11, %12 : vector<256x128xf32>
    %14 = arith.maximumf %10, %13 : vector<256x128xf32>
    %15 = arith.truncf %14 : vector<256x128xf32> to vector<256x128xbf16>
    %cst_7 = arith.constant 0.000000e+00 : f32
    %16 = vector.broadcast %cst_7 : f32 to vector<128x64xf32>
    %cst_8 = arith.constant 0.000000e+00 : f32
    %17 = vector.broadcast %cst_8 : f32 to vector<64x64xf32>
    %c0_9 = arith.constant 0 : index
    %c0_10 = arith.constant 0 : index
    %c0_11 = arith.constant 0 : index
    %18 = vector.load %arg4[%c0_9, %c0_10, %c0_11] : memref<4x128x64xbf16, #tpu.memory_space<vmem>>, vector<1x128x64xbf16>
    %19 = vector.shape_cast %18 : vector<1x128x64xbf16> to vector<128x64xbf16>
    %cst_12 = arith.constant dense<0.000000e+00> : vector<256x64xf32>
    %20 = tpu.matmul %15, %19, %cst_12 {dimension_numbers = #tpu.dot_dimension_numbers<[1], [0], [0], [1], [0, 0, 1, 1], [], []>} : vector<256x128xbf16>, vector<128x64xbf16>, vector<256x64xf32> -> vector<256x64xf32>
    %21 = arith.truncf %20 : vector<256x64xf32> to vector<256x64xbf16>
    %c0_13 = arith.constant 0 : index
    %c0_14 = arith.constant 0 : index
    %c0_15 = arith.constant 0 : index
    %22 = vector.load %arg5[%c0_13, %c0_14, %c0_15] : memref<4x128x256xbf16, #tpu.memory_space<vmem>>, vector<1x128x256xbf16>
    %23 = vector.shape_cast %22 : vector<1x128x256xbf16> to vector<128x256xbf16>
    %cst_16 = arith.constant dense<0.000000e+00> : vector<128x64xf32>
    %24 = tpu.matmul %23, %21, %cst_16 {dimension_numbers = #tpu.dot_dimension_numbers<[1], [0], [0], [1], [0, 0, 1, 1], [], []>} : vector<128x256xbf16>, vector<256x64xbf16>, vector<128x64xf32> -> vector<128x64xf32>
    %25 = arith.addf %16, %24 : vector<128x64xf32>
    %c0_17 = arith.constant 0 : index
    %c0_18 = arith.constant 0 : index
    %c0_19 = arith.constant 0 : index
    %26 = vector.load %arg7[%c0_17, %c0_18, %c0_19] : memref<4x64x256xbf16, #tpu.memory_space<vmem>>, vector<1x64x256xbf16>
    %27 = vector.shape_cast %26 : vector<1x64x256xbf16> to vector<64x256xbf16>
    %cst_20 = arith.constant dense<0.000000e+00> : vector<64x64xf32>
    %28 = tpu.matmul %27, %21, %cst_20 {dimension_numbers = #tpu.dot_dimension_numbers<[1], [0], [0], [1], [0, 0, 1, 1], [], []>} : vector<64x256xbf16>, vector<256x64xbf16>, vector<64x64xf32> -> vector<64x64xf32>
    %29 = arith.addf %17, %28 : vector<64x64xf32>
    %c1 = arith.constant 1 : index
    %c0_21 = arith.constant 0 : index
    %c0_22 = arith.constant 0 : index
    %30 = vector.load %arg4[%c1, %c0_21, %c0_22] : memref<4x128x64xbf16, #tpu.memory_space<vmem>>, vector<1x128x64xbf16>
    %31 = vector.shape_cast %30 : vector<1x128x64xbf16> to vector<128x64xbf16>
    %cst_23 = arith.constant dense<0.000000e+00> : vector<256x64xf32>
    %32 = tpu.matmul %15, %31, %cst_23 {dimension_numbers = #tpu.dot_dimension_numbers<[1], [0], [0], [1], [0, 0, 1, 1], [], []>} : vector<256x128xbf16>, vector<128x64xbf16>, vector<256x64xf32> -> vector<256x64xf32>
    %33 = arith.truncf %32 : vector<256x64xf32> to vector<256x64xbf16>
    %c1_24 = arith.constant 1 : index
    %c0_25 = arith.constant 0 : index
    %c0_26 = arith.constant 0 : index
    %34 = vector.load %arg5[%c1_24, %c0_25, %c0_26] : memref<4x128x256xbf16, #tpu.memory_space<vmem>>, vector<1x128x256xbf16>
    %35 = vector.shape_cast %34 : vector<1x128x256xbf16> to vector<128x256xbf16>
    %cst_27 = arith.constant dense<0.000000e+00> : vector<128x64xf32>
    %36 = tpu.matmul %35, %33, %cst_27 {dimension_numbers = #tpu.dot_dimension_numbers<[1], [0], [0], [1], [0, 0, 1, 1], [], []>} : vector<128x256xbf16>, vector<256x64xbf16>, vector<128x64xf32> -> vector<128x64xf32>
    %37 = arith.addf %25, %36 : vector<128x64xf32>
    %c1_28 = arith.constant 1 : index
    %c0_29 = arith.constant 0 : index
    %c0_30 = arith.constant 0 : index
    %38 = vector.load %arg7[%c1_28, %c0_29, %c0_30] : memref<4x64x256xbf16, #tpu.memory_space<vmem>>, vector<1x64x256xbf16>
    %39 = vector.shape_cast %38 : vector<1x64x256xbf16> to vector<64x256xbf16>
    %cst_31 = arith.constant dense<0.000000e+00> : vector<64x64xf32>
    %40 = tpu.matmul %39, %33, %cst_31 {dimension_numbers = #tpu.dot_dimension_numbers<[1], [0], [0], [1], [0, 0, 1, 1], [], []>} : vector<64x256xbf16>, vector<256x64xbf16>, vector<64x64xf32> -> vector<64x64xf32>
    %41 = arith.addf %29, %40 : vector<64x64xf32>
    %c2 = arith.constant 2 : index
    %c0_32 = arith.constant 0 : index
    %c0_33 = arith.constant 0 : index
    %42 = vector.load %arg4[%c2, %c0_32, %c0_33] : memref<4x128x64xbf16, #tpu.memory_space<vmem>>, vector<1x128x64xbf16>
    %43 = vector.shape_cast %42 : vector<1x128x64xbf16> to vector<128x64xbf16>
    %cst_34 = arith.constant dense<0.000000e+00> : vector<256x64xf32>
    %44 = tpu.matmul %15, %43, %cst_34 {dimension_numbers = #tpu.dot_dimension_numbers<[1], [0], [0], [1], [0, 0, 1, 1], [], []>} : vector<256x128xbf16>, vector<128x64xbf16>, vector<256x64xf32> -> vector<256x64xf32>
    %45 = arith.truncf %44 : vector<256x64xf32> to vector<256x64xbf16>
    %c2_35 = arith.constant 2 : index
    %c0_36 = arith.constant 0 : index
    %c0_37 = arith.constant 0 : index
    %46 = vector.load %arg5[%c2_35, %c0_36, %c0_37] : memref<4x128x256xbf16, #tpu.memory_space<vmem>>, vector<1x128x256xbf16>
    %47 = vector.shape_cast %46 : vector<1x128x256xbf16> to vector<128x256xbf16>
    %cst_38 = arith.constant dense<0.000000e+00> : vector<128x64xf32>
    %48 = tpu.matmul %47, %45, %cst_38 {dimension_numbers = #tpu.dot_dimension_numbers<[1], [0], [0], [1], [0, 0, 1, 1], [], []>} : vector<128x256xbf16>, vector<256x64xbf16>, vector<128x64xf32> -> vector<128x64xf32>
    %49 = arith.addf %37, %48 : vector<128x64xf32>
    %c2_39 = arith.constant 2 : index
    %c0_40 = arith.constant 0 : index
    %c0_41 = arith.constant 0 : index
    %50 = vector.load %arg7[%c2_39, %c0_40, %c0_41] : memref<4x64x256xbf16, #tpu.memory_space<vmem>>, vector<1x64x256xbf16>
    %51 = vector.shape_cast %50 : vector<1x64x256xbf16> to vector<64x256xbf16>
    %cst_42 = arith.constant dense<0.000000e+00> : vector<64x64xf32>
    %52 = tpu.matmul %51, %45, %cst_42 {dimension_numbers = #tpu.dot_dimension_numbers<[1], [0], [0], [1], [0, 0, 1, 1], [], []>} : vector<64x256xbf16>, vector<256x64xbf16>, vector<64x64xf32> -> vector<64x64xf32>
    %53 = arith.addf %41, %52 : vector<64x64xf32>
    %c3 = arith.constant 3 : index
    %c0_43 = arith.constant 0 : index
    %c0_44 = arith.constant 0 : index
    %54 = vector.load %arg4[%c3, %c0_43, %c0_44] : memref<4x128x64xbf16, #tpu.memory_space<vmem>>, vector<1x128x64xbf16>
    %55 = vector.shape_cast %54 : vector<1x128x64xbf16> to vector<128x64xbf16>
    %cst_45 = arith.constant dense<0.000000e+00> : vector<256x64xf32>
    %56 = tpu.matmul %15, %55, %cst_45 {dimension_numbers = #tpu.dot_dimension_numbers<[1], [0], [0], [1], [0, 0, 1, 1], [], []>} : vector<256x128xbf16>, vector<128x64xbf16>, vector<256x64xf32> -> vector<256x64xf32>
    %57 = arith.truncf %56 : vector<256x64xf32> to vector<256x64xbf16>
    %c3_46 = arith.constant 3 : index
    %c0_47 = arith.constant 0 : index
    %c0_48 = arith.constant 0 : index
    %58 = vector.load %arg5[%c3_46, %c0_47, %c0_48] : memref<4x128x256xbf16, #tpu.memory_space<vmem>>, vector<1x128x256xbf16>
    %59 = vector.shape_cast %58 : vector<1x128x256xbf16> to vector<128x256xbf16>
    %cst_49 = arith.constant dense<0.000000e+00> : vector<128x64xf32>
    %60 = tpu.matmul %59, %57, %cst_49 {dimension_numbers = #tpu.dot_dimension_numbers<[1], [0], [0], [1], [0, 0, 1, 1], [], []>} : vector<128x256xbf16>, vector<256x64xbf16>, vector<128x64xf32> -> vector<128x64xf32>
    %61 = arith.addf %49, %60 : vector<128x64xf32>
    %c3_50 = arith.constant 3 : index
    %c0_51 = arith.constant 0 : index
    %c0_52 = arith.constant 0 : index
    %62 = vector.load %arg7[%c3_50, %c0_51, %c0_52] : memref<4x64x256xbf16, #tpu.memory_space<vmem>>, vector<1x64x256xbf16>
    %63 = vector.shape_cast %62 : vector<1x64x256xbf16> to vector<64x256xbf16>
    %cst_53 = arith.constant dense<0.000000e+00> : vector<64x64xf32>
    %64 = tpu.matmul %63, %57, %cst_53 {dimension_numbers = #tpu.dot_dimension_numbers<[1], [0], [0], [1], [0, 0, 1, 1], [], []>} : vector<64x256xbf16>, vector<256x64xbf16>, vector<64x64xf32> -> vector<64x64xf32>
    %65 = arith.addf %53, %64 : vector<64x64xf32>
    %c0_54 = arith.constant 0 : index
    %c0_55 = arith.constant 0 : index
    %66 = vector.load %arg6[%c0_54, %c0_55] : memref<128x1xf32, #tpu.memory_space<vmem>>, vector<128x1xf32>
    %67 = vector.broadcast %66 : vector<128x1xf32> to vector<128x64xf32>
    %68 = arith.addf %61, %67 : vector<128x64xf32>
    %cst_56 = arith.constant 0.000000e+00 : f32
    %69 = vector.broadcast %cst_56 : f32 to vector<128x64xf32>
    %70 = arith.maximumf %68, %69 : vector<128x64xf32>
    %71 = arith.truncf %70 : vector<128x64xf32> to vector<128x64xbf16>
    %c0_57 = arith.constant 0 : index
    %c0_58 = arith.constant 0 : index
    %72 = vector.load %arg8[%c0_57, %c0_58] : memref<64x1xf32, #tpu.memory_space<vmem>>, vector<64x1xf32>
    %73 = vector.broadcast %72 : vector<64x1xf32> to vector<64x64xf32>
    %74 = arith.addf %65, %73 : vector<64x64xf32>
    %c0_59 = arith.constant 0 : index
    %c0_60 = arith.constant 0 : index
    %75 = vector.load %arg9[%c0_59, %c0_60] : memref<1x64xf32, #tpu.memory_space<vmem>>, vector<1x64xf32>
    %76 = vector.broadcast %75 : vector<1x64xf32> to vector<64x64xf32>
    %77 = arith.mulf %74, %76 : vector<64x64xf32>
    %cst_61 = arith.constant dense<0.000000e+00> : vector<64xf32>
    %78 = vector.multi_reduction <add>, %77, %cst_61 [1] : vector<64x64xf32> to vector<64xf32>
    %79 = vector.shape_cast %78 : vector<64xf32> to vector<64x1xf32>
    %cst_62 = arith.constant 0.000000e+00 : f32
    %80 = vector.broadcast %cst_62 : f32 to vector<64x32xf32>
    %c0_63 = arith.constant 0 : index
    %c0_64 = arith.constant 0 : index
    %c0_65 = arith.constant 0 : index
    %81 = vector.load %arg10[%c0_63, %c0_64, %c0_65] : memref<4x64x32xbf16, #tpu.memory_space<vmem>>, vector<1x64x32xbf16>
    %82 = vector.shape_cast %81 : vector<1x64x32xbf16> to vector<64x32xbf16>
    %cst_66 = arith.constant dense<0.000000e+00> : vector<128x32xf32>
    %83 = tpu.matmul %71, %82, %cst_66 {dimension_numbers = #tpu.dot_dimension_numbers<[1], [0], [0], [1], [0, 0, 1, 1], [], []>} : vector<128x64xbf16>, vector<64x32xbf16>, vector<128x32xf32> -> vector<128x32xf32>
    %84 = arith.truncf %83 : vector<128x32xf32> to vector<128x32xbf16>
    %c0_67 = arith.constant 0 : index
    %c0_68 = arith.constant 0 : index
    %c0_69 = arith.constant 0 : index
    %85 = vector.load %arg11[%c0_67, %c0_68, %c0_69] : memref<4x64x128xbf16, #tpu.memory_space<vmem>>, vector<1x64x128xbf16>
    %86 = vector.shape_cast %85 : vector<1x64x128xbf16> to vector<64x128xbf16>
    %cst_70 = arith.constant dense<0.000000e+00> : vector<64x32xf32>
    %87 = tpu.matmul %86, %84, %cst_70 {dimension_numbers = #tpu.dot_dimension_numbers<[1], [0], [0], [1], [0, 0, 1, 1], [], []>} : vector<64x128xbf16>, vector<128x32xbf16>, vector<64x32xf32> -> vector<64x32xf32>
    %88 = arith.addf %80, %87 : vector<64x32xf32>
    %c1_71 = arith.constant 1 : index
    %c0_72 = arith.constant 0 : index
    %c0_73 = arith.constant 0 : index
    %89 = vector.load %arg10[%c1_71, %c0_72, %c0_73] : memref<4x64x32xbf16, #tpu.memory_space<vmem>>, vector<1x64x32xbf16>
    %90 = vector.shape_cast %89 : vector<1x64x32xbf16> to vector<64x32xbf16>
    %cst_74 = arith.constant dense<0.000000e+00> : vector<128x32xf32>
    %91 = tpu.matmul %71, %90, %cst_74 {dimension_numbers = #tpu.dot_dimension_numbers<[1], [0], [0], [1], [0, 0, 1, 1], [], []>} : vector<128x64xbf16>, vector<64x32xbf16>, vector<128x32xf32> -> vector<128x32xf32>
    %92 = arith.truncf %91 : vector<128x32xf32> to vector<128x32xbf16>
    %c1_75 = arith.constant 1 : index
    %c0_76 = arith.constant 0 : index
    %c0_77 = arith.constant 0 : index
    %93 = vector.load %arg11[%c1_75, %c0_76, %c0_77] : memref<4x64x128xbf16, #tpu.memory_space<vmem>>, vector<1x64x128xbf16>
    %94 = vector.shape_cast %93 : vector<1x64x128xbf16> to vector<64x128xbf16>
    %cst_78 = arith.constant dense<0.000000e+00> : vector<64x32xf32>
    %95 = tpu.matmul %94, %92, %cst_78 {dimension_numbers = #tpu.dot_dimension_numbers<[1], [0], [0], [1], [0, 0, 1, 1], [], []>} : vector<64x128xbf16>, vector<128x32xbf16>, vector<64x32xf32> -> vector<64x32xf32>
    %96 = arith.addf %88, %95 : vector<64x32xf32>
    %c2_79 = arith.constant 2 : index
    %c0_80 = arith.constant 0 : index
    %c0_81 = arith.constant 0 : index
    %97 = vector.load %arg10[%c2_79, %c0_80, %c0_81] : memref<4x64x32xbf16, #tpu.memory_space<vmem>>, vector<1x64x32xbf16>
    %98 = vector.shape_cast %97 : vector<1x64x32xbf16> to vector<64x32xbf16>
    %cst_82 = arith.constant dense<0.000000e+00> : vector<128x32xf32>
    %99 = tpu.matmul %71, %98, %cst_82 {dimension_numbers = #tpu.dot_dimension_numbers<[1], [0], [0], [1], [0, 0, 1, 1], [], []>} : vector<128x64xbf16>, vector<64x32xbf16>, vector<128x32xf32> -> vector<128x32xf32>
    %100 = arith.truncf %99 : vector<128x32xf32> to vector<128x32xbf16>
    %c2_83 = arith.constant 2 : index
    %c0_84 = arith.constant 0 : index
    %c0_85 = arith.constant 0 : index
    %101 = vector.load %arg11[%c2_83, %c0_84, %c0_85] : memref<4x64x128xbf16, #tpu.memory_space<vmem>>, vector<1x64x128xbf16>
    %102 = vector.shape_cast %101 : vector<1x64x128xbf16> to vector<64x128xbf16>
    %cst_86 = arith.constant dense<0.000000e+00> : vector<64x32xf32>
    %103 = tpu.matmul %102, %100, %cst_86 {dimension_numbers = #tpu.dot_dimension_numbers<[1], [0], [0], [1], [0, 0, 1, 1], [], []>} : vector<64x128xbf16>, vector<128x32xbf16>, vector<64x32xf32> -> vector<64x32xf32>
    %104 = arith.addf %96, %103 : vector<64x32xf32>
    %c3_87 = arith.constant 3 : index
    %c0_88 = arith.constant 0 : index
    %c0_89 = arith.constant 0 : index
    %105 = vector.load %arg10[%c3_87, %c0_88, %c0_89] : memref<4x64x32xbf16, #tpu.memory_space<vmem>>, vector<1x64x32xbf16>
    %106 = vector.shape_cast %105 : vector<1x64x32xbf16> to vector<64x32xbf16>
    %cst_90 = arith.constant dense<0.000000e+00> : vector<128x32xf32>
    %107 = tpu.matmul %71, %106, %cst_90 {dimension_numbers = #tpu.dot_dimension_numbers<[1], [0], [0], [1], [0, 0, 1, 1], [], []>} : vector<128x64xbf16>, vector<64x32xbf16>, vector<128x32xf32> -> vector<128x32xf32>
    %108 = arith.truncf %107 : vector<128x32xf32> to vector<128x32xbf16>
    %c3_91 = arith.constant 3 : index
    %c0_92 = arith.constant 0 : index
    %c0_93 = arith.constant 0 : index
    %109 = vector.load %arg11[%c3_91, %c0_92, %c0_93] : memref<4x64x128xbf16, #tpu.memory_space<vmem>>, vector<1x64x128xbf16>
    %110 = vector.shape_cast %109 : vector<1x64x128xbf16> to vector<64x128xbf16>
    %cst_94 = arith.constant dense<0.000000e+00> : vector<64x32xf32>
    %111 = tpu.matmul %110, %108, %cst_94 {dimension_numbers = #tpu.dot_dimension_numbers<[1], [0], [0], [1], [0, 0, 1, 1], [], []>} : vector<64x128xbf16>, vector<128x32xbf16>, vector<64x32xf32> -> vector<64x32xf32>
    %112 = arith.addf %104, %111 : vector<64x32xf32>
    %113 = vector.broadcast %79 : vector<64x1xf32> to vector<64x32xf32>
    %114 = arith.addf %112, %113 : vector<64x32xf32>
    %cst_95 = arith.constant 0.000000e+00 : f32
    %115 = vector.broadcast %cst_95 : f32 to vector<64x32xf32>
    %116 = arith.maximumf %114, %115 : vector<64x32xf32>
    %cst_96 = arith.constant 0.000000e+00 : f32
    %117 = vector.broadcast %cst_96 : f32 to vector<8x16xf32>
    %118 = vector.extract_strided_slice %116 {offsets = [0, 0], sizes = [8, 32], strides = [1, 1]} : vector<64x32xf32> to vector<8x32xf32>
    %c0_97 = arith.constant 0 : index
    %c0_98 = arith.constant 0 : index
    %c0_99 = arith.constant 0 : index
    %119 = vector.load %arg12[%c0_97, %c0_98, %c0_99] : memref<8x32x16xf32, #tpu.memory_space<vmem>>, vector<1x32x16xf32>
    %120 = vector.shape_cast %119 : vector<1x32x16xf32> to vector<32x16xf32>
    %cst_100 = arith.constant dense<0.000000e+00> : vector<8x16xf32>
    %121 = tpu.matmul %118, %120, %cst_100 {dimension_numbers = #tpu.dot_dimension_numbers<[1], [0], [0], [1], [0, 0, 1, 1], [], []>} : vector<8x32xf32>, vector<32x16xf32>, vector<8x16xf32> -> vector<8x16xf32>
    %122 = arith.addf %117, %121 : vector<8x16xf32>
    %123 = vector.extract_strided_slice %116 {offsets = [8, 0], sizes = [8, 32], strides = [1, 1]} : vector<64x32xf32> to vector<8x32xf32>
    %c1_101 = arith.constant 1 : index
    %c0_102 = arith.constant 0 : index
    %c0_103 = arith.constant 0 : index
    %124 = vector.load %arg12[%c1_101, %c0_102, %c0_103] : memref<8x32x16xf32, #tpu.memory_space<vmem>>, vector<1x32x16xf32>
    %125 = vector.shape_cast %124 : vector<1x32x16xf32> to vector<32x16xf32>
    %cst_104 = arith.constant dense<0.000000e+00> : vector<8x16xf32>
    %126 = tpu.matmul %123, %125, %cst_104 {dimension_numbers = #tpu.dot_dimension_numbers<[1], [0], [0], [1], [0, 0, 1, 1], [], []>} : vector<8x32xf32>, vector<32x16xf32>, vector<8x16xf32> -> vector<8x16xf32>
    %127 = arith.addf %122, %126 : vector<8x16xf32>
    %128 = vector.extract_strided_slice %116 {offsets = [16, 0], sizes = [8, 32], strides = [1, 1]} : vector<64x32xf32> to vector<8x32xf32>
    %c2_105 = arith.constant 2 : index
    %c0_106 = arith.constant 0 : index
    %c0_107 = arith.constant 0 : index
    %129 = vector.load %arg12[%c2_105, %c0_106, %c0_107] : memref<8x32x16xf32, #tpu.memory_space<vmem>>, vector<1x32x16xf32>
    %130 = vector.shape_cast %129 : vector<1x32x16xf32> to vector<32x16xf32>
    %cst_108 = arith.constant dense<0.000000e+00> : vector<8x16xf32>
    %131 = tpu.matmul %128, %130, %cst_108 {dimension_numbers = #tpu.dot_dimension_numbers<[1], [0], [0], [1], [0, 0, 1, 1], [], []>} : vector<8x32xf32>, vector<32x16xf32>, vector<8x16xf32> -> vector<8x16xf32>
    %132 = arith.addf %127, %131 : vector<8x16xf32>
    %133 = vector.extract_strided_slice %116 {offsets = [24, 0], sizes = [8, 32], strides = [1, 1]} : vector<64x32xf32> to vector<8x32xf32>
    %c3_109 = arith.constant 3 : index
    %c0_110 = arith.constant 0 : index
    %c0_111 = arith.constant 0 : index
    %134 = vector.load %arg12[%c3_109, %c0_110, %c0_111] : memref<8x32x16xf32, #tpu.memory_space<vmem>>, vector<1x32x16xf32>
    %135 = vector.shape_cast %134 : vector<1x32x16xf32> to vector<32x16xf32>
    %cst_112 = arith.constant dense<0.000000e+00> : vector<8x16xf32>
    %136 = tpu.matmul %133, %135, %cst_112 {dimension_numbers = #tpu.dot_dimension_numbers<[1], [0], [0], [1], [0, 0, 1, 1], [], []>} : vector<8x32xf32>, vector<32x16xf32>, vector<8x16xf32> -> vector<8x16xf32>
    %137 = arith.addf %132, %136 : vector<8x16xf32>
    %138 = vector.extract_strided_slice %116 {offsets = [32, 0], sizes = [8, 32], strides = [1, 1]} : vector<64x32xf32> to vector<8x32xf32>
    %c4 = arith.constant 4 : index
    %c0_113 = arith.constant 0 : index
    %c0_114 = arith.constant 0 : index
    %139 = vector.load %arg12[%c4, %c0_113, %c0_114] : memref<8x32x16xf32, #tpu.memory_space<vmem>>, vector<1x32x16xf32>
    %140 = vector.shape_cast %139 : vector<1x32x16xf32> to vector<32x16xf32>
    %cst_115 = arith.constant dense<0.000000e+00> : vector<8x16xf32>
    %141 = tpu.matmul %138, %140, %cst_115 {dimension_numbers = #tpu.dot_dimension_numbers<[1], [0], [0], [1], [0, 0, 1, 1], [], []>} : vector<8x32xf32>, vector<32x16xf32>, vector<8x16xf32> -> vector<8x16xf32>
    %142 = arith.addf %137, %141 : vector<8x16xf32>
    %143 = vector.extract_strided_slice %116 {offsets = [40, 0], sizes = [8, 32], strides = [1, 1]} : vector<64x32xf32> to vector<8x32xf32>
    %c5 = arith.constant 5 : index
    %c0_116 = arith.constant 0 : index
    %c0_117 = arith.constant 0 : index
    %144 = vector.load %arg12[%c5, %c0_116, %c0_117] : memref<8x32x16xf32, #tpu.memory_space<vmem>>, vector<1x32x16xf32>
    %145 = vector.shape_cast %144 : vector<1x32x16xf32> to vector<32x16xf32>
    %cst_118 = arith.constant dense<0.000000e+00> : vector<8x16xf32>
    %146 = tpu.matmul %143, %145, %cst_118 {dimension_numbers = #tpu.dot_dimension_numbers<[1], [0], [0], [1], [0, 0, 1, 1], [], []>} : vector<8x32xf32>, vector<32x16xf32>, vector<8x16xf32> -> vector<8x16xf32>
    %147 = arith.addf %142, %146 : vector<8x16xf32>
    %148 = vector.extract_strided_slice %116 {offsets = [48, 0], sizes = [8, 32], strides = [1, 1]} : vector<64x32xf32> to vector<8x32xf32>
    %c6 = arith.constant 6 : index
    %c0_119 = arith.constant 0 : index
    %c0_120 = arith.constant 0 : index
    %149 = vector.load %arg12[%c6, %c0_119, %c0_120] : memref<8x32x16xf32, #tpu.memory_space<vmem>>, vector<1x32x16xf32>
    %150 = vector.shape_cast %149 : vector<1x32x16xf32> to vector<32x16xf32>
    %cst_121 = arith.constant dense<0.000000e+00> : vector<8x16xf32>
    %151 = tpu.matmul %148, %150, %cst_121 {dimension_numbers = #tpu.dot_dimension_numbers<[1], [0], [0], [1], [0, 0, 1, 1], [], []>} : vector<8x32xf32>, vector<32x16xf32>, vector<8x16xf32> -> vector<8x16xf32>
    %152 = arith.addf %147, %151 : vector<8x16xf32>
    %153 = vector.extract_strided_slice %116 {offsets = [56, 0], sizes = [8, 32], strides = [1, 1]} : vector<64x32xf32> to vector<8x32xf32>
    %c7 = arith.constant 7 : index
    %c0_122 = arith.constant 0 : index
    %c0_123 = arith.constant 0 : index
    %154 = vector.load %arg12[%c7, %c0_122, %c0_123] : memref<8x32x16xf32, #tpu.memory_space<vmem>>, vector<1x32x16xf32>
    %155 = vector.shape_cast %154 : vector<1x32x16xf32> to vector<32x16xf32>
    %cst_124 = arith.constant dense<0.000000e+00> : vector<8x16xf32>
    %156 = tpu.matmul %153, %155, %cst_124 {dimension_numbers = #tpu.dot_dimension_numbers<[1], [0], [0], [1], [0, 0, 1, 1], [], []>} : vector<8x32xf32>, vector<32x16xf32>, vector<8x16xf32> -> vector<8x16xf32>
    %157 = arith.addf %152, %156 : vector<8x16xf32>
    %c0_125 = arith.constant 0 : index
    %c0_126 = arith.constant 0 : index
    %158 = vector.load %arg13[%c0_125, %c0_126] : memref<1x16xf32, #tpu.memory_space<vmem>>, vector<1x16xf32>
    %159 = vector.broadcast %158 : vector<1x16xf32> to vector<8x16xf32>
    %160 = arith.addf %157, %159 : vector<8x16xf32>
    %c0_127 = arith.constant 0 : index
    %c0_128 = arith.constant 0 : index
    %161 = vector.load %arg14[%c0_127, %c0_128] : memref<8x16xf32, #tpu.memory_space<vmem>>, vector<8x16xf32>
    tpu.vector_store %arg14[%c0_127, %c0_128], %160 {strides = array<i32>} : memref<8x16xf32, #tpu.memory_space<vmem>>, vector<8x16xf32>,
    return
  }
  func.func @transform_0(%arg0: i32) -> (i32, i32) {
    %c0_i32 = arith.constant 0 : i32
    %c0_i32_0 = arith.constant 0 : i32
    return %arg0, %c0_i32 : i32, i32
  }
  func.func @transform_1(%arg0: i32) -> (i32, i32) {
    %c0_i32 = arith.constant 0 : i32
    %c0_i32_0 = arith.constant 0 : i32
    %c0_i32_1 = arith.constant 0 : i32
    return %c0_i32, %c0_i32_0 : i32, i32
  }
  func.func @transform_2(%arg0: i32) -> (i32, i32) {
    %c0_i32 = arith.constant 0 : i32
    %c0_i32_0 = arith.constant 0 : i32
    %c0_i32_1 = arith.constant 0 : i32
    return %c0_i32, %c0_i32_0 : i32, i32
  }
  func.func @transform_3(%arg0: i32) -> (i32, i32, i32) {
    %c0_i32 = arith.constant 0 : i32
    %c0_i32_0 = arith.constant 0 : i32
    %c0_i32_1 = arith.constant 0 : i32
    %c0_i32_2 = arith.constant 0 : i32
    return %c0_i32, %c0_i32_0, %c0_i32_1 : i32, i32, i32
  }
  func.func @transform_4(%arg0: i32) -> (i32, i32, i32) {
    %c0_i32 = arith.constant 0 : i32
    %c0_i32_0 = arith.constant 0 : i32
    %c0_i32_1 = arith.constant 0 : i32
    %c0_i32_2 = arith.constant 0 : i32
    return %c0_i32, %c0_i32_0, %c0_i32_1 : i32, i32, i32
  }
  func.func @transform_5(%arg0: i32) -> (i32, i32) {
    %c0_i32 = arith.constant 0 : i32
    %c0_i32_0 = arith.constant 0 : i32
    %c0_i32_1 = arith.constant 0 : i32
    return %c0_i32, %c0_i32_0 : i32, i32
  }
  func.func @transform_6(%arg0: i32) -> (i32, i32, i32) {
    %c0_i32 = arith.constant 0 : i32
    %c0_i32_0 = arith.constant 0 : i32
    %c0_i32_1 = arith.constant 0 : i32
    %c0_i32_2 = arith.constant 0 : i32
    return %c0_i32, %c0_i32_0, %c0_i32_1 : i32, i32, i32
  }
  func.func @transform_7(%arg0: i32) -> (i32, i32) {
    %c0_i32 = arith.constant 0 : i32
    %c0_i32_0 = arith.constant 0 : i32
    %c0_i32_1 = arith.constant 0 : i32
    return %c0_i32, %c0_i32_0 : i32, i32
  }
  func.func @transform_8(%arg0: i32) -> (i32, i32) {
    %c0_i32 = arith.constant 0 : i32
    %c0_i32_0 = arith.constant 0 : i32
    %c0_i32_1 = arith.constant 0 : i32
    return %c0_i32, %c0_i32_0 : i32, i32
  }
  func.func @transform_9(%arg0: i32) -> (i32, i32, i32) {
    %c0_i32 = arith.constant 0 : i32
    %c0_i32_0 = arith.constant 0 : i32
    %c0_i32_1 = arith.constant 0 : i32
    %c0_i32_2 = arith.constant 0 : i32
    return %c0_i32, %c0_i32_0, %c0_i32_1 : i32, i32, i32
  }
  func.func @transform_10(%arg0: i32) -> (i32, i32, i32) {
    %c0_i32 = arith.constant 0 : i32
    %c0_i32_0 = arith.constant 0 : i32
    %c0_i32_1 = arith.constant 0 : i32
    %c0_i32_2 = arith.constant 0 : i32
    return %c0_i32, %c0_i32_0, %c0_i32_1 : i32, i32, i32
  }
  func.func @transform_11(%arg0: i32) -> (i32, i32, i32) {
    %c0_i32 = arith.constant 0 : i32
    %c0_i32_0 = arith.constant 0 : i32
    %c0_i32_1 = arith.constant 0 : i32
    %c0_i32_2 = arith.constant 0 : i32
    return %c0_i32, %c0_i32_0, %c0_i32_1 : i32, i32, i32
  }
  func.func @transform_12(%arg0: i32) -> (i32, i32) {
    %c0_i32 = arith.constant 0 : i32
    %c0_i32_0 = arith.constant 0 : i32
    %c0_i32_1 = arith.constant 0 : i32
    return %c0_i32, %c0_i32_0 : i32, i32
  }
  func.func @transform_13(%arg0: i32) -> (i32, i32) {
    %c0_i32 = arith.constant 0 : i32
    %c0_i32_0 = arith.constant 0 : i32
    return %arg0, %c0_i32 : i32, i32
  }
}

</mosaic_0001>

<llo_original>
// kernel: tile.8
$region0: #{tile.8}
  #allocation0 [shape = 's32[1]{0}', space=sflag, size = 0x4, scoped, tag = 'scoped memory for tile.8']
  %s0 = inlined_call_operand.vmem [shape: f32[16], index: 0, kind: input, shape index: {}]
  %s1 = inlined_call_operand.vmem [shape: f32[8,16], index: 1, kind: output, shape index: {}]
  // Predicated region
  $region2: #{tile.8} parent=0 // pred_check
    _
  $region3: #{tile.8} parent=0 // pred_check_branch
    %3 = sbr.rel (0) target = $region5
  $region4: #{tile.8} parent=0 // pred_region
    _
  $region5: #{tile.8} parent=0 // pred_fallthru
    _
  %v4 = vld [vmem:[%s0] ss:$0 sm:$0xff]
  %5 = vst [vmem:[%s1] sm:$0xff] %v4

// kernel: tile.0
$region0: #{tile.0}
  %s0 = inlined_call_operand.vmem [shape: f32[8,16], index: 0, kind: input, shape index: {}]
  %s1 = inlined_call_operand.vmem [shape: f32[128,1], index: 1, kind: output, shape index: {}]
  %v2 = vld [vmem:[%s0] sm:$0xff]
  %vm3 = vcmask 7168
  %4 = vst.msk [vmem:[%s1] ss:$16 sm:$0x3] %vm3, %v2
  %5 = vst.msk [vmem:[%s1] ss:$16 sm:$0xc] %vm3, %v2
  %6 = vst.msk [vmem:[%s1] ss:$16 sm:$0x30] %vm3, %v2
  %7 = vst.msk [vmem:[%s1] ss:$16 sm:$0xc0] %vm3, %v2
  %v8 = vld [vmem:[%s0] sm:$0xff]
  %9 = vrot.lane.b32.xlu0 %v8, 127
  %v10 = vpop.permute.xlu0 %9
  %vm11 = vcmask 7168
  %s12 = scalar_lea.vmem %s1, 1
  %13 = vst.msk [vmem:[%s12] ss:$16 sm:$0x3] %vm11, %v10
  %s14 = scalar_lea.vmem %s1, 1
  %15 = vst.msk [vmem:[%s14] ss:$16 sm:$0xc] %vm11, %v10
  %s16 = scalar_lea.vmem %s1, 1
  %17 = vst.msk [vmem:[%s16] ss:$16 sm:$0x30] %vm11, %v10
  %s18 = scalar_lea.vmem %s1, 1
  %19 = vst.msk [vmem:[%s18] ss:$16 sm:$0xc0] %vm11, %v10
  %v20 = vld [vmem:[%s0] sm:$0xff]
  %21 = vrot.lane.b32.xlu0 %v20, 126
  %v22 = vpop.permute.xlu0 %21
  %vm23 = vcmask 7168
  %s24 = scalar_lea.vmem %s1, 2
  %25 = vst.msk [vmem:[%s24] ss:$16 sm:$0x3] %vm23, %v22
  %s26 = scalar_lea.vmem %s1, 2
  %27 = vst.msk [vmem:[%s26] ss:$16 sm:$0xc] %vm23, %v22
  %s28 = scalar_lea.vmem %s1, 2
  %29 = vst.msk [vmem:[%s28] ss:$16 sm:$0x30] %vm23, %v22
  %s30 = scalar_lea.vmem %s1, 2
  %31 = vst.msk [vmem:[%s30] ss:$16 sm:$0xc0] %vm23, %v22
  %v32 = vld [vmem:[%s0] sm:$0xff]
  %33 = vrot.lane.b32.xlu0 %v32, 125
  %v34 = vpop.permute.xlu0 %33
  %vm35 = vcmask 7168
  %s36 = scalar_lea.vmem %s1, 3
  %37 = vst.msk [vmem:[%s36] ss:$16 sm:$0x3] %vm35, %v34
  %s38 = scalar_lea.vmem %s1, 3
  %39 = vst.msk [vmem:[%s38] ss:$16 sm:$0xc] %vm35, %v34
  %s40 = scalar_lea.vmem %s1, 3
  %41 = vst.msk [vmem:[%s40] ss:$16 sm:$0x30] %vm35, %v34
  %s42 = scalar_lea.vmem %s1, 3
  %43 = vst.msk [vmem:[%s42] ss:$16 sm:$0xc0] %vm35, %v34
  %v44 = vld [vmem:[%s0] sm:$0xff]
  %45 = vrot.lane.b32.xlu0 %v44, 124
  %v46 = vpop.permute.xlu0 %45
  %vm47 = vcmask 7168
  %s48 = scalar_lea.vmem %s1, 4
  %49 = vst.msk [vmem:[%s48] ss:$16 sm:$0x3] %vm47, %v46
  %s50 = scalar_lea.vmem %s1, 4
  %51 = vst.msk [vmem:[%s50] ss:$16 sm:$0xc] %vm47, %v46
  %s52 = scalar_lea.vmem %s1, 4
  %53 = vst.msk [vmem:[%s52] ss:$16 sm:$0x30] %vm47, %v46
  %s54 = scalar_lea.vmem %s1, 4
  %55 = vst.msk [vmem:[%s54] ss:$16 sm:$0xc0] %vm47, %v46
  %v56 = vld [vmem:[%s0] sm:$0xff]
  %57 = vrot.lane.b32.xlu0 %v56, 123
  %v58 = vpop.permute.xlu0 %57
  %vm59 = vcmask 7168
  %s60 = scalar_lea.vmem %s1, 5
  %61 = vst.msk [vmem:[%s60] ss:$16 sm:$0x3] %vm59, %v58
  %s62 = scalar_lea.vmem %s1, 5
  %63 = vst.msk [vmem:[%s62] ss:$16 sm:$0xc] %vm59, %v58
  %s64 = scalar_lea.vmem %s1, 5
  %65 = vst.msk [vmem:[%s64] ss:$16 sm:$0x30] %vm59, %v58
  %s66 = scalar_lea.vmem %s1, 5
  %67 = vst.msk [vmem:[%s66] ss:$16 sm:$0xc0] %vm59, %v58
  %v68 = vld [vmem:[%s0] sm:$0xff]
  %69 = vrot.lane.b32.xlu0 %v68, 122
  %v70 = vpop.permute.xlu0 %69
  %vm71 = vcmask 7168
  %s72 = scalar_lea.vmem %s1, 6
  %73 = vst.msk [vmem:[%s72] ss:$16 sm:$0x3] %vm71, %v70
  %s74 = scalar_lea.vmem %s1, 6
  %75 = vst.msk [vmem:[%s74] ss:$16 sm:$0xc] %vm71, %v70
  %s76 = scalar_lea.vmem %s1, 6
  %77 = vst.msk [vmem:[%s76] ss:$16 sm:$0x30] %vm71, %v70
  %s78 = scalar_lea.vmem %s1, 6
  %79 = vst.msk [vmem:[%s78] ss:$16 sm:$0xc0] %vm71, %v70
  %v80 = vld [vmem:[%s0] sm:$0xff]
  %81 = vrot.lane.b32.xlu0 %v80, 121
  %v82 = vpop.permute.xlu0 %81
  %vm83 = vcmask 7168
  %s84 = scalar_lea.vmem %s1, 7
  %85 = vst.msk [vmem:[%s84] ss:$16 sm:$0x3] %vm83, %v82
  %s86 = scalar_lea.vmem %s1, 7
  %87 = vst.msk [vmem:[%s86] ss:$16 sm:$0xc] %vm83, %v82
  %s88 = scalar_lea.vmem %s1, 7
  %89 = vst.msk [vmem:[%s88] ss:$16 sm:$0x30] %vm83, %v82
  %s90 = scalar_lea.vmem %s1, 7
  %91 = vst.msk [vmem:[%s90] ss:$16 sm:$0xc0] %vm83, %v82
  %v92 = vld [vmem:[%s0] sm:$0xff]
  %93 = vrot.lane.b32.xlu0 %v92, 120
  %v94 = vpop.permute.xlu0 %93
  %vm95 = vcmask 7168
  %s96 = scalar_lea.vmem %s1, 8
  %97 = vst.msk [vmem:[%s96] ss:$16 sm:$0x3] %vm95, %v94
  %s98 = scalar_lea.vmem %s1, 8
  %99 = vst.msk [vmem:[%s98] ss:$16 sm:$0xc] %vm95, %v94
  %s100 = scalar_lea.vmem %s1, 8
  %101 = vst.msk [vmem:[%s100] ss:$16 sm:$0x30] %vm95, %v94
  %s102 = scalar_lea.vmem %s1, 8
  %103 = vst.msk [vmem:[%s102] ss:$16 sm:$0xc0] %vm95, %v94
  %v104 = vld [vmem:[%s0] sm:$0xff]
  %105 = vrot.lane.b32.xlu0 %v104, 119
  %v106 = vpop.permute.xlu0 %105
  %vm107 = vcmask 7168
  %s108 = scalar_lea.vmem %s1, 9
  %109 = vst.msk [vmem:[%s108] ss:$16 sm:$0x3] %vm107, %v106
  %s110 = scalar_lea.vmem %s1, 9
  %111 = vst.msk [vmem:[%s110] ss:$16 sm:$0xc] %vm107, %v106
  %s112 = scalar_lea.vmem %s1, 9
  %113 = vst.msk [vmem:[%s112] ss:$16 sm:$0x30] %vm107, %v106
  %s114 = scalar_lea.vmem %s1, 9
  %115 = vst.msk [vmem:[%s114] ss:$16 sm:$0xc0] %vm107, %v106
  %v116 = vld [vmem:[%s0] sm:$0xff]
  %117 = vrot.lane.b32.xlu0 %v116, 118
  %v118 = vpop.permute.xlu0 %117
  %vm119 = vcmask 7168
  %s120 = scalar_lea.vmem %s1, 10
  %121 = vst.msk [vmem:[%s120] ss:$16 sm:$0x3] %vm119, %v118
  %s122 = scalar_lea.vmem %s1, 10
  %123 = vst.msk [vmem:[%s122] ss:$16 sm:$0xc] %vm119, %v118
  %s124 = scalar_lea.vmem %s1, 10
  %125 = vst.msk [vmem:[%s124] ss:$16 sm:$0x30] %vm119, %v118
  %s126 = scalar_lea.vmem %s1, 10
  %127 = vst.msk [vmem:[%s126] ss:$16 sm:$0xc0] %vm119, %v118
  %v128 = vld [vmem:[%s0] sm:$0xff]
  %129 = vrot.lane.b32.xlu0 %v128, 117
  %v130 = vpop.permute.xlu0 %129
  %vm131 = vcmask 7168
  %s132 = scalar_lea.vmem %s1, 11
  %133 = vst.msk [vmem:[%s132] ss:$16 sm:$0x3] %vm131, %v130
  %s134 = scalar_lea.vmem %s1, 11
  %135 = vst.msk [vmem:[%s134] ss:$16 sm:$0xc] %vm131, %v130
  %s136 = scalar_lea.vmem %s1, 11
  %137 = vst.msk [vmem:[%s136] ss:$16 sm:$0x30] %vm131, %v130
  %s138 = scalar_lea.vmem %s1, 11
  %139 = vst.msk [vmem:[%s138] ss:$16 sm:$0xc0] %vm131, %v130
  %v140 = vld [vmem:[%s0] sm:$0xff]
  %141 = vrot.lane.b32.xlu0 %v140, 116
  %v142 = vpop.permute.xlu0 %141
  %vm143 = vcmask 7168
  %s144 = scalar_lea.vmem %s1, 12
  %145 = vst.msk [vmem:[%s144] ss:$16 sm:$0x3] %vm143, %v142
  %s146 = scalar_lea.vmem %s1, 12
  %147 = vst.msk [vmem:[%s146] ss:$16 sm:$0xc] %vm143, %v142
  %s148 = scalar_lea.vmem %s1, 12
  %149 = vst.msk [vmem:[%s148] ss:$16 sm:$0x30] %vm143, %v142
  %s150 = scalar_lea.vmem %s1, 12
  %151 = vst.msk [vmem:[%s150] ss:$16 sm:$0xc0] %vm143, %v142
  %v152 = vld [vmem:[%s0] sm:$0xff]
  %153 = vrot.lane.b32.xlu0 %v152, 115
  %v154 = vpop.permute.xlu0 %153
  %vm155 = vcmask 7168
  %s156 = scalar_lea.vmem %s1, 13
  %157 = vst.msk [vmem:[%s156] ss:$16 sm:$0x3] %vm155, %v154
  %s158 = scalar_lea.vmem %s1, 13
  %159 = vst.msk [vmem:[%s158] ss:$16 sm:$0xc] %vm155, %v154
  %s160 = scalar_lea.vmem %s1, 13
  %161 = vst.msk [vmem:[%s160] ss:$16 sm:$0x30] %vm155, %v154
  %s162 = scalar_lea.vmem %s1, 13
  %163 = vst.msk [vmem:[%s162] ss:$16 sm:$0xc0] %vm155, %v154
  %v164 = vld [vmem:[%s0] sm:$0xff]
  %165 = vrot.lane.b32.xlu0 %v164, 114
  %v166 = vpop.permute.xlu0 %165
  %vm167 = vcmask 7168
  %s168 = scalar_lea.vmem %s1, 14
  %169 = vst.msk [vmem:[%s168] ss:$16 sm:$0x3] %vm167, %v166
  %s170 = scalar_lea.vmem %s1, 14
  %171 = vst.msk [vmem:[%s170] ss:$16 sm:$0xc] %vm167, %v166
  %s172 = scalar_lea.vmem %s1, 14
  %173 = vst.msk [vmem:[%s172] ss:$16 sm:$0x30] %vm167, %v166
  %s174 = scalar_lea.vmem %s1, 14
  %175 = vst.msk [vmem:[%s174] ss:$16 sm:$0xc0] %vm167, %v166
  %v176 = vld [vmem:[%s0] sm:$0xff]
  %177 = vrot.lane.b32.xlu0 %v176, 113
  %v178 = vpop.permute.xlu0 %177
  %vm179 = vcmask 7168
  %s180 = scalar_lea.vmem %s1, 15
  %181 = vst.msk [vmem:[%s180] ss:$16 sm:$0x3] %vm179, %v178
  %s182 = scalar_lea.vmem %s1, 15
  %183 = vst.msk [vmem:[%s182] ss:$16 sm:$0xc] %vm179, %v178
  %s184 = scalar_lea.vmem %s1, 15
  %185 = vst.msk [vmem:[%s184] ss:$16 sm:$0x30] %vm179, %v178
  %s186 = scalar_lea.vmem %s1, 15
  %187 = vst.msk [vmem:[%s186] ss:$16 sm:$0xc0] %vm179, %v178

// kernel: forward.1
$region0: #{forward.1}
  #allocation0 [shape = 'u32[]', space=smem, size = 0x4, offset = 0x4, fixed_abs, tag = 'smem constant byte address 0x4 - core index']
  #allocation1 [shape = 'u32[144,128]{1,0:T(1,128)}', space=vmem, size = 0x12000, scoped, tag = 'internal scratch']
  %s0 = inlined_call_operand.vmem [shape: bf16[104,324], index: 0, kind: input, shape index: {}]
  %s1 = inlined_call_operand.vmem [shape: bf16[256,104], index: 1, kind: input, shape index: {}]
  %s2 = inlined_call_operand.vmem [shape: bf16[324,512], index: 2, kind: input, shape index: {}]
  %s3 = inlined_call_operand.vmem [shape: bf16[4,128,64], index: 3, kind: input, shape index: {}]
  %s4 = inlined_call_operand.vmem [shape: bf16[4,128,256], index: 4, kind: input, shape index: {}]
  %s5 = inlined_call_operand.vmem [shape: f32[128,1], index: 5, kind: input, shape index: {}]
  %s6 = inlined_call_operand.vmem [shape: bf16[4,64,256], index: 6, kind: input, shape index: {}]
  %s7 = inlined_call_operand.vmem [shape: f32[64,1], index: 7, kind: input, shape index: {}]
  %s8 = inlined_call_operand.vmem [shape: f32[1,64], index: 8, kind: input, shape index: {}]
  %s9 = inlined_call_operand.vmem [shape: bf16[4,64,32], index: 9, kind: input, shape index: {}]
  %s10 = inlined_call_operand.vmem [shape: bf16[4,64,128], index: 10, kind: input, shape index: {}]
  %s11 = inlined_call_operand.vmem [shape: f32[8,32,16], index: 11, kind: input, shape index: {}]
  %s12 = inlined_call_operand.vmem [shape: f32[1,16], index: 12, kind: input, shape index: {}]
  %s13 = inlined_call_operand.vmem [shape: f32[8,16], index: 13, kind: output, shape index: {}]
  %s14 = sld [smem:[#allocation0]]
  $region62: #{forward.1} parent=0
    _
  %s16 = ssub.s32 1, %s14
  %s17 = scalar_select 0, %s16, %s14
  // Predicated region
  $region2: #{forward.1} parent=0 // pred_check
    _
  $region3: #{forward.1} parent=0 // pred_check_branch
    %19 = sbr.rel (0) target = $region5
  $region4: #{forward.1} parent=0 // pred_region
    _
  $region5: #{forward.1} parent=0 // pred_fallthru
    _
  // Predicated region
  $region6: #{forward.1} parent=0 // pred_check
    _
  $region7: #{forward.1} parent=0 // pred_check_branch
    %21 = sbr.rel (0) target = $region9
  $region8: #{forward.1} parent=0 // pred_region
    _
  $region9: #{forward.1} parent=0 // pred_fallthru
    _
  // Predicated region
  $region10: #{forward.1} parent=0 // pred_check
    _
  $region11: #{forward.1} parent=0 // pred_check_branch
    %23 = sbr.rel (0) target = $region13
  $region12: #{forward.1} parent=0 // pred_region
    _
  $region13: #{forward.1} parent=0 // pred_fallthru
    _
  // Predicated region
  $region14: #{forward.1} parent=0 // pred_check
    _
  $region15: #{forward.1} parent=0 // pred_check_branch
    %25 = sbr.rel (0) target = $region17
  $region16: #{forward.1} parent=0 // pred_region
    _
  $region17: #{forward.1} parent=0 // pred_fallthru
    _
  // Predicated region
  $region18: #{forward.1} parent=0 // pred_check
    _
  $region19: #{forward.1} parent=0 // pred_check_branch
    %27 = sbr.rel (0) target = $region21
  $region20: #{forward.1} parent=0 // pred_region
    _
  $region21: #{forward.1} parent=0 // pred_fallthru
    _
  // Predicated region
  $region22: #{forward.1} parent=0 // pred_check
    _
  $region23: #{forward.1} parent=0 // pred_check_branch
    %29 = sbr.rel (0) target = $region25
  $region24: #{forward.1} parent=0 // pred_region
    _
  $region25: #{forward.1} parent=0 // pred_fallthru
    _
  // Predicated region
  $region26: #{forward.1} parent=0 // pred_check
    _
  $region27: #{forward.1} parent=0 // pred_check_branch
    %31 = sbr.rel (0) target = $region29
  $region28: #{forward.1} parent=0 // pred_region
    _
  $region29: #{forward.1} parent=0 // pred_fallthru
    _
  // Predicated region
  $region30: #{forward.1} parent=0 // pred_check
    _
  $region31: #{forward.1} parent=0 // pred_check_branch
    %33 = sbr.rel (0) target = $region33
  $region32: #{forward.1} parent=0 // pred_region
    _
  $region33: #{forward.1} parent=0 // pred_fallthru
    _
  // Predicated region
  $region34: #{forward.1} parent=0 // pred_check
    _
  $region35: #{forward.1} parent=0 // pred_check_branch
    %35 = sbr.rel (0) target = $region37
  $region36: #{forward.1} parent=0 // pred_region
    _
  $region37: #{forward.1} parent=0 // pred_fallthru
    _
  // Predicated region
  $region38: #{forward.1} parent=0 // pred_check
    _
  $region39: #{forward.1} parent=0 // pred_check_branch
    %37 = sbr.rel (0) target = $region41
  $region40: #{forward.1} parent=0 // pred_region
    _
  $region41: #{forward.1} parent=0 // pred_fallthru
    _
  // Predicated region
  $region42: #{forward.1} parent=0 // pred_check
    _
  $region43: #{forward.1} parent=0 // pred_check_branch
    %39 = sbr.rel (0) target = $region45
  $region44: #{forward.1} parent=0 // pred_region
    _
  $region45: #{forward.1} parent=0 // pred_fallthru
    _
  // Predicated region
  $region46: #{forward.1} parent=0 // pred_check
    _
  $region47: #{forward.1} parent=0 // pred_check_branch
    %41 = sbr.rel (0) target = $region49
  $region48: #{forward.1} parent=0 // pred_region
    _
  $region49: #{forward.1} parent=0 // pred_fallthru
    _
  // Predicated region
  $region50: #{forward.1} parent=0 // pred_check
    _
  $region51: #{forward.1} parent=0 // pred_check_branch
    %43 = sbr.rel (0) target = $region53
  $region52: #{forward.1} parent=0 // pred_region
    _
  $region53: #{forward.1} parent=0 // pred_fallthru
    _
  %v45 = vld [vmem:[%s1] sm:$0xf]
  %v46 = vld [vmem:[%s1 + $0x4] sm:$0xf]
  %v47 = vld [vmem:[%s1 + $0x8] sm:$0xf]
  %v48 = vld [vmem:[%s1 + $0xc] sm:$0xf]
  %v49 = vld [vmem:[%s1 + $0x10] sm:$0xf]
  %v50 = vld [vmem:[%s1 + $0x14] sm:$0xf]
  %v51 = vld [vmem:[%s1 + $0x18] sm:$0xf]
  %v52 = vld [vmem:[%s1 + $0x1c] sm:$0xf]
  %v53 = vld [vmem:[%s1 + $0x20] sm:$0xf]
  %v54 = vld [vmem:[%s1 + $0x24] sm:$0xf]
  %v55 = vld [vmem:[%s1 + $0x28] sm:$0xf]
  %v56 = vld [vmem:[%s1 + $0x2c] sm:$0xf]
  %v57 = vld [vmem:[%s1 + $0x30] sm:$0xf]
  %v58 = vld [vmem:[%s1 + $0x34] sm:$0xf]
  %v59 = vld [vmem:[%s1 + $0x38] sm:$0xf]
  %v60 = vld [vmem:[%s1 + $0x3c] sm:$0xf]
  %v61 = vld [vmem:[%s1 + $0x40] sm:$0xf]
  %v62 = vld [vmem:[%s1 + $0x44] sm:$0xf]
  %v63 = vld [vmem:[%s1 + $0x48] sm:$0xf]
  %v64 = vld [vmem:[%s1 + $0x4c] sm:$0xf]
  %v65 = vld [vmem:[%s1 + $0x50] sm:$0xf]
  %v66 = vld [vmem:[%s1 + $0x54] sm:$0xf]
  %v67 = vld [vmem:[%s1 + $0x58] sm:$0xf]
  %v68 = vld [vmem:[%s1 + $0x5c] sm:$0xf]
  %v69 = vld [vmem:[%s1 + $0x60] sm:$0xf]
  %v70 = vld [vmem:[%s1 + $0x64] sm:$0xf]
  %v71 = vld [vmem:[%s1 + $0x68] sm:$0xf]
  %v72 = vld [vmem:[%s1 + $0x6c] sm:$0xf]
  %v73 = vld [vmem:[%s1 + $0x70] sm:$0xf]
  %v74 = vld [vmem:[%s1 + $0x74] sm:$0xf]
  %v75 = vld [vmem:[%s1 + $0x78] sm:$0xf]
  %v76 = vld [vmem:[%s1 + $0x7c] sm:$0xf]
  %v77 = vld [vmem:[%s0] sm:$0xff]
  %v78 = vld [vmem:[%s0 + $0x8] sm:$0xf]
  %v79 = vld [vmem:[%s0 + $0xc] sm:$0xff]
  %v80 = vld [vmem:[%s0 + $0x14] sm:$0xf]
  %v81 = vld [vmem:[%s0 + $0x18] sm:$0xff]
  %v82 = vld [vmem:[%s0 + $0x20] sm:$0xf]
  %v83 = vld [vmem:[%s0 + $0x24] sm:$0xff]
  %v84 = vld [vmem:[%s0 + $0x2c] sm:$0xf]
  %v85 = vld [vmem:[%s0 + $0x30] sm:$0xff]
  %v86 = vld [vmem:[%s0 + $0x38] sm:$0xf]
  %v87 = vld [vmem:[%s0 + $0x3c] sm:$0xff]
  %v88 = vld [vmem:[%s0 + $0x44] sm:$0xf]
  %v89 = vld [vmem:[%s0 + $0x48] sm:$0xff]
  %v90 = vld [vmem:[%s0 + $0x50] sm:$0xf]
  %v91 = vld [vmem:[%s0 + $0x54] sm:$0xff]
  %v92 = vld [vmem:[%s0 + $0x5c] sm:$0xf]
  %v93 = vld [vmem:[%s0 + $0x60] sm:$0xff]
  %v94 = vld [vmem:[%s0 + $0x68] sm:$0xf]
  %v95 = vld [vmem:[%s0 + $0x6c] sm:$0xff]
  %v96 = vld [vmem:[%s0 + $0x74] sm:$0xf]
  %v97 = vld [vmem:[%s0 + $0x78] sm:$0xff]
  %v98 = vld [vmem:[%s0 + $0x80] sm:$0xf]
  %v99 = vld [vmem:[%s0 + $0x84] sm:$0xff]
  %v100 = vld [vmem:[%s0 + $0x8c] sm:$0xf]
  %v101 = vld [vmem:[%s0 + $0x90] sm:$0xff]
  %v102 = vld [vmem:[%s0 + $0x98] sm:$0xf]
  %v135 = vunpack.c.l.b16 %v45
  %v136 = vunpack.c.l.b16 %v46
  %v137 = vunpack.c.l.b16 %v47
  %v138 = vunpack.c.l.b16 %v48
  %v139 = vunpack.c.l.b16 %v49
  %v140 = vunpack.c.l.b16 %v50
  %v141 = vunpack.c.l.b16 %v51
  %v142 = vunpack.c.l.b16 %v52
  %v143 = vunpack.c.l.b16 %v53
  %v144 = vunpack.c.l.b16 %v54
  %v145 = vunpack.c.l.b16 %v55
  %v146 = vunpack.c.l.b16 %v56
  %v147 = vunpack.c.l.b16 %v57
  %v148 = vunpack.c.l.b16 %v58
  %v149 = vunpack.c.l.b16 %v59
  %v150 = vunpack.c.l.b16 %v60
  %v151 = vunpack.c.l.b16 %v61
  %v152 = vunpack.c.l.b16 %v62
  %v153 = vunpack.c.l.b16 %v63
  %v154 = vunpack.c.l.b16 %v64
  %v155 = vunpack.c.l.b16 %v65
  %v156 = vunpack.c.l.b16 %v66
  %v157 = vunpack.c.l.b16 %v67
  %v158 = vunpack.c.l.b16 %v68
  %v159 = vunpack.c.l.b16 %v69
  %v160 = vunpack.c.l.b16 %v70
  %v161 = vunpack.c.l.b16 %v71
  %v162 = vunpack.c.l.b16 %v72
  %v163 = vunpack.c.l.b16 %v73
  %v164 = vunpack.c.l.b16 %v74
  %v165 = vunpack.c.l.b16 %v75
  %v166 = vunpack.c.l.b16 %v76
  %v167 = vpack.c.b16 %v136, %v135
  %v168 = vpack.c.b16 %v138, %v137
  %v169 = vpack.c.b16 %v140, %v139
  %v170 = vpack.c.b16 %v142, %v141
  %v171 = vpack.c.b16 %v144, %v143
  %v172 = vpack.c.b16 %v146, %v145
  %v173 = vpack.c.b16 %v148, %v147
  %v174 = vpack.c.b16 %v150, %v149
  %v175 = vpack.c.b16 %v152, %v151
  %v176 = vpack.c.b16 %v154, %v153
  %v177 = vpack.c.b16 %v156, %v155
  %v178 = vpack.c.b16 %v158, %v157
  %v179 = vpack.c.b16 %v160, %v159
  %v180 = vpack.c.b16 %v162, %v161
  %v181 = vpack.c.b16 %v164, %v163
  %v182 = vpack.c.b16 %v166, %v165
  %v209 = vunpack.c.l.b16 %v77
  %v210 = vunpack.c.h.b16 %v77
  %v211 = vunpack.c.l.b16 %v78
  %v212 = vunpack.c.l.b16 %v79
  %v213 = vunpack.c.h.b16 %v79
  %v214 = vunpack.c.l.b16 %v80
  %v215 = vunpack.c.l.b16 %v81
  %v216 = vunpack.c.h.b16 %v81
  %v217 = vunpack.c.l.b16 %v82
  %v218 = vunpack.c.l.b16 %v83
  %v219 = vunpack.c.h.b16 %v83
  %v220 = vunpack.c.l.b16 %v84
  %v221 = vunpack.c.l.b16 %v85
  %v222 = vunpack.c.h.b16 %v85
  %v223 = vunpack.c.l.b16 %v86
  %v224 = vunpack.c.l.b16 %v87
  %v225 = vunpack.c.h.b16 %v87
  %v226 = vunpack.c.l.b16 %v88
  %v227 = vunpack.c.l.b16 %v89
  %v228 = vunpack.c.h.b16 %v89
  %v229 = vunpack.c.l.b16 %v90
  %v230 = vunpack.c.l.b16 %v91
  %v231 = vunpack.c.h.b16 %v91
  %v232 = vunpack.c.l.b16 %v92
  %v233 = vunpack.c.l.b16 %v93
  %v234 = vunpack.c.h.b16 %v93
  %v235 = vunpack.c.l.b16 %v94
  %v236 = vunpack.c.l.b16 %v95
  %v237 = vunpack.c.h.b16 %v95
  %v238 = vunpack.c.l.b16 %v96
  %v239 = vunpack.c.l.b16 %v97
  %v240 = vunpack.c.h.b16 %v97
  %v241 = vunpack.c.l.b16 %v98
  %v242 = vunpack.c.l.b16 %v99
  %v243 = vunpack.c.h.b16 %v99
  %v244 = vunpack.c.l.b16 %v100
  %v245 = vunpack.c.l.b16 %v101
  %v246 = vunpack.c.h.b16 %v101
  %v247 = vunpack.c.l.b16 %v102
  %v248 = vpack.c.b16 %v212, %v209
  %v249 = vpack.c.b16 %v213, %v210
  %v250 = vpack.c.b16 %v214, %v211
  %v251 = vpack.c.b16 %v218, %v215
  %v252 = vpack.c.b16 %v219, %v216
  %v253 = vpack.c.b16 %v220, %v217
  %v254 = vpack.c.b16 %v224, %v221
  %v255 = vpack.c.b16 %v225, %v222
  %v256 = vpack.c.b16 %v226, %v223
  %v257 = vpack.c.b16 %v230, %v227
  %v258 = vpack.c.b16 %v231, %v228
  %v259 = vpack.c.b16 %v232, %v229
  %v260 = vpack.c.b16 %v236, %v233
  %v261 = vpack.c.b16 %v237, %v234
  %v262 = vpack.c.b16 %v238, %v235
  %v263 = vpack.c.b16 %v242, %v239
  %v264 = vpack.c.b16 %v243, %v240
  %v265 = vpack.c.b16 %v244, %v241
  %v266 = vpack.c.b16 %v245, %v245
  %v267 = vpack.c.b16 %v246, %v246
  %v268 = vpack.c.b16 %v247, %v247
  %vm287 = vcmask 850944
  %v289 = vsel %vm287, %v167, 0
  %v292 = vsel %vm287, %v168, 0
  %v295 = vsel %vm287, %v169, 0
  %v298 = vsel %vm287, %v170, 0
  %v301 = vsel %vm287, %v171, 0
  %v304 = vsel %vm287, %v172, 0
  %v307 = vsel %vm287, %v173, 0
  %v310 = vsel %vm287, %v174, 0
  %v313 = vsel %vm287, %v175, 0
  %v316 = vsel %vm287, %v176, 0
  %v319 = vsel %vm287, %v177, 0
  %v322 = vsel %vm287, %v178, 0
  %v325 = vsel %vm287, %v179, 0
  %v328 = vsel %vm287, %v180, 0
  %v331 = vsel %vm287, %v181, 0
  %v334 = vsel %vm287, %v182, 0
  %vm336 = vcmask 1043456
  %v338 = vsel %vm336, %v266, 0
  %v341 = vsel %vm336, %v267, 0
  %v344 = vsel %vm336, %v268, 0
  %346 = vmatprep.subr.bf16.mxu0 %v249
  %347 = vmatpush1.bf16.msra.mxu0 %v248
  %348 = vmatprep.subr.bf16.mxu0 %v252
  %349 = vmatpush1.bf16.msra.mxu0 %v251
  %350 = vmatprep.subr.bf16.mxu0 %v255
  %351 = vmatpush1.bf16.msra.mxu0 %v254
  %352 = vmatprep.subr.bf16.mxu0 %v258
  %353 = vmatpush1.bf16.msra.mxu0 %v257
  %354 = vmatprep.subr.bf16.mxu0 %v261
  %355 = vmatpush1.bf16.msra.mxu0 %v260
  %356 = vmatprep.subr.bf16.mxu0 %v264
  %357 = vmatpush1.bf16.msra.mxu0 %v263
  %358 = vmatprep.subr.bf16.mxu0 %v341
  %359 = vmatpush1.bf16.msra.mxu0 %v338
  %360 = vmatprep.subr.bf16.mxu0 0
  %361 = vmatpush1.bf16.msra.mxu0 0
  %362 = vmatprep.subr.bf16.mxu0 0
  %363 = vmatpush1.bf16.msra.mxu0 0
  %364 = vmatprep.subr.bf16.mxu0 0
  %365 = vmatpush1.bf16.msra.mxu0 0
  %366 = vmatprep.subr.bf16.mxu0 0
  %367 = vmatpush1.bf16.msra.mxu0 0
  %368 = vmatprep.subr.bf16.mxu0 0
  %369 = vmatpush1.bf16.msra.mxu0 0
  %370 = vmatprep.subr.bf16.mxu0 0
  %371 = vmatpush1.bf16.msra.mxu0 0
  %372 = vmatprep.subr.bf16.mxu0 0
  %373 = vmatpush1.bf16.msra.mxu0 0
  %374 = vmatprep.subr.bf16.mxu0 0
  %375 = vmatpush1.bf16.msra.mxu0 0
  %376 = vmatprep.subr.bf16.mxu0 0
  %377 = vmatpush1.bf16.msra.mxu0 0
  %378 = vmatprep.mubr.bf16.mxu0 0
  %379 = vmatmul.mubr.bf16.gmra.mrb[0].mxu0 %v289
  %v380 = vpop.f32.mrb[0].mxu0
  %v381 = vadd.f32 0.0, %v380
  %v382 = vpop.f32.mrb[0].mxu0
  %v383 = vadd.f32 0.0, %v382
  %v384 = vpop.f32.mrb[0].mxu0
  %v385 = vadd.f32 0.0, %v384
  %v386 = vpop.f32.mrb[0].mxu0
  %v387 = vadd.f32 0.0, %v386
  %388 = vmatprep.mubr.bf16.mxu0 0
  %389 = vmatmul.mubr.bf16.gmra.mrb[0].mxu0 %v292
  %v390 = vpop.f32.mrb[0].mxu0
  %v391 = vadd.f32 0.0, %v390
  %v392 = vpop.f32.mrb[0].mxu0
  %v393 = vadd.f32 0.0, %v392
  %v394 = vpop.f32.mrb[0].mxu0
  %v395 = vadd.f32 0.0, %v394
  %v396 = vpop.f32.mrb[0].mxu0
  %v397 = vadd.f32 0.0, %v396
  %398 = vmatprep.mubr.bf16.mxu0 0
  %399 = vmatmul.mubr.bf16.gmra.mrb[0].mxu0 %v295
  %v400 = vpop.f32.mrb[0].mxu0
  %v401 = vadd.f32 0.0, %v400
  %v402 = vpop.f32.mrb[0].mxu0
  %v403 = vadd.f32 0.0, %v402
  %v404 = vpop.f32.mrb[0].mxu0
  %v405 = vadd.f32 0.0, %v404
  %v406 = vpop.f32.mrb[0].mxu0
  %v407 = vadd.f32 0.0, %v406
  %408 = vmatprep.mubr.bf16.mxu0 0
  %409 = vmatmul.mubr.bf16.gmra.mrb[0].mxu0 %v298
  %v410 = vpop.f32.mrb[0].mxu0
  %v411 = vadd.f32 0.0, %v410
  %v412 = vpop.f32.mrb[0].mxu0
  %v413 = vadd.f32 0.0, %v412
  %v414 = vpop.f32.mrb[0].mxu0
  %v415 = vadd.f32 0.0, %v414
  %v416 = vpop.f32.mrb[0].mxu0
  %v417 = vadd.f32 0.0, %v416
  %418 = vmatprep.mubr.bf16.mxu0 0
  %419 = vmatmul.mubr.bf16.gmra.mrb[0].mxu0 %v301
  %v420 = vpop.f32.mrb[0].mxu0
  %v421 = vadd.f32 0.0, %v420
  %v422 = vpop.f32.mrb[0].mxu0
  %v423 = vadd.f32 0.0, %v422
  %v424 = vpop.f32.mrb[0].mxu0
  %v425 = vadd.f32 0.0, %v424
  %v426 = vpop.f32.mrb[0].mxu0
  %v427 = vadd.f32 0.0, %v426
  %428 = vmatprep.mubr.bf16.mxu0 0
  %429 = vmatmul.mubr.bf16.gmra.mrb[0].mxu0 %v304
  %v430 = vpop.f32.mrb[0].mxu0
  %v431 = vadd.f32 0.0, %v430
  %v432 = vpop.f32.mrb[0].mxu0
  %v433 = vadd.f32 0.0, %v432
  %v434 = vpop.f32.mrb[0].mxu0
  %v435 = vadd.f32 0.0, %v434
  %v436 = vpop.f32.mrb[0].mxu0
  %v437 = vadd.f32 0.0, %v436
  %438 = vmatprep.mubr.bf16.mxu0 0
  %439 = vmatmul.mubr.bf16.gmra.mrb[0].mxu0 %v307
  %v440 = vpop.f32.mrb[0].mxu0
  %v441 = vadd.f32 0.0, %v440
  %v442 = vpop.f32.mrb[0].mxu0
  %v443 = vadd.f32 0.0, %v442
  %v444 = vpop.f32.mrb[0].mxu0
  %v445 = vadd.f32 0.0, %v444
  %v446 = vpop.f32.mrb[0].mxu0
  %v447 = vadd.f32 0.0, %v446
  %448 = vmatprep.mubr.bf16.mxu0 0
  %449 = vmatmul.mubr.bf16.gmra.mrb[0].mxu0 %v310
  %v450 = vpop.f32.mrb[0].mxu0
  %v451 = vadd.f32 0.0, %v450
  %v452 = vpop.f32.mrb[0].mxu0
  %v453 = vadd.f32 0.0, %v452
  %v454 = vpop.f32.mrb[0].mxu0
  %v455 = vadd.f32 0.0, %v454
  %v456 = vpop.f32.mrb[0].mxu0
  %v457 = vadd.f32 0.0, %v456
  %458 = vmatprep.mubr.bf16.mxu0 0
  %459 = vmatmul.mubr.bf16.gmra.mrb[0].mxu0 %v313
  %v460 = vpop.f32.mrb[0].mxu0
  %v461 = vadd.f32 0.0, %v460
  %v462 = vpop.f32.mrb[0].mxu0
  %v463 = vadd.f32 0.0, %v462
  %v464 = vpop.f32.mrb[0].mxu0
  %v465 = vadd.f32 0.0, %v464
  %v466 = vpop.f32.mrb[0].mxu0
  %v467 = vadd.f32 0.0, %v466
  %468 = vmatprep.mubr.bf16.mxu0 0
  %469 = vmatmul.mubr.bf16.gmra.mrb[0].mxu0 %v316
  %v470 = vpop.f32.mrb[0].mxu0
  %v471 = vadd.f32 0.0, %v470
  %v472 = vpop.f32.mrb[0].mxu0
  %v473 = vadd.f32 0.0, %v472
  %v474 = vpop.f32.mrb[0].mxu0
  %v475 = vadd.f32 0.0, %v474
  %v476 = vpop.f32.mrb[0].mxu0
  %v477 = vadd.f32 0.0, %v476
  %478 = vmatprep.mubr.bf16.mxu0 0
  %479 = vmatmul.mubr.bf16.gmra.mrb[0].mxu0 %v319
  %v480 = vpop.f32.mrb[0].mxu0
  %v481 = vadd.f32 0.0, %v480
  %v482 = vpop.f32.mrb[0].mxu0
  %v483 = vadd.f32 0.0, %v482
  %v484 = vpop.f32.mrb[0].mxu0
  %v485 = vadd.f32 0.0, %v484
  %v486 = vpop.f32.mrb[0].mxu0
  %v487 = vadd.f32 0.0, %v486
  %488 = vmatprep.mubr.bf16.mxu0 0
  %489 = vmatmul.mubr.bf16.gmra.mrb[0].mxu0 %v322
  %v490 = vpop.f32.mrb[0].mxu0
  %v491 = vadd.f32 0.0, %v490
  %v492 = vpop.f32.mrb[0].mxu0
  %v493 = vadd.f32 0.0, %v492
  %v494 = vpop.f32.mrb[0].mxu0
  %v495 = vadd.f32 0.0, %v494
  %v496 = vpop.f32.mrb[0].mxu0
  %v497 = vadd.f32 0.0, %v496
  %498 = vmatprep.mubr.bf16.mxu0 0
  %499 = vmatmul.mubr.bf16.gmra.mrb[0].mxu0 %v325
  %v500 = vpop.f32.mrb[0].mxu0
  %v501 = vadd.f32 0.0, %v500
  %v502 = vpop.f32.mrb[0].mxu0
  %v503 = vadd.f32 0.0, %v502
  %v504 = vpop.f32.mrb[0].mxu0
  %v505 = vadd.f32 0.0, %v504
  %v506 = vpop.f32.mrb[0].mxu0
  %v507 = vadd.f32 0.0, %v506
  %508 = vmatprep.mubr.bf16.mxu0 0
  %509 = vmatmul.mubr.bf16.gmra.mrb[0].mxu0 %v328
  %v510 = vpop.f32.mrb[0].mxu0
  %v511 = vadd.f32 0.0, %v510
  %v512 = vpop.f32.mrb[0].mxu0
  %v513 = vadd.f32 0.0, %v512
  %v514 = vpop.f32.mrb[0].mxu0
  %v515 = vadd.f32 0.0, %v514
  %v516 = vpop.f32.mrb[0].mxu0
  %v517 = vadd.f32 0.0, %v516
  %518 = vmatprep.mubr.bf16.mxu0 0
  %519 = vmatmul.mubr.bf16.gmra.mrb[0].mxu0 %v331
  %v520 = vpop.f32.mrb[0].mxu0
  %v521 = vadd.f32 0.0, %v520
  %v522 = vpop.f32.mrb[0].mxu0
  %v523 = vadd.f32 0.0, %v522
  %v524 = vpop.f32.mrb[0].mxu0
  %v525 = vadd.f32 0.0, %v524
  %v526 = vpop.f32.mrb[0].mxu0
  %v527 = vadd.f32 0.0, %v526
  %528 = vmatprep.mubr.bf16.mxu0 0
  %529 = vmatmul.mubr.bf16.gmra.mrb[0].mxu0 %v334
  %v530 = vpop.f32.mrb[0].mxu0
  %v531 = vadd.f32 0.0, %v530
  %v532 = vpop.f32.mrb[0].mxu0
  %v533 = vadd.f32 0.0, %v532
  %v534 = vpop.f32.mrb[0].mxu0
  %v535 = vadd.f32 0.0, %v534
  %v536 = vpop.f32.mrb[0].mxu0
  %v537 = vadd.f32 0.0, %v536
  %538 = vdwg.mxu0
  %539 = vmatprep.subr.bf16.mxu0 0
  %540 = vmatpush1.bf16.msra.mxu0 %v250
  %541 = vmatprep.subr.bf16.mxu0 0
  %542 = vmatpush1.bf16.msra.mxu0 %v253
  %543 = vmatprep.subr.bf16.mxu0 0
  %544 = vmatpush1.bf16.msra.mxu0 %v256
  %545 = vmatprep.subr.bf16.mxu0 0
  %546 = vmatpush1.bf16.msra.mxu0 %v259
  %547 = vmatprep.subr.bf16.mxu0 0
  %548 = vmatpush1.bf16.msra.mxu0 %v262
  %549 = vmatprep.subr.bf16.mxu0 0
  %550 = vmatpush1.bf16.msra.mxu0 %v265
  %551 = vmatprep.subr.bf16.mxu0 0
  %552 = vmatpush1.bf16.msra.mxu0 %v344
  %553 = vmatprep.subr.bf16.mxu0 0
  %554 = vmatpush1.bf16.msra.mxu0 0
  %555 = vmatprep.subr.bf16.mxu0 0
  %556 = vmatpush1.bf16.msra.mxu0 0
  %557 = vmatprep.subr.bf16.mxu0 0
  %558 = vmatpush1.bf16.msra.mxu0 0
  %559 = vmatprep.subr.bf16.mxu0 0
  %560 = vmatpush1.bf16.msra.mxu0 0
  %561 = vmatprep.subr.bf16.mxu0 0
  %562 = vmatpush1.bf16.msra.mxu0 0
  %563 = vmatprep.subr.bf16.mxu0 0
  %564 = vmatpush1.bf16.msra.mxu0 0
  %565 = vmatprep.subr.bf16.mxu0 0
  %566 = vmatpush1.bf16.msra.mxu0 0
  %567 = vmatprep.subr.bf16.mxu0 0
  %568 = vmatpush1.bf16.msra.mxu0 0
  %569 = vmatprep.subr.bf16.mxu0 0
  %570 = vmatpush1.bf16.msra.mxu0 0
  %571 = vmatprep.mubr.bf16.mxu0 0
  %572 = vmatmul.mubr.bf16.gmra.mrb[0].mxu0 %v289
  %v573 = vpop.f32.mrb[0].mxu0
  %v574 = vadd.f32 0.0, %v573
  %v575 = vpop.f32.mrb[0].mxu0
  %v576 = vpop.f32.mrb[0].mxu0
  %v577 = vadd.f32 0.0, %v576
  %v578 = vpop.f32.mrb[0].mxu0
  %579 = vmatprep.mubr.bf16.mxu0 0
  %580 = vmatmul.mubr.bf16.gmra.mrb[0].mxu0 %v292
  %v581 = vpop.f32.mrb[0].mxu0
  %v582 = vadd.f32 0.0, %v581
  %v583 = vpop.f32.mrb[0].mxu0
  %v584 = vpop.f32.mrb[0].mxu0
  %v585 = vadd.f32 0.0, %v584
  %v586 = vpop.f32.mrb[0].mxu0
  %587 = vmatprep.mubr.bf16.mxu0 0
  %588 = vmatmul.mubr.bf16.gmra.mrb[0].mxu0 %v295
  %v589 = vpop.f32.mrb[0].mxu0
  %v590 = vadd.f32 0.0, %v589
  %v591 = vpop.f32.mrb[0].mxu0
  %v592 = vpop.f32.mrb[0].mxu0
  %v593 = vadd.f32 0.0, %v592
  %v594 = vpop.f32.mrb[0].mxu0
  %595 = vmatprep.mubr.bf16.mxu0 0
  %596 = vmatmul.mubr.bf16.gmra.mrb[0].mxu0 %v298
  %v597 = vpop.f32.mrb[0].mxu0
  %v598 = vadd.f32 0.0, %v597
  %v599 = vpop.f32.mrb[0].mxu0
  %v600 = vpop.f32.mrb[0].mxu0
  %v601 = vadd.f32 0.0, %v600
  %v602 = vpop.f32.mrb[0].mxu0
  %603 = vmatprep.mubr.bf16.mxu0 0
  %604 = vmatmul.mubr.bf16.gmra.mrb[0].mxu0 %v301
  %v605 = vpop.f32.mrb[0].mxu0
  %v606 = vadd.f32 0.0, %v605
  %v607 = vpop.f32.mrb[0].mxu0
  %v608 = vpop.f32.mrb[0].mxu0
  %v609 = vadd.f32 0.0, %v608
  %v610 = vpop.f32.mrb[0].mxu0
  %611 = vmatprep.mubr.bf16.mxu0 0
  %612 = vmatmul.mubr.bf16.gmra.mrb[0].mxu0 %v304
  %v613 = vpop.f32.mrb[0].mxu0
  %v614 = vadd.f32 0.0, %v613
  %v615 = vpop.f32.mrb[0].mxu0
  %v616 = vpop.f32.mrb[0].mxu0
  %v617 = vadd.f32 0.0, %v616
  %v618 = vpop.f32.mrb[0].mxu0
  %619 = vmatprep.mubr.bf16.mxu0 0
  %620 = vmatmul.mubr.bf16.gmra.mrb[0].mxu0 %v307
  %v621 = vpop.f32.mrb[0].mxu0
  %v622 = vadd.f32 0.0, %v621
  %v623 = vpop.f32.mrb[0].mxu0
  %v624 = vpop.f32.mrb[0].mxu0
  %v625 = vadd.f32 0.0, %v624
  %v626 = vpop.f32.mrb[0].mxu0
  %627 = vmatprep.mubr.bf16.mxu0 0
  %628 = vmatmul.mubr.bf16.gmra.mrb[0].mxu0 %v310
  %v629 = vpop.f32.mrb[0].mxu0
  %v630 = vadd.f32 0.0, %v629
  %v631 = vpop.f32.mrb[0].mxu0
  %v632 = vpop.f32.mrb[0].mxu0
  %v633 = vadd.f32 0.0, %v632
  %v634 = vpop.f32.mrb[0].mxu0
  %635 = vmatprep.mubr.bf16.mxu0 0
  %636 = vmatmul.mubr.bf16.gmra.mrb[0].mxu0 %v313
  %v637 = vpop.f32.mrb[0].mxu0
  %v638 = vadd.f32 0.0, %v637
  %v639 = vpop.f32.mrb[0].mxu0
  %v640 = vpop.f32.mrb[0].mxu0
  %v641 = vadd.f32 0.0, %v640
  %v642 = vpop.f32.mrb[0].mxu0
  %643 = vmatprep.mubr.bf16.mxu0 0
  %644 = vmatmul.mubr.bf16.gmra.mrb[0].mxu0 %v316
  %v645 = vpop.f32.mrb[0].mxu0
  %v646 = vadd.f32 0.0, %v645
  %v647 = vpop.f32.mrb[0].mxu0
  %v648 = vpop.f32.mrb[0].mxu0
  %v649 = vadd.f32 0.0, %v648
  %v650 = vpop.f32.mrb[0].mxu0
  %651 = vmatprep.mubr.bf16.mxu0 0
  %652 = vmatmul.mubr.bf16.gmra.mrb[0].mxu0 %v319
  %v653 = vpop.f32.mrb[0].mxu0
  %v654 = vadd.f32 0.0, %v653
  %v655 = vpop.f32.mrb[0].mxu0
  %v656 = vpop.f32.mrb[0].mxu0
  %v657 = vadd.f32 0.0, %v656
  %v658 = vpop.f32.mrb[0].mxu0
  %659 = vmatprep.mubr.bf16.mxu0 0
  %660 = vmatmul.mubr.bf16.gmra.mrb[0].mxu0 %v322
  %v661 = vpop.f32.mrb[0].mxu0
  %v662 = vadd.f32 0.0, %v661
  %v663 = vpop.f32.mrb[0].mxu0
  %v664 = vpop.f32.mrb[0].mxu0
  %v665 = vadd.f32 0.0, %v664
  %v666 = vpop.f32.mrb[0].mxu0
  %667 = vmatprep.mubr.bf16.mxu0 0
  %668 = vmatmul.mubr.bf16.gmra.mrb[0].mxu0 %v325
  %v669 = vpop.f32.mrb[0].mxu0
  %v670 = vadd.f32 0.0, %v669
  %v671 = vpop.f32.mrb[0].mxu0
  %v672 = vpop.f32.mrb[0].mxu0
  %v673 = vadd.f32 0.0, %v672
  %v674 = vpop.f32.mrb[0].mxu0
  %675 = vmatprep.mubr.bf16.mxu0 0
  %676 = vmatmul.mubr.bf16.gmra.mrb[0].mxu0 %v328
  %v677 = vpop.f32.mrb[0].mxu0
  %v678 = vadd.f32 0.0, %v677
  %v679 = vpop.f32.mrb[0].mxu0
  %v680 = vpop.f32.mrb[0].mxu0
  %v681 = vadd.f32 0.0, %v680
  %v682 = vpop.f32.mrb[0].mxu0
  %683 = vmatprep.mubr.bf16.mxu0 0
  %684 = vmatmul.mubr.bf16.gmra.mrb[0].mxu0 %v331
  %v685 = vpop.f32.mrb[0].mxu0
  %v686 = vadd.f32 0.0, %v685
  %v687 = vpop.f32.mrb[0].mxu0
  %v688 = vpop.f32.mrb[0].mxu0
  %v689 = vadd.f32 0.0, %v688
  %v690 = vpop.f32.mrb[0].mxu0
  %691 = vmatprep.mubr.bf16.mxu0 0
  %692 = vmatmul.mubr.bf16.gmra.mrb[0].mxu0 %v334
  %v693 = vpop.f32.mrb[0].mxu0
  %v694 = vadd.f32 0.0, %v693
  %v695 = vpop.f32.mrb[0].mxu0
  %v696 = vpop.f32.mrb[0].mxu0
  %v697 = vadd.f32 0.0, %v696
  %v698 = vpop.f32.mrb[0].mxu0
  %699 = vdwg.mxu0
  %v700 = vmax.f32 %v381, 0.0
  %v701 = vmax.f32 %v383, 0.0
  %v702 = vmax.f32 %v574, 0.0
  %v703 = vmax.f32 %v385, 0.0
  %v704 = vmax.f32 %v387, 0.0
  %v705 = vmax.f32 %v577, 0.0
  %v706 = vmax.f32 %v391, 0.0
  %v707 = vmax.f32 %v393, 0.0
  %v708 = vmax.f32 %v582, 0.0
  %v709 = vmax.f32 %v395, 0.0
  %v710 = vmax.f32 %v397, 0.0
  %v711 = vmax.f32 %v585, 0.0
  %v712 = vmax.f32 %v401, 0.0
  %v713 = vmax.f32 %v403, 0.0
  %v714 = vmax.f32 %v590, 0.0
  %v715 = vmax.f32 %v405, 0.0
  %v716 = vmax.f32 %v407, 0.0
  %v717 = vmax.f32 %v593, 0.0
  %v718 = vmax.f32 %v411, 0.0
  %v719 = vmax.f32 %v413, 0.0
  %v720 = vmax.f32 %v598, 0.0
  %v721 = vmax.f32 %v415, 0.0
  %v722 = vmax.f32 %v417, 0.0
  %v723 = vmax.f32 %v601, 0.0
  %v724 = vmax.f32 %v421, 0.0
  %v725 = vmax.f32 %v423, 0.0
  %v726 = vmax.f32 %v606, 0.0
  %v727 = vmax.f32 %v425, 0.0
  %v728 = vmax.f32 %v427, 0.0
  %v729 = vmax.f32 %v609, 0.0
  %v730 = vmax.f32 %v431, 0.0
  %v731 = vmax.f32 %v433, 0.0
  %v732 = vmax.f32 %v614, 0.0
  %v733 = vmax.f32 %v435, 0.0
  %v734 = vmax.f32 %v437, 0.0
  %v735 = vmax.f32 %v617, 0.0
  %v736 = vmax.f32 %v441, 0.0
  %v737 = vmax.f32 %v443, 0.0
  %v738 = vmax.f32 %v622, 0.0
  %v739 = vmax.f32 %v445, 0.0
  %v740 = vmax.f32 %v447, 0.0
  %v741 = vmax.f32 %v625, 0.0
  %v742 = vmax.f32 %v451, 0.0
  %v743 = vmax.f32 %v453, 0.0
  %v744 = vmax.f32 %v630, 0.0
  %v745 = vmax.f32 %v455, 0.0
  %v746 = vmax.f32 %v457, 0.0
  %v747 = vmax.f32 %v633, 0.0
  %v748 = vmax.f32 %v461, 0.0
  %v749 = vmax.f32 %v463, 0.0
  %v750 = vmax.f32 %v638, 0.0
  %v751 = vmax.f32 %v465, 0.0
  %v752 = vmax.f32 %v467, 0.0
  %v753 = vmax.f32 %v641, 0.0
  %v754 = vmax.f32 %v471, 0.0
  %v755 = vmax.f32 %v473, 0.0
  %v756 = vmax.f32 %v646, 0.0
  %v757 = vmax.f32 %v475, 0.0
  %v758 = vmax.f32 %v477, 0.0
  %v759 = vmax.f32 %v649, 0.0
  %v760 = vmax.f32 %v481, 0.0
  %v761 = vmax.f32 %v483, 0.0
  %v762 = vmax.f32 %v654, 0.0
  %v763 = vmax.f32 %v485, 0.0
  %v764 = vmax.f32 %v487, 0.0
  %v765 = vmax.f32 %v657, 0.0
  %v766 = vmax.f32 %v491, 0.0
  %v767 = vmax.f32 %v493, 0.0
  %v768 = vmax.f32 %v662, 0.0
  %v769 = vmax.f32 %v495, 0.0
  %v770 = vmax.f32 %v497, 0.0
  %v771 = vmax.f32 %v665, 0.0
  %v772 = vmax.f32 %v501, 0.0
  %v773 = vmax.f32 %v503, 0.0
  %v774 = vmax.f32 %v670, 0.0
  %v775 = vmax.f32 %v505, 0.0
  %v776 = vmax.f32 %v507, 0.0
  %v777 = vmax.f32 %v673, 0.0
  %v778 = vmax.f32 %v511, 0.0
  %v779 = vmax.f32 %v513, 0.0
  %v780 = vmax.f32 %v678, 0.0
  %v781 = vmax.f32 %v515, 0.0
  %v782 = vmax.f32 %v517, 0.0
  %v783 = vmax.f32 %v681, 0.0
  %v784 = vmax.f32 %v521, 0.0
  %v785 = vmax.f32 %v523, 0.0
  %v786 = vmax.f32 %v686, 0.0
  %v787 = vmax.f32 %v525, 0.0
  %v788 = vmax.f32 %v527, 0.0
  %v789 = vmax.f32 %v689, 0.0
  %v790 = vmax.f32 %v531, 0.0
  %v791 = vmax.f32 %v533, 0.0
  %v792 = vmax.f32 %v694, 0.0
  %v793 = vmax.f32 %v535, 0.0
  %v794 = vmax.f32 %v537, 0.0
  %v795 = vmax.f32 %v697, 0.0
  %v796 = vpack.c.bf16 %v703, %v700
  %v797 = vpack.c.bf16 %v704, %v701
  %v798 = vpack.c.bf16 %v705, %v702
  %v799 = vpack.c.bf16 %v709, %v706
  %v800 = vpack.c.bf16 %v710, %v707
  %v801 = vpack.c.bf16 %v711, %v708
  %v802 = vpack.c.bf16 %v715, %v712
  %v803 = vpack.c.bf16 %v716, %v713
  %v804 = vpack.c.bf16 %v717, %v714
  %v805 = vpack.c.bf16 %v721, %v718
  %v806 = vpack.c.bf16 %v722, %v719
  %v807 = vpack.c.bf16 %v723, %v720
  %v808 = vpack.c.bf16 %v727, %v724
  %v809 = vpack.c.bf16 %v728, %v725
  %v810 = vpack.c.bf16 %v729, %v726
  %v811 = vpack.c.bf16 %v733, %v730
  %v812 = vpack.c.bf16 %v734, %v731
  %v813 = vpack.c.bf16 %v735, %v732
  %v814 = vpack.c.bf16 %v739, %v736
  %v815 = vpack.c.bf16 %v740, %v737
  %v816 = vpack.c.bf16 %v741, %v738
  %v817 = vpack.c.bf16 %v745, %v742
  %v818 = vpack.c.bf16 %v746, %v743
  %v819 = vpack.c.bf16 %v747, %v744
  %v820 = vpack.c.bf16 %v751, %v748
  %v821 = vpack.c.bf16 %v752, %v749
  %v822 = vpack.c.bf16 %v753, %v750
  %v823 = vpack.c.bf16 %v757, %v754
  %v824 = vpack.c.bf16 %v758, %v755
  %v825 = vpack.c.bf16 %v759, %v756
  %v826 = vpack.c.bf16 %v763, %v760
  %v827 = vpack.c.bf16 %v764, %v761
  %v828 = vpack.c.bf16 %v765, %v762
  %v829 = vpack.c.bf16 %v769, %v766
  %v830 = vpack.c.bf16 %v770, %v767
  %v831 = vpack.c.bf16 %v771, %v768
  %v832 = vpack.c.bf16 %v775, %v772
  %v833 = vpack.c.bf16 %v776, %v773
  %v834 = vpack.c.bf16 %v777, %v774
  %v835 = vpack.c.bf16 %v781, %v778
  %v836 = vpack.c.bf16 %v782, %v779
  %v837 = vpack.c.bf16 %v783, %v780
  %v838 = vpack.c.bf16 %v787, %v784
  %v839 = vpack.c.bf16 %v788, %v785
  %v840 = vpack.c.bf16 %v789, %v786
  %v841 = vpack.c.bf16 %v793, %v790
  %v842 = vpack.c.bf16 %v794, %v791
  %v843 = vpack.c.bf16 %v795, %v792
  %v844 = vld [vmem:[%s2] sm:$0xff]
  %v845 = vld [vmem:[%s2 + $0x8] sm:$0xff]
  %v846 = vld [vmem:[%s2 + $0x10] sm:$0xff]
  %v847 = vld [vmem:[%s2 + $0x18] sm:$0xff]
  %v848 = vld [vmem:[%s2 + $0x20] sm:$0xff]
  %v849 = vld [vmem:[%s2 + $0x28] sm:$0xff]
  %v850 = vld [vmem:[%s2 + $0x30] sm:$0xff]
  %v851 = vld [vmem:[%s2 + $0x38] sm:$0xff]
  %v852 = vld [vmem:[%s2 + $0x40] sm:$0xff]
  %v853 = vld [vmem:[%s2 + $0x48] sm:$0xff]
  %v854 = vld [vmem:[%s2 + $0x50] sm:$0xff]
  %v855 = vld [vmem:[%s2 + $0x58] sm:$0xff]
  %v856 = vld [vmem:[%s2 + $0x60] sm:$0xff]
  %v857 = vld [vmem:[%s2 + $0x68] sm:$0xff]
  %v858 = vld [vmem:[%s2 + $0x70] sm:$0xff]
  %v859 = vld [vmem:[%s2 + $0x78] sm:$0xff]
  %v860 = vld [vmem:[%s2 + $0x80] sm:$0xff]
  %v861 = vld [vmem:[%s2 + $0x88] sm:$0xff]
  %v862 = vld [vmem:[%s2 + $0x90] sm:$0xff]
  %v863 = vld [vmem:[%s2 + $0x98] sm:$0xff]
  %v864 = vld [vmem:[%s2 + $0xa0] sm:$0xff]
  %v865 = vld [vmem:[%s2 + $0xa8] sm:$0xff]
  %v866 = vld [vmem:[%s2 + $0xb0] sm:$0xff]
  %v867 = vld [vmem:[%s2 + $0xb8] sm:$0xff]
  %v868 = vld [vmem:[%s2 + $0xc0] sm:$0xff]
  %v869 = vld [vmem:[%s2 + $0xc8] sm:$0xff]
  %v870 = vld [vmem:[%s2 + $0xd0] sm:$0xff]
  %v871 = vld [vmem:[%s2 + $0xd8] sm:$0xff]
  %v872 = vld [vmem:[%s2 + $0xe0] sm:$0xff]
  %v873 = vld [vmem:[%s2 + $0xe8] sm:$0xff]
  %v874 = vld [vmem:[%s2 + $0xf0] sm:$0xff]
  %v875 = vld [vmem:[%s2 + $0xf8] sm:$0xff]
  %v876 = vld [vmem:[%s2 + $0x100] sm:$0xff]
  %v877 = vld [vmem:[%s2 + $0x108] sm:$0xff]
  %v878 = vld [vmem:[%s2 + $0x110] sm:$0xff]
  %v879 = vld [vmem:[%s2 + $0x118] sm:$0xff]
  %v880 = vld [vmem:[%s2 + $0x120] sm:$0xff]
  %v881 = vld [vmem:[%s2 + $0x128] sm:$0xff]
  %v882 = vld [vmem:[%s2 + $0x130] sm:$0xff]
  %v883 = vld [vmem:[%s2 + $0x138] sm:$0xff]
  %v884 = vld [vmem:[%s2 + $0x140] sm:$0xff]
  %v885 = vld [vmem:[%s2 + $0x148] sm:$0xff]
  %v886 = vld [vmem:[%s2 + $0x150] sm:$0xff]
  %v887 = vld [vmem:[%s2 + $0x158] sm:$0xff]
  %v888 = vld [vmem:[%s2 + $0x160] sm:$0xff]
  %v889 = vld [vmem:[%s2 + $0x168] sm:$0xff]
  %v890 = vld [vmem:[%s2 + $0x170] sm:$0xff]
  %v891 = vld [vmem:[%s2 + $0x178] sm:$0xff]
  %v892 = vld [vmem:[%s2 + $0x180] sm:$0xff]
  %v893 = vld [vmem:[%s2 + $0x188] sm:$0xff]
  %v894 = vld [vmem:[%s2 + $0x190] sm:$0xff]
  %v895 = vld [vmem:[%s2 + $0x198] sm:$0xff]
  %v896 = vld [vmem:[%s2 + $0x1a0] sm:$0xff]
  %v897 = vld [vmem:[%s2 + $0x1a8] sm:$0xff]
  %v898 = vld [vmem:[%s2 + $0x1b0] sm:$0xff]
  %v899 = vld [vmem:[%s2 + $0x1b8] sm:$0xff]
  %v900 = vld [vmem:[%s2 + $0x1c0] sm:$0xff]
  %v901 = vld [vmem:[%s2 + $0x1c8] sm:$0xff]
  %v902 = vld [vmem:[%s2 + $0x1d0] sm:$0xff]
  %v903 = vld [vmem:[%s2 + $0x1d8] sm:$0xff]
  %v904 = vld [vmem:[%s2 + $0x1e0] sm:$0xff]
  %v905 = vld [vmem:[%s2 + $0x1e8] sm:$0xff]
  %v906 = vld [vmem:[%s2 + $0x1f0] sm:$0xff]
  %v907 = vld [vmem:[%s2 + $0x1f8] sm:$0xff]
  %v908 = vld [vmem:[%s2 + $0x200] sm:$0xff]
  %v909 = vld [vmem:[%s2 + $0x208] sm:$0xff]
  %v910 = vld [vmem:[%s2 + $0x210] sm:$0xff]
  %v911 = vld [vmem:[%s2 + $0x218] sm:$0xff]
  %v912 = vld [vmem:[%s2 + $0x220] sm:$0xff]
  %v913 = vld [vmem:[%s2 + $0x228] sm:$0xff]
  %v914 = vld [vmem:[%s2 + $0x230] sm:$0xff]
  %v915 = vld [vmem:[%s2 + $0x238] sm:$0xff]
  %v916 = vld [vmem:[%s2 + $0x240] sm:$0xff]
  %v917 = vld [vmem:[%s2 + $0x248] sm:$0xff]
  %v918 = vld [vmem:[%s2 + $0x250] sm:$0xff]
  %v919 = vld [vmem:[%s2 + $0x258] sm:$0xff]
  %v920 = vld [vmem:[%s2 + $0x260] sm:$0xff]
  %v921 = vld [vmem:[%s2 + $0x268] sm:$0xff]
  %v922 = vld [vmem:[%s2 + $0x270] sm:$0xff]
  %v923 = vld [vmem:[%s2 + $0x278] sm:$0xff]
  %v924 = vld [vmem:[%s2 + $0x280] sm:$0x33]
  %v925 = vld [vmem:[%s2 + $0x288] sm:$0x33]
  %v1008 = vunpack.c.l.b16 %v844
  %v1009 = vunpack.c.h.b16 %v844
  %v1010 = vunpack.c.l.b16 %v845
  %v1011 = vunpack.c.h.b16 %v845
  %v1012 = vunpack.c.l.b16 %v846
  %v1013 = vunpack.c.h.b16 %v846
  %v1014 = vunpack.c.l.b16 %v847
  %v1015 = vunpack.c.h.b16 %v847
  %v1016 = vunpack.c.l.b16 %v848
  %v1017 = vunpack.c.h.b16 %v848
  %v1018 = vunpack.c.l.b16 %v849
  %v1019 = vunpack.c.h.b16 %v849
  %v1020 = vunpack.c.l.b16 %v850
  %v1021 = vunpack.c.h.b16 %v850
  %v1022 = vunpack.c.l.b16 %v851
  %v1023 = vunpack.c.h.b16 %v851
  %v1024 = vunpack.c.l.b16 %v852
  %v1025 = vunpack.c.h.b16 %v852
  %v1026 = vunpack.c.l.b16 %v853
  %v1027 = vunpack.c.h.b16 %v853
  %v1028 = vunpack.c.l.b16 %v854
  %v1029 = vunpack.c.h.b16 %v854
  %v1030 = vunpack.c.l.b16 %v855
  %v1031 = vunpack.c.h.b16 %v855
  %v1032 = vunpack.c.l.b16 %v856
  %v1033 = vunpack.c.h.b16 %v856
  %v1034 = vunpack.c.l.b16 %v857
  %v1035 = vunpack.c.h.b16 %v857
  %v1036 = vunpack.c.l.b16 %v858
  %v1037 = vunpack.c.h.b16 %v858
  %v1038 = vunpack.c.l.b16 %v859
  %v1039 = vunpack.c.h.b16 %v859
  %v1040 = vunpack.c.l.b16 %v860
  %v1041 = vunpack.c.h.b16 %v860
  %v1042 = vunpack.c.l.b16 %v861
  %v1043 = vunpack.c.h.b16 %v861
  %v1044 = vunpack.c.l.b16 %v862
  %v1045 = vunpack.c.h.b16 %v862
  %v1046 = vunpack.c.l.b16 %v863
  %v1047 = vunpack.c.h.b16 %v863
  %v1048 = vunpack.c.l.b16 %v864
  %v1049 = vunpack.c.h.b16 %v864
  %v1050 = vunpack.c.l.b16 %v865
  %v1051 = vunpack.c.h.b16 %v865
  %v1052 = vunpack.c.l.b16 %v866
  %v1053 = vunpack.c.h.b16 %v866
  %v1054 = vunpack.c.l.b16 %v867
  %v1055 = vunpack.c.h.b16 %v867
  %v1056 = vunpack.c.l.b16 %v868
  %v1057 = vunpack.c.h.b16 %v868
  %v1058 = vunpack.c.l.b16 %v869
  %v1059 = vunpack.c.h.b16 %v869
  %v1060 = vunpack.c.l.b16 %v870
  %v1061 = vunpack.c.h.b16 %v870
  %v1062 = vunpack.c.l.b16 %v871
  %v1063 = vunpack.c.h.b16 %v871
  %v1064 = vunpack.c.l.b16 %v872
  %v1065 = vunpack.c.h.b16 %v872
  %v1066 = vunpack.c.l.b16 %v873
  %v1067 = vunpack.c.h.b16 %v873
  %v1068 = vunpack.c.l.b16 %v874
  %v1069 = vunpack.c.h.b16 %v874
  %v1070 = vunpack.c.l.b16 %v875
  %v1071 = vunpack.c.h.b16 %v875
  %v1072 = vunpack.c.l.b16 %v876
  %v1073 = vunpack.c.h.b16 %v876
  %v1074 = vunpack.c.l.b16 %v877
  %v1075 = vunpack.c.h.b16 %v877
  %v1076 = vunpack.c.l.b16 %v878
  %v1077 = vunpack.c.h.b16 %v878
  %v1078 = vunpack.c.l.b16 %v879
  %v1079 = vunpack.c.h.b16 %v879
  %v1080 = vunpack.c.l.b16 %v880
  %v1081 = vunpack.c.h.b16 %v880
  %v1082 = vunpack.c.l.b16 %v881
  %v1083 = vunpack.c.h.b16 %v881
  %v1084 = vunpack.c.l.b16 %v882
  %v1085 = vunpack.c.h.b16 %v882
  %v1086 = vunpack.c.l.b16 %v883
  %v1087 = vunpack.c.h.b16 %v883
  %v1088 = vunpack.c.l.b16 %v884
  %v1089 = vunpack.c.h.b16 %v884
  %v1090 = vunpack.c.l.b16 %v885
  %v1091 = vunpack.c.h.b16 %v885
  %v1092 = vunpack.c.l.b16 %v886
  %v1093 = vunpack.c.h.b16 %v886
  %v1094 = vunpack.c.l.b16 %v887
  %v1095 = vunpack.c.h.b16 %v887
  %v1096 = vunpack.c.l.b16 %v888
  %v1097 = vunpack.c.h.b16 %v888
  %v1098 = vunpack.c.l.b16 %v889
  %v1099 = vunpack.c.h.b16 %v889
  %v1100 = vunpack.c.l.b16 %v890
  %v1101 = vunpack.c.h.b16 %v890
  %v1102 = vunpack.c.l.b16 %v891
  %v1103 = vunpack.c.h.b16 %v891
  %v1104 = vunpack.c.l.b16 %v892
  %v1105 = vunpack.c.h.b16 %v892
  %v1106 = vunpack.c.l.b16 %v893
  %v1107 = vunpack.c.h.b16 %v893
  %v1108 = vunpack.c.l.b16 %v894
  %v1109 = vunpack.c.h.b16 %v894
  %v1110 = vunpack.c.l.b16 %v895
  %v1111 = vunpack.c.h.b16 %v895
  %v1112 = vunpack.c.l.b16 %v896
  %v1113 = vunpack.c.h.b16 %v896
  %v1114 = vunpack.c.l.b16 %v897
  %v1115 = vunpack.c.h.b16 %v897
  %v1116 = vunpack.c.l.b16 %v898
  %v1117 = vunpack.c.h.b16 %v898
  %v1118 = vunpack.c.l.b16 %v899
  %v1119 = vunpack.c.h.b16 %v899
  %v1120 = vunpack.c.l.b16 %v900
  %v1121 = vunpack.c.h.b16 %v900
  %v1122 = vunpack.c.l.b16 %v901
  %v1123 = vunpack.c.h.b16 %v901
  %v1124 = vunpack.c.l.b16 %v902
  %v1125 = vunpack.c.h.b16 %v902
  %v1126 = vunpack.c.l.b16 %v903
  %v1127 = vunpack.c.h.b16 %v903
  %v1128 = vunpack.c.l.b16 %v904
  %v1129 = vunpack.c.h.b16 %v904
  %v1130 = vunpack.c.l.b16 %v905
  %v1131 = vunpack.c.h.b16 %v905
  %v1132 = vunpack.c.l.b16 %v906
  %v1133 = vunpack.c.h.b16 %v906
  %v1134 = vunpack.c.l.b16 %v907
  %v1135 = vunpack.c.h.b16 %v907
  %v1136 = vunpack.c.l.b16 %v908
  %v1137 = vunpack.c.h.b16 %v908
  %v1138 = vunpack.c.l.b16 %v909
  %v1139 = vunpack.c.h.b16 %v909
  %v1140 = vunpack.c.l.b16 %v910
  %v1141 = vunpack.c.h.b16 %v910
  %v1142 = vunpack.c.l.b16 %v911
  %v1143 = vunpack.c.h.b16 %v911
  %v1144 = vunpack.c.l.b16 %v912
  %v1145 = vunpack.c.h.b16 %v912
  %v1146 = vunpack.c.l.b16 %v913
  %v1147 = vunpack.c.h.b16 %v913
  %v1148 = vunpack.c.l.b16 %v914
  %v1149 = vunpack.c.h.b16 %v914
  %v1150 = vunpack.c.l.b16 %v915
  %v1151 = vunpack.c.h.b16 %v915
  %v1152 = vunpack.c.l.b16 %v916
  %v1153 = vunpack.c.h.b16 %v916
  %v1154 = vunpack.c.l.b16 %v917
  %v1155 = vunpack.c.h.b16 %v917
  %v1156 = vunpack.c.l.b16 %v918
  %v1157 = vunpack.c.h.b16 %v918
  %v1158 = vunpack.c.l.b16 %v919
  %v1159 = vunpack.c.h.b16 %v919
  %v1160 = vunpack.c.l.b16 %v920
  %v1161 = vunpack.c.h.b16 %v920
  %v1162 = vunpack.c.l.b16 %v921
  %v1163 = vunpack.c.h.b16 %v921
  %v1164 = vunpack.c.l.b16 %v922
  %v1165 = vunpack.c.h.b16 %v922
  %v1166 = vunpack.c.l.b16 %v923
  %v1167 = vunpack.c.h.b16 %v923
  %v1168 = vunpack.c.l.b16 %v924
  %v1169 = vunpack.c.h.b16 %v924
  %v1170 = vunpack.c.l.b16 %v925
  %v1171 = vunpack.c.h.b16 %v925
  %v1172 = vpack.c.b16 %v1012, %v1008
  %v1173 = vpack.c.b16 %v1013, %v1009
  %v1174 = vpack.c.b16 %v1014, %v1010
  %v1175 = vpack.c.b16 %v1015, %v1011
  %v1176 = vpack.c.b16 %v1020, %v1016
  %v1177 = vpack.c.b16 %v1021, %v1017
  %v1178 = vpack.c.b16 %v1022, %v1018
  %v1179 = vpack.c.b16 %v1023, %v1019
  %v1180 = vpack.c.b16 %v1028, %v1024
  %v1181 = vpack.c.b16 %v1029, %v1025
  %v1182 = vpack.c.b16 %v1030, %v1026
  %v1183 = vpack.c.b16 %v1031, %v1027
  %v1184 = vpack.c.b16 %v1036, %v1032
  %v1185 = vpack.c.b16 %v1037, %v1033
  %v1186 = vpack.c.b16 %v1038, %v1034
  %v1187 = vpack.c.b16 %v1039, %v1035
  %v1188 = vpack.c.b16 %v1044, %v1040
  %v1189 = vpack.c.b16 %v1045, %v1041
  %v1190 = vpack.c.b16 %v1046, %v1042
  %v1191 = vpack.c.b16 %v1047, %v1043
  %v1192 = vpack.c.b16 %v1052, %v1048
  %v1193 = vpack.c.b16 %v1053, %v1049
  %v1194 = vpack.c.b16 %v1054, %v1050
  %v1195 = vpack.c.b16 %v1055, %v1051
  %v1196 = vpack.c.b16 %v1060, %v1056
  %v1197 = vpack.c.b16 %v1061, %v1057
  %v1198 = vpack.c.b16 %v1062, %v1058
  %v1199 = vpack.c.b16 %v1063, %v1059
  %v1200 = vpack.c.b16 %v1068, %v1064
  %v1201 = vpack.c.b16 %v1069, %v1065
  %v1202 = vpack.c.b16 %v1070, %v1066
  %v1203 = vpack.c.b16 %v1071, %v1067
  %v1204 = vpack.c.b16 %v1076, %v1072
  %v1205 = vpack.c.b16 %v1077, %v1073
  %v1206 = vpack.c.b16 %v1078, %v1074
  %v1207 = vpack.c.b16 %v1079, %v1075
  %v1208 = vpack.c.b16 %v1084, %v1080
  %v1209 = vpack.c.b16 %v1085, %v1081
  %v1210 = vpack.c.b16 %v1086, %v1082
  %v1211 = vpack.c.b16 %v1087, %v1083
  %v1212 = vpack.c.b16 %v1092, %v1088
  %v1213 = vpack.c.b16 %v1093, %v1089
  %v1214 = vpack.c.b16 %v1094, %v1090
  %v1215 = vpack.c.b16 %v1095, %v1091
  %v1216 = vpack.c.b16 %v1100, %v1096
  %v1217 = vpack.c.b16 %v1101, %v1097
  %v1218 = vpack.c.b16 %v1102, %v1098
  %v1219 = vpack.c.b16 %v1103, %v1099
  %v1220 = vpack.c.b16 %v1108, %v1104
  %v1221 = vpack.c.b16 %v1109, %v1105
  %v1222 = vpack.c.b16 %v1110, %v1106
  %v1223 = vpack.c.b16 %v1111, %v1107
  %v1224 = vpack.c.b16 %v1116, %v1112
  %v1225 = vpack.c.b16 %v1117, %v1113
  %v1226 = vpack.c.b16 %v1118, %v1114
  %v1227 = vpack.c.b16 %v1119, %v1115
  %v1228 = vpack.c.b16 %v1124, %v1120
  %v1229 = vpack.c.b16 %v1125, %v1121
  %v1230 = vpack.c.b16 %v1126, %v1122
  %v1231 = vpack.c.b16 %v1127, %v1123
  %v1232 = vpack.c.b16 %v1132, %v1128
  %v1233 = vpack.c.b16 %v1133, %v1129
  %v1234 = vpack.c.b16 %v1134, %v1130
  %v1235 = vpack.c.b16 %v1135, %v1131
  %v1236 = vpack.c.b16 %v1140, %v1136
  %v1237 = vpack.c.b16 %v1141, %v1137
  %v1238 = vpack.c.b16 %v1142, %v1138
  %v1239 = vpack.c.b16 %v1143, %v1139
  %v1240 = vpack.c.b16 %v1148, %v1144
  %v1241 = vpack.c.b16 %v1149, %v1145
  %v1242 = vpack.c.b16 %v1150, %v1146
  %v1243 = vpack.c.b16 %v1151, %v1147
  %v1244 = vpack.c.b16 %v1156, %v1152
  %v1245 = vpack.c.b16 %v1157, %v1153
  %v1246 = vpack.c.b16 %v1158, %v1154
  %v1247 = vpack.c.b16 %v1159, %v1155
  %v1248 = vpack.c.b16 %v1164, %v1160
  %v1249 = vpack.c.b16 %v1165, %v1161
  %v1250 = vpack.c.b16 %v1166, %v1162
  %v1251 = vpack.c.b16 %v1167, %v1163
  %v1252 = vpack.c.b16 %v1168, %v1168
  %v1253 = vpack.c.b16 %v1169, %v1169
  %v1254 = vpack.c.b16 %v1170, %v1170
  %v1255 = vpack.c.b16 %v1171, %v1171
  %vm1336 = vcmask 556032
  %v1338 = vsel %vm1336, %v798, 0
  %v1341 = vsel %vm1336, %v801, 0
  %v1344 = vsel %vm1336, %v804, 0
  %v1347 = vsel %vm1336, %v807, 0
  %v1350 = vsel %vm1336, %v810, 0
  %v1353 = vsel %vm1336, %v813, 0
  %v1356 = vsel %vm1336, %v816, 0
  %v1359 = vsel %vm1336, %v819, 0
  %v1362 = vsel %vm1336, %v822, 0
  %v1365 = vsel %vm1336, %v825, 0
  %v1368 = vsel %vm1336, %v828, 0
  %v1371 = vsel %vm1336, %v831, 0
  %v1374 = vsel %vm1336, %v834, 0
  %v1377 = vsel %vm1336, %v837, 0
  %v1380 = vsel %vm1336, %v840, 0
  %v1383 = vsel %vm1336, %v843, 0
  %vm1385 = vcmask 1041408
  %v1387 = vsel %vm1385, %v1252, 0
  %v1390 = vsel %vm1385, %v1253, 0
  %v1393 = vsel %vm1385, %v1254, 0
  %v1396 = vsel %vm1385, %v1255, 0
  %1398 = vmatprep.subr.bf16.mxu0 %v1173
  %1399 = vmatpush1.bf16.msra.mxu0 %v1172
  %1400 = vmatprep.subr.bf16.mxu0 %v1177
  %1401 = vmatpush1.bf16.msra.mxu0 %v1176
  %1402 = vmatprep.subr.bf16.mxu0 %v1181
  %1403 = vmatpush1.bf16.msra.mxu0 %v1180
  %1404 = vmatprep.subr.bf16.mxu0 %v1185
  %1405 = vmatpush1.bf16.msra.mxu0 %v1184
  %1406 = vmatprep.subr.bf16.mxu0 %v1189
  %1407 = vmatpush1.bf16.msra.mxu0 %v1188
  %1408 = vmatprep.subr.bf16.mxu0 %v1193
  %1409 = vmatpush1.bf16.msra.mxu0 %v1192
  %1410 = vmatprep.subr.bf16.mxu0 %v1197
  %1411 = vmatpush1.bf16.msra.mxu0 %v1196
  %1412 = vmatprep.subr.bf16.mxu0 %v1201
  %1413 = vmatpush1.bf16.msra.mxu0 %v1200
  %1414 = vmatprep.subr.bf16.mxu0 %v1205
  %1415 = vmatpush1.bf16.msra.mxu0 %v1204
  %1416 = vmatprep.subr.bf16.mxu0 %v1209
  %1417 = vmatpush1.bf16.msra.mxu0 %v1208
  %1418 = vmatprep.subr.bf16.mxu0 %v1213
  %1419 = vmatpush1.bf16.msra.mxu0 %v1212
  %1420 = vmatprep.subr.bf16.mxu0 %v1217
  %1421 = vmatpush1.bf16.msra.mxu0 %v1216
  %1422 = vmatprep.subr.bf16.mxu0 %v1221
  %1423 = vmatpush1.bf16.msra.mxu0 %v1220
  %1424 = vmatprep.subr.bf16.mxu0 %v1225
  %1425 = vmatpush1.bf16.msra.mxu0 %v1224
  %1426 = vmatprep.subr.bf16.mxu0 %v1229
  %1427 = vmatpush1.bf16.msra.mxu0 %v1228
  %1428 = vmatprep.subr.bf16.mxu0 %v1233
  %1429 = vmatpush1.bf16.msra.mxu0 %v1232
  %1430 = vmatprep.mubr.bf16.mxu0 %v797
  %1431 = vmatmul.mubr.bf16.gmra.mrb[0].mxu0 %v796
  %v1432 = vpop.f32.mrb[0].mxu0
  %v1433 = vadd.f32 0.0, %v1432
  %v1434 = vpop.f32.mrb[0].mxu0
  %v1435 = vadd.f32 0.0, %v1434
  %v1436 = vpop.f32.mrb[0].mxu0
  %v1437 = vadd.f32 0.0, %v1436
  %v1438 = vpop.f32.mrb[0].mxu0
  %v1439 = vadd.f32 0.0, %v1438
  %1440 = vmatprep.mubr.bf16.mxu0 %v800
  %1441 = vmatmul.mubr.bf16.gmra.mrb[0].mxu0 %v799
  %v1442 = vpop.f32.mrb[0].mxu0
  %v1443 = vadd.f32 0.0, %v1442
  %v1444 = vpop.f32.mrb[0].mxu0
  %v1445 = vadd.f32 0.0, %v1444
  %v1446 = vpop.f32.mrb[0].mxu0
  %v1447 = vadd.f32 0.0, %v1446
  %v1448 = vpop.f32.mrb[0].mxu0
  %v1449 = vadd.f32 0.0, %v1448
  %1450 = vmatprep.mubr.bf16.mxu0 %v803
  %1451 = vmatmul.mubr.bf16.gmra.mrb[0].mxu0 %v802
  %v1452 = vpop.f32.mrb[0].mxu0
  %v1453 = vadd.f32 0.0, %v1452
  %v1454 = vpop.f32.mrb[0].mxu0
  %v1455 = vadd.f32 0.0, %v1454
  %v1456 = vpop.f32.mrb[0].mxu0
  %v1457 = vadd.f32 0.0, %v1456
  %v1458 = vpop.f32.mrb[0].mxu0
  %v1459 = vadd.f32 0.0, %v1458
  %1460 = vmatprep.mubr.bf16.mxu0 %v806
  %1461 = vmatmul.mubr.bf16.gmra.mrb[0].mxu0 %v805
  %v1462 = vpop.f32.mrb[0].mxu0
  %v1463 = vadd.f32 0.0, %v1462
  %v1464 = vpop.f32.mrb[0].mxu0
  %v1465 = vadd.f32 0.0, %v1464
  %v1466 = vpop.f32.mrb[0].mxu0
  %v1467 = vadd.f32 0.0, %v1466
  %v1468 = vpop.f32.mrb[0].mxu0
  %v1469 = vadd.f32 0.0, %v1468
  %1470 = vmatprep.mubr.bf16.mxu0 %v809
  %1471 = vmatmul.mubr.bf16.gmra.mrb[0].mxu0 %v808
  %v1472 = vpop.f32.mrb[0].mxu0
  %v1473 = vadd.f32 0.0, %v1472
  %v1474 = vpop.f32.mrb[0].mxu0
  %v1475 = vadd.f32 0.0, %v1474
  %v1476 = vpop.f32.mrb[0].mxu0
  %v1477 = vadd.f32 0.0, %v1476
  %v1478 = vpop.f32.mrb[0].mxu0
  %v1479 = vadd.f32 0.0, %v1478
  %1480 = vmatprep.mubr.bf16.mxu0 %v812
  %1481 = vmatmul.mubr.bf16.gmra.mrb[0].mxu0 %v811
  %v1482 = vpop.f32.mrb[0].mxu0
  %v1483 = vadd.f32 0.0, %v1482
  %v1484 = vpop.f32.mrb[0].mxu0
  %v1485 = vadd.f32 0.0, %v1484
  %v1486 = vpop.f32.mrb[0].mxu0
  %v1487 = vadd.f32 0.0, %v1486
  %v1488 = vpop.f32.mrb[0].mxu0
  %v1489 = vadd.f32 0.0, %v1488
  %1490 = vmatprep.mubr.bf16.mxu0 %v815
  %1491 = vmatmul.mubr.bf16.gmra.mrb[0].mxu0 %v814
  %v1492 = vpop.f32.mrb[0].mxu0
  %v1493 = vadd.f32 0.0, %v1492
  %v1494 = vpop.f32.mrb[0].mxu0
  %v1495 = vadd.f32 0.0, %v1494
  %v1496 = vpop.f32.mrb[0].mxu0
  %v1497 = vadd.f32 0.0, %v1496
  %v1498 = vpop.f32.mrb[0].mxu0
  %v1499 = vadd.f32 0.0, %v1498
  %1500 = vmatprep.mubr.bf16.mxu0 %v818
  %1501 = vmatmul.mubr.bf16.gmra.mrb[0].mxu0 %v817
  %v1502 = vpop.f32.mrb[0].mxu0
  %v1503 = vadd.f32 0.0, %v1502
  %v1504 = vpop.f32.mrb[0].mxu0
  %v1505 = vadd.f32 0.0, %v1504
  %v1506 = vpop.f32.mrb[0].mxu0
  %v1507 = vadd.f32 0.0, %v1506
  %v1508 = vpop.f32.mrb[0].mxu0
  %v1509 = vadd.f32 0.0, %v1508
  %1510 = vmatprep.mubr.bf16.mxu0 %v821
  %1511 = vmatmul.mubr.bf16.gmra.mrb[0].mxu0 %v820
  %v1512 = vpop.f32.mrb[0].mxu0
  %v1513 = vadd.f32 0.0, %v1512
  %v1514 = vpop.f32.mrb[0].mxu0
  %v1515 = vadd.f32 0.0, %v1514
  %v1516 = vpop.f32.mrb[0].mxu0
  %v1517 = vadd.f32 0.0, %v1516
  %v1518 = vpop.f32.mrb[0].mxu0
  %v1519 = vadd.f32 0.0, %v1518
  %1520 = vmatprep.mubr.bf16.mxu0 %v824
  %1521 = vmatmul.mubr.bf16.gmra.mrb[0].mxu0 %v823
  %v1522 = vpop.f32.mrb[0].mxu0
  %v1523 = vadd.f32 0.0, %v1522
  %v1524 = vpop.f32.mrb[0].mxu0
  %v1525 = vadd.f32 0.0, %v1524
  %v1526 = vpop.f32.mrb[0].mxu0
  %v1527 = vadd.f32 0.0, %v1526
  %v1528 = vpop.f32.mrb[0].mxu0
  %v1529 = vadd.f32 0.0, %v1528
  %1530 = vmatprep.mubr.bf16.mxu0 %v827
  %1531 = vmatmul.mubr.bf16.gmra.mrb[0].mxu0 %v826
  %v1532 = vpop.f32.mrb[0].mxu0
  %v1533 = vadd.f32 0.0, %v1532
  %v1534 = vpop.f32.mrb[0].mxu0
  %v1535 = vadd.f32 0.0, %v1534
  %v1536 = vpop.f32.mrb[0].mxu0
  %v1537 = vadd.f32 0.0, %v1536
  %v1538 = vpop.f32.mrb[0].mxu0
  %v1539 = vadd.f32 0.0, %v1538
  %1540 = vmatprep.mubr.bf16.mxu0 %v830
  %1541 = vmatmul.mubr.bf16.gmra.mrb[0].mxu0 %v829
  %v1542 = vpop.f32.mrb[0].mxu0
  %v1543 = vadd.f32 0.0, %v1542
  %v1544 = vpop.f32.mrb[0].mxu0
  %v1545 = vadd.f32 0.0, %v1544
  %v1546 = vpop.f32.mrb[0].mxu0
  %v1547 = vadd.f32 0.0, %v1546
  %v1548 = vpop.f32.mrb[0].mxu0
  %v1549 = vadd.f32 0.0, %v1548
  %1550 = vmatprep.mubr.bf16.mxu0 %v833
  %1551 = vmatmul.mubr.bf16.gmra.mrb[0].mxu0 %v832
  %v1552 = vpop.f32.mrb[0].mxu0
  %v1553 = vadd.f32 0.0, %v1552
  %v1554 = vpop.f32.mrb[0].mxu0
  %v1555 = vadd.f32 0.0, %v1554
  %v1556 = vpop.f32.mrb[0].mxu0
  %v1557 = vadd.f32 0.0, %v1556
  %v1558 = vpop.f32.mrb[0].mxu0
  %v1559 = vadd.f32 0.0, %v1558
  %1560 = vmatprep.mubr.bf16.mxu0 %v836
  %1561 = vmatmul.mubr.bf16.gmra.mrb[0].mxu0 %v835
  %v1562 = vpop.f32.mrb[0].mxu0
  %v1563 = vadd.f32 0.0, %v1562
  %v1564 = vpop.f32.mrb[0].mxu0
  %v1565 = vadd.f32 0.0, %v1564
  %v1566 = vpop.f32.mrb[0].mxu0
  %v1567 = vadd.f32 0.0, %v1566
  %v1568 = vpop.f32.mrb[0].mxu0
  %v1569 = vadd.f32 0.0, %v1568
  %1570 = vmatprep.mubr.bf16.mxu0 %v839
  %1571 = vmatmul.mubr.bf16.gmra.mrb[0].mxu0 %v838
  %v1572 = vpop.f32.mrb[0].mxu0
  %v1573 = vadd.f32 0.0, %v1572
  %v1574 = vpop.f32.mrb[0].mxu0
  %v1575 = vadd.f32 0.0, %v1574
  %v1576 = vpop.f32.mrb[0].mxu0
  %v1577 = vadd.f32 0.0, %v1576
  %v1578 = vpop.f32.mrb[0].mxu0
  %v1579 = vadd.f32 0.0, %v1578
  %1580 = vmatprep.mubr.bf16.mxu0 %v842
  %1581 = vmatmul.mubr.bf16.gmra.mrb[0].mxu0 %v841
  %v1582 = vpop.f32.mrb[0].mxu0
  %v1583 = vadd.f32 0.0, %v1582
  %v1584 = vpop.f32.mrb[0].mxu0
  %v1585 = vadd.f32 0.0, %v1584
  %v1586 = vpop.f32.mrb[0].mxu0
  %v1587 = vadd.f32 0.0, %v1586
  %v1588 = vpop.f32.mrb[0].mxu0
  %v1589 = vadd.f32 0.0, %v1588
  %1590 = vdwg.mxu0
  %1591 = vmatprep.subr.bf16.mxu0 %v1237
  %1592 = vmatpush1.bf16.msra.mxu0 %v1236
  %1593 = vmatprep.subr.bf16.mxu0 %v1241
  %1594 = vmatpush1.bf16.msra.mxu0 %v1240
  %1595 = vmatprep.subr.bf16.mxu0 %v1245
  %1596 = vmatpush1.bf16.msra.mxu0 %v1244
  %1597 = vmatprep.subr.bf16.mxu0 %v1249
  %1598 = vmatpush1.bf16.msra.mxu0 %v1248
  %1599 = vmatprep.subr.bf16.mxu0 %v1390
  %1600 = vmatpush1.bf16.msra.mxu0 %v1387
  %1601 = vmatprep.subr.bf16.mxu0 0
  %1602 = vmatpush1.bf16.msra.mxu0 0
  %1603 = vmatprep.subr.bf16.mxu0 0
  %1604 = vmatpush1.bf16.msra.mxu0 0
  %1605 = vmatprep.subr.bf16.mxu0 0
  %1606 = vmatpush1.bf16.msra.mxu0 0
  %1607 = vmatprep.subr.bf16.mxu0 0
  %1608 = vmatpush1.bf16.msra.mxu0 0
  %1609 = vmatprep.subr.bf16.mxu0 0
  %1610 = vmatpush1.bf16.msra.mxu0 0
  %1611 = vmatprep.subr.bf16.mxu0 0
  %1612 = vmatpush1.bf16.msra.mxu0 0
  %1613 = vmatprep.subr.bf16.mxu0 0
  %1614 = vmatpush1.bf16.msra.mxu0 0
  %1615 = vmatprep.subr.bf16.mxu0 0
  %1616 = vmatpush1.bf16.msra.mxu0 0
  %1617 = vmatprep.subr.bf16.mxu0 0
  %1618 = vmatpush1.bf16.msra.mxu0 0
  %1619 = vmatprep.subr.bf16.mxu0 0
  %1620 = vmatpush1.bf16.msra.mxu0 0
  %1621 = vmatprep.subr.bf16.mxu0 0
  %1622 = vmatpush1.bf16.msra.mxu0 0
  %1623 = vmatprep.mubr.bf16.mxu0 0
  %1624 = vmatmul.mubr.bf16.gmra.mrb[0].mxu0 %v1338
  %v1625 = vpop.f32.mrb[0].mxu0
  %v1626 = vadd.f32 %v1433, %v1625
  %v1627 = vpop.f32.mrb[0].mxu0
  %v1628 = vadd.f32 %v1435, %v1627
  %v1629 = vpop.f32.mrb[0].mxu0
  %v1630 = vadd.f32 %v1437, %v1629
  %v1631 = vpop.f32.mrb[0].mxu0
  %v1632 = vadd.f32 %v1439, %v1631
  %1633 = vmatprep.mubr.bf16.mxu0 0
  %1634 = vmatmul.mubr.bf16.gmra.mrb[0].mxu0 %v1341
  %v1635 = vpop.f32.mrb[0].mxu0
  %v1636 = vadd.f32 %v1443, %v1635
  %v1637 = vpop.f32.mrb[0].mxu0
  %v1638 = vadd.f32 %v1445, %v1637
  %v1639 = vpop.f32.mrb[0].mxu0
  %v1640 = vadd.f32 %v1447, %v1639
  %v1641 = vpop.f32.mrb[0].mxu0
  %v1642 = vadd.f32 %v1449, %v1641
  %1643 = vmatprep.mubr.bf16.mxu0 0
  %1644 = vmatmul.mubr.bf16.gmra.mrb[0].mxu0 %v1344
  %v1645 = vpop.f32.mrb[0].mxu0
  %v1646 = vadd.f32 %v1453, %v1645
  %v1647 = vpop.f32.mrb[0].mxu0
  %v1648 = vadd.f32 %v1455, %v1647
  %v1649 = vpop.f32.mrb[0].mxu0
  %v1650 = vadd.f32 %v1457, %v1649
  %v1651 = vpop.f32.mrb[0].mxu0
  %v1652 = vadd.f32 %v1459, %v1651
  %1653 = vmatprep.mubr.bf16.mxu0 0
  %1654 = vmatmul.mubr.bf16.gmra.mrb[0].mxu0 %v1347
  %v1655 = vpop.f32.mrb[0].mxu0
  %v1656 = vadd.f32 %v1463, %v1655
  %v1657 = vpop.f32.mrb[0].mxu0
  %v1658 = vadd.f32 %v1465, %v1657
  %v1659 = vpop.f32.mrb[0].mxu0
  %v1660 = vadd.f32 %v1467, %v1659
  %v1661 = vpop.f32.mrb[0].mxu0
  %v1662 = vadd.f32 %v1469, %v1661
  %1663 = vmatprep.mubr.bf16.mxu0 0
  %1664 = vmatmul.mubr.bf16.gmra.mrb[0].mxu0 %v1350
  %v1665 = vpop.f32.mrb[0].mxu0
  %v1666 = vadd.f32 %v1473, %v1665
  %v1667 = vpop.f32.mrb[0].mxu0
  %v1668 = vadd.f32 %v1475, %v1667
  %v1669 = vpop.f32.mrb[0].mxu0
  %v1670 = vadd.f32 %v1477, %v1669
  %v1671 = vpop.f32.mrb[0].mxu0
  %v1672 = vadd.f32 %v1479, %v1671
  %1673 = vmatprep.mubr.bf16.mxu0 0
  %1674 = vmatmul.mubr.bf16.gmra.mrb[0].mxu0 %v1353
  %v1675 = vpop.f32.mrb[0].mxu0
  %v1676 = vadd.f32 %v1483, %v1675
  %v1677 = vpop.f32.mrb[0].mxu0
  %v1678 = vadd.f32 %v1485, %v1677
  %v1679 = vpop.f32.mrb[0].mxu0
  %v1680 = vadd.f32 %v1487, %v1679
  %v1681 = vpop.f32.mrb[0].mxu0
  %v1682 = vadd.f32 %v1489, %v1681
  %1683 = vmatprep.mubr.bf16.mxu0 0
  %1684 = vmatmul.mubr.bf16.gmra.mrb[0].mxu0 %v1356
  %v1685 = vpop.f32.mrb[0].mxu0
  %v1686 = vadd.f32 %v1493, %v1685
  %v1687 = vpop.f32.mrb[0].mxu0
  %v1688 = vadd.f32 %v1495, %v1687
  %v1689 = vpop.f32.mrb[0].mxu0
  %v1690 = vadd.f32 %v1497, %v1689
  %v1691 = vpop.f32.mrb[0].mxu0
  %v1692 = vadd.f32 %v1499, %v1691
  %1693 = vmatprep.mubr.bf16.mxu0 0
  %1694 = vmatmul.mubr.bf16.gmra.mrb[0].mxu0 %v1359
  %v1695 = vpop.f32.mrb[0].mxu0
  %v1696 = vadd.f32 %v1503, %v1695
  %v1697 = vpop.f32.mrb[0].mxu0
  %v1698 = vadd.f32 %v1505, %v1697
  %v1699 = vpop.f32.mrb[0].mxu0
  %v1700 = vadd.f32 %v1507, %v1699
  %v1701 = vpop.f32.mrb[0].mxu0
  %v1702 = vadd.f32 %v1509, %v1701
  %1703 = vmatprep.mubr.bf16.mxu0 0
  %1704 = vmatmul.mubr.bf16.gmra.mrb[0].mxu0 %v1362
  %v1705 = vpop.f32.mrb[0].mxu0
  %v1706 = vadd.f32 %v1513, %v1705
  %v1707 = vpop.f32.mrb[0].mxu0
  %v1708 = vadd.f32 %v1515, %v1707
  %v1709 = vpop.f32.mrb[0].mxu0
  %v1710 = vadd.f32 %v1517, %v1709
  %v1711 = vpop.f32.mrb[0].mxu0
  %v1712 = vadd.f32 %v1519, %v1711
  %1713 = vmatprep.mubr.bf16.mxu0 0
  %1714 = vmatmul.mubr.bf16.gmra.mrb[0].mxu0 %v1365
  %v1715 = vpop.f32.mrb[0].mxu0
  %v1716 = vadd.f32 %v1523, %v1715
  %v1717 = vpop.f32.mrb[0].mxu0
  %v1718 = vadd.f32 %v1525, %v1717
  %v1719 = vpop.f32.mrb[0].mxu0
  %v1720 = vadd.f32 %v1527, %v1719
  %v1721 = vpop.f32.mrb[0].mxu0
  %v1722 = vadd.f32 %v1529, %v1721
  %1723 = vmatprep.mubr.bf16.mxu0 0
  %1724 = vmatmul.mubr.bf16.gmra.mrb[0].mxu0 %v1368
  %v1725 = vpop.f32.mrb[0].mxu0
  %v1726 = vadd.f32 %v1533, %v1725
  %v1727 = vpop.f32.mrb[0].mxu0
  %v1728 = vadd.f32 %v1535, %v1727
  %v1729 = vpop.f32.mrb[0].mxu0
  %v1730 = vadd.f32 %v1537, %v1729
  %v1731 = vpop.f32.mrb[0].mxu0
  %v1732 = vadd.f32 %v1539, %v1731
  %1733 = vmatprep.mubr.bf16.mxu0 0
  %1734 = vmatmul.mubr.bf16.gmra.mrb[0].mxu0 %v1371
  %v1735 = vpop.f32.mrb[0].mxu0
  %v1736 = vadd.f32 %v1543, %v1735
  %v1737 = vpop.f32.mrb[0].mxu0
  %v1738 = vadd.f32 %v1545, %v1737
  %v1739 = vpop.f32.mrb[0].mxu0
  %v1740 = vadd.f32 %v1547, %v1739
  %v1741 = vpop.f32.mrb[0].mxu0
  %v1742 = vadd.f32 %v1549, %v1741
  %1743 = vmatprep.mubr.bf16.mxu0 0
  %1744 = vmatmul.mubr.bf16.gmra.mrb[0].mxu0 %v1374
  %v1745 = vpop.f32.mrb[0].mxu0
  %v1746 = vadd.f32 %v1553, %v1745
  %v1747 = vpop.f32.mrb[0].mxu0
  %v1748 = vadd.f32 %v1555, %v1747
  %v1749 = vpop.f32.mrb[0].mxu0
  %v1750 = vadd.f32 %v1557, %v1749
  %v1751 = vpop.f32.mrb[0].mxu0
  %v1752 = vadd.f32 %v1559, %v1751
  %1753 = vmatprep.mubr.bf16.mxu0 0
  %1754 = vmatmul.mubr.bf16.gmra.mrb[0].mxu0 %v1377
  %v1755 = vpop.f32.mrb[0].mxu0
  %v1756 = vadd.f32 %v1563, %v1755
  %v1757 = vpop.f32.mrb[0].mxu0
  %v1758 = vadd.f32 %v1565, %v1757
  %v1759 = vpop.f32.mrb[0].mxu0
  %v1760 = vadd.f32 %v1567, %v1759
  %v1761 = vpop.f32.mrb[0].mxu0
  %v1762 = vadd.f32 %v1569, %v1761
  %1763 = vmatprep.mubr.bf16.mxu0 0
  %1764 = vmatmul.mubr.bf16.gmra.mrb[0].mxu0 %v1380
  %v1765 = vpop.f32.mrb[0].mxu0
  %v1766 = vadd.f32 %v1573, %v1765
  %v1767 = vpop.f32.mrb[0].mxu0
  %v1768 = vadd.f32 %v1575, %v1767
  %v1769 = vpop.f32.mrb[0].mxu0
  %v1770 = vadd.f32 %v1577, %v1769
  %v1771 = vpop.f32.mrb[0].mxu0
  %v1772 = vadd.f32 %v1579, %v1771
  %1773 = vmatprep.mubr.bf16.mxu0 0
  %1774 = vmatmul.mubr.bf16.gmra.mrb[0].mxu0 %v1383
  %v1775 = vpop.f32.mrb[0].mxu0
  %v1776 = vadd.f32 %v1583, %v1775
  %v1777 = vpop.f32.mrb[0].mxu0
  %v1778 = vadd.f32 %v1585, %v1777
  %v1779 = vpop.f32.mrb[0].mxu0
  %v1780 = vadd.f32 %v1587, %v1779
  %v1781 = vpop.f32.mrb[0].mxu0
  %v1782 = vadd.f32 %v1589, %v1781
  %1783 = vdwg.mxu0
  %1784 = vmatprep.subr.bf16.mxu0 %v1175
  %1785 = vmatpush1.bf16.msra.mxu0 %v1174
  %1786 = vmatprep.subr.bf16.mxu0 %v1179
  %1787 = vmatpush1.bf16.msra.mxu0 %v1178
  %1788 = vmatprep.subr.bf16.mxu0 %v1183
  %1789 = vmatpush1.bf16.msra.mxu0 %v1182
  %1790 = vmatprep.subr.bf16.mxu0 %v1187
  %1791 = vmatpush1.bf16.msra.mxu0 %v1186
  %1792 = vmatprep.subr.bf16.mxu0 %v1191
  %1793 = vmatpush1.bf16.msra.mxu0 %v1190
  %1794 = vmatprep.subr.bf16.mxu0 %v1195
  %1795 = vmatpush1.bf16.msra.mxu0 %v1194
  %1796 = vmatprep.subr.bf16.mxu0 %v1199
  %1797 = vmatpush1.bf16.msra.mxu0 %v1198
  %1798 = vmatprep.subr.bf16.mxu0 %v1203
  %1799 = vmatpush1.bf16.msra.mxu0 %v1202
  %1800 = vmatprep.subr.bf16.mxu0 %v1207
  %1801 = vmatpush1.bf16.msra.mxu0 %v1206
  %1802 = vmatprep.subr.bf16.mxu0 %v1211
  %1803 = vmatpush1.bf16.msra.mxu0 %v1210
  %1804 = vmatprep.subr.bf16.mxu0 %v1215
  %1805 = vmatpush1.bf16.msra.mxu0 %v1214
  %1806 = vmatprep.subr.bf16.mxu0 %v1219
  %1807 = vmatpush1.bf16.msra.mxu0 %v1218
  %1808 = vmatprep.subr.bf16.mxu0 %v1223
  %1809 = vmatpush1.bf16.msra.mxu0 %v1222
  %1810 = vmatprep.subr.bf16.mxu0 %v1227
  %1811 = vmatpush1.bf16.msra.mxu0 %v1226
  %1812 = vmatprep.subr.bf16.mxu0 %v1231
  %1813 = vmatpush1.bf16.msra.mxu0 %v1230
  %1814 = vmatprep.subr.bf16.mxu0 %v1235
  %1815 = vmatpush1.bf16.msra.mxu0 %v1234
  %1816 = vmatprep.mubr.bf16.mxu0 %v797
  %1817 = vmatmul.mubr.bf16.gmra.mrb[0].mxu0 %v796
  %v1818 = vpop.f32.mrb[0].mxu0
  %v1819 = vadd.f32 0.0, %v1818
  %v1820 = vpop.f32.mrb[0].mxu0
  %v1821 = vadd.f32 0.0, %v1820
  %v1822 = vpop.f32.mrb[0].mxu0
  %v1823 = vadd.f32 0.0, %v1822
  %v1824 = vpop.f32.mrb[0].mxu0
  %v1825 = vadd.f32 0.0, %v1824
  %1826 = vmatprep.mubr.bf16.mxu0 %v800
  %1827 = vmatmul.mubr.bf16.gmra.mrb[0].mxu0 %v799
  %v1828 = vpop.f32.mrb[0].mxu0
  %v1829 = vadd.f32 0.0, %v1828
  %v1830 = vpop.f32.mrb[0].mxu0
  %v1831 = vadd.f32 0.0, %v1830
  %v1832 = vpop.f32.mrb[0].mxu0
  %v1833 = vadd.f32 0.0, %v1832
  %v1834 = vpop.f32.mrb[0].mxu0
  %v1835 = vadd.f32 0.0, %v1834
  %1836 = vmatprep.mubr.bf16.mxu0 %v803
  %1837 = vmatmul.mubr.bf16.gmra.mrb[0].mxu0 %v802
  %v1838 = vpop.f32.mrb[0].mxu0
  %v1839 = vadd.f32 0.0, %v1838
  %v1840 = vpop.f32.mrb[0].mxu0
  %v1841 = vadd.f32 0.0, %v1840
  %v1842 = vpop.f32.mrb[0].mxu0
  %v1843 = vadd.f32 0.0, %v1842
  %v1844 = vpop.f32.mrb[0].mxu0
  %v1845 = vadd.f32 0.0, %v1844
  %1846 = vmatprep.mubr.bf16.mxu0 %v806
  %1847 = vmatmul.mubr.bf16.gmra.mrb[0].mxu0 %v805
  %v1848 = vpop.f32.mrb[0].mxu0
  %v1849 = vadd.f32 0.0, %v1848
  %v1850 = vpop.f32.mrb[0].mxu0
  %v1851 = vadd.f32 0.0, %v1850
  %v1852 = vpop.f32.mrb[0].mxu0
  %v1853 = vadd.f32 0.0, %v1852
  %v1854 = vpop.f32.mrb[0].mxu0
  %v1855 = vadd.f32 0.0, %v1854
  %1856 = vmatprep.mubr.bf16.mxu0 %v809
  %1857 = vmatmul.mubr.bf16.gmra.mrb[0].mxu0 %v808
  %v1858 = vpop.f32.mrb[0].mxu0
  %v1859 = vadd.f32 0.0, %v1858
  %v1860 = vpop.f32.mrb[0].mxu0
  %v1861 = vadd.f32 0.0, %v1860
  %v1862 = vpop.f32.mrb[0].mxu0
  %v1863 = vadd.f32 0.0, %v1862
  %v1864 = vpop.f32.mrb[0].mxu0
  %v1865 = vadd.f32 0.0, %v1864
  %1866 = vmatprep.mubr.bf16.mxu0 %v812
  %1867 = vmatmul.mubr.bf16.gmra.mrb[0].mxu0 %v811
  %v1868 = vpop.f32.mrb[0].mxu0
  %v1869 = vadd.f32 0.0, %v1868
  %v1870 = vpop.f32.mrb[0].mxu0
  %v1871 = vadd.f32 0.0, %v1870
  %v1872 = vpop.f32.mrb[0].mxu0
  %v1873 = vadd.f32 0.0, %v1872
  %v1874 = vpop.f32.mrb[0].mxu0
  %v1875 = vadd.f32 0.0, %v1874
  %1876 = vmatprep.mubr.bf16.mxu0 %v815
  %1877 = vmatmul.mubr.bf16.gmra.mrb[0].mxu0 %v814
  %v1878 = vpop.f32.mrb[0].mxu0
  %v1879 = vadd.f32 0.0, %v1878
  %v1880 = vpop.f32.mrb[0].mxu0
  %v1881 = vadd.f32 0.0, %v1880
  %v1882 = vpop.f32.mrb[0].mxu0
  %v1883 = vadd.f32 0.0, %v1882
  %v1884 = vpop.f32.mrb[0].mxu0
  %v1885 = vadd.f32 0.0, %v1884
  %1886 = vmatprep.mubr.bf16.mxu0 %v818
  %1887 = vmatmul.mubr.bf16.gmra.mrb[0].mxu0 %v817
  %v1888 = vpop.f32.mrb[0].mxu0
  %v1889 = vadd.f32 0.0, %v1888
  %v1890 = vpop.f32.mrb[0].mxu0
  %v1891 = vadd.f32 0.0, %v1890
  %v1892 = vpop.f32.mrb[0].mxu0
  %v1893 = vadd.f32 0.0, %v1892
  %v1894 = vpop.f32.mrb[0].mxu0
  %v1895 = vadd.f32 0.0, %v1894
  %1896 = vmatprep.mubr.bf16.mxu0 %v821
  %1897 = vmatmul.mubr.bf16.gmra.mrb[0].mxu0 %v820
  %v1898 = vpop.f32.mrb[0].mxu0
  %v1899 = vadd.f32 0.0, %v1898
  %v1900 = vpop.f32.mrb[0].mxu0
  %v1901 = vadd.f32 0.0, %v1900
  %v1902 = vpop.f32.mrb[0].mxu0
  %v1903 = vadd.f32 0.0, %v1902
  %v1904 = vpop.f32.mrb[0].mxu0
  %v1905 = vadd.f32 0.0, %v1904
  %1906 = vmatprep.mubr.bf16.mxu0 %v824
  %1907 = vmatmul.mubr.bf16.gmra.mrb[0].mxu0 %v823
  %v1908 = vpop.f32.mrb[0].mxu0
  %v1909 = vadd.f32 0.0, %v1908
  %v1910 = vpop.f32.mrb[0].mxu0
  %v1911 = vadd.f32 0.0, %v1910
  %v1912 = vpop.f32.mrb[0].mxu0
  %v1913 = vadd.f32 0.0, %v1912
  %v1914 = vpop.f32.mrb[0].mxu0
  %v1915 = vadd.f32 0.0, %v1914
  %1916 = vmatprep.mubr.bf16.mxu0 %v827
  %1917 = vmatmul.mubr.bf16.gmra.mrb[0].mxu0 %v826
  %v1918 = vpop.f32.mrb[0].mxu0
  %v1919 = vadd.f32 0.0, %v1918
  %v1920 = vpop.f32.mrb[0].mxu0
  %v1921 = vadd.f32 0.0, %v1920
  %v1922 = vpop.f32.mrb[0].mxu0
  %v1923 = vadd.f32 0.0, %v1922
  %v1924 = vpop.f32.mrb[0].mxu0
  %v1925 = vadd.f32 0.0, %v1924
  %1926 = vmatprep.mubr.bf16.mxu0 %v830
  %1927 = vmatmul.mubr.bf16.gmra.mrb[0].mxu0 %v829
  %v1928 = vpop.f32.mrb[0].mxu0
  %v1929 = vadd.f32 0.0, %v1928
  %v1930 = vpop.f32.mrb[0].mxu0
  %v1931 = vadd.f32 0.0, %v1930
  %v1932 = vpop.f32.mrb[0].mxu0
  %v1933 = vadd.f32 0.0, %v1932
  %v1934 = vpop.f32.mrb[0].mxu0
  %v1935 = vadd.f32 0.0, %v1934
  %1936 = vmatprep.mubr.bf16.mxu0 %v833
  %1937 = vmatmul.mubr.bf16.gmra.mrb[0].mxu0 %v832
  %v1938 = vpop.f32.mrb[0].mxu0
  %v1939 = vadd.f32 0.0, %v1938
  %v1940 = vpop.f32.mrb[0].mxu0
  %v1941 = vadd.f32 0.0, %v1940
  %v1942 = vpop.f32.mrb[0].mxu0
  %v1943 = vadd.f32 0.0, %v1942
  %v1944 = vpop.f32.mrb[0].mxu0
  %v1945 = vadd.f32 0.0, %v1944
  %1946 = vmatprep.mubr.bf16.mxu0 %v836
  %1947 = vmatmul.mubr.bf16.gmra.mrb[0].mxu0 %v835
  %v1948 = vpop.f32.mrb[0].mxu0
  %v1949 = vadd.f32 0.0, %v1948
  %v1950 = vpop.f32.mrb[0].mxu0
  %v1951 = vadd.f32 0.0, %v1950
  %v1952 = vpop.f32.mrb[0].mxu0
  %v1953 = vadd.f32 0.0, %v1952
  %v1954 = vpop.f32.mrb[0].mxu0
  %v1955 = vadd.f32 0.0, %v1954
  %1956 = vmatprep.mubr.bf16.mxu0 %v839
  %1957 = vmatmul.mubr.bf16.gmra.mrb[0].mxu0 %v838
  %v1958 = vpop.f32.mrb[0].mxu0
  %v1959 = vadd.f32 0.0, %v1958
  %v1960 = vpop.f32.mrb[0].mxu0
  %v1961 = vadd.f32 0.0, %v1960
  %v1962 = vpop.f32.mrb[0].mxu0
  %v1963 = vadd.f32 0.0, %v1962
  %v1964 = vpop.f32.mrb[0].mxu0
  %v1965 = vadd.f32 0.0, %v1964
  %1966 = vmatprep.mubr.bf16.mxu0 %v842
  %1967 = vmatmul.mubr.bf16.gmra.mrb[0].mxu0 %v841
  %v1968 = vpop.f32.mrb[0].mxu0
  %v1969 = vadd.f32 0.0, %v1968
  %v1970 = vpop.f32.mrb[0].mxu0
  %v1971 = vadd.f32 0.0, %v1970
  %v1972 = vpop.f32.mrb[0].mxu0
  %v1973 = vadd.f32 0.0, %v1972
  %v1974 = vpop.f32.mrb[0].mxu0
  %v1975 = vadd.f32 0.0, %v1974
  %1976 = vdwg.mxu0
  %1977 = vmatprep.subr.bf16.mxu0 %v1239
  %1978 = vmatpush1.bf16.msra.mxu0 %v1238
  %1979 = vmatprep.subr.bf16.mxu0 %v1243
  %1980 = vmatpush1.bf16.msra.mxu0 %v1242
  %1981 = vmatprep.subr.bf16.mxu0 %v1247
  %1982 = vmatpush1.bf16.msra.mxu0 %v1246
  %1983 = vmatprep.subr.bf16.mxu0 %v1251
  %1984 = vmatpush1.bf16.msra.mxu0 %v1250
  %1985 = vmatprep.subr.bf16.mxu0 %v1396
  %1986 = vmatpush1.bf16.msra.mxu0 %v1393
  %1987 = vmatprep.subr.bf16.mxu0 0
  %1988 = vmatpush1.bf16.msra.mxu0 0
  %1989 = vmatprep.subr.bf16.mxu0 0
  %1990 = vmatpush1.bf16.msra.mxu0 0
  %1991 = vmatprep.subr.bf16.mxu0 0
  %1992 = vmatpush1.bf16.msra.mxu0 0
  %1993 = vmatprep.subr.bf16.mxu0 0
  %1994 = vmatpush1.bf16.msra.mxu0 0
  %1995 = vmatprep.subr.bf16.mxu0 0
  %1996 = vmatpush1.bf16.msra.mxu0 0
  %1997 = vmatprep.subr.bf16.mxu0 0
  %1998 = vmatpush1.bf16.msra.mxu0 0
  %1999 = vmatprep.subr.bf16.mxu0 0
  %2000 = vmatpush1.bf16.msra.mxu0 0
  %2001 = vmatprep.subr.bf16.mxu0 0
  %2002 = vmatpush1.bf16.msra.mxu0 0
  %2003 = vmatprep.subr.bf16.mxu0 0
  %2004 = vmatpush1.bf16.msra.mxu0 0
  %2005 = vmatprep.subr.bf16.mxu0 0
  %2006 = vmatpush1.bf16.msra.mxu0 0
  %2007 = vmatprep.subr.bf16.mxu0 0
  %2008 = vmatpush1.bf16.msra.mxu0 0
  %2009 = vmatprep.mubr.bf16.mxu0 0
  %2010 = vmatmul.mubr.bf16.gmra.mrb[0].mxu0 %v1338
  %v2011 = vpop.f32.mrb[0].mxu0
  %v2012 = vadd.f32 %v1819, %v2011
  %v2013 = vpop.f32.mrb[0].mxu0
  %v2014 = vadd.f32 %v1821, %v2013
  %v2015 = vpop.f32.mrb[0].mxu0
  %v2016 = vadd.f32 %v1823, %v2015
  %v2017 = vpop.f32.mrb[0].mxu0
  %v2018 = vadd.f32 %v1825, %v2017
  %2019 = vmatprep.mubr.bf16.mxu0 0
  %2020 = vmatmul.mubr.bf16.gmra.mrb[0].mxu0 %v1341
  %v2021 = vpop.f32.mrb[0].mxu0
  %v2022 = vadd.f32 %v1829, %v2021
  %v2023 = vpop.f32.mrb[0].mxu0
  %v2024 = vadd.f32 %v1831, %v2023
  %v2025 = vpop.f32.mrb[0].mxu0
  %v2026 = vadd.f32 %v1833, %v2025
  %v2027 = vpop.f32.mrb[0].mxu0
  %v2028 = vadd.f32 %v1835, %v2027
  %2029 = vmatprep.mubr.bf16.mxu0 0
  %2030 = vmatmul.mubr.bf16.gmra.mrb[0].mxu0 %v1344
  %v2031 = vpop.f32.mrb[0].mxu0
  %v2032 = vadd.f32 %v1839, %v2031
  %v2033 = vpop.f32.mrb[0].mxu0
  %v2034 = vadd.f32 %v1841, %v2033
  %v2035 = vpop.f32.mrb[0].mxu0
  %v2036 = vadd.f32 %v1843, %v2035
  %v2037 = vpop.f32.mrb[0].mxu0
  %v2038 = vadd.f32 %v1845, %v2037
  %2039 = vmatprep.mubr.bf16.mxu0 0
  %2040 = vmatmul.mubr.bf16.gmra.mrb[0].mxu0 %v1347
  %v2041 = vpop.f32.mrb[0].mxu0
  %v2042 = vadd.f32 %v1849, %v2041
  %v2043 = vpop.f32.mrb[0].mxu0
  %v2044 = vadd.f32 %v1851, %v2043
  %v2045 = vpop.f32.mrb[0].mxu0
  %v2046 = vadd.f32 %v1853, %v2045
  %v2047 = vpop.f32.mrb[0].mxu0
  %v2048 = vadd.f32 %v1855, %v2047
  %2049 = vmatprep.mubr.bf16.mxu0 0
  %2050 = vmatmul.mubr.bf16.gmra.mrb[0].mxu0 %v1350
  %v2051 = vpop.f32.mrb[0].mxu0
  %v2052 = vadd.f32 %v1859, %v2051
  %v2053 = vpop.f32.mrb[0].mxu0
  %v2054 = vadd.f32 %v1861, %v2053
  %v2055 = vpop.f32.mrb[0].mxu0
  %v2056 = vadd.f32 %v1863, %v2055
  %v2057 = vpop.f32.mrb[0].mxu0
  %v2058 = vadd.f32 %v1865, %v2057
  %2059 = vmatprep.mubr.bf16.mxu0 0
  %2060 = vmatmul.mubr.bf16.gmra.mrb[0].mxu0 %v1353
  %v2061 = vpop.f32.mrb[0].mxu0
  %v2062 = vadd.f32 %v1869, %v2061
  %v2063 = vpop.f32.mrb[0].mxu0
  %v2064 = vadd.f32 %v1871, %v2063
  %v2065 = vpop.f32.mrb[0].mxu0
  %v2066 = vadd.f32 %v1873, %v2065
  %v2067 = vpop.f32.mrb[0].mxu0
  %v2068 = vadd.f32 %v1875, %v2067
  %2069 = vmatprep.mubr.bf16.mxu0 0
  %2070 = vmatmul.mubr.bf16.gmra.mrb[0].mxu0 %v1356
  %v2071 = vpop.f32.mrb[0].mxu0
  %v2072 = vadd.f32 %v1879, %v2071
  %v2073 = vpop.f32.mrb[0].mxu0
  %v2074 = vadd.f32 %v1881, %v2073
  %v2075 = vpop.f32.mrb[0].mxu0
  %v2076 = vadd.f32 %v1883, %v2075
  %v2077 = vpop.f32.mrb[0].mxu0
  %v2078 = vadd.f32 %v1885, %v2077
  %2079 = vmatprep.mubr.bf16.mxu0 0
  %2080 = vmatmul.mubr.bf16.gmra.mrb[0].mxu0 %v1359
  %v2081 = vpop.f32.mrb[0].mxu0
  %v2082 = vadd.f32 %v1889, %v2081
  %v2083 = vpop.f32.mrb[0].mxu0
  %v2084 = vadd.f32 %v1891, %v2083
  %v2085 = vpop.f32.mrb[0].mxu0
  %v2086 = vadd.f32 %v1893, %v2085
  %v2087 = vpop.f32.mrb[0].mxu0
  %v2088 = vadd.f32 %v1895, %v2087
  %2089 = vmatprep.mubr.bf16.mxu0 0
  %2090 = vmatmul.mubr.bf16.gmra.mrb[0].mxu0 %v1362
  %v2091 = vpop.f32.mrb[0].mxu0
  %v2092 = vadd.f32 %v1899, %v2091
  %v2093 = vpop.f32.mrb[0].mxu0
  %v2094 = vadd.f32 %v1901, %v2093
  %v2095 = vpop.f32.mrb[0].mxu0
  %v2096 = vadd.f32 %v1903, %v2095
  %v2097 = vpop.f32.mrb[0].mxu0
  %v2098 = vadd.f32 %v1905, %v2097
  %2099 = vmatprep.mubr.bf16.mxu0 0
  %2100 = vmatmul.mubr.bf16.gmra.mrb[0].mxu0 %v1365
  %v2101 = vpop.f32.mrb[0].mxu0
  %v2102 = vadd.f32 %v1909, %v2101
  %v2103 = vpop.f32.mrb[0].mxu0
  %v2104 = vadd.f32 %v1911, %v2103
  %v2105 = vpop.f32.mrb[0].mxu0
  %v2106 = vadd.f32 %v1913, %v2105
  %v2107 = vpop.f32.mrb[0].mxu0
  %v2108 = vadd.f32 %v1915, %v2107
  %2109 = vmatprep.mubr.bf16.mxu0 0
  %2110 = vmatmul.mubr.bf16.gmra.mrb[0].mxu0 %v1368
  %v2111 = vpop.f32.mrb[0].mxu0
  %v2112 = vadd.f32 %v1919, %v2111
  %v2113 = vpop.f32.mrb[0].mxu0
  %v2114 = vadd.f32 %v1921, %v2113
  %v2115 = vpop.f32.mrb[0].mxu0
  %v2116 = vadd.f32 %v1923, %v2115
  %v2117 = vpop.f32.mrb[0].mxu0
  %v2118 = vadd.f32 %v1925, %v2117
  %2119 = vmatprep.mubr.bf16.mxu0 0
  %2120 = vmatmul.mubr.bf16.gmra.mrb[0].mxu0 %v1371
  %v2121 = vpop.f32.mrb[0].mxu0
  %v2122 = vadd.f32 %v1929, %v2121
  %v2123 = vpop.f32.mrb[0].mxu0
  %v2124 = vadd.f32 %v1931, %v2123
  %v2125 = vpop.f32.mrb[0].mxu0
  %v2126 = vadd.f32 %v1933, %v2125
  %v2127 = vpop.f32.mrb[0].mxu0
  %v2128 = vadd.f32 %v1935, %v2127
  %2129 = vmatprep.mubr.bf16.mxu0 0
  %2130 = vmatmul.mubr.bf16.gmra.mrb[0].mxu0 %v1374
  %v2131 = vpop.f32.mrb[0].mxu0
  %v2132 = vadd.f32 %v1939, %v2131
  %v2133 = vpop.f32.mrb[0].mxu0
  %v2134 = vadd.f32 %v1941, %v2133
  %v2135 = vpop.f32.mrb[0].mxu0
  %v2136 = vadd.f32 %v1943, %v2135
  %v2137 = vpop.f32.mrb[0].mxu0
  %v2138 = vadd.f32 %v1945, %v2137
  %2139 = vmatprep.mubr.bf16.mxu0 0
  %2140 = vmatmul.mubr.bf16.gmra.mrb[0].mxu0 %v1377
  %v2141 = vpop.f32.mrb[0].mxu0
  %v2142 = vadd.f32 %v1949, %v2141
  %v2143 = vpop.f32.mrb[0].mxu0
  %v2144 = vadd.f32 %v1951, %v2143
  %v2145 = vpop.f32.mrb[0].mxu0
  %v2146 = vadd.f32 %v1953, %v2145
  %v2147 = vpop.f32.mrb[0].mxu0
  %v2148 = vadd.f32 %v1955, %v2147
  %2149 = vmatprep.mubr.bf16.mxu0 0
  %2150 = vmatmul.mubr.bf16.gmra.mrb[0].mxu0 %v1380
  %v2151 = vpop.f32.mrb[0].mxu0
  %v2152 = vadd.f32 %v1959, %v2151
  %v2153 = vpop.f32.mrb[0].mxu0
  %v2154 = vadd.f32 %v1961, %v2153
  %v2155 = vpop.f32.mrb[0].mxu0
  %v2156 = vadd.f32 %v1963, %v2155
  %v2157 = vpop.f32.mrb[0].mxu0
  %v2158 = vadd.f32 %v1965, %v2157
  %2159 = vmatprep.mubr.bf16.mxu0 0
  %2160 = vmatmul.mubr.bf16.gmra.mrb[0].mxu0 %v1383
  %v2161 = vpop.f32.mrb[0].mxu0
  %v2162 = vadd.f32 %v1969, %v2161
  %v2163 = vpop.f32.mrb[0].mxu0
  %v2164 = vadd.f32 %v1971, %v2163
  %v2165 = vpop.f32.mrb[0].mxu0
  %v2166 = vadd.f32 %v1973, %v2165
  %v2167 = vpop.f32.mrb[0].mxu0
  %v2168 = vadd.f32 %v1975, %v2167
  %2169 = vdwg.mxu0
  %v2170 = vmax.f32 %v1626, %v1628
  %v2171 = vmax.f32 %v1630, %v1632
  %v2172 = vmax.f32 %v1636, %v1638
  %v2173 = vmax.f32 %v1640, %v1642
  %v2174 = vmax.f32 %v1646, %v1648
  %v2175 = vmax.f32 %v1650, %v1652
  %v2176 = vmax.f32 %v1656, %v1658
  %v2177 = vmax.f32 %v1660, %v1662
  %v2178 = vmax.f32 %v1666, %v1668
  %v2179 = vmax.f32 %v1670, %v1672
  %v2180 = vmax.f32 %v1676, %v1678
  %v2181 = vmax.f32 %v1680, %v1682
  %v2182 = vmax.f32 %v1686, %v1688
  %v2183 = vmax.f32 %v1690, %v1692
  %v2184 = vmax.f32 %v1696, %v1698
  %v2185 = vmax.f32 %v1700, %v1702
  %v2186 = vmax.f32 %v1706, %v1708
  %v2187 = vmax.f32 %v1710, %v1712
  %v2188 = vmax.f32 %v1716, %v1718
  %v2189 = vmax.f32 %v1720, %v1722
  %v2190 = vmax.f32 %v1726, %v1728
  %v2191 = vmax.f32 %v1730, %v1732
  %v2192 = vmax.f32 %v1736, %v1738
  %v2193 = vmax.f32 %v1740, %v1742
  %v2194 = vmax.f32 %v1746, %v1748
  %v2195 = vmax.f32 %v1750, %v1752
  %v2196 = vmax.f32 %v1756, %v1758
  %v2197 = vmax.f32 %v1760, %v1762
  %v2198 = vmax.f32 %v1766, %v1768
  %v2199 = vmax.f32 %v1770, %v1772
  %v2200 = vmax.f32 %v1776, %v1778
  %v2201 = vmax.f32 %v1780, %v1782
  %v2202 = vmax.f32 %v2012, %v2014
  %v2203 = vmax.f32 %v2016, %v2018
  %v2204 = vmax.f32 %v2022, %v2024
  %v2205 = vmax.f32 %v2026, %v2028
  %v2206 = vmax.f32 %v2032, %v2034
  %v2207 = vmax.f32 %v2036, %v2038
  %v2208 = vmax.f32 %v2042, %v2044
  %v2209 = vmax.f32 %v2046, %v2048
  %v2210 = vmax.f32 %v2052, %v2054
  %v2211 = vmax.f32 %v2056, %v2058
  %v2212 = vmax.f32 %v2062, %v2064
  %v2213 = vmax.f32 %v2066, %v2068
  %v2214 = vmax.f32 %v2072, %v2074
  %v2215 = vmax.f32 %v2076, %v2078
  %v2216 = vmax.f32 %v2082, %v2084
  %v2217 = vmax.f32 %v2086, %v2088
  %v2218 = vmax.f32 %v2092, %v2094
  %v2219 = vmax.f32 %v2096, %v2098
  %v2220 = vmax.f32 %v2102, %v2104
  %v2221 = vmax.f32 %v2106, %v2108
  %v2222 = vmax.f32 %v2112, %v2114
  %v2223 = vmax.f32 %v2116, %v2118
  %v2224 = vmax.f32 %v2122, %v2124
  %v2225 = vmax.f32 %v2126, %v2128
  %v2226 = vmax.f32 %v2132, %v2134
  %v2227 = vmax.f32 %v2136, %v2138
  %v2228 = vmax.f32 %v2142, %v2144
  %v2229 = vmax.f32 %v2146, %v2148
  %v2230 = vmax.f32 %v2152, %v2154
  %v2231 = vmax.f32 %v2156, %v2158
  %v2232 = vmax.f32 %v2162, %v2164
  %v2233 = vmax.f32 %v2166, %v2168
  %v2234 = vmax.f32 %v2170, %v2202
  %v2235 = vmax.f32 %v2171, %v2203
  %v2236 = vmax.f32 %v2172, %v2204
  %v2237 = vmax.f32 %v2173, %v2205
  %v2238 = vmax.f32 %v2174, %v2206
  %v2239 = vmax.f32 %v2175, %v2207
  %v2240 = vmax.f32 %v2176, %v2208
  %v2241 = vmax.f32 %v2177, %v2209
  %v2242 = vmax.f32 %v2178, %v2210
  %v2243 = vmax.f32 %v2179, %v2211
  %v2244 = vmax.f32 %v2180, %v2212
  %v2245 = vmax.f32 %v2181, %v2213
  %v2246 = vmax.f32 %v2182, %v2214
  %v2247 = vmax.f32 %v2183, %v2215
  %v2248 = vmax.f32 %v2184, %v2216
  %v2249 = vmax.f32 %v2185, %v2217
  %v2250 = vmax.f32 %v2186, %v2218
  %v2251 = vmax.f32 %v2187, %v2219
  %v2252 = vmax.f32 %v2188, %v2220
  %v2253 = vmax.f32 %v2189, %v2221
  %v2254 = vmax.f32 %v2190, %v2222
  %v2255 = vmax.f32 %v2191, %v2223
  %v2256 = vmax.f32 %v2192, %v2224
  %v2257 = vmax.f32 %v2193, %v2225
  %v2258 = vmax.f32 %v2194, %v2226
  %v2259 = vmax.f32 %v2195, %v2227
  %v2260 = vmax.f32 %v2196, %v2228
  %v2261 = vmax.f32 %v2197, %v2229
  %v2262 = vmax.f32 %v2198, %v2230
  %v2263 = vmax.f32 %v2199, %v2231
  %v2264 = vmax.f32 %v2200, %v2232
  %v2265 = vmax.f32 %v2201, %v2233
  %v2266 = vpack.c.bf16 %v2235, %v2234
  %v2267 = vpack.c.bf16 %v2237, %v2236
  %v2268 = vpack.c.bf16 %v2239, %v2238
  %v2269 = vpack.c.bf16 %v2241, %v2240
  %v2270 = vpack.c.bf16 %v2243, %v2242
  %v2271 = vpack.c.bf16 %v2245, %v2244
  %v2272 = vpack.c.bf16 %v2247, %v2246
  %v2273 = vpack.c.bf16 %v2249, %v2248
  %v2274 = vpack.c.bf16 %v2251, %v2250
  %v2275 = vpack.c.bf16 %v2253, %v2252
  %v2276 = vpack.c.bf16 %v2255, %v2254
  %v2277 = vpack.c.bf16 %v2257, %v2256
  %v2278 = vpack.c.bf16 %v2259, %v2258
  %v2279 = vpack.c.bf16 %v2261, %v2260
  %v2280 = vpack.c.bf16 %v2263, %v2262
  %v2281 = vpack.c.bf16 %v2265, %v2264
  %v2282 = vld [vmem:[%s3] sm:$0xf]
  %v2283 = vld [vmem:[%s3 + $0x4] sm:$0xf]
  %v2284 = vld [vmem:[%s3 + $0x8] sm:$0xf]
  %v2285 = vld [vmem:[%s3 + $0xc] sm:$0xf]
  %v2286 = vld [vmem:[%s3 + $0x10] sm:$0xf]
  %v2287 = vld [vmem:[%s3 + $0x14] sm:$0xf]
  %v2288 = vld [vmem:[%s3 + $0x18] sm:$0xf]
  %v2289 = vld [vmem:[%s3 + $0x1c] sm:$0xf]
  %v2290 = vld [vmem:[%s3 + $0x20] sm:$0xf]
  %v2291 = vld [vmem:[%s3 + $0x24] sm:$0xf]
  %v2292 = vld [vmem:[%s3 + $0x28] sm:$0xf]
  %v2293 = vld [vmem:[%s3 + $0x2c] sm:$0xf]
  %v2294 = vld [vmem:[%s3 + $0x30] sm:$0xf]
  %v2295 = vld [vmem:[%s3 + $0x34] sm:$0xf]
  %v2296 = vld [vmem:[%s3 + $0x38] sm:$0xf]
  %v2297 = vld [vmem:[%s3 + $0x3c] sm:$0xf]
  %v2314 = vunpack.c.l.b16 %v2282
  %v2315 = vunpack.c.l.b16 %v2283
  %v2316 = vunpack.c.l.b16 %v2284
  %v2317 = vunpack.c.l.b16 %v2285
  %v2318 = vunpack.c.l.b16 %v2286
  %v2319 = vunpack.c.l.b16 %v2287
  %v2320 = vunpack.c.l.b16 %v2288
  %v2321 = vunpack.c.l.b16 %v2289
  %v2322 = vunpack.c.l.b16 %v2290
  %v2323 = vunpack.c.l.b16 %v2291
  %v2324 = vunpack.c.l.b16 %v2292
  %v2325 = vunpack.c.l.b16 %v2293
  %v2326 = vunpack.c.l.b16 %v2294
  %v2327 = vunpack.c.l.b16 %v2295
  %v2328 = vunpack.c.l.b16 %v2296
  %v2329 = vunpack.c.l.b16 %v2297
  %v2330 = vpack.c.b16 %v2315, %v2314
  %v2331 = vpack.c.b16 %v2317, %v2316
  %v2332 = vpack.c.b16 %v2319, %v2318
  %v2333 = vpack.c.b16 %v2321, %v2320
  %v2334 = vpack.c.b16 %v2323, %v2322
  %v2335 = vpack.c.b16 %v2325, %v2324
  %v2336 = vpack.c.b16 %v2327, %v2326
  %v2337 = vpack.c.b16 %v2329, %v2328
  %2346 = vmatprep.subr.bf16.mxu0 0
  %2347 = vmatpush1.bf16.msra.mxu0 %v2330
  %2348 = vmatprep.subr.bf16.mxu0 0
  %2349 = vmatpush1.bf16.msra.mxu0 %v2331
  %2350 = vmatprep.subr.bf16.mxu0 0
  %2351 = vmatpush1.bf16.msra.mxu0 %v2332
  %2352 = vmatprep.subr.bf16.mxu0 0
  %2353 = vmatpush1.bf16.msra.mxu0 %v2333
  %2354 = vmatprep.subr.bf16.mxu0 0
  %2355 = vmatpush1.bf16.msra.mxu0 %v2334
  %2356 = vmatprep.subr.bf16.mxu0 0
  %2357 = vmatpush1.bf16.msra.mxu0 %v2335
  %2358 = vmatprep.subr.bf16.mxu0 0
  %2359 = vmatpush1.bf16.msra.mxu0 %v2336
  %2360 = vmatprep.subr.bf16.mxu0 0
  %2361 = vmatpush1.bf16.msra.mxu0 %v2337
  %2362 = vmatprep.subr.bf16.mxu0 0
  %2363 = vmatpush1.bf16.msra.mxu0 0
  %2364 = vmatprep.subr.bf16.mxu0 0
  %2365 = vmatpush1.bf16.msra.mxu0 0
  %2366 = vmatprep.subr.bf16.mxu0 0
  %2367 = vmatpush1.bf16.msra.mxu0 0
  %2368 = vmatprep.subr.bf16.mxu0 0
  %2369 = vmatpush1.bf16.msra.mxu0 0
  %2370 = vmatprep.subr.bf16.mxu0 0
  %2371 = vmatpush1.bf16.msra.mxu0 0
  %2372 = vmatprep.subr.bf16.mxu0 0
  %2373 = vmatpush1.bf16.msra.mxu0 0
  %2374 = vmatprep.subr.bf16.mxu0 0
  %2375 = vmatpush1.bf16.msra.mxu0 0
  %2376 = vmatprep.subr.bf16.mxu0 0
  %2377 = vmatpush1.bf16.msra.mxu0 0
  %2378 = vmatprep.mubr.bf16.mxu0 0
  %2379 = vmatmul.mubr.bf16.gmra.mrb[0].mxu0 %v2266
  %v2380 = vpop.f32.mrb[0].mxu0
  %v2381 = vadd.f32 0.0, %v2380
  %v2382 = vpop.f32.mrb[0].mxu0
  %v2383 = vpop.f32.mrb[0].mxu0
  %v2384 = vadd.f32 0.0, %v2383
  %v2385 = vpop.f32.mrb[0].mxu0
  %2386 = vmatprep.mubr.bf16.mxu0 0
  %2387 = vmatmul.mubr.bf16.gmra.mrb[0].mxu0 %v2267
  %v2388 = vpop.f32.mrb[0].mxu0
  %v2389 = vadd.f32 0.0, %v2388
  %v2390 = vpop.f32.mrb[0].mxu0
  %v2391 = vpop.f32.mrb[0].mxu0
  %v2392 = vadd.f32 0.0, %v2391
  %v2393 = vpop.f32.mrb[0].mxu0
  %2394 = vmatprep.mubr.bf16.mxu0 0
  %2395 = vmatmul.mubr.bf16.gmra.mrb[0].mxu0 %v2268
  %v2396 = vpop.f32.mrb[0].mxu0
  %v2397 = vadd.f32 0.0, %v2396
  %v2398 = vpop.f32.mrb[0].mxu0
  %v2399 = vpop.f32.mrb[0].mxu0
  %v2400 = vadd.f32 0.0, %v2399
  %v2401 = vpop.f32.mrb[0].mxu0
  %2402 = vmatprep.mubr.bf16.mxu0 0
  %2403 = vmatmul.mubr.bf16.gmra.mrb[0].mxu0 %v2269
  %v2404 = vpop.f32.mrb[0].mxu0
  %v2405 = vadd.f32 0.0, %v2404
  %v2406 = vpop.f32.mrb[0].mxu0
  %v2407 = vpop.f32.mrb[0].mxu0
  %v2408 = vadd.f32 0.0, %v2407
  %v2409 = vpop.f32.mrb[0].mxu0
  %2410 = vmatprep.mubr.bf16.mxu0 0
  %2411 = vmatmul.mubr.bf16.gmra.mrb[0].mxu0 %v2270
  %v2412 = vpop.f32.mrb[0].mxu0
  %v2413 = vadd.f32 0.0, %v2412
  %v2414 = vpop.f32.mrb[0].mxu0
  %v2415 = vpop.f32.mrb[0].mxu0
  %v2416 = vadd.f32 0.0, %v2415
  %v2417 = vpop.f32.mrb[0].mxu0
  %2418 = vmatprep.mubr.bf16.mxu0 0
  %2419 = vmatmul.mubr.bf16.gmra.mrb[0].mxu0 %v2271
  %v2420 = vpop.f32.mrb[0].mxu0
  %v2421 = vadd.f32 0.0, %v2420
  %v2422 = vpop.f32.mrb[0].mxu0
  %v2423 = vpop.f32.mrb[0].mxu0
  %v2424 = vadd.f32 0.0, %v2423
  %v2425 = vpop.f32.mrb[0].mxu0
  %2426 = vmatprep.mubr.bf16.mxu0 0
  %2427 = vmatmul.mubr.bf16.gmra.mrb[0].mxu0 %v2272
  %v2428 = vpop.f32.mrb[0].mxu0
  %v2429 = vadd.f32 0.0, %v2428
  %v2430 = vpop.f32.mrb[0].mxu0
  %v2431 = vpop.f32.mrb[0].mxu0
  %v2432 = vadd.f32 0.0, %v2431
  %v2433 = vpop.f32.mrb[0].mxu0
  %2434 = vmatprep.mubr.bf16.mxu0 0
  %2435 = vmatmul.mubr.bf16.gmra.mrb[0].mxu0 %v2273
  %v2436 = vpop.f32.mrb[0].mxu0
  %v2437 = vadd.f32 0.0, %v2436
  %v2438 = vpop.f32.mrb[0].mxu0
  %v2439 = vpop.f32.mrb[0].mxu0
  %v2440 = vadd.f32 0.0, %v2439
  %v2441 = vpop.f32.mrb[0].mxu0
  %2442 = vmatprep.mubr.bf16.mxu0 0
  %2443 = vmatmul.mubr.bf16.gmra.mrb[0].mxu0 %v2274
  %v2444 = vpop.f32.mrb[0].mxu0
  %v2445 = vadd.f32 0.0, %v2444
  %v2446 = vpop.f32.mrb[0].mxu0
  %v2447 = vpop.f32.mrb[0].mxu0
  %v2448 = vadd.f32 0.0, %v2447
  %v2449 = vpop.f32.mrb[0].mxu0
  %2450 = vmatprep.mubr.bf16.mxu0 0
  %2451 = vmatmul.mubr.bf16.gmra.mrb[0].mxu0 %v2275
  %v2452 = vpop.f32.mrb[0].mxu0
  %v2453 = vadd.f32 0.0, %v2452
  %v2454 = vpop.f32.mrb[0].mxu0
  %v2455 = vpop.f32.mrb[0].mxu0
  %v2456 = vadd.f32 0.0, %v2455
  %v2457 = vpop.f32.mrb[0].mxu0
  %2458 = vmatprep.mubr.bf16.mxu0 0
  %2459 = vmatmul.mubr.bf16.gmra.mrb[0].mxu0 %v2276
  %v2460 = vpop.f32.mrb[0].mxu0
  %v2461 = vadd.f32 0.0, %v2460
  %v2462 = vpop.f32.mrb[0].mxu0
  %v2463 = vpop.f32.mrb[0].mxu0
  %v2464 = vadd.f32 0.0, %v2463
  %v2465 = vpop.f32.mrb[0].mxu0
  %2466 = vmatprep.mubr.bf16.mxu0 0
  %2467 = vmatmul.mubr.bf16.gmra.mrb[0].mxu0 %v2277
  %v2468 = vpop.f32.mrb[0].mxu0
  %v2469 = vadd.f32 0.0, %v2468
  %v2470 = vpop.f32.mrb[0].mxu0
  %v2471 = vpop.f32.mrb[0].mxu0
  %v2472 = vadd.f32 0.0, %v2471
  %v2473 = vpop.f32.mrb[0].mxu0
  %2474 = vmatprep.mubr.bf16.mxu0 0
  %2475 = vmatmul.mubr.bf16.gmra.mrb[0].mxu0 %v2278
  %v2476 = vpop.f32.mrb[0].mxu0
  %v2477 = vadd.f32 0.0, %v2476
  %v2478 = vpop.f32.mrb[0].mxu0
  %v2479 = vpop.f32.mrb[0].mxu0
  %v2480 = vadd.f32 0.0, %v2479
  %v2481 = vpop.f32.mrb[0].mxu0
  %2482 = vmatprep.mubr.bf16.mxu0 0
  %2483 = vmatmul.mubr.bf16.gmra.mrb[0].mxu0 %v2279
  %v2484 = vpop.f32.mrb[0].mxu0
  %v2485 = vadd.f32 0.0, %v2484
  %v2486 = vpop.f32.mrb[0].mxu0
  %v2487 = vpop.f32.mrb[0].mxu0
  %v2488 = vadd.f32 0.0, %v2487
  %v2489 = vpop.f32.mrb[0].mxu0
  %2490 = vmatprep.mubr.bf16.mxu0 0
  %2491 = vmatmul.mubr.bf16.gmra.mrb[0].mxu0 %v2280
  %v2492 = vpop.f32.mrb[0].mxu0
  %v2493 = vadd.f32 0.0, %v2492
  %v2494 = vpop.f32.mrb[0].mxu0
  %v2495 = vpop.f32.mrb[0].mxu0
  %v2496 = vadd.f32 0.0, %v2495
  %v2497 = vpop.f32.mrb[0].mxu0
  %2498 = vmatprep.mubr.bf16.mxu0 0
  %2499 = vmatmul.mubr.bf16.gmra.mrb[0].mxu0 %v2281
  %v2500 = vpop.f32.mrb[0].mxu0
  %v2501 = vadd.f32 0.0, %v2500
  %v2502 = vpop.f32.mrb[0].mxu0
  %v2503 = vpop.f32.mrb[0].mxu0
  %v2504 = vadd.f32 0.0, %v2503
  %v2505 = vpop.f32.mrb[0].mxu0
  %2506 = vdwg.mxu0
  %v2507 = vpack.c.bf16 %v2384, %v2381
  %v2508 = vpack.c.bf16 %v2392, %v2389
  %v2509 = vpack.c.bf16 %v2400, %v2397
  %v2510 = vpack.c.bf16 %v2408, %v2405
  %v2511 = vpack.c.bf16 %v2416, %v2413
  %v2512 = vpack.c.bf16 %v2424, %v2421
  %v2513 = vpack.c.bf16 %v2432, %v2429
  %v2514 = vpack.c.bf16 %v2440, %v2437
  %v2515 = vpack.c.bf16 %v2448, %v2445
  %v2516 = vpack.c.bf16 %v2456, %v2453
  %v2517 = vpack.c.bf16 %v2464, %v2461
  %v2518 = vpack.c.bf16 %v2472, %v2469
  %v2519 = vpack.c.bf16 %v2480, %v2477
  %v2520 = vpack.c.bf16 %v2488, %v2485
  %v2521 = vpack.c.bf16 %v2496, %v2493
  %v2522 = vpack.c.bf16 %v2504, %v2501
  %v2523 = vld [vmem:[%s4] sm:$0xff]
  %v2524 = vld [vmem:[%s4 + $0x8] sm:$0xff]
  %v2525 = vld [vmem:[%s4 + $0x10] sm:$0xff]
  %v2526 = vld [vmem:[%s4 + $0x18] sm:$0xff]
  %v2527 = vld [vmem:[%s4 + $0x20] sm:$0xff]
  %v2528 = vld [vmem:[%s4 + $0x28] sm:$0xff]
  %v2529 = vld [vmem:[%s4 + $0x30] sm:$0xff]
  %v2530 = vld [vmem:[%s4 + $0x38] sm:$0xff]
  %v2531 = vld [vmem:[%s4 + $0x40] sm:$0xff]
  %v2532 = vld [vmem:[%s4 + $0x48] sm:$0xff]
  %v2533 = vld [vmem:[%s4 + $0x50] sm:$0xff]
  %v2534 = vld [vmem:[%s4 + $0x58] sm:$0xff]
  %v2535 = vld [vmem:[%s4 + $0x60] sm:$0xff]
  %v2536 = vld [vmem:[%s4 + $0x68] sm:$0xff]
  %v2537 = vld [vmem:[%s4 + $0x70] sm:$0xff]
  %v2538 = vld [vmem:[%s4 + $0x78] sm:$0xff]
  %v2539 = vld [vmem:[%s6] sm:$0xff]
  %v2540 = vld [vmem:[%s6 + $0x8] sm:$0xff]
  %v2541 = vld [vmem:[%s6 + $0x10] sm:$0xff]
  %v2542 = vld [vmem:[%s6 + $0x18] sm:$0xff]
  %v2543 = vld [vmem:[%s6 + $0x20] sm:$0xff]
  %v2544 = vld [vmem:[%s6 + $0x28] sm:$0xff]
  %v2545 = vld [vmem:[%s6 + $0x30] sm:$0xff]
  %v2546 = vld [vmem:[%s6 + $0x38] sm:$0xff]
  %s2547 = scalar_lea.vmem %s3, 64
  %v2548 = vld [vmem:[%s2547] sm:$0xf]
  %v2549 = vld [vmem:[%s2547 + $0x4] sm:$0xf]
  %v2550 = vld [vmem:[%s2547 + $0x8] sm:$0xf]
  %v2551 = vld [vmem:[%s2547 + $0xc] sm:$0xf]
  %v2552 = vld [vmem:[%s2547 + $0x10] sm:$0xf]
  %v2553 = vld [vmem:[%s2547 + $0x14] sm:$0xf]
  %v2554 = vld [vmem:[%s2547 + $0x18] sm:$0xf]
  %v2555 = vld [vmem:[%s2547 + $0x1c] sm:$0xf]
  %v2556 = vld [vmem:[%s2547 + $0x20] sm:$0xf]
  %v2557 = vld [vmem:[%s2547 + $0x24] sm:$0xf]
  %v2558 = vld [vmem:[%s2547 + $0x28] sm:$0xf]
  %v2559 = vld [vmem:[%s2547 + $0x2c] sm:$0xf]
  %v2560 = vld [vmem:[%s2547 + $0x30] sm:$0xf]
  %v2561 = vld [vmem:[%s2547 + $0x34] sm:$0xf]
  %v2562 = vld [vmem:[%s2547 + $0x38] sm:$0xf]
  %v2563 = vld [vmem:[%s2547 + $0x3c] sm:$0xf]
  %v2580 = vunpack.c.l.b16 %v2548
  %v2581 = vunpack.c.l.b16 %v2549
  %v2582 = vunpack.c.l.b16 %v2550
  %v2583 = vunpack.c.l.b16 %v2551
  %v2584 = vunpack.c.l.b16 %v2552
  %v2585 = vunpack.c.l.b16 %v2553
  %v2586 = vunpack.c.l.b16 %v2554
  %v2587 = vunpack.c.l.b16 %v2555
  %v2588 = vunpack.c.l.b16 %v2556
  %v2589 = vunpack.c.l.b16 %v2557
  %v2590 = vunpack.c.l.b16 %v2558
  %v2591 = vunpack.c.l.b16 %v2559
  %v2592 = vunpack.c.l.b16 %v2560
  %v2593 = vunpack.c.l.b16 %v2561
  %v2594 = vunpack.c.l.b16 %v2562
  %v2595 = vunpack.c.l.b16 %v2563
  %v2596 = vpack.c.b16 %v2581, %v2580
  %v2597 = vpack.c.b16 %v2583, %v2582
  %v2598 = vpack.c.b16 %v2585, %v2584
  %v2599 = vpack.c.b16 %v2587, %v2586
  %v2600 = vpack.c.b16 %v2589, %v2588
  %v2601 = vpack.c.b16 %v2591, %v2590
  %v2602 = vpack.c.b16 %v2593, %v2592
  %v2603 = vpack.c.b16 %v2595, %v2594
  %2612 = vmatprep.subr.bf16.mxu0 0
  %2613 = vmatpush1.bf16.msra.mxu0 %v2596
  %2614 = vmatprep.subr.bf16.mxu0 0
  %2615 = vmatpush1.bf16.msra.mxu0 %v2597
  %2616 = vmatprep.subr.bf16.mxu0 0
  %2617 = vmatpush1.bf16.msra.mxu0 %v2598
  %2618 = vmatprep.subr.bf16.mxu0 0
  %2619 = vmatpush1.bf16.msra.mxu0 %v2599
  %2620 = vmatprep.subr.bf16.mxu0 0
  %2621 = vmatpush1.bf16.msra.mxu0 %v2600
  %2622 = vmatprep.subr.bf16.mxu0 0
  %2623 = vmatpush1.bf16.msra.mxu0 %v2601
  %2624 = vmatprep.subr.bf16.mxu0 0
  %2625 = vmatpush1.bf16.msra.mxu0 %v2602
  %2626 = vmatprep.subr.bf16.mxu0 0
  %2627 = vmatpush1.bf16.msra.mxu0 %v2603
  %2628 = vmatprep.subr.bf16.mxu0 0
  %2629 = vmatpush1.bf16.msra.mxu0 0
  %2630 = vmatprep.subr.bf16.mxu0 0
  %2631 = vmatpush1.bf16.msra.mxu0 0
  %2632 = vmatprep.subr.bf16.mxu0 0
  %2633 = vmatpush1.bf16.msra.mxu0 0
  %2634 = vmatprep.subr.bf16.mxu0 0
  %2635 = vmatpush1.bf16.msra.mxu0 0
  %2636 = vmatprep.subr.bf16.mxu0 0
  %2637 = vmatpush1.bf16.msra.mxu0 0
  %2638 = vmatprep.subr.bf16.mxu0 0
  %2639 = vmatpush1.bf16.msra.mxu0 0
  %2640 = vmatprep.subr.bf16.mxu0 0
  %2641 = vmatpush1.bf16.msra.mxu0 0
  %2642 = vmatprep.subr.bf16.mxu0 0
  %2643 = vmatpush1.bf16.msra.mxu0 0
  %2644 = vmatprep.mubr.bf16.mxu0 0
  %2645 = vmatmul.mubr.bf16.gmra.mrb[0].mxu0 %v2266
  %v2646 = vpop.f32.mrb[0].mxu0
  %v2647 = vadd.f32 0.0, %v2646
  %v2648 = vpop.f32.mrb[0].mxu0
  %v2649 = vpop.f32.mrb[0].mxu0
  %v2650 = vadd.f32 0.0, %v2649
  %v2651 = vpop.f32.mrb[0].mxu0
  %2652 = vmatprep.mubr.bf16.mxu0 0
  %2653 = vmatmul.mubr.bf16.gmra.mrb[0].mxu0 %v2267
  %v2654 = vpop.f32.mrb[0].mxu0
  %v2655 = vadd.f32 0.0, %v2654
  %v2656 = vpop.f32.mrb[0].mxu0
  %v2657 = vpop.f32.mrb[0].mxu0
  %v2658 = vadd.f32 0.0, %v2657
  %v2659 = vpop.f32.mrb[0].mxu0
  %2660 = vmatprep.mubr.bf16.mxu0 0
  %2661 = vmatmul.mubr.bf16.gmra.mrb[0].mxu0 %v2268
  %v2662 = vpop.f32.mrb[0].mxu0
  %v2663 = vadd.f32 0.0, %v2662
  %v2664 = vpop.f32.mrb[0].mxu0
  %v2665 = vpop.f32.mrb[0].mxu0
  %v2666 = vadd.f32 0.0, %v2665
  %v2667 = vpop.f32.mrb[0].mxu0
  %2668 = vmatprep.mubr.bf16.mxu0 0
  %2669 = vmatmul.mubr.bf16.gmra.mrb[0].mxu0 %v2269
  %v2670 = vpop.f32.mrb[0].mxu0
  %v2671 = vadd.f32 0.0, %v2670
  %v2672 = vpop.f32.mrb[0].mxu0
  %v2673 = vpop.f32.mrb[0].mxu0
  %v2674 = vadd.f32 0.0, %v2673
  %v2675 = vpop.f32.mrb[0].mxu0
  %2676 = vmatprep.mubr.bf16.mxu0 0
  %2677 = vmatmul.mubr.bf16.gmra.mrb[0].mxu0 %v2270
  %v2678 = vpop.f32.mrb[0].mxu0
  %v2679 = vadd.f32 0.0, %v2678
  %v2680 = vpop.f32.mrb[0].mxu0
  %v2681 = vpop.f32.mrb[0].mxu0
  %v2682 = vadd.f32 0.0, %v2681
  %v2683 = vpop.f32.mrb[0].mxu0
  %2684 = vmatprep.mubr.bf16.mxu0 0
  %2685 = vmatmul.mubr.bf16.gmra.mrb[0].mxu0 %v2271
  %v2686 = vpop.f32.mrb[0].mxu0
  %v2687 = vadd.f32 0.0, %v2686
  %v2688 = vpop.f32.mrb[0].mxu0
  %v2689 = vpop.f32.mrb[0].mxu0
  %v2690 = vadd.f32 0.0, %v2689
  %v2691 = vpop.f32.mrb[0].mxu0
  %2692 = vmatprep.mubr.bf16.mxu0 0
  %2693 = vmatmul.mubr.bf16.gmra.mrb[0].mxu0 %v2272
  %v2694 = vpop.f32.mrb[0].mxu0
  %v2695 = vadd.f32 0.0, %v2694
  %v2696 = vpop.f32.mrb[0].mxu0
  %v2697 = vpop.f32.mrb[0].mxu0
  %v2698 = vadd.f32 0.0, %v2697
  %v2699 = vpop.f32.mrb[0].mxu0
  %2700 = vmatprep.mubr.bf16.mxu0 0
  %2701 = vmatmul.mubr.bf16.gmra.mrb[0].mxu0 %v2273
  %v2702 = vpop.f32.mrb[0].mxu0
  %v2703 = vadd.f32 0.0, %v2702
  %v2704 = vpop.f32.mrb[0].mxu0
  %v2705 = vpop.f32.mrb[0].mxu0
  %v2706 = vadd.f32 0.0, %v2705
  %v2707 = vpop.f32.mrb[0].mxu0
  %2708 = vmatprep.mubr.bf16.mxu0 0
  %2709 = vmatmul.mubr.bf16.gmra.mrb[0].mxu0 %v2274
  %v2710 = vpop.f32.mrb[0].mxu0
  %v2711 = vadd.f32 0.0, %v2710
  %v2712 = vpop.f32.mrb[0].mxu0
  %v2713 = vpop.f32.mrb[0].mxu0
  %v2714 = vadd.f32 0.0, %v2713
  %v2715 = vpop.f32.mrb[0].mxu0
  %2716 = vmatprep.mubr.bf16.mxu0 0
  %2717 = vmatmul.mubr.bf16.gmra.mrb[0].mxu0 %v2275
  %v2718 = vpop.f32.mrb[0].mxu0
  %v2719 = vadd.f32 0.0, %v2718
  %v2720 = vpop.f32.mrb[0].mxu0
  %v2721 = vpop.f32.mrb[0].mxu0
  %v2722 = vadd.f32 0.0, %v2721
  %v2723 = vpop.f32.mrb[0].mxu0
  %2724 = vmatprep.mubr.bf16.mxu0 0
  %2725 = vmatmul.mubr.bf16.gmra.mrb[0].mxu0 %v2276
  %v2726 = vpop.f32.mrb[0].mxu0
  %v2727 = vadd.f32 0.0, %v2726
  %v2728 = vpop.f32.mrb[0].mxu0
  %v2729 = vpop.f32.mrb[0].mxu0
  %v2730 = vadd.f32 0.0, %v2729
  %v2731 = vpop.f32.mrb[0].mxu0
  %2732 = vmatprep.mubr.bf16.mxu0 0
  %2733 = vmatmul.mubr.bf16.gmra.mrb[0].mxu0 %v2277
  %v2734 = vpop.f32.mrb[0].mxu0
  %v2735 = vadd.f32 0.0, %v2734
  %v2736 = vpop.f32.mrb[0].mxu0
  %v2737 = vpop.f32.mrb[0].mxu0
  %v2738 = vadd.f32 0.0, %v2737
  %v2739 = vpop.f32.mrb[0].mxu0
  %2740 = vmatprep.mubr.bf16.mxu0 0
  %2741 = vmatmul.mubr.bf16.gmra.mrb[0].mxu0 %v2278
  %v2742 = vpop.f32.mrb[0].mxu0
  %v2743 = vadd.f32 0.0, %v2742
  %v2744 = vpop.f32.mrb[0].mxu0
  %v2745 = vpop.f32.mrb[0].mxu0
  %v2746 = vadd.f32 0.0, %v2745
  %v2747 = vpop.f32.mrb[0].mxu0
  %2748 = vmatprep.mubr.bf16.mxu0 0
  %2749 = vmatmul.mubr.bf16.gmra.mrb[0].mxu0 %v2279
  %v2750 = vpop.f32.mrb[0].mxu0
  %v2751 = vadd.f32 0.0, %v2750
  %v2752 = vpop.f32.mrb[0].mxu0
  %v2753 = vpop.f32.mrb[0].mxu0
  %v2754 = vadd.f32 0.0, %v2753
  %v2755 = vpop.f32.mrb[0].mxu0
  %2756 = vmatprep.mubr.bf16.mxu0 0
  %2757 = vmatmul.mubr.bf16.gmra.mrb[0].mxu0 %v2280
  %v2758 = vpop.f32.mrb[0].mxu0
  %v2759 = vadd.f32 0.0, %v2758
  %v2760 = vpop.f32.mrb[0].mxu0
  %v2761 = vpop.f32.mrb[0].mxu0
  %v2762 = vadd.f32 0.0, %v2761
  %v2763 = vpop.f32.mrb[0].mxu0
  %2764 = vmatprep.mubr.bf16.mxu0 0
  %2765 = vmatmul.mubr.bf16.gmra.mrb[0].mxu0 %v2281
  %v2766 = vpop.f32.mrb[0].mxu0
  %v2767 = vadd.f32 0.0, %v2766
  %v2768 = vpop.f32.mrb[0].mxu0
  %v2769 = vpop.f32.mrb[0].mxu0
  %v2770 = vadd.f32 0.0, %v2769
  %v2771 = vpop.f32.mrb[0].mxu0
  %2772 = vdwg.mxu0
  %v2773 = vpack.c.bf16 %v2650, %v2647
  %v2774 = vpack.c.bf16 %v2658, %v2655
  %v2775 = vpack.c.bf16 %v2666, %v2663
  %v2776 = vpack.c.bf16 %v2674, %v2671
  %v2777 = vpack.c.bf16 %v2682, %v2679
  %v2778 = vpack.c.bf16 %v2690, %v2687
  %v2779 = vpack.c.bf16 %v2698, %v2695
  %v2780 = vpack.c.bf16 %v2706, %v2703
  %v2781 = vpack.c.bf16 %v2714, %v2711
  %v2782 = vpack.c.bf16 %v2722, %v2719
  %v2783 = vpack.c.bf16 %v2730, %v2727
  %v2784 = vpack.c.bf16 %v2738, %v2735
  %v2785 = vpack.c.bf16 %v2746, %v2743
  %v2786 = vpack.c.bf16 %v2754, %v2751
  %v2787 = vpack.c.bf16 %v2762, %v2759
  %v2788 = vpack.c.bf16 %v2770, %v2767
  %s2789 = scalar_lea.vmem %s4, 128
  %v2790 = vld [vmem:[%s2789] sm:$0xff]
  %v2791 = vld [vmem:[%s2789 + $0x8] sm:$0xff]
  %v2792 = vld [vmem:[%s2789 + $0x10] sm:$0xff]
  %v2793 = vld [vmem:[%s2789 + $0x18] sm:$0xff]
  %v2794 = vld [vmem:[%s2789 + $0x20] sm:$0xff]
  %v2795 = vld [vmem:[%s2789 + $0x28] sm:$0xff]
  %v2796 = vld [vmem:[%s2789 + $0x30] sm:$0xff]
  %v2797 = vld [vmem:[%s2789 + $0x38] sm:$0xff]
  %v2798 = vld [vmem:[%s2789 + $0x40] sm:$0xff]
  %v2799 = vld [vmem:[%s2789 + $0x48] sm:$0xff]
  %v2800 = vld [vmem:[%s2789 + $0x50] sm:$0xff]
  %v2801 = vld [vmem:[%s2789 + $0x58] sm:$0xff]
  %v2802 = vld [vmem:[%s2789 + $0x60] sm:$0xff]
  %v2803 = vld [vmem:[%s2789 + $0x68] sm:$0xff]
  %v2804 = vld [vmem:[%s2789 + $0x70] sm:$0xff]
  %v2805 = vld [vmem:[%s2789 + $0x78] sm:$0xff]
  %v2822 = vunpack.c.l.b16 %v2790
  %v2823 = vunpack.c.h.b16 %v2790
  %v2824 = vunpack.c.l.b16 %v2791
  %v2825 = vunpack.c.h.b16 %v2791
  %v2826 = vunpack.c.l.b16 %v2792
  %v2827 = vunpack.c.h.b16 %v2792
  %v2828 = vunpack.c.l.b16 %v2793
  %v2829 = vunpack.c.h.b16 %v2793
  %v2830 = vunpack.c.l.b16 %v2794
  %v2831 = vunpack.c.h.b16 %v2794
  %v2832 = vunpack.c.l.b16 %v2795
  %v2833 = vunpack.c.h.b16 %v2795
  %v2834 = vunpack.c.l.b16 %v2796
  %v2835 = vunpack.c.h.b16 %v2796
  %v2836 = vunpack.c.l.b16 %v2797
  %v2837 = vunpack.c.h.b16 %v2797
  %v2838 = vunpack.c.l.b16 %v2798
  %v2839 = vunpack.c.h.b16 %v2798
  %v2840 = vunpack.c.l.b16 %v2799
  %v2841 = vunpack.c.h.b16 %v2799
  %v2842 = vunpack.c.l.b16 %v2800
  %v2843 = vunpack.c.h.b16 %v2800
  %v2844 = vunpack.c.l.b16 %v2801
  %v2845 = vunpack.c.h.b16 %v2801
  %v2846 = vunpack.c.l.b16 %v2802
  %v2847 = vunpack.c.h.b16 %v2802
  %v2848 = vunpack.c.l.b16 %v2803
  %v2849 = vunpack.c.h.b16 %v2803
  %v2850 = vunpack.c.l.b16 %v2804
  %v2851 = vunpack.c.h.b16 %v2804
  %v2852 = vunpack.c.l.b16 %v2805
  %v2853 = vunpack.c.h.b16 %v2805
  %v2854 = vpack.c.b16 %v2824, %v2822
  %v2855 = vpack.c.b16 %v2825, %v2823
  %v2856 = vpack.c.b16 %v2828, %v2826
  %v2857 = vpack.c.b16 %v2829, %v2827
  %v2858 = vpack.c.b16 %v2832, %v2830
  %v2859 = vpack.c.b16 %v2833, %v2831
  %v2860 = vpack.c.b16 %v2836, %v2834
  %v2861 = vpack.c.b16 %v2837, %v2835
  %v2862 = vpack.c.b16 %v2840, %v2838
  %v2863 = vpack.c.b16 %v2841, %v2839
  %v2864 = vpack.c.b16 %v2844, %v2842
  %v2865 = vpack.c.b16 %v2845, %v2843
  %v2866 = vpack.c.b16 %v2848, %v2846
  %v2867 = vpack.c.b16 %v2849, %v2847
  %v2868 = vpack.c.b16 %v2852, %v2850
  %v2869 = vpack.c.b16 %v2853, %v2851
  %2886 = vmatprep.subr.bf16.mxu0 0
  %2887 = vmatpush1.bf16.msra.mxu0 %v2773
  %2888 = vmatprep.subr.bf16.mxu0 0
  %2889 = vmatpush1.bf16.msra.mxu0 %v2774
  %2890 = vmatprep.subr.bf16.mxu0 0
  %2891 = vmatpush1.bf16.msra.mxu0 %v2775
  %2892 = vmatprep.subr.bf16.mxu0 0
  %2893 = vmatpush1.bf16.msra.mxu0 %v2776
  %2894 = vmatprep.subr.bf16.mxu0 0
  %2895 = vmatpush1.bf16.msra.mxu0 %v2777
  %2896 = vmatprep.subr.bf16.mxu0 0
  %2897 = vmatpush1.bf16.msra.mxu0 %v2778
  %2898 = vmatprep.subr.bf16.mxu0 0
  %2899 = vmatpush1.bf16.msra.mxu0 %v2779
  %2900 = vmatprep.subr.bf16.mxu0 0
  %2901 = vmatpush1.bf16.msra.mxu0 %v2780
  %2902 = vmatprep.subr.bf16.mxu0 0
  %2903 = vmatpush1.bf16.msra.mxu0 %v2781
  %2904 = vmatprep.subr.bf16.mxu0 0
  %2905 = vmatpush1.bf16.msra.mxu0 %v2782
  %2906 = vmatprep.subr.bf16.mxu0 0
  %2907 = vmatpush1.bf16.msra.mxu0 %v2783
  %2908 = vmatprep.subr.bf16.mxu0 0
  %2909 = vmatpush1.bf16.msra.mxu0 %v2784
  %2910 = vmatprep.subr.bf16.mxu0 0
  %2911 = vmatpush1.bf16.msra.mxu0 %v2785
  %2912 = vmatprep.subr.bf16.mxu0 0
  %2913 = vmatpush1.bf16.msra.mxu0 %v2786
  %2914 = vmatprep.subr.bf16.mxu0 0
  %2915 = vmatpush1.bf16.msra.mxu0 %v2787
  %2916 = vmatprep.subr.bf16.mxu0 0
  %2917 = vmatpush1.bf16.msra.mxu0 %v2788
  %2918 = vmatprep.mubr.bf16.mxu0 %v2855
  %2919 = vmatmul.mubr.bf16.gmra.mrb[0].mxu0 %v2854
  %v2920 = vpop.f32.mrb[0].mxu0
  %v2921 = vadd.f32 0.0, %v2920
  %v2922 = vpop.f32.mrb[0].mxu0
  %v2923 = vpop.f32.mrb[0].mxu0
  %v2924 = vadd.f32 0.0, %v2923
  %v2925 = vpop.f32.mrb[0].mxu0
  %2926 = vmatprep.mubr.bf16.mxu0 %v2857
  %2927 = vmatmul.mubr.bf16.gmra.mrb[0].mxu0 %v2856
  %v2928 = vpop.f32.mrb[0].mxu0
  %v2929 = vadd.f32 0.0, %v2928
  %v2930 = vpop.f32.mrb[0].mxu0
  %v2931 = vpop.f32.mrb[0].mxu0
  %v2932 = vadd.f32 0.0, %v2931
  %v2933 = vpop.f32.mrb[0].mxu0
  %2934 = vmatprep.mubr.bf16.mxu0 %v2859
  %2935 = vmatmul.mubr.bf16.gmra.mrb[0].mxu0 %v2858
  %v2936 = vpop.f32.mrb[0].mxu0
  %v2937 = vadd.f32 0.0, %v2936
  %v2938 = vpop.f32.mrb[0].mxu0
  %v2939 = vpop.f32.mrb[0].mxu0
  %v2940 = vadd.f32 0.0, %v2939
  %v2941 = vpop.f32.mrb[0].mxu0
  %2942 = vmatprep.mubr.bf16.mxu0 %v2861
  %2943 = vmatmul.mubr.bf16.gmra.mrb[0].mxu0 %v2860
  %v2944 = vpop.f32.mrb[0].mxu0
  %v2945 = vadd.f32 0.0, %v2944
  %v2946 = vpop.f32.mrb[0].mxu0
  %v2947 = vpop.f32.mrb[0].mxu0
  %v2948 = vadd.f32 0.0, %v2947
  %v2949 = vpop.f32.mrb[0].mxu0
  %2950 = vmatprep.mubr.bf16.mxu0 %v2863
  %2951 = vmatmul.mubr.bf16.gmra.mrb[0].mxu0 %v2862
  %v2952 = vpop.f32.mrb[0].mxu0
  %v2953 = vadd.f32 0.0, %v2952
  %v2954 = vpop.f32.mrb[0].mxu0
  %v2955 = vpop.f32.mrb[0].mxu0
  %v2956 = vadd.f32 0.0, %v2955
  %v2957 = vpop.f32.mrb[0].mxu0
  %2958 = vmatprep.mubr.bf16.mxu0 %v2865
  %2959 = vmatmul.mubr.bf16.gmra.mrb[0].mxu0 %v2864
  %v2960 = vpop.f32.mrb[0].mxu0
  %v2961 = vadd.f32 0.0, %v2960
  %v2962 = vpop.f32.mrb[0].mxu0
  %v2963 = vpop.f32.mrb[0].mxu0
  %v2964 = vadd.f32 0.0, %v2963
  %v2965 = vpop.f32.mrb[0].mxu0
  %2966 = vmatprep.mubr.bf16.mxu0 %v2867
  %2967 = vmatmul.mubr.bf16.gmra.mrb[0].mxu0 %v2866
  %v2968 = vpop.f32.mrb[0].mxu0
  %v2969 = vadd.f32 0.0, %v2968
  %v2970 = vpop.f32.mrb[0].mxu0
  %v2971 = vpop.f32.mrb[0].mxu0
  %v2972 = vadd.f32 0.0, %v2971
  %v2973 = vpop.f32.mrb[0].mxu0
  %2974 = vmatprep.mubr.bf16.mxu0 %v2869
  %2975 = vmatmul.mubr.bf16.gmra.mrb[0].mxu0 %v2868
  %v2976 = vpop.f32.mrb[0].mxu0
  %v2977 = vadd.f32 0.0, %v2976
  %v2978 = vpop.f32.mrb[0].mxu0
  %v2979 = vpop.f32.mrb[0].mxu0
  %v2980 = vadd.f32 0.0, %v2979
  %v2981 = vpop.f32.mrb[0].mxu0
  %2982 = vdwg.mxu0
  %v2999 = vunpack.c.l.b16 %v2523
  %v3000 = vunpack.c.h.b16 %v2523
  %v3001 = vunpack.c.l.b16 %v2524
  %v3002 = vunpack.c.h.b16 %v2524
  %v3003 = vunpack.c.l.b16 %v2525
  %v3004 = vunpack.c.h.b16 %v2525
  %v3005 = vunpack.c.l.b16 %v2526
  %v3006 = vunpack.c.h.b16 %v2526
  %v3007 = vunpack.c.l.b16 %v2527
  %v3008 = vunpack.c.h.b16 %v2527
  %v3009 = vunpack.c.l.b16 %v2528
  %v3010 = vunpack.c.h.b16 %v2528
  %v3011 = vunpack.c.l.b16 %v2529
  %v3012 = vunpack.c.h.b16 %v2529
  %v3013 = vunpack.c.l.b16 %v2530
  %v3014 = vunpack.c.h.b16 %v2530
  %v3015 = vunpack.c.l.b16 %v2531
  %v3016 = vunpack.c.h.b16 %v2531
  %v3017 = vunpack.c.l.b16 %v2532
  %v3018 = vunpack.c.h.b16 %v2532
  %v3019 = vunpack.c.l.b16 %v2533
  %v3020 = vunpack.c.h.b16 %v2533
  %v3021 = vunpack.c.l.b16 %v2534
  %v3022 = vunpack.c.h.b16 %v2534
  %v3023 = vunpack.c.l.b16 %v2535
  %v3024 = vunpack.c.h.b16 %v2535
  %v3025 = vunpack.c.l.b16 %v2536
  %v3026 = vunpack.c.h.b16 %v2536
  %v3027 = vunpack.c.l.b16 %v2537
  %v3028 = vunpack.c.h.b16 %v2537
  %v3029 = vunpack.c.l.b16 %v2538
  %v3030 = vunpack.c.h.b16 %v2538
  %v3031 = vpack.c.b16 %v3001, %v2999
  %v3032 = vpack.c.b16 %v3002, %v3000
  %v3033 = vpack.c.b16 %v3005, %v3003
  %v3034 = vpack.c.b16 %v3006, %v3004
  %v3035 = vpack.c.b16 %v3009, %v3007
  %v3036 = vpack.c.b16 %v3010, %v3008
  %v3037 = vpack.c.b16 %v3013, %v3011
  %v3038 = vpack.c.b16 %v3014, %v3012
  %v3039 = vpack.c.b16 %v3017, %v3015
  %v3040 = vpack.c.b16 %v3018, %v3016
  %v3041 = vpack.c.b16 %v3021, %v3019
  %v3042 = vpack.c.b16 %v3022, %v3020
  %v3043 = vpack.c.b16 %v3025, %v3023
  %v3044 = vpack.c.b16 %v3026, %v3024
  %v3045 = vpack.c.b16 %v3029, %v3027
  %v3046 = vpack.c.b16 %v3030, %v3028
  %3063 = vmatprep.subr.bf16.mxu0 0
  %3064 = vmatpush1.bf16.msra.mxu0 %v2507
  %3065 = vmatprep.subr.bf16.mxu0 0
  %3066 = vmatpush1.bf16.msra.mxu0 %v2508
  %3067 = vmatprep.subr.bf16.mxu0 0
  %3068 = vmatpush1.bf16.msra.mxu0 %v2509
  %3069 = vmatprep.subr.bf16.mxu0 0
  %3070 = vmatpush1.bf16.msra.mxu0 %v2510
  %3071 = vmatprep.subr.bf16.mxu0 0
  %3072 = vmatpush1.bf16.msra.mxu0 %v2511
  %3073 = vmatprep.subr.bf16.mxu0 0
  %3074 = vmatpush1.bf16.msra.mxu0 %v2512
  %3075 = vmatprep.subr.bf16.mxu0 0
  %3076 = vmatpush1.bf16.msra.mxu0 %v2513
  %3077 = vmatprep.subr.bf16.mxu0 0
  %3078 = vmatpush1.bf16.msra.mxu0 %v2514
  %3079 = vmatprep.subr.bf16.mxu0 0
  %3080 = vmatpush1.bf16.msra.mxu0 %v2515
  %3081 = vmatprep.subr.bf16.mxu0 0
  %3082 = vmatpush1.bf16.msra.mxu0 %v2516
  %3083 = vmatprep.subr.bf16.mxu0 0
  %3084 = vmatpush1.bf16.msra.mxu0 %v2517
  %3085 = vmatprep.subr.bf16.mxu0 0
  %3086 = vmatpush1.bf16.msra.mxu0 %v2518
  %3087 = vmatprep.subr.bf16.mxu0 0
  %3088 = vmatpush1.bf16.msra.mxu0 %v2519
  %3089 = vmatprep.subr.bf16.mxu0 0
  %3090 = vmatpush1.bf16.msra.mxu0 %v2520
  %3091 = vmatprep.subr.bf16.mxu0 0
  %3092 = vmatpush1.bf16.msra.mxu0 %v2521
  %3093 = vmatprep.subr.bf16.mxu0 0
  %3094 = vmatpush1.bf16.msra.mxu0 %v2522
  %3095 = vmatprep.mubr.bf16.mxu0 %v3032
  %3096 = vmatmul.mubr.bf16.gmra.mrb[0].mxu0 %v3031
  %v3097 = vpop.f32.mrb[0].mxu0
  %v3098 = vadd.f32 %v2921, %v3097
  %v3099 = vpop.f32.mrb[0].mxu0
  %v3100 = vpop.f32.mrb[0].mxu0
  %v3101 = vadd.f32 %v2924, %v3100
  %v3102 = vpop.f32.mrb[0].mxu0
  %3103 = vmatprep.mubr.bf16.mxu0 %v3034
  %3104 = vmatmul.mubr.bf16.gmra.mrb[0].mxu0 %v3033
  %v3105 = vpop.f32.mrb[0].mxu0
  %v3106 = vadd.f32 %v2929, %v3105
  %v3107 = vpop.f32.mrb[0].mxu0
  %v3108 = vpop.f32.mrb[0].mxu0
  %v3109 = vadd.f32 %v2932, %v3108
  %v3110 = vpop.f32.mrb[0].mxu0
  %3111 = vmatprep.mubr.bf16.mxu0 %v3036
  %3112 = vmatmul.mubr.bf16.gmra.mrb[0].mxu0 %v3035
  %v3113 = vpop.f32.mrb[0].mxu0
  %v3114 = vadd.f32 %v2937, %v3113
  %v3115 = vpop.f32.mrb[0].mxu0
  %v3116 = vpop.f32.mrb[0].mxu0
  %v3117 = vadd.f32 %v2940, %v3116
  %v3118 = vpop.f32.mrb[0].mxu0
  %3119 = vmatprep.mubr.bf16.mxu0 %v3038
  %3120 = vmatmul.mubr.bf16.gmra.mrb[0].mxu0 %v3037
  %v3121 = vpop.f32.mrb[0].mxu0
  %v3122 = vadd.f32 %v2945, %v3121
  %v3123 = vpop.f32.mrb[0].mxu0
  %v3124 = vpop.f32.mrb[0].mxu0
  %v3125 = vadd.f32 %v2948, %v3124
  %v3126 = vpop.f32.mrb[0].mxu0
  %3127 = vmatprep.mubr.bf16.mxu0 %v3040
  %3128 = vmatmul.mubr.bf16.gmra.mrb[0].mxu0 %v3039
  %v3129 = vpop.f32.mrb[0].mxu0
  %v3130 = vadd.f32 %v2953, %v3129
  %v3131 = vpop.f32.mrb[0].mxu0
  %v3132 = vpop.f32.mrb[0].mxu0
  %v3133 = vadd.f32 %v2956, %v3132
  %v3134 = vpop.f32.mrb[0].mxu0
  %3135 = vmatprep.mubr.bf16.mxu0 %v3042
  %3136 = vmatmul.mubr.bf16.gmra.mrb[0].mxu0 %v3041
  %v3137 = vpop.f32.mrb[0].mxu0
  %v3138 = vadd.f32 %v2961, %v3137
  %v3139 = vpop.f32.mrb[0].mxu0
  %v3140 = vpop.f32.mrb[0].mxu0
  %v3141 = vadd.f32 %v2964, %v3140
  %v3142 = vpop.f32.mrb[0].mxu0
  %3143 = vmatprep.mubr.bf16.mxu0 %v3044
  %3144 = vmatmul.mubr.bf16.gmra.mrb[0].mxu0 %v3043
  %v3145 = vpop.f32.mrb[0].mxu0
  %v3146 = vadd.f32 %v2969, %v3145
  %v3147 = vpop.f32.mrb[0].mxu0
  %v3148 = vpop.f32.mrb[0].mxu0
  %v3149 = vadd.f32 %v2972, %v3148
  %v3150 = vpop.f32.mrb[0].mxu0
  %3151 = vmatprep.mubr.bf16.mxu0 %v3046
  %3152 = vmatmul.mubr.bf16.gmra.mrb[0].mxu0 %v3045
  %v3153 = vpop.f32.mrb[0].mxu0
  %v3154 = vadd.f32 %v2977, %v3153
  %v3155 = vpop.f32.mrb[0].mxu0
  %v3156 = vpop.f32.mrb[0].mxu0
  %v3157 = vadd.f32 %v2980, %v3156
  %v3158 = vpop.f32.mrb[0].mxu0
  %3159 = vdwg.mxu0
  %s3160 = scalar_lea.vmem %s6, 64
  %v3161 = vld [vmem:[%s3160] sm:$0xff]
  %v3162 = vld [vmem:[%s3160 + $0x8] sm:$0xff]
  %v3163 = vld [vmem:[%s3160 + $0x10] sm:$0xff]
  %v3164 = vld [vmem:[%s3160 + $0x18] sm:$0xff]
  %v3165 = vld [vmem:[%s3160 + $0x20] sm:$0xff]
  %v3166 = vld [vmem:[%s3160 + $0x28] sm:$0xff]
  %v3167 = vld [vmem:[%s3160 + $0x30] sm:$0xff]
  %v3168 = vld [vmem:[%s3160 + $0x38] sm:$0xff]
  %v3177 = vunpack.c.l.b16 %v3161
  %v3178 = vunpack.c.h.b16 %v3161
  %v3179 = vunpack.c.l.b16 %v3162
  %v3180 = vunpack.c.h.b16 %v3162
  %v3181 = vunpack.c.l.b16 %v3163
  %v3182 = vunpack.c.h.b16 %v3163
  %v3183 = vunpack.c.l.b16 %v3164
  %v3184 = vunpack.c.h.b16 %v3164
  %v3185 = vunpack.c.l.b16 %v3165
  %v3186 = vunpack.c.h.b16 %v3165
  %v3187 = vunpack.c.l.b16 %v3166
  %v3188 = vunpack.c.h.b16 %v3166
  %v3189 = vunpack.c.l.b16 %v3167
  %v3190 = vunpack.c.h.b16 %v3167
  %v3191 = vunpack.c.l.b16 %v3168
  %v3192 = vunpack.c.h.b16 %v3168
  %v3193 = vpack.c.b16 %v3179, %v3177
  %v3194 = vpack.c.b16 %v3180, %v3178
  %v3195 = vpack.c.b16 %v3183, %v3181
  %v3196 = vpack.c.b16 %v3184, %v3182
  %v3197 = vpack.c.b16 %v3187, %v3185
  %v3198 = vpack.c.b16 %v3188, %v3186
  %v3199 = vpack.c.b16 %v3191, %v3189
  %v3200 = vpack.c.b16 %v3192, %v3190
  %3209 = vmatprep.subr.bf16.mxu0 0
  %3210 = vmatpush1.bf16.msra.mxu0 %v2773
  %3211 = vmatprep.subr.bf16.mxu0 0
  %3212 = vmatpush1.bf16.msra.mxu0 %v2774
  %3213 = vmatprep.subr.bf16.mxu0 0
  %3214 = vmatpush1.bf16.msra.mxu0 %v2775
  %3215 = vmatprep.subr.bf16.mxu0 0
  %3216 = vmatpush1.bf16.msra.mxu0 %v2776
  %3217 = vmatprep.subr.bf16.mxu0 0
  %3218 = vmatpush1.bf16.msra.mxu0 %v2777
  %3219 = vmatprep.subr.bf16.mxu0 0
  %3220 = vmatpush1.bf16.msra.mxu0 %v2778
  %3221 = vmatprep.subr.bf16.mxu0 0
  %3222 = vmatpush1.bf16.msra.mxu0 %v2779
  %3223 = vmatprep.subr.bf16.mxu0 0
  %3224 = vmatpush1.bf16.msra.mxu0 %v2780
  %3225 = vmatprep.subr.bf16.mxu0 0
  %3226 = vmatpush1.bf16.msra.mxu0 %v2781
  %3227 = vmatprep.subr.bf16.mxu0 0
  %3228 = vmatpush1.bf16.msra.mxu0 %v2782
  %3229 = vmatprep.subr.bf16.mxu0 0
  %3230 = vmatpush1.bf16.msra.mxu0 %v2783
  %3231 = vmatprep.subr.bf16.mxu0 0
  %3232 = vmatpush1.bf16.msra.mxu0 %v2784
  %3233 = vmatprep.subr.bf16.mxu0 0
  %3234 = vmatpush1.bf16.msra.mxu0 %v2785
  %3235 = vmatprep.subr.bf16.mxu0 0
  %3236 = vmatpush1.bf16.msra.mxu0 %v2786
  %3237 = vmatprep.subr.bf16.mxu0 0
  %3238 = vmatpush1.bf16.msra.mxu0 %v2787
  %3239 = vmatprep.subr.bf16.mxu0 0
  %3240 = vmatpush1.bf16.msra.mxu0 %v2788
  %3241 = vmatprep.mubr.bf16.mxu0 %v3194
  %3242 = vmatmul.mubr.bf16.gmra.mrb[0].mxu0 %v3193
  %v3243 = vpop.f32.mrb[0].mxu0
  %v3244 = vadd.f32 0.0, %v3243
  %v3245 = vpop.f32.mrb[0].mxu0
  %v3246 = vpop.f32.mrb[0].mxu0
  %v3247 = vadd.f32 0.0, %v3246
  %v3248 = vpop.f32.mrb[0].mxu0
  %3249 = vmatprep.mubr.bf16.mxu0 %v3196
  %3250 = vmatmul.mubr.bf16.gmra.mrb[0].mxu0 %v3195
  %v3251 = vpop.f32.mrb[0].mxu0
  %v3252 = vadd.f32 0.0, %v3251
  %v3253 = vpop.f32.mrb[0].mxu0
  %v3254 = vpop.f32.mrb[0].mxu0
  %v3255 = vadd.f32 0.0, %v3254
  %v3256 = vpop.f32.mrb[0].mxu0
  %3257 = vmatprep.mubr.bf16.mxu0 %v3198
  %3258 = vmatmul.mubr.bf16.gmra.mrb[0].mxu0 %v3197
  %v3259 = vpop.f32.mrb[0].mxu0
  %v3260 = vadd.f32 0.0, %v3259
  %v3261 = vpop.f32.mrb[0].mxu0
  %v3262 = vpop.f32.mrb[0].mxu0
  %v3263 = vadd.f32 0.0, %v3262
  %v3264 = vpop.f32.mrb[0].mxu0
  %3265 = vmatprep.mubr.bf16.mxu0 %v3200
  %3266 = vmatmul.mubr.bf16.gmra.mrb[0].mxu0 %v3199
  %v3267 = vpop.f32.mrb[0].mxu0
  %v3268 = vadd.f32 0.0, %v3267
  %v3269 = vpop.f32.mrb[0].mxu0
  %v3270 = vpop.f32.mrb[0].mxu0
  %v3271 = vadd.f32 0.0, %v3270
  %v3272 = vpop.f32.mrb[0].mxu0
  %3273 = vdwg.mxu0
  %v3282 = vunpack.c.l.b16 %v2539
  %v3283 = vunpack.c.h.b16 %v2539
  %v3284 = vunpack.c.l.b16 %v2540
  %v3285 = vunpack.c.h.b16 %v2540
  %v3286 = vunpack.c.l.b16 %v2541
  %v3287 = vunpack.c.h.b16 %v2541
  %v3288 = vunpack.c.l.b16 %v2542
  %v3289 = vunpack.c.h.b16 %v2542
  %v3290 = vunpack.c.l.b16 %v2543
  %v3291 = vunpack.c.h.b16 %v2543
  %v3292 = vunpack.c.l.b16 %v2544
  %v3293 = vunpack.c.h.b16 %v2544
  %v3294 = vunpack.c.l.b16 %v2545
  %v3295 = vunpack.c.h.b16 %v2545
  %v3296 = vunpack.c.l.b16 %v2546
  %v3297 = vunpack.c.h.b16 %v2546
  %v3298 = vpack.c.b16 %v3284, %v3282
  %v3299 = vpack.c.b16 %v3285, %v3283
  %v3300 = vpack.c.b16 %v3288, %v3286
  %v3301 = vpack.c.b16 %v3289, %v3287
  %v3302 = vpack.c.b16 %v3292, %v3290
  %v3303 = vpack.c.b16 %v3293, %v3291
  %v3304 = vpack.c.b16 %v3296, %v3294
  %v3305 = vpack.c.b16 %v3297, %v3295
  %3314 = vmatprep.subr.bf16.mxu0 0
  %3315 = vmatpush1.bf16.msra.mxu0 %v2507
  %3316 = vmatprep.subr.bf16.mxu0 0
  %3317 = vmatpush1.bf16.msra.mxu0 %v2508
  %3318 = vmatprep.subr.bf16.mxu0 0
  %3319 = vmatpush1.bf16.msra.mxu0 %v2509
  %3320 = vmatprep.subr.bf16.mxu0 0
  %3321 = vmatpush1.bf16.msra.mxu0 %v2510
  %3322 = vmatprep.subr.bf16.mxu0 0
  %3323 = vmatpush1.bf16.msra.mxu0 %v2511
  %3324 = vmatprep.subr.bf16.mxu0 0
  %3325 = vmatpush1.bf16.msra.mxu0 %v2512
  %3326 = vmatprep.subr.bf16.mxu0 0
  %3327 = vmatpush1.bf16.msra.mxu0 %v2513
  %3328 = vmatprep.subr.bf16.mxu0 0
  %3329 = vmatpush1.bf16.msra.mxu0 %v2514
  %3330 = vmatprep.subr.bf16.mxu0 0
  %3331 = vmatpush1.bf16.msra.mxu0 %v2515
  %3332 = vmatprep.subr.bf16.mxu0 0
  %3333 = vmatpush1.bf16.msra.mxu0 %v2516
  %3334 = vmatprep.subr.bf16.mxu0 0
  %3335 = vmatpush1.bf16.msra.mxu0 %v2517
  %3336 = vmatprep.subr.bf16.mxu0 0
  %3337 = vmatpush1.bf16.msra.mxu0 %v2518
  %3338 = vmatprep.subr.bf16.mxu0 0
  %3339 = vmatpush1.bf16.msra.mxu0 %v2519
  %3340 = vmatprep.subr.bf16.mxu0 0
  %3341 = vmatpush1.bf16.msra.mxu0 %v2520
  %3342 = vmatprep.subr.bf16.mxu0 0
  %3343 = vmatpush1.bf16.msra.mxu0 %v2521
  %3344 = vmatprep.subr.bf16.mxu0 0
  %3345 = vmatpush1.bf16.msra.mxu0 %v2522
  %3346 = vmatprep.mubr.bf16.mxu0 %v3299
  %3347 = vmatmul.mubr.bf16.gmra.mrb[0].mxu0 %v3298
  %v3348 = vpop.f32.mrb[0].mxu0
  %v3349 = vadd.f32 %v3244, %v3348
  %v3350 = vpop.f32.mrb[0].mxu0
  %v3351 = vpop.f32.mrb[0].mxu0
  %v3352 = vadd.f32 %v3247, %v3351
  %v3353 = vpop.f32.mrb[0].mxu0
  %3354 = vmatprep.mubr.bf16.mxu0 %v3301
  %3355 = vmatmul.mubr.bf16.gmra.mrb[0].mxu0 %v3300
  %v3356 = vpop.f32.mrb[0].mxu0
  %v3357 = vadd.f32 %v3252, %v3356
  %v3358 = vpop.f32.mrb[0].mxu0
  %v3359 = vpop.f32.mrb[0].mxu0
  %v3360 = vadd.f32 %v3255, %v3359
  %v3361 = vpop.f32.mrb[0].mxu0
  %3362 = vmatprep.mubr.bf16.mxu0 %v3303
  %3363 = vmatmul.mubr.bf16.gmra.mrb[0].mxu0 %v3302
  %v3364 = vpop.f32.mrb[0].mxu0
  %v3365 = vadd.f32 %v3260, %v3364
  %v3366 = vpop.f32.mrb[0].mxu0
  %v3367 = vpop.f32.mrb[0].mxu0
  %v3368 = vadd.f32 %v3263, %v3367
  %v3369 = vpop.f32.mrb[0].mxu0
  %3370 = vmatprep.mubr.bf16.mxu0 %v3305
  %3371 = vmatmul.mubr.bf16.gmra.mrb[0].mxu0 %v3304
  %v3372 = vpop.f32.mrb[0].mxu0
  %v3373 = vadd.f32 %v3268, %v3372
  %v3374 = vpop.f32.mrb[0].mxu0
  %v3375 = vpop.f32.mrb[0].mxu0
  %v3376 = vadd.f32 %v3271, %v3375
  %v3377 = vpop.f32.mrb[0].mxu0
  %3378 = vdwg.mxu0
  %s3379 = scalar_lea.vmem %s3, 128
  %v3380 = vld [vmem:[%s3379] sm:$0xf]
  %v3381 = vld [vmem:[%s3379 + $0x4] sm:$0xf]
  %v3382 = vld [vmem:[%s3379 + $0x8] sm:$0xf]
  %v3383 = vld [vmem:[%s3379 + $0xc] sm:$0xf]
  %v3384 = vld [vmem:[%s3379 + $0x10] sm:$0xf]
  %v3385 = vld [vmem:[%s3379 + $0x14] sm:$0xf]
  %v3386 = vld [vmem:[%s3379 + $0x18] sm:$0xf]
  %v3387 = vld [vmem:[%s3379 + $0x1c] sm:$0xf]
  %v3388 = vld [vmem:[%s3379 + $0x20] sm:$0xf]
  %v3389 = vld [vmem:[%s3379 + $0x24] sm:$0xf]
  %v3390 = vld [vmem:[%s3379 + $0x28] sm:$0xf]
  %v3391 = vld [vmem:[%s3379 + $0x2c] sm:$0xf]
  %v3392 = vld [vmem:[%s3379 + $0x30] sm:$0xf]
  %v3393 = vld [vmem:[%s3379 + $0x34] sm:$0xf]
  %v3394 = vld [vmem:[%s3379 + $0x38] sm:$0xf]
  %v3395 = vld [vmem:[%s3379 + $0x3c] sm:$0xf]
  %v3412 = vunpack.c.l.b16 %v3380
  %v3413 = vunpack.c.l.b16 %v3381
  %v3414 = vunpack.c.l.b16 %v3382
  %v3415 = vunpack.c.l.b16 %v3383
  %v3416 = vunpack.c.l.b16 %v3384
  %v3417 = vunpack.c.l.b16 %v3385
  %v3418 = vunpack.c.l.b16 %v3386
  %v3419 = vunpack.c.l.b16 %v3387
  %v3420 = vunpack.c.l.b16 %v3388
  %v3421 = vunpack.c.l.b16 %v3389
  %v3422 = vunpack.c.l.b16 %v3390
  %v3423 = vunpack.c.l.b16 %v3391
  %v3424 = vunpack.c.l.b16 %v3392
  %v3425 = vunpack.c.l.b16 %v3393
  %v3426 = vunpack.c.l.b16 %v3394
  %v3427 = vunpack.c.l.b16 %v3395
  %v3428 = vpack.c.b16 %v3413, %v3412
  %v3429 = vpack.c.b16 %v3415, %v3414
  %v3430 = vpack.c.b16 %v3417, %v3416
  %v3431 = vpack.c.b16 %v3419, %v3418
  %v3432 = vpack.c.b16 %v3421, %v3420
  %v3433 = vpack.c.b16 %v3423, %v3422
  %v3434 = vpack.c.b16 %v3425, %v3424
  %v3435 = vpack.c.b16 %v3427, %v3426
  %3444 = vmatprep.subr.bf16.mxu0 0
  %3445 = vmatpush1.bf16.msra.mxu0 %v3428
  %3446 = vmatprep.subr.bf16.mxu0 0
  %3447 = vmatpush1.bf16.msra.mxu0 %v3429
  %3448 = vmatprep.subr.bf16.mxu0 0
  %3449 = vmatpush1.bf16.msra.mxu0 %v3430
  %3450 = vmatprep.subr.bf16.mxu0 0
  %3451 = vmatpush1.bf16.msra.mxu0 %v3431
  %3452 = vmatprep.subr.bf16.mxu0 0
  %3453 = vmatpush1.bf16.msra.mxu0 %v3432
  %3454 = vmatprep.subr.bf16.mxu0 0
  %3455 = vmatpush1.bf16.msra.mxu0 %v3433
  %3456 = vmatprep.subr.bf16.mxu0 0
  %3457 = vmatpush1.bf16.msra.mxu0 %v3434
  %3458 = vmatprep.subr.bf16.mxu0 0
  %3459 = vmatpush1.bf16.msra.mxu0 %v3435
  %3460 = vmatprep.subr.bf16.mxu0 0
  %3461 = vmatpush1.bf16.msra.mxu0 0
  %3462 = vmatprep.subr.bf16.mxu0 0
  %3463 = vmatpush1.bf16.msra.mxu0 0
  %3464 = vmatprep.subr.bf16.mxu0 0
  %3465 = vmatpush1.bf16.msra.mxu0 0
  %3466 = vmatprep.subr.bf16.mxu0 0
  %3467 = vmatpush1.bf16.msra.mxu0 0
  %3468 = vmatprep.subr.bf16.mxu0 0
  %3469 = vmatpush1.bf16.msra.mxu0 0
  %3470 = vmatprep.subr.bf16.mxu0 0
  %3471 = vmatpush1.bf16.msra.mxu0 0
  %3472 = vmatprep.subr.bf16.mxu0 0
  %3473 = vmatpush1.bf16.msra.mxu0 0
  %3474 = vmatprep.subr.bf16.mxu0 0
  %3475 = vmatpush1.bf16.msra.mxu0 0
  %3476 = vmatprep.mubr.bf16.mxu0 0
  %3477 = vmatmul.mubr.bf16.gmra.mrb[0].mxu0 %v2266
  %v3478 = vpop.f32.mrb[0].mxu0
  %v3479 = vadd.f32 0.0, %v3478
  %v3480 = vpop.f32.mrb[0].mxu0
  %v3481 = vpop.f32.mrb[0].mxu0
  %v3482 = vadd.f32 0.0, %v3481
  %v3483 = vpop.f32.mrb[0].mxu0
  %3484 = vmatprep.mubr.bf16.mxu0 0
  %3485 = vmatmul.mubr.bf16.gmra.mrb[0].mxu0 %v2267
  %v3486 = vpop.f32.mrb[0].mxu0
  %v3487 = vadd.f32 0.0, %v3486
  %v3488 = vpop.f32.mrb[0].mxu0
  %v3489 = vpop.f32.mrb[0].mxu0
  %v3490 = vadd.f32 0.0, %v3489
  %v3491 = vpop.f32.mrb[0].mxu0
  %3492 = vmatprep.mubr.bf16.mxu0 0
  %3493 = vmatmul.mubr.bf16.gmra.mrb[0].mxu0 %v2268
  %v3494 = vpop.f32.mrb[0].mxu0
  %v3495 = vadd.f32 0.0, %v3494
  %v3496 = vpop.f32.mrb[0].mxu0
  %v3497 = vpop.f32.mrb[0].mxu0
  %v3498 = vadd.f32 0.0, %v3497
  %v3499 = vpop.f32.mrb[0].mxu0
  %3500 = vmatprep.mubr.bf16.mxu0 0
  %3501 = vmatmul.mubr.bf16.gmra.mrb[0].mxu0 %v2269
  %v3502 = vpop.f32.mrb[0].mxu0
  %v3503 = vadd.f32 0.0, %v3502
  %v3504 = vpop.f32.mrb[0].mxu0
  %v3505 = vpop.f32.mrb[0].mxu0
  %v3506 = vadd.f32 0.0, %v3505
  %v3507 = vpop.f32.mrb[0].mxu0
  %3508 = vmatprep.mubr.bf16.mxu0 0
  %3509 = vmatmul.mubr.bf16.gmra.mrb[0].mxu0 %v2270
  %v3510 = vpop.f32.mrb[0].mxu0
  %v3511 = vadd.f32 0.0, %v3510
  %v3512 = vpop.f32.mrb[0].mxu0
  %v3513 = vpop.f32.mrb[0].mxu0
  %v3514 = vadd.f32 0.0, %v3513
  %v3515 = vpop.f32.mrb[0].mxu0
  %3516 = vmatprep.mubr.bf16.mxu0 0
  %3517 = vmatmul.mubr.bf16.gmra.mrb[0].mxu0 %v2271
  %v3518 = vpop.f32.mrb[0].mxu0
  %v3519 = vadd.f32 0.0, %v3518
  %v3520 = vpop.f32.mrb[0].mxu0
  %v3521 = vpop.f32.mrb[0].mxu0
  %v3522 = vadd.f32 0.0, %v3521
  %v3523 = vpop.f32.mrb[0].mxu0
  %3524 = vmatprep.mubr.bf16.mxu0 0
  %3525 = vmatmul.mubr.bf16.gmra.mrb[0].mxu0 %v2272
  %v3526 = vpop.f32.mrb[0].mxu0
  %v3527 = vadd.f32 0.0, %v3526
  %v3528 = vpop.f32.mrb[0].mxu0
  %v3529 = vpop.f32.mrb[0].mxu0
  %v3530 = vadd.f32 0.0, %v3529
  %v3531 = vpop.f32.mrb[0].mxu0
  %3532 = vmatprep.mubr.bf16.mxu0 0
  %3533 = vmatmul.mubr.bf16.gmra.mrb[0].mxu0 %v2273
  %v3534 = vpop.f32.mrb[0].mxu0
  %v3535 = vadd.f32 0.0, %v3534
  %v3536 = vpop.f32.mrb[0].mxu0
  %v3537 = vpop.f32.mrb[0].mxu0
  %v3538 = vadd.f32 0.0, %v3537
  %v3539 = vpop.f32.mrb[0].mxu0
  %3540 = vmatprep.mubr.bf16.mxu0 0
  %3541 = vmatmul.mubr.bf16.gmra.mrb[0].mxu0 %v2274
  %v3542 = vpop.f32.mrb[0].mxu0
  %v3543 = vadd.f32 0.0, %v3542
  %v3544 = vpop.f32.mrb[0].mxu0
  %v3545 = vpop.f32.mrb[0].mxu0
  %v3546 = vadd.f32 0.0, %v3545
  %v3547 = vpop.f32.mrb[0].mxu0
  %3548 = vmatprep.mubr.bf16.mxu0 0
  %3549 = vmatmul.mubr.bf16.gmra.mrb[0].mxu0 %v2275
  %v3550 = vpop.f32.mrb[0].mxu0
  %v3551 = vadd.f32 0.0, %v3550
  %v3552 = vpop.f32.mrb[0].mxu0
  %v3553 = vpop.f32.mrb[0].mxu0
  %v3554 = vadd.f32 0.0, %v3553
  %v3555 = vpop.f32.mrb[0].mxu0
  %3556 = vmatprep.mubr.bf16.mxu0 0
  %3557 = vmatmul.mubr.bf16.gmra.mrb[0].mxu0 %v2276
  %v3558 = vpop.f32.mrb[0].mxu0
  %v3559 = vadd.f32 0.0, %v3558
  %v3560 = vpop.f32.mrb[0].mxu0
  %v3561 = vpop.f32.mrb[0].mxu0
  %v3562 = vadd.f32 0.0, %v3561
  %v3563 = vpop.f32.mrb[0].mxu0
  %3564 = vmatprep.mubr.bf16.mxu0 0
  %3565 = vmatmul.mubr.bf16.gmra.mrb[0].mxu0 %v2277
  %v3566 = vpop.f32.mrb[0].mxu0
  %v3567 = vadd.f32 0.0, %v3566
  %v3568 = vpop.f32.mrb[0].mxu0
  %v3569 = vpop.f32.mrb[0].mxu0
  %v3570 = vadd.f32 0.0, %v3569
  %v3571 = vpop.f32.mrb[0].mxu0
  %3572 = vmatprep.mubr.bf16.mxu0 0
  %3573 = vmatmul.mubr.bf16.gmra.mrb[0].mxu0 %v2278
  %v3574 = vpop.f32.mrb[0].mxu0
  %v3575 = vadd.f32 0.0, %v3574
  %v3576 = vpop.f32.mrb[0].mxu0
  %v3577 = vpop.f32.mrb[0].mxu0
  %v3578 = vadd.f32 0.0, %v3577
  %v3579 = vpop.f32.mrb[0].mxu0
  %3580 = vmatprep.mubr.bf16.mxu0 0
  %3581 = vmatmul.mubr.bf16.gmra.mrb[0].mxu0 %v2279
  %v3582 = vpop.f32.mrb[0].mxu0
  %v3583 = vadd.f32 0.0, %v3582
  %v3584 = vpop.f32.mrb[0].mxu0
  %v3585 = vpop.f32.mrb[0].mxu0
  %v3586 = vadd.f32 0.0, %v3585
  %v3587 = vpop.f32.mrb[0].mxu0
  %3588 = vmatprep.mubr.bf16.mxu0 0
  %3589 = vmatmul.mubr.bf16.gmra.mrb[0].mxu0 %v2280
  %v3590 = vpop.f32.mrb[0].mxu0
  %v3591 = vadd.f32 0.0, %v3590
  %v3592 = vpop.f32.mrb[0].mxu0
  %v3593 = vpop.f32.mrb[0].mxu0
  %v3594 = vadd.f32 0.0, %v3593
  %v3595 = vpop.f32.mrb[0].mxu0
  %3596 = vmatprep.mubr.bf16.mxu0 0
  %3597 = vmatmul.mubr.bf16.gmra.mrb[0].mxu0 %v2281
  %v3598 = vpop.f32.mrb[0].mxu0
  %v3599 = vadd.f32 0.0, %v3598
  %v3600 = vpop.f32.mrb[0].mxu0
  %v3601 = vpop.f32.mrb[0].mxu0
  %v3602 = vadd.f32 0.0, %v3601
  %v3603 = vpop.f32.mrb[0].mxu0
  %3604 = vdwg.mxu0
  %v3605 = vpack.c.bf16 %v3482, %v3479
  %v3606 = vpack.c.bf16 %v3490, %v3487
  %v3607 = vpack.c.bf16 %v3498, %v3495
  %v3608 = vpack.c.bf16 %v3506, %v3503
  %v3609 = vpack.c.bf16 %v3514, %v3511
  %v3610 = vpack.c.bf16 %v3522, %v3519
  %v3611 = vpack.c.bf16 %v3530, %v3527
  %v3612 = vpack.c.bf16 %v3538, %v3535
  %v3613 = vpack.c.bf16 %v3546, %v3543
  %v3614 = vpack.c.bf16 %v3554, %v3551
  %v3615 = vpack.c.bf16 %v3562, %v3559
  %v3616 = vpack.c.bf16 %v3570, %v3567
  %v3617 = vpack.c.bf16 %v3578, %v3575
  %v3618 = vpack.c.bf16 %v3586, %v3583
  %v3619 = vpack.c.bf16 %v3594, %v3591
  %v3620 = vpack.c.bf16 %v3602, %v3599
  %s3621 = scalar_lea.vmem %s4, 256
  %v3622 = vld [vmem:[%s3621] sm:$0xff]
  %v3623 = vld [vmem:[%s3621 + $0x8] sm:$0xff]
  %v3624 = vld [vmem:[%s3621 + $0x10] sm:$0xff]
  %v3625 = vld [vmem:[%s3621 + $0x18] sm:$0xff]
  %v3626 = vld [vmem:[%s3621 + $0x20] sm:$0xff]
  %v3627 = vld [vmem:[%s3621 + $0x28] sm:$0xff]
  %v3628 = vld [vmem:[%s3621 + $0x30] sm:$0xff]
  %v3629 = vld [vmem:[%s3621 + $0x38] sm:$0xff]
  %v3630 = vld [vmem:[%s3621 + $0x40] sm:$0xff]
  %v3631 = vld [vmem:[%s3621 + $0x48] sm:$0xff]
  %v3632 = vld [vmem:[%s3621 + $0x50] sm:$0xff]
  %v3633 = vld [vmem:[%s3621 + $0x58] sm:$0xff]
  %v3634 = vld [vmem:[%s3621 + $0x60] sm:$0xff]
  %v3635 = vld [vmem:[%s3621 + $0x68] sm:$0xff]
  %v3636 = vld [vmem:[%s3621 + $0x70] sm:$0xff]
  %v3637 = vld [vmem:[%s3621 + $0x78] sm:$0xff]
  %v3654 = vunpack.c.l.b16 %v3622
  %v3655 = vunpack.c.h.b16 %v3622
  %v3656 = vunpack.c.l.b16 %v3623
  %v3657 = vunpack.c.h.b16 %v3623
  %v3658 = vunpack.c.l.b16 %v3624
  %v3659 = vunpack.c.h.b16 %v3624
  %v3660 = vunpack.c.l.b16 %v3625
  %v3661 = vunpack.c.h.b16 %v3625
  %v3662 = vunpack.c.l.b16 %v3626
  %v3663 = vunpack.c.h.b16 %v3626
  %v3664 = vunpack.c.l.b16 %v3627
  %v3665 = vunpack.c.h.b16 %v3627
  %v3666 = vunpack.c.l.b16 %v3628
  %v3667 = vunpack.c.h.b16 %v3628
  %v3668 = vunpack.c.l.b16 %v3629
  %v3669 = vunpack.c.h.b16 %v3629
  %v3670 = vunpack.c.l.b16 %v3630
  %v3671 = vunpack.c.h.b16 %v3630
  %v3672 = vunpack.c.l.b16 %v3631
  %v3673 = vunpack.c.h.b16 %v3631
  %v3674 = vunpack.c.l.b16 %v3632
  %v3675 = vunpack.c.h.b16 %v3632
  %v3676 = vunpack.c.l.b16 %v3633
  %v3677 = vunpack.c.h.b16 %v3633
  %v3678 = vunpack.c.l.b16 %v3634
  %v3679 = vunpack.c.h.b16 %v3634
  %v3680 = vunpack.c.l.b16 %v3635
  %v3681 = vunpack.c.h.b16 %v3635
  %v3682 = vunpack.c.l.b16 %v3636
  %v3683 = vunpack.c.h.b16 %v3636
  %v3684 = vunpack.c.l.b16 %v3637
  %v3685 = vunpack.c.h.b16 %v3637
  %v3686 = vpack.c.b16 %v3656, %v3654
  %v3687 = vpack.c.b16 %v3657, %v3655
  %v3688 = vpack.c.b16 %v3660, %v3658
  %v3689 = vpack.c.b16 %v3661, %v3659
  %v3690 = vpack.c.b16 %v3664, %v3662
  %v3691 = vpack.c.b16 %v3665, %v3663
  %v3692 = vpack.c.b16 %v3668, %v3666
  %v3693 = vpack.c.b16 %v3669, %v3667
  %v3694 = vpack.c.b16 %v3672, %v3670
  %v3695 = vpack.c.b16 %v3673, %v3671
  %v3696 = vpack.c.b16 %v3676, %v3674
  %v3697 = vpack.c.b16 %v3677, %v3675
  %v3698 = vpack.c.b16 %v3680, %v3678
  %v3699 = vpack.c.b16 %v3681, %v3679
  %v3700 = vpack.c.b16 %v3684, %v3682
  %v3701 = vpack.c.b16 %v3685, %v3683
  %3718 = vmatprep.subr.bf16.mxu0 0
  %3719 = vmatpush1.bf16.msra.mxu0 %v3605
  %3720 = vmatprep.subr.bf16.mxu0 0
  %3721 = vmatpush1.bf16.msra.mxu0 %v3606
  %3722 = vmatprep.subr.bf16.mxu0 0
  %3723 = vmatpush1.bf16.msra.mxu0 %v3607
  %3724 = vmatprep.subr.bf16.mxu0 0
  %3725 = vmatpush1.bf16.msra.mxu0 %v3608
  %3726 = vmatprep.subr.bf16.mxu0 0
  %3727 = vmatpush1.bf16.msra.mxu0 %v3609
  %3728 = vmatprep.subr.bf16.mxu0 0
  %3729 = vmatpush1.bf16.msra.mxu0 %v3610
  %3730 = vmatprep.subr.bf16.mxu0 0
  %3731 = vmatpush1.bf16.msra.mxu0 %v3611
  %3732 = vmatprep.subr.bf16.mxu0 0
  %3733 = vmatpush1.bf16.msra.mxu0 %v3612
  %3734 = vmatprep.subr.bf16.mxu0 0
  %3735 = vmatpush1.bf16.msra.mxu0 %v3613
  %3736 = vmatprep.subr.bf16.mxu0 0
  %3737 = vmatpush1.bf16.msra.mxu0 %v3614
  %3738 = vmatprep.subr.bf16.mxu0 0
  %3739 = vmatpush1.bf16.msra.mxu0 %v3615
  %3740 = vmatprep.subr.bf16.mxu0 0
  %3741 = vmatpush1.bf16.msra.mxu0 %v3616
  %3742 = vmatprep.subr.bf16.mxu0 0
  %3743 = vmatpush1.bf16.msra.mxu0 %v3617
  %3744 = vmatprep.subr.bf16.mxu0 0
  %3745 = vmatpush1.bf16.msra.mxu0 %v3618
  %3746 = vmatprep.subr.bf16.mxu0 0
  %3747 = vmatpush1.bf16.msra.mxu0 %v3619
  %3748 = vmatprep.subr.bf16.mxu0 0
  %3749 = vmatpush1.bf16.msra.mxu0 %v3620
  %3750 = vmatprep.mubr.bf16.mxu0 %v3687
  %3751 = vmatmul.mubr.bf16.gmra.mrb[0].mxu0 %v3686
  %v3752 = vpop.f32.mrb[0].mxu0
  %v3753 = vadd.f32 0.0, %v3752
  %v3754 = vpop.f32.mrb[0].mxu0
  %v3755 = vpop.f32.mrb[0].mxu0
  %v3756 = vadd.f32 0.0, %v3755
  %v3757 = vpop.f32.mrb[0].mxu0
  %3758 = vmatprep.mubr.bf16.mxu0 %v3689
  %3759 = vmatmul.mubr.bf16.gmra.mrb[0].mxu0 %v3688
  %v3760 = vpop.f32.mrb[0].mxu0
  %v3761 = vadd.f32 0.0, %v3760
  %v3762 = vpop.f32.mrb[0].mxu0
  %v3763 = vpop.f32.mrb[0].mxu0
  %v3764 = vadd.f32 0.0, %v3763
  %v3765 = vpop.f32.mrb[0].mxu0
  %3766 = vmatprep.mubr.bf16.mxu0 %v3691
  %3767 = vmatmul.mubr.bf16.gmra.mrb[0].mxu0 %v3690
  %v3768 = vpop.f32.mrb[0].mxu0
  %v3769 = vadd.f32 0.0, %v3768
  %v3770 = vpop.f32.mrb[0].mxu0
  %v3771 = vpop.f32.mrb[0].mxu0
  %v3772 = vadd.f32 0.0, %v3771
  %v3773 = vpop.f32.mrb[0].mxu0
  %3774 = vmatprep.mubr.bf16.mxu0 %v3693
  %3775 = vmatmul.mubr.bf16.gmra.mrb[0].mxu0 %v3692
  %v3776 = vpop.f32.mrb[0].mxu0
  %v3777 = vadd.f32 0.0, %v3776
  %v3778 = vpop.f32.mrb[0].mxu0
  %v3779 = vpop.f32.mrb[0].mxu0
  %v3780 = vadd.f32 0.0, %v3779
  %v3781 = vpop.f32.mrb[0].mxu0
  %3782 = vmatprep.mubr.bf16.mxu0 %v3695
  %3783 = vmatmul.mubr.bf16.gmra.mrb[0].mxu0 %v3694
  %v3784 = vpop.f32.mrb[0].mxu0
  %v3785 = vadd.f32 0.0, %v3784
  %v3786 = vpop.f32.mrb[0].mxu0
  %v3787 = vpop.f32.mrb[0].mxu0
  %v3788 = vadd.f32 0.0, %v3787
  %v3789 = vpop.f32.mrb[0].mxu0
  %3790 = vmatprep.mubr.bf16.mxu0 %v3697
  %3791 = vmatmul.mubr.bf16.gmra.mrb[0].mxu0 %v3696
  %v3792 = vpop.f32.mrb[0].mxu0
  %v3793 = vadd.f32 0.0, %v3792
  %v3794 = vpop.f32.mrb[0].mxu0
  %v3795 = vpop.f32.mrb[0].mxu0
  %v3796 = vadd.f32 0.0, %v3795
  %v3797 = vpop.f32.mrb[0].mxu0
  %3798 = vmatprep.mubr.bf16.mxu0 %v3699
  %3799 = vmatmul.mubr.bf16.gmra.mrb[0].mxu0 %v3698
  %v3800 = vpop.f32.mrb[0].mxu0
  %v3801 = vadd.f32 0.0, %v3800
  %v3802 = vpop.f32.mrb[0].mxu0
  %v3803 = vpop.f32.mrb[0].mxu0
  %v3804 = vadd.f32 0.0, %v3803
  %v3805 = vpop.f32.mrb[0].mxu0
  %3806 = vmatprep.mubr.bf16.mxu0 %v3701
  %3807 = vmatmul.mubr.bf16.gmra.mrb[0].mxu0 %v3700
  %v3808 = vpop.f32.mrb[0].mxu0
  %v3809 = vadd.f32 0.0, %v3808
  %v3810 = vpop.f32.mrb[0].mxu0
  %v3811 = vpop.f32.mrb[0].mxu0
  %v3812 = vadd.f32 0.0, %v3811
  %v3813 = vpop.f32.mrb[0].mxu0
  %3814 = vdwg.mxu0
  %v3815 = vadd.f32 %v3098, %v3753
  %v3816 = vadd.f32 %v3101, %v3756
  %v3817 = vadd.f32 %v3106, %v3761
  %v3818 = vadd.f32 %v3109, %v3764
  %v3819 = vadd.f32 %v3114, %v3769
  %v3820 = vadd.f32 %v3117, %v3772
  %v3821 = vadd.f32 %v3122, %v3777
  %v3822 = vadd.f32 %v3125, %v3780
  %v3823 = vadd.f32 %v3130, %v3785
  %v3824 = vadd.f32 %v3133, %v3788
  %v3825 = vadd.f32 %v3138, %v3793
  %v3826 = vadd.f32 %v3141, %v3796
  %v3827 = vadd.f32 %v3146, %v3801
  %v3828 = vadd.f32 %v3149, %v3804
  %v3829 = vadd.f32 %v3154, %v3809
  %v3830 = vadd.f32 %v3157, %v3812
  %s3831 = scalar_lea.vmem %s6, 128
  %v3832 = vld [vmem:[%s3831] sm:$0xff]
  %v3833 = vld [vmem:[%s3831 + $0x8] sm:$0xff]
  %v3834 = vld [vmem:[%s3831 + $0x10] sm:$0xff]
  %v3835 = vld [vmem:[%s3831 + $0x18] sm:$0xff]
  %v3836 = vld [vmem:[%s3831 + $0x20] sm:$0xff]
  %v3837 = vld [vmem:[%s3831 + $0x28] sm:$0xff]
  %v3838 = vld [vmem:[%s3831 + $0x30] sm:$0xff]
  %v3839 = vld [vmem:[%s3831 + $0x38] sm:$0xff]
  %v3848 = vunpack.c.l.b16 %v3832
  %v3849 = vunpack.c.h.b16 %v3832
  %v3850 = vunpack.c.l.b16 %v3833
  %v3851 = vunpack.c.h.b16 %v3833
  %v3852 = vunpack.c.l.b16 %v3834
  %v3853 = vunpack.c.h.b16 %v3834
  %v3854 = vunpack.c.l.b16 %v3835
  %v3855 = vunpack.c.h.b16 %v3835
  %v3856 = vunpack.c.l.b16 %v3836
  %v3857 = vunpack.c.h.b16 %v3836
  %v3858 = vunpack.c.l.b16 %v3837
  %v3859 = vunpack.c.h.b16 %v3837
  %v3860 = vunpack.c.l.b16 %v3838
  %v3861 = vunpack.c.h.b16 %v3838
  %v3862 = vunpack.c.l.b16 %v3839
  %v3863 = vunpack.c.h.b16 %v3839
  %v3864 = vpack.c.b16 %v3850, %v3848
  %v3865 = vpack.c.b16 %v3851, %v3849
  %v3866 = vpack.c.b16 %v3854, %v3852
  %v3867 = vpack.c.b16 %v3855, %v3853
  %v3868 = vpack.c.b16 %v3858, %v3856
  %v3869 = vpack.c.b16 %v3859, %v3857
  %v3870 = vpack.c.b16 %v3862, %v3860
  %v3871 = vpack.c.b16 %v3863, %v3861
  %3880 = vmatprep.subr.bf16.mxu0 0
  %3881 = vmatpush1.bf16.msra.mxu0 %v3605
  %3882 = vmatprep.subr.bf16.mxu0 0
  %3883 = vmatpush1.bf16.msra.mxu0 %v3606
  %3884 = vmatprep.subr.bf16.mxu0 0
  %3885 = vmatpush1.bf16.msra.mxu0 %v3607
  %3886 = vmatprep.subr.bf16.mxu0 0
  %3887 = vmatpush1.bf16.msra.mxu0 %v3608
  %3888 = vmatprep.subr.bf16.mxu0 0
  %3889 = vmatpush1.bf16.msra.mxu0 %v3609
  %3890 = vmatprep.subr.bf16.mxu0 0
  %3891 = vmatpush1.bf16.msra.mxu0 %v3610
  %3892 = vmatprep.subr.bf16.mxu0 0
  %3893 = vmatpush1.bf16.msra.mxu0 %v3611
  %3894 = vmatprep.subr.bf16.mxu0 0
  %3895 = vmatpush1.bf16.msra.mxu0 %v3612
  %3896 = vmatprep.subr.bf16.mxu0 0
  %3897 = vmatpush1.bf16.msra.mxu0 %v3613
  %3898 = vmatprep.subr.bf16.mxu0 0
  %3899 = vmatpush1.bf16.msra.mxu0 %v3614
  %3900 = vmatprep.subr.bf16.mxu0 0
  %3901 = vmatpush1.bf16.msra.mxu0 %v3615
  %3902 = vmatprep.subr.bf16.mxu0 0
  %3903 = vmatpush1.bf16.msra.mxu0 %v3616
  %3904 = vmatprep.subr.bf16.mxu0 0
  %3905 = vmatpush1.bf16.msra.mxu0 %v3617
  %3906 = vmatprep.subr.bf16.mxu0 0
  %3907 = vmatpush1.bf16.msra.mxu0 %v3618
  %3908 = vmatprep.subr.bf16.mxu0 0
  %3909 = vmatpush1.bf16.msra.mxu0 %v3619
  %3910 = vmatprep.subr.bf16.mxu0 0
  %3911 = vmatpush1.bf16.msra.mxu0 %v3620
  %3912 = vmatprep.mubr.bf16.mxu0 %v3865
  %3913 = vmatmul.mubr.bf16.gmra.mrb[0].mxu0 %v3864
  %v3914 = vpop.f32.mrb[0].mxu0
  %v3915 = vadd.f32 0.0, %v3914
  %v3916 = vpop.f32.mrb[0].mxu0
  %v3917 = vpop.f32.mrb[0].mxu0
  %v3918 = vadd.f32 0.0, %v3917
  %v3919 = vpop.f32.mrb[0].mxu0
  %3920 = vmatprep.mubr.bf16.mxu0 %v3867
  %3921 = vmatmul.mubr.bf16.gmra.mrb[0].mxu0 %v3866
  %v3922 = vpop.f32.mrb[0].mxu0
  %v3923 = vadd.f32 0.0, %v3922
  %v3924 = vpop.f32.mrb[0].mxu0
  %v3925 = vpop.f32.mrb[0].mxu0
  %v3926 = vadd.f32 0.0, %v3925
  %v3927 = vpop.f32.mrb[0].mxu0
  %3928 = vmatprep.mubr.bf16.mxu0 %v3869
  %3929 = vmatmul.mubr.bf16.gmra.mrb[0].mxu0 %v3868
  %v3930 = vpop.f32.mrb[0].mxu0
  %v3931 = vadd.f32 0.0, %v3930
  %v3932 = vpop.f32.mrb[0].mxu0
  %v3933 = vpop.f32.mrb[0].mxu0
  %v3934 = vadd.f32 0.0, %v3933
  %v3935 = vpop.f32.mrb[0].mxu0
  %3936 = vmatprep.mubr.bf16.mxu0 %v3871
  %3937 = vmatmul.mubr.bf16.gmra.mrb[0].mxu0 %v3870
  %v3938 = vpop.f32.mrb[0].mxu0
  %v3939 = vadd.f32 0.0, %v3938
  %v3940 = vpop.f32.mrb[0].mxu0
  %v3941 = vpop.f32.mrb[0].mxu0
  %v3942 = vadd.f32 0.0, %v3941
  %v3943 = vpop.f32.mrb[0].mxu0
  %3944 = vdwg.mxu0
  %v3945 = vadd.f32 %v3349, %v3915
  %v3946 = vadd.f32 %v3352, %v3918
  %v3947 = vadd.f32 %v3357, %v3923
  %v3948 = vadd.f32 %v3360, %v3926
  %v3949 = vadd.f32 %v3365, %v3931
  %v3950 = vadd.f32 %v3368, %v3934
  %v3951 = vadd.f32 %v3373, %v3939
  %v3952 = vadd.f32 %v3376, %v3942
  %s3953 = scalar_lea.vmem %s3, 192
  %v3954 = vld [vmem:[%s3953] sm:$0xf]
  %v3955 = vld [vmem:[%s3953 + $0x4] sm:$0xf]
  %v3956 = vld [vmem:[%s3953 + $0x8] sm:$0xf]
  %v3957 = vld [vmem:[%s3953 + $0xc] sm:$0xf]
  %v3958 = vld [vmem:[%s3953 + $0x10] sm:$0xf]
  %v3959 = vld [vmem:[%s3953 + $0x14] sm:$0xf]
  %v3960 = vld [vmem:[%s3953 + $0x18] sm:$0xf]
  %v3961 = vld [vmem:[%s3953 + $0x1c] sm:$0xf]
  %v3962 = vld [vmem:[%s3953 + $0x20] sm:$0xf]
  %v3963 = vld [vmem:[%s3953 + $0x24] sm:$0xf]
  %v3964 = vld [vmem:[%s3953 + $0x28] sm:$0xf]
  %v3965 = vld [vmem:[%s3953 + $0x2c] sm:$0xf]
  %v3966 = vld [vmem:[%s3953 + $0x30] sm:$0xf]
  %v3967 = vld [vmem:[%s3953 + $0x34] sm:$0xf]
  %v3968 = vld [vmem:[%s3953 + $0x38] sm:$0xf]
  %v3969 = vld [vmem:[%s3953 + $0x3c] sm:$0xf]
  %v3986 = vunpack.c.l.b16 %v3954
  %v3987 = vunpack.c.l.b16 %v3955
  %v3988 = vunpack.c.l.b16 %v3956
  %v3989 = vunpack.c.l.b16 %v3957
  %v3990 = vunpack.c.l.b16 %v3958
  %v3991 = vunpack.c.l.b16 %v3959
  %v3992 = vunpack.c.l.b16 %v3960
  %v3993 = vunpack.c.l.b16 %v3961
  %v3994 = vunpack.c.l.b16 %v3962
  %v3995 = vunpack.c.l.b16 %v3963
  %v3996 = vunpack.c.l.b16 %v3964
  %v3997 = vunpack.c.l.b16 %v3965
  %v3998 = vunpack.c.l.b16 %v3966
  %v3999 = vunpack.c.l.b16 %v3967
  %v4000 = vunpack.c.l.b16 %v3968
  %v4001 = vunpack.c.l.b16 %v3969
  %v4002 = vpack.c.b16 %v3987, %v3986
  %v4003 = vpack.c.b16 %v3989, %v3988
  %v4004 = vpack.c.b16 %v3991, %v3990
  %v4005 = vpack.c.b16 %v3993, %v3992
  %v4006 = vpack.c.b16 %v3995, %v3994
  %v4007 = vpack.c.b16 %v3997, %v3996
  %v4008 = vpack.c.b16 %v3999, %v3998
  %v4009 = vpack.c.b16 %v4001, %v4000
  %4018 = vmatprep.subr.bf16.mxu0 0
  %4019 = vmatpush1.bf16.msra.mxu0 %v4002
  %4020 = vmatprep.subr.bf16.mxu0 0
  %4021 = vmatpush1.bf16.msra.mxu0 %v4003
  %4022 = vmatprep.subr.bf16.mxu0 0
  %4023 = vmatpush1.bf16.msra.mxu0 %v4004
  %4024 = vmatprep.subr.bf16.mxu0 0
  %4025 = vmatpush1.bf16.msra.mxu0 %v4005
  %4026 = vmatprep.subr.bf16.mxu0 0
  %4027 = vmatpush1.bf16.msra.mxu0 %v4006
  %4028 = vmatprep.subr.bf16.mxu0 0
  %4029 = vmatpush1.bf16.msra.mxu0 %v4007
  %4030 = vmatprep.subr.bf16.mxu0 0
  %4031 = vmatpush1.bf16.msra.mxu0 %v4008
  %4032 = vmatprep.subr.bf16.mxu0 0
  %4033 = vmatpush1.bf16.msra.mxu0 %v4009
  %4034 = vmatprep.subr.bf16.mxu0 0
  %4035 = vmatpush1.bf16.msra.mxu0 0
  %4036 = vmatprep.subr.bf16.mxu0 0
  %4037 = vmatpush1.bf16.msra.mxu0 0
  %4038 = vmatprep.subr.bf16.mxu0 0
  %4039 = vmatpush1.bf16.msra.mxu0 0
  %4040 = vmatprep.subr.bf16.mxu0 0
  %4041 = vmatpush1.bf16.msra.mxu0 0
  %4042 = vmatprep.subr.bf16.mxu0 0
  %4043 = vmatpush1.bf16.msra.mxu0 0
  %4044 = vmatprep.subr.bf16.mxu0 0
  %4045 = vmatpush1.bf16.msra.mxu0 0
  %4046 = vmatprep.subr.bf16.mxu0 0
  %4047 = vmatpush1.bf16.msra.mxu0 0
  %4048 = vmatprep.subr.bf16.mxu0 0
  %4049 = vmatpush1.bf16.msra.mxu0 0
  %4050 = vmatprep.mubr.bf16.mxu0 0
  %4051 = vmatmul.mubr.bf16.gmra.mrb[0].mxu0 %v2266
  %v4052 = vpop.f32.mrb[0].mxu0
  %v4053 = vadd.f32 0.0, %v4052
  %v4054 = vpop.f32.mrb[0].mxu0
  %v4055 = vpop.f32.mrb[0].mxu0
  %v4056 = vadd.f32 0.0, %v4055
  %v4057 = vpop.f32.mrb[0].mxu0
  %4058 = vmatprep.mubr.bf16.mxu0 0
  %4059 = vmatmul.mubr.bf16.gmra.mrb[0].mxu0 %v2267
  %v4060 = vpop.f32.mrb[0].mxu0
  %v4061 = vadd.f32 0.0, %v4060
  %v4062 = vpop.f32.mrb[0].mxu0
  %v4063 = vpop.f32.mrb[0].mxu0
  %v4064 = vadd.f32 0.0, %v4063
  %v4065 = vpop.f32.mrb[0].mxu0
  %4066 = vmatprep.mubr.bf16.mxu0 0
  %4067 = vmatmul.mubr.bf16.gmra.mrb[0].mxu0 %v2268
  %v4068 = vpop.f32.mrb[0].mxu0
  %v4069 = vadd.f32 0.0, %v4068
  %v4070 = vpop.f32.mrb[0].mxu0
  %v4071 = vpop.f32.mrb[0].mxu0
  %v4072 = vadd.f32 0.0, %v4071
  %v4073 = vpop.f32.mrb[0].mxu0
  %4074 = vmatprep.mubr.bf16.mxu0 0
  %4075 = vmatmul.mubr.bf16.gmra.mrb[0].mxu0 %v2269
  %v4076 = vpop.f32.mrb[0].mxu0
  %v4077 = vadd.f32 0.0, %v4076
  %v4078 = vpop.f32.mrb[0].mxu0
  %v4079 = vpop.f32.mrb[0].mxu0
  %v4080 = vadd.f32 0.0, %v4079
  %v4081 = vpop.f32.mrb[0].mxu0
  %4082 = vmatprep.mubr.bf16.mxu0 0
  %4083 = vmatmul.mubr.bf16.gmra.mrb[0].mxu0 %v2270
  %v4084 = vpop.f32.mrb[0].mxu0
  %v4085 = vadd.f32 0.0, %v4084
  %v4086 = vpop.f32.mrb[0].mxu0
  %v4087 = vpop.f32.mrb[0].mxu0
  %v4088 = vadd.f32 0.0, %v4087
  %v4089 = vpop.f32.mrb[0].mxu0
  %4090 = vmatprep.mubr.bf16.mxu0 0
  %4091 = vmatmul.mubr.bf16.gmra.mrb[0].mxu0 %v2271
  %v4092 = vpop.f32.mrb[0].mxu0
  %v4093 = vadd.f32 0.0, %v4092
  %v4094 = vpop.f32.mrb[0].mxu0
  %v4095 = vpop.f32.mrb[0].mxu0
  %v4096 = vadd.f32 0.0, %v4095
  %v4097 = vpop.f32.mrb[0].mxu0
  %4098 = vmatprep.mubr.bf16.mxu0 0
  %4099 = vmatmul.mubr.bf16.gmra.mrb[0].mxu0 %v2272
  %v4100 = vpop.f32.mrb[0].mxu0
  %v4101 = vadd.f32 0.0, %v4100
  %v4102 = vpop.f32.mrb[0].mxu0
  %v4103 = vpop.f32.mrb[0].mxu0
  %v4104 = vadd.f32 0.0, %v4103
  %v4105 = vpop.f32.mrb[0].mxu0
  %4106 = vmatprep.mubr.bf16.mxu0 0
  %4107 = vmatmul.mubr.bf16.gmra.mrb[0].mxu0 %v2273
  %v4108 = vpop.f32.mrb[0].mxu0
  %v4109 = vadd.f32 0.0, %v4108
  %v4110 = vpop.f32.mrb[0].mxu0
  %v4111 = vpop.f32.mrb[0].mxu0
  %v4112 = vadd.f32 0.0, %v4111
  %v4113 = vpop.f32.mrb[0].mxu0
  %4114 = vmatprep.mubr.bf16.mxu0 0
  %4115 = vmatmul.mubr.bf16.gmra.mrb[0].mxu0 %v2274
  %v4116 = vpop.f32.mrb[0].mxu0
  %v4117 = vadd.f32 0.0, %v4116
  %v4118 = vpop.f32.mrb[0].mxu0
  %v4119 = vpop.f32.mrb[0].mxu0
  %v4120 = vadd.f32 0.0, %v4119
  %v4121 = vpop.f32.mrb[0].mxu0
  %4122 = vmatprep.mubr.bf16.mxu0 0
  %4123 = vmatmul.mubr.bf16.gmra.mrb[0].mxu0 %v2275
  %v4124 = vpop.f32.mrb[0].mxu0
  %v4125 = vadd.f32 0.0, %v4124
  %v4126 = vpop.f32.mrb[0].mxu0
  %v4127 = vpop.f32.mrb[0].mxu0
  %v4128 = vadd.f32 0.0, %v4127
  %v4129 = vpop.f32.mrb[0].mxu0
  %4130 = vmatprep.mubr.bf16.mxu0 0
  %4131 = vmatmul.mubr.bf16.gmra.mrb[0].mxu0 %v2276
  %v4132 = vpop.f32.mrb[0].mxu0
  %v4133 = vadd.f32 0.0, %v4132
  %v4134 = vpop.f32.mrb[0].mxu0
  %v4135 = vpop.f32.mrb[0].mxu0
  %v4136 = vadd.f32 0.0, %v4135
  %v4137 = vpop.f32.mrb[0].mxu0
  %4138 = vmatprep.mubr.bf16.mxu0 0
  %4139 = vmatmul.mubr.bf16.gmra.mrb[0].mxu0 %v2277
  %v4140 = vpop.f32.mrb[0].mxu0
  %v4141 = vadd.f32 0.0, %v4140
  %v4142 = vpop.f32.mrb[0].mxu0
  %v4143 = vpop.f32.mrb[0].mxu0
  %v4144 = vadd.f32 0.0, %v4143
  %v4145 = vpop.f32.mrb[0].mxu0
  %4146 = vmatprep.mubr.bf16.mxu0 0
  %4147 = vmatmul.mubr.bf16.gmra.mrb[0].mxu0 %v2278
  %v4148 = vpop.f32.mrb[0].mxu0
  %v4149 = vadd.f32 0.0, %v4148
  %v4150 = vpop.f32.mrb[0].mxu0
  %v4151 = vpop.f32.mrb[0].mxu0
  %v4152 = vadd.f32 0.0, %v4151
  %v4153 = vpop.f32.mrb[0].mxu0
  %4154 = vmatprep.mubr.bf16.mxu0 0
  %4155 = vmatmul.mubr.bf16.gmra.mrb[0].mxu0 %v2279
  %v4156 = vpop.f32.mrb[0].mxu0
  %v4157 = vadd.f32 0.0, %v4156
  %v4158 = vpop.f32.mrb[0].mxu0
  %v4159 = vpop.f32.mrb[0].mxu0
  %v4160 = vadd.f32 0.0, %v4159
  %v4161 = vpop.f32.mrb[0].mxu0
  %4162 = vmatprep.mubr.bf16.mxu0 0
  %4163 = vmatmul.mubr.bf16.gmra.mrb[0].mxu0 %v2280
  %v4164 = vpop.f32.mrb[0].mxu0
  %v4165 = vadd.f32 0.0, %v4164
  %v4166 = vpop.f32.mrb[0].mxu0
  %v4167 = vpop.f32.mrb[0].mxu0
  %v4168 = vadd.f32 0.0, %v4167
  %v4169 = vpop.f32.mrb[0].mxu0
  %4170 = vmatprep.mubr.bf16.mxu0 0
  %4171 = vmatmul.mubr.bf16.gmra.mrb[0].mxu0 %v2281
  %v4172 = vpop.f32.mrb[0].mxu0
  %v4173 = vadd.f32 0.0, %v4172
  %v4174 = vpop.f32.mrb[0].mxu0
  %v4175 = vpop.f32.mrb[0].mxu0
  %v4176 = vadd.f32 0.0, %v4175
  %v4177 = vpop.f32.mrb[0].mxu0
  %4178 = vdwg.mxu0
  %v4179 = vpack.c.bf16 %v4056, %v4053
  %v4180 = vpack.c.bf16 %v4064, %v4061
  %v4181 = vpack.c.bf16 %v4072, %v4069
  %v4182 = vpack.c.bf16 %v4080, %v4077
  %v4183 = vpack.c.bf16 %v4088, %v4085
  %v4184 = vpack.c.bf16 %v4096, %v4093
  %v4185 = vpack.c.bf16 %v4104, %v4101
  %v4186 = vpack.c.bf16 %v4112, %v4109
  %v4187 = vpack.c.bf16 %v4120, %v4117
  %v4188 = vpack.c.bf16 %v4128, %v4125
  %v4189 = vpack.c.bf16 %v4136, %v4133
  %v4190 = vpack.c.bf16 %v4144, %v4141
  %v4191 = vpack.c.bf16 %v4152, %v4149
  %v4192 = vpack.c.bf16 %v4160, %v4157
  %v4193 = vpack.c.bf16 %v4168, %v4165
  %v4194 = vpack.c.bf16 %v4176, %v4173
  %s4195 = scalar_lea.vmem %s4, 384
  %v4196 = vld [vmem:[%s4195] sm:$0xff]
  %v4197 = vld [vmem:[%s4195 + $0x8] sm:$0xff]
  %v4198 = vld [vmem:[%s4195 + $0x10] sm:$0xff]
  %v4199 = vld [vmem:[%s4195 + $0x18] sm:$0xff]
  %v4200 = vld [vmem:[%s4195 + $0x20] sm:$0xff]
  %v4201 = vld [vmem:[%s4195 + $0x28] sm:$0xff]
  %v4202 = vld [vmem:[%s4195 + $0x30] sm:$0xff]
  %v4203 = vld [vmem:[%s4195 + $0x38] sm:$0xff]
  %v4204 = vld [vmem:[%s4195 + $0x40] sm:$0xff]
  %v4205 = vld [vmem:[%s4195 + $0x48] sm:$0xff]
  %v4206 = vld [vmem:[%s4195 + $0x50] sm:$0xff]
  %v4207 = vld [vmem:[%s4195 + $0x58] sm:$0xff]
  %v4208 = vld [vmem:[%s4195 + $0x60] sm:$0xff]
  %v4209 = vld [vmem:[%s4195 + $0x68] sm:$0xff]
  %v4210 = vld [vmem:[%s4195 + $0x70] sm:$0xff]
  %v4211 = vld [vmem:[%s4195 + $0x78] sm:$0xff]
  %v4228 = vunpack.c.l.b16 %v4196
  %v4229 = vunpack.c.h.b16 %v4196
  %v4230 = vunpack.c.l.b16 %v4197
  %v4231 = vunpack.c.h.b16 %v4197
  %v4232 = vunpack.c.l.b16 %v4198
  %v4233 = vunpack.c.h.b16 %v4198
  %v4234 = vunpack.c.l.b16 %v4199
  %v4235 = vunpack.c.h.b16 %v4199
  %v4236 = vunpack.c.l.b16 %v4200
  %v4237 = vunpack.c.h.b16 %v4200
  %v4238 = vunpack.c.l.b16 %v4201
  %v4239 = vunpack.c.h.b16 %v4201
  %v4240 = vunpack.c.l.b16 %v4202
  %v4241 = vunpack.c.h.b16 %v4202
  %v4242 = vunpack.c.l.b16 %v4203
  %v4243 = vunpack.c.h.b16 %v4203
  %v4244 = vunpack.c.l.b16 %v4204
  %v4245 = vunpack.c.h.b16 %v4204
  %v4246 = vunpack.c.l.b16 %v4205
  %v4247 = vunpack.c.h.b16 %v4205
  %v4248 = vunpack.c.l.b16 %v4206
  %v4249 = vunpack.c.h.b16 %v4206
  %v4250 = vunpack.c.l.b16 %v4207
  %v4251 = vunpack.c.h.b16 %v4207
  %v4252 = vunpack.c.l.b16 %v4208
  %v4253 = vunpack.c.h.b16 %v4208
  %v4254 = vunpack.c.l.b16 %v4209
  %v4255 = vunpack.c.h.b16 %v4209
  %v4256 = vunpack.c.l.b16 %v4210
  %v4257 = vunpack.c.h.b16 %v4210
  %v4258 = vunpack.c.l.b16 %v4211
  %v4259 = vunpack.c.h.b16 %v4211
  %v4260 = vpack.c.b16 %v4230, %v4228
  %v4261 = vpack.c.b16 %v4231, %v4229
  %v4262 = vpack.c.b16 %v4234, %v4232
  %v4263 = vpack.c.b16 %v4235, %v4233
  %v4264 = vpack.c.b16 %v4238, %v4236
  %v4265 = vpack.c.b16 %v4239, %v4237
  %v4266 = vpack.c.b16 %v4242, %v4240
  %v4267 = vpack.c.b16 %v4243, %v4241
  %v4268 = vpack.c.b16 %v4246, %v4244
  %v4269 = vpack.c.b16 %v4247, %v4245
  %v4270 = vpack.c.b16 %v4250, %v4248
  %v4271 = vpack.c.b16 %v4251, %v4249
  %v4272 = vpack.c.b16 %v4254, %v4252
  %v4273 = vpack.c.b16 %v4255, %v4253
  %v4274 = vpack.c.b16 %v4258, %v4256
  %v4275 = vpack.c.b16 %v4259, %v4257
  %4292 = vmatprep.subr.bf16.mxu0 0
  %4293 = vmatpush1.bf16.msra.mxu0 %v4179
  %4294 = vmatprep.subr.bf16.mxu0 0
  %4295 = vmatpush1.bf16.msra.mxu0 %v4180
  %4296 = vmatprep.subr.bf16.mxu0 0
  %4297 = vmatpush1.bf16.msra.mxu0 %v4181
  %4298 = vmatprep.subr.bf16.mxu0 0
  %4299 = vmatpush1.bf16.msra.mxu0 %v4182
  %4300 = vmatprep.subr.bf16.mxu0 0
  %4301 = vmatpush1.bf16.msra.mxu0 %v4183
  %4302 = vmatprep.subr.bf16.mxu0 0
  %4303 = vmatpush1.bf16.msra.mxu0 %v4184
  %4304 = vmatprep.subr.bf16.mxu0 0
  %4305 = vmatpush1.bf16.msra.mxu0 %v4185
  %4306 = vmatprep.subr.bf16.mxu0 0
  %4307 = vmatpush1.bf16.msra.mxu0 %v4186
  %4308 = vmatprep.subr.bf16.mxu0 0
  %4309 = vmatpush1.bf16.msra.mxu0 %v4187
  %4310 = vmatprep.subr.bf16.mxu0 0
  %4311 = vmatpush1.bf16.msra.mxu0 %v4188
  %4312 = vmatprep.subr.bf16.mxu0 0
  %4313 = vmatpush1.bf16.msra.mxu0 %v4189
  %4314 = vmatprep.subr.bf16.mxu0 0
  %4315 = vmatpush1.bf16.msra.mxu0 %v4190
  %4316 = vmatprep.subr.bf16.mxu0 0
  %4317 = vmatpush1.bf16.msra.mxu0 %v4191
  %4318 = vmatprep.subr.bf16.mxu0 0
  %4319 = vmatpush1.bf16.msra.mxu0 %v4192
  %4320 = vmatprep.subr.bf16.mxu0 0
  %4321 = vmatpush1.bf16.msra.mxu0 %v4193
  %4322 = vmatprep.subr.bf16.mxu0 0
  %4323 = vmatpush1.bf16.msra.mxu0 %v4194
  %4324 = vmatprep.mubr.bf16.mxu0 %v4261
  %4325 = vmatmul.mubr.bf16.gmra.mrb[0].mxu0 %v4260
  %v4326 = vpop.f32.mrb[0].mxu0
  %v4327 = vadd.f32 0.0, %v4326
  %v4328 = vpop.f32.mrb[0].mxu0
  %v4329 = vpop.f32.mrb[0].mxu0
  %v4330 = vadd.f32 0.0, %v4329
  %v4331 = vpop.f32.mrb[0].mxu0
  %4332 = vmatprep.mubr.bf16.mxu0 %v4263
  %4333 = vmatmul.mubr.bf16.gmra.mrb[0].mxu0 %v4262
  %v4334 = vpop.f32.mrb[0].mxu0
  %v4335 = vadd.f32 0.0, %v4334
  %v4336 = vpop.f32.mrb[0].mxu0
  %v4337 = vpop.f32.mrb[0].mxu0
  %v4338 = vadd.f32 0.0, %v4337
  %v4339 = vpop.f32.mrb[0].mxu0
  %4340 = vmatprep.mubr.bf16.mxu0 %v4265
  %4341 = vmatmul.mubr.bf16.gmra.mrb[0].mxu0 %v4264
  %v4342 = vpop.f32.mrb[0].mxu0
  %v4343 = vadd.f32 0.0, %v4342
  %v4344 = vpop.f32.mrb[0].mxu0
  %v4345 = vpop.f32.mrb[0].mxu0
  %v4346 = vadd.f32 0.0, %v4345
  %v4347 = vpop.f32.mrb[0].mxu0
  %4348 = vmatprep.mubr.bf16.mxu0 %v4267
  %4349 = vmatmul.mubr.bf16.gmra.mrb[0].mxu0 %v4266
  %v4350 = vpop.f32.mrb[0].mxu0
  %v4351 = vadd.f32 0.0, %v4350
  %v4352 = vpop.f32.mrb[0].mxu0
  %v4353 = vpop.f32.mrb[0].mxu0
  %v4354 = vadd.f32 0.0, %v4353
  %v4355 = vpop.f32.mrb[0].mxu0
  %4356 = vmatprep.mubr.bf16.mxu0 %v4269
  %4357 = vmatmul.mubr.bf16.gmra.mrb[0].mxu0 %v4268
  %v4358 = vpop.f32.mrb[0].mxu0
  %v4359 = vadd.f32 0.0, %v4358
  %v4360 = vpop.f32.mrb[0].mxu0
  %v4361 = vpop.f32.mrb[0].mxu0
  %v4362 = vadd.f32 0.0, %v4361
  %v4363 = vpop.f32.mrb[0].mxu0
  %4364 = vmatprep.mubr.bf16.mxu0 %v4271
  %4365 = vmatmul.mubr.bf16.gmra.mrb[0].mxu0 %v4270
  %v4366 = vpop.f32.mrb[0].mxu0
  %v4367 = vadd.f32 0.0, %v4366
  %v4368 = vpop.f32.mrb[0].mxu0
  %v4369 = vpop.f32.mrb[0].mxu0
  %v4370 = vadd.f32 0.0, %v4369
  %v4371 = vpop.f32.mrb[0].mxu0
  %4372 = vmatprep.mubr.bf16.mxu0 %v4273
  %4373 = vmatmul.mubr.bf16.gmra.mrb[0].mxu0 %v4272
  %v4374 = vpop.f32.mrb[0].mxu0
  %v4375 = vadd.f32 0.0, %v4374
  %v4376 = vpop.f32.mrb[0].mxu0
  %v4377 = vpop.f32.mrb[0].mxu0
  %v4378 = vadd.f32 0.0, %v4377
  %v4379 = vpop.f32.mrb[0].mxu0
  %4380 = vmatprep.mubr.bf16.mxu0 %v4275
  %4381 = vmatmul.mubr.bf16.gmra.mrb[0].mxu0 %v4274
  %v4382 = vpop.f32.mrb[0].mxu0
  %v4383 = vadd.f32 0.0, %v4382
  %v4384 = vpop.f32.mrb[0].mxu0
  %v4385 = vpop.f32.mrb[0].mxu0
  %v4386 = vadd.f32 0.0, %v4385
  %v4387 = vpop.f32.mrb[0].mxu0
  %4388 = vdwg.mxu0
  %v4389 = vadd.f32 %v3815, %v4327
  %v4390 = vadd.f32 %v3816, %v4330
  %v4391 = vadd.f32 %v3817, %v4335
  %v4392 = vadd.f32 %v3818, %v4338
  %v4393 = vadd.f32 %v3819, %v4343
  %v4394 = vadd.f32 %v3820, %v4346
  %v4395 = vadd.f32 %v3821, %v4351
  %v4396 = vadd.f32 %v3822, %v4354
  %v4397 = vadd.f32 %v3823, %v4359
  %v4398 = vadd.f32 %v3824, %v4362
  %v4399 = vadd.f32 %v3825, %v4367
  %v4400 = vadd.f32 %v3826, %v4370
  %v4401 = vadd.f32 %v3827, %v4375
  %v4402 = vadd.f32 %v3828, %v4378
  %v4403 = vadd.f32 %v3829, %v4383
  %v4404 = vadd.f32 %v3830, %v4386
  %s4405 = scalar_lea.vmem %s6, 192
  %v4406 = vld [vmem:[%s4405] sm:$0xff]
  %v4407 = vld [vmem:[%s4405 + $0x8] sm:$0xff]
  %v4408 = vld [vmem:[%s4405 + $0x10] sm:$0xff]
  %v4409 = vld [vmem:[%s4405 + $0x18] sm:$0xff]
  %v4410 = vld [vmem:[%s4405 + $0x20] sm:$0xff]
  %v4411 = vld [vmem:[%s4405 + $0x28] sm:$0xff]
  %v4412 = vld [vmem:[%s4405 + $0x30] sm:$0xff]
  %v4413 = vld [vmem:[%s4405 + $0x38] sm:$0xff]
  %v4422 = vunpack.c.l.b16 %v4406
  %v4423 = vunpack.c.h.b16 %v4406
  %v4424 = vunpack.c.l.b16 %v4407
  %v4425 = vunpack.c.h.b16 %v4407
  %v4426 = vunpack.c.l.b16 %v4408
  %v4427 = vunpack.c.h.b16 %v4408
  %v4428 = vunpack.c.l.b16 %v4409
  %v4429 = vunpack.c.h.b16 %v4409
  %v4430 = vunpack.c.l.b16 %v4410
  %v4431 = vunpack.c.h.b16 %v4410
  %v4432 = vunpack.c.l.b16 %v4411
  %v4433 = vunpack.c.h.b16 %v4411
  %v4434 = vunpack.c.l.b16 %v4412
  %v4435 = vunpack.c.h.b16 %v4412
  %v4436 = vunpack.c.l.b16 %v4413
  %v4437 = vunpack.c.h.b16 %v4413
  %v4438 = vpack.c.b16 %v4424, %v4422
  %v4439 = vpack.c.b16 %v4425, %v4423
  %v4440 = vpack.c.b16 %v4428, %v4426
  %v4441 = vpack.c.b16 %v4429, %v4427
  %v4442 = vpack.c.b16 %v4432, %v4430
  %v4443 = vpack.c.b16 %v4433, %v4431
  %v4444 = vpack.c.b16 %v4436, %v4434
  %v4445 = vpack.c.b16 %v4437, %v4435
  %4454 = vmatprep.subr.bf16.mxu0 0
  %4455 = vmatpush1.bf16.msra.mxu0 %v4179
  %4456 = vmatprep.subr.bf16.mxu0 0
  %4457 = vmatpush1.bf16.msra.mxu0 %v4180
  %4458 = vmatprep.subr.bf16.mxu0 0
  %4459 = vmatpush1.bf16.msra.mxu0 %v4181
  %4460 = vmatprep.subr.bf16.mxu0 0
  %4461 = vmatpush1.bf16.msra.mxu0 %v4182
  %4462 = vmatprep.subr.bf16.mxu0 0
  %4463 = vmatpush1.bf16.msra.mxu0 %v4183
  %4464 = vmatprep.subr.bf16.mxu0 0
  %4465 = vmatpush1.bf16.msra.mxu0 %v4184
  %4466 = vmatprep.subr.bf16.mxu0 0
  %4467 = vmatpush1.bf16.msra.mxu0 %v4185
  %4468 = vmatprep.subr.bf16.mxu0 0
  %4469 = vmatpush1.bf16.msra.mxu0 %v4186
  %4470 = vmatprep.subr.bf16.mxu0 0
  %4471 = vmatpush1.bf16.msra.mxu0 %v4187
  %4472 = vmatprep.subr.bf16.mxu0 0
  %4473 = vmatpush1.bf16.msra.mxu0 %v4188
  %4474 = vmatprep.subr.bf16.mxu0 0
  %4475 = vmatpush1.bf16.msra.mxu0 %v4189
  %4476 = vmatprep.subr.bf16.mxu0 0
  %4477 = vmatpush1.bf16.msra.mxu0 %v4190
  %4478 = vmatprep.subr.bf16.mxu0 0
  %4479 = vmatpush1.bf16.msra.mxu0 %v4191
  %4480 = vmatprep.subr.bf16.mxu0 0
  %4481 = vmatpush1.bf16.msra.mxu0 %v4192
  %4482 = vmatprep.subr.bf16.mxu0 0
  %4483 = vmatpush1.bf16.msra.mxu0 %v4193
  %4484 = vmatprep.subr.bf16.mxu0 0
  %4485 = vmatpush1.bf16.msra.mxu0 %v4194
  %4486 = vmatprep.mubr.bf16.mxu0 %v4439
  %4487 = vmatmul.mubr.bf16.gmra.mrb[0].mxu0 %v4438
  %v4488 = vpop.f32.mrb[0].mxu0
  %v4489 = vadd.f32 0.0, %v4488
  %v4490 = vpop.f32.mrb[0].mxu0
  %v4491 = vpop.f32.mrb[0].mxu0
  %v4492 = vadd.f32 0.0, %v4491
  %v4493 = vpop.f32.mrb[0].mxu0
  %4494 = vmatprep.mubr.bf16.mxu0 %v4441
  %4495 = vmatmul.mubr.bf16.gmra.mrb[0].mxu0 %v4440
  %v4496 = vpop.f32.mrb[0].mxu0
  %v4497 = vadd.f32 0.0, %v4496
  %v4498 = vpop.f32.mrb[0].mxu0
  %v4499 = vpop.f32.mrb[0].mxu0
  %v4500 = vadd.f32 0.0, %v4499
  %v4501 = vpop.f32.mrb[0].mxu0
  %4502 = vmatprep.mubr.bf16.mxu0 %v4443
  %4503 = vmatmul.mubr.bf16.gmra.mrb[0].mxu0 %v4442
  %v4504 = vpop.f32.mrb[0].mxu0
  %v4505 = vadd.f32 0.0, %v4504
  %v4506 = vpop.f32.mrb[0].mxu0
  %v4507 = vpop.f32.mrb[0].mxu0
  %v4508 = vadd.f32 0.0, %v4507
  %v4509 = vpop.f32.mrb[0].mxu0
  %4510 = vmatprep.mubr.bf16.mxu0 %v4445
  %4511 = vmatmul.mubr.bf16.gmra.mrb[0].mxu0 %v4444
  %v4512 = vpop.f32.mrb[0].mxu0
  %v4513 = vadd.f32 0.0, %v4512
  %v4514 = vpop.f32.mrb[0].mxu0
  %v4515 = vpop.f32.mrb[0].mxu0
  %v4516 = vadd.f32 0.0, %v4515
  %v4517 = vpop.f32.mrb[0].mxu0
  %4518 = vdwg.mxu0
  %v4519 = vadd.f32 %v3945, %v4489
  %v4520 = vadd.f32 %v3946, %v4492
  %v4521 = vadd.f32 %v3947, %v4497
  %v4522 = vadd.f32 %v3948, %v4500
  %v4523 = vadd.f32 %v3949, %v4505
  %v4524 = vadd.f32 %v3950, %v4508
  %v4525 = vadd.f32 %v3951, %v4513
  %v4526 = vadd.f32 %v3952, %v4516
  %v4527 = vld [vmem:[%s5] sm:$0xff]
  %v4528 = vld [vmem:[%s5 + $0x8] sm:$0xff]
  %v4529 = vld [vmem:[%s5 + $0x10] sm:$0xff]
  %v4530 = vld [vmem:[%s5 + $0x18] sm:$0xff]
  %v4531 = vld [vmem:[%s5 + $0x20] sm:$0xff]
  %v4532 = vld [vmem:[%s5 + $0x28] sm:$0xff]
  %v4533 = vld [vmem:[%s5 + $0x30] sm:$0xff]
  %v4534 = vld [vmem:[%s5 + $0x38] sm:$0xff]
  %v4535 = vld [vmem:[%s5 + $0x40] sm:$0xff]
  %v4536 = vld [vmem:[%s5 + $0x48] sm:$0xff]
  %v4537 = vld [vmem:[%s5 + $0x50] sm:$0xff]
  %v4538 = vld [vmem:[%s5 + $0x58] sm:$0xff]
  %v4539 = vld [vmem:[%s5 + $0x60] sm:$0xff]
  %v4540 = vld [vmem:[%s5 + $0x68] sm:$0xff]
  %v4541 = vld [vmem:[%s5 + $0x70] sm:$0xff]
  %v4542 = vld [vmem:[%s5 + $0x78] sm:$0xff]
  %4544 = vset.pattern.permute.xlu0 0
  %4545 = vperm.xlu0 %4544, %v4527
  %v4546 = vpop.permute.xlu0 %4545
  %4549 = vset.pattern.permute.xlu0 0
  %4550 = vperm.xlu0 %4549, %v4528
  %v4551 = vpop.permute.xlu0 %4550
  %4554 = vset.pattern.permute.xlu0 0
  %4555 = vperm.xlu0 %4554, %v4529
  %v4556 = vpop.permute.xlu0 %4555
  %4559 = vset.pattern.permute.xlu0 0
  %4560 = vperm.xlu0 %4559, %v4530
  %v4561 = vpop.permute.xlu0 %4560
  %4564 = vset.pattern.permute.xlu0 0
  %4565 = vperm.xlu0 %4564, %v4531
  %v4566 = vpop.permute.xlu0 %4565
  %4569 = vset.pattern.permute.xlu0 0
  %4570 = vperm.xlu0 %4569, %v4532
  %v4571 = vpop.permute.xlu0 %4570
  %4574 = vset.pattern.permute.xlu0 0
  %4575 = vperm.xlu0 %4574, %v4533
  %v4576 = vpop.permute.xlu0 %4575
  %4579 = vset.pattern.permute.xlu0 0
  %4580 = vperm.xlu0 %4579, %v4534
  %v4581 = vpop.permute.xlu0 %4580
  %4584 = vset.pattern.permute.xlu0 0
  %4585 = vperm.xlu0 %4584, %v4535
  %v4586 = vpop.permute.xlu0 %4585
  %4589 = vset.pattern.permute.xlu0 0
  %4590 = vperm.xlu0 %4589, %v4536
  %v4591 = vpop.permute.xlu0 %4590
  %4594 = vset.pattern.permute.xlu0 0
  %4595 = vperm.xlu0 %4594, %v4537
  %v4596 = vpop.permute.xlu0 %4595
  %4599 = vset.pattern.permute.xlu0 0
  %4600 = vperm.xlu0 %4599, %v4538
  %v4601 = vpop.permute.xlu0 %4600
  %4604 = vset.pattern.permute.xlu0 0
  %4605 = vperm.xlu0 %4604, %v4539
  %v4606 = vpop.permute.xlu0 %4605
  %4609 = vset.pattern.permute.xlu0 0
  %4610 = vperm.xlu0 %4609, %v4540
  %v4611 = vpop.permute.xlu0 %4610
  %4614 = vset.pattern.permute.xlu0 0
  %4615 = vperm.xlu0 %4614, %v4541
  %v4616 = vpop.permute.xlu0 %4615
  %4619 = vset.pattern.permute.xlu0 0
  %4620 = vperm.xlu0 %4619, %v4542
  %v4621 = vpop.permute.xlu0 %4620
  %v4623 = vadd.f32 %v4389, %v4546
  %v4624 = vadd.f32 %v4390, %v4551
  %v4625 = vadd.f32 %v4391, %v4556
  %v4626 = vadd.f32 %v4392, %v4561
  %v4627 = vadd.f32 %v4393, %v4566
  %v4628 = vadd.f32 %v4394, %v4571
  %v4629 = vadd.f32 %v4395, %v4576
  %v4630 = vadd.f32 %v4396, %v4581
  %v4631 = vadd.f32 %v4397, %v4586
  %v4632 = vadd.f32 %v4398, %v4591
  %v4633 = vadd.f32 %v4399, %v4596
  %v4634 = vadd.f32 %v4400, %v4601
  %v4635 = vadd.f32 %v4401, %v4606
  %v4636 = vadd.f32 %v4402, %v4611
  %v4637 = vadd.f32 %v4403, %v4616
  %v4638 = vadd.f32 %v4404, %v4621
  %v4639 = vmax.f32 %v4623, 0.0
  %v4640 = vmax.f32 %v4624, 0.0
  %v4641 = vmax.f32 %v4625, 0.0
  %v4642 = vmax.f32 %v4626, 0.0
  %v4643 = vmax.f32 %v4627, 0.0
  %v4644 = vmax.f32 %v4628, 0.0
  %v4645 = vmax.f32 %v4629, 0.0
  %v4646 = vmax.f32 %v4630, 0.0
  %v4647 = vmax.f32 %v4631, 0.0
  %v4648 = vmax.f32 %v4632, 0.0
  %v4649 = vmax.f32 %v4633, 0.0
  %v4650 = vmax.f32 %v4634, 0.0
  %v4651 = vmax.f32 %v4635, 0.0
  %v4652 = vmax.f32 %v4636, 0.0
  %v4653 = vmax.f32 %v4637, 0.0
  %v4654 = vmax.f32 %v4638, 0.0
  %v4655 = vpack.c.bf16 %v4640, %v4639
  %v4656 = vpack.c.bf16 %v4642, %v4641
  %v4657 = vpack.c.bf16 %v4644, %v4643
  %v4658 = vpack.c.bf16 %v4646, %v4645
  %v4659 = vpack.c.bf16 %v4648, %v4647
  %v4660 = vpack.c.bf16 %v4650, %v4649
  %v4661 = vpack.c.bf16 %v4652, %v4651
  %v4662 = vpack.c.bf16 %v4654, %v4653
  %v4663 = vld [vmem:[%s7] sm:$0xff]
  %v4664 = vld [vmem:[%s7 + $0x8] sm:$0xff]
  %v4665 = vld [vmem:[%s7 + $0x10] sm:$0xff]
  %v4666 = vld [vmem:[%s7 + $0x18] sm:$0xff]
  %v4667 = vld [vmem:[%s7 + $0x20] sm:$0xff]
  %v4668 = vld [vmem:[%s7 + $0x28] sm:$0xff]
  %v4669 = vld [vmem:[%s7 + $0x30] sm:$0xff]
  %v4670 = vld [vmem:[%s7 + $0x38] sm:$0xff]
  %4672 = vset.pattern.permute.xlu0 0
  %4673 = vperm.xlu0 %4672, %v4663
  %v4674 = vpop.permute.xlu0 %4673
  %4677 = vset.pattern.permute.xlu0 0
  %4678 = vperm.xlu0 %4677, %v4664
  %v4679 = vpop.permute.xlu0 %4678
  %4682 = vset.pattern.permute.xlu0 0
  %4683 = vperm.xlu0 %4682, %v4665
  %v4684 = vpop.permute.xlu0 %4683
  %4687 = vset.pattern.permute.xlu0 0
  %4688 = vperm.xlu0 %4687, %v4666
  %v4689 = vpop.permute.xlu0 %4688
  %4692 = vset.pattern.permute.xlu0 0
  %4693 = vperm.xlu0 %4692, %v4667
  %v4694 = vpop.permute.xlu0 %4693
  %4697 = vset.pattern.permute.xlu0 0
  %4698 = vperm.xlu0 %4697, %v4668
  %v4699 = vpop.permute.xlu0 %4698
  %4702 = vset.pattern.permute.xlu0 0
  %4703 = vperm.xlu0 %4702, %v4669
  %v4704 = vpop.permute.xlu0 %4703
  %4707 = vset.pattern.permute.xlu0 0
  %4708 = vperm.xlu0 %4707, %v4670
  %v4709 = vpop.permute.xlu0 %4708
  %v4711 = vadd.f32 %v4519, %v4674
  %v4712 = vadd.f32 %v4520, %v4679
  %v4713 = vadd.f32 %v4521, %v4684
  %v4714 = vadd.f32 %v4522, %v4689
  %v4715 = vadd.f32 %v4523, %v4694
  %v4716 = vadd.f32 %v4524, %v4699
  %v4717 = vadd.f32 %v4525, %v4704
  %v4718 = vadd.f32 %v4526, %v4709
  %v4719 = vld [vmem:[%s8] sm:$0x1]
  %v4721 = vlaneseq
  %v4722 = vshrl.u32 %v4721, 7
  %v4723 = vsub.s32 0, %v4722
  %v4724 = vrot.slane %v4719, %v4723
  %v4726 = vmul.f32 %v4711, %v4724
  %v4727 = vmul.f32 %v4712, %v4724
  %v4728 = vmul.f32 %v4713, %v4724
  %v4729 = vmul.f32 %v4714, %v4724
  %v4730 = vmul.f32 %v4715, %v4724
  %v4731 = vmul.f32 %v4716, %v4724
  %v4732 = vmul.f32 %v4717, %v4724
  %v4733 = vmul.f32 %v4718, %v4724
  %vm4734 = vcmask 523264
  %v4735 = vsel %vm4734, %v4726, 0.0
  %4736 = vadd.xlane.f32.xlu0 %v4735
  %v4737 = vpop.xlane.xlu0 %4736
  %v4738 = vsel %vm4734, %v4727, 0.0
  %4739 = vadd.xlane.f32.xlu0 %v4738
  %v4740 = vpop.xlane.xlu0 %4739
  %v4741 = vsel %vm4734, %v4728, 0.0
  %4742 = vadd.xlane.f32.xlu0 %v4741
  %v4743 = vpop.xlane.xlu0 %4742
  %v4744 = vsel %vm4734, %v4729, 0.0
  %4745 = vadd.xlane.f32.xlu0 %v4744
  %v4746 = vpop.xlane.xlu0 %4745
  %v4747 = vsel %vm4734, %v4730, 0.0
  %4748 = vadd.xlane.f32.xlu0 %v4747
  %v4749 = vpop.xlane.xlu0 %4748
  %v4750 = vsel %vm4734, %v4731, 0.0
  %4751 = vadd.xlane.f32.xlu0 %v4750
  %v4752 = vpop.xlane.xlu0 %4751
  %v4753 = vsel %vm4734, %v4732, 0.0
  %4754 = vadd.xlane.f32.xlu0 %v4753
  %v4755 = vpop.xlane.xlu0 %4754
  %v4756 = vsel %vm4734, %v4733, 0.0
  %4757 = vadd.xlane.f32.xlu0 %v4756
  %v4758 = vpop.xlane.xlu0 %4757
  %v4759 = vld [vmem:[%s9] sm:$0xf]
  %v4760 = vld [vmem:[%s9 + $0x4] sm:$0xf]
  %v4761 = vld [vmem:[%s9 + $0x8] sm:$0xf]
  %v4762 = vld [vmem:[%s9 + $0xc] sm:$0xf]
  %v4763 = vld [vmem:[%s9 + $0x10] sm:$0xf]
  %v4764 = vld [vmem:[%s9 + $0x14] sm:$0xf]
  %v4765 = vld [vmem:[%s9 + $0x18] sm:$0xf]
  %v4766 = vld [vmem:[%s9 + $0x1c] sm:$0xf]
  %v4775 = vunpack.c.l.b16 %v4759
  %v4776 = vunpack.c.l.b16 %v4760
  %v4777 = vunpack.c.l.b16 %v4761
  %v4778 = vunpack.c.l.b16 %v4762
  %v4779 = vunpack.c.l.b16 %v4763
  %v4780 = vunpack.c.l.b16 %v4764
  %v4781 = vunpack.c.l.b16 %v4765
  %v4782 = vunpack.c.l.b16 %v4766
  %v4783 = vpack.c.b16 %v4776, %v4775
  %v4784 = vpack.c.b16 %v4778, %v4777
  %v4785 = vpack.c.b16 %v4780, %v4779
  %v4786 = vpack.c.b16 %v4782, %v4781
  %v4792 = vsel %vm4734, %v4655, 0
  %v4795 = vsel %vm4734, %v4656, 0
  %v4798 = vsel %vm4734, %v4657, 0
  %v4801 = vsel %vm4734, %v4658, 0
  %v4804 = vsel %vm4734, %v4659, 0
  %v4807 = vsel %vm4734, %v4660, 0
  %v4810 = vsel %vm4734, %v4661, 0
  %v4813 = vsel %vm4734, %v4662, 0
  %4815 = vmatprep.subr.bf16.mxu0 0
  %4816 = vmatpush1.bf16.msra.mxu0 %v4783
  %4817 = vmatprep.subr.bf16.mxu0 0
  %4818 = vmatpush1.bf16.msra.mxu0 %v4784
  %4819 = vmatprep.subr.bf16.mxu0 0
  %4820 = vmatpush1.bf16.msra.mxu0 %v4785
  %4821 = vmatprep.subr.bf16.mxu0 0
  %4822 = vmatpush1.bf16.msra.mxu0 %v4786
  %4823 = vmatprep.subr.bf16.mxu0 0
  %4824 = vmatpush1.bf16.msra.mxu0 0
  %4825 = vmatprep.subr.bf16.mxu0 0
  %4826 = vmatpush1.bf16.msra.mxu0 0
  %4827 = vmatprep.subr.bf16.mxu0 0
  %4828 = vmatpush1.bf16.msra.mxu0 0
  %4829 = vmatprep.subr.bf16.mxu0 0
  %4830 = vmatpush1.bf16.msra.mxu0 0
  %4831 = vmatprep.subr.bf16.mxu0 0
  %4832 = vmatpush1.bf16.msra.mxu0 0
  %4833 = vmatprep.subr.bf16.mxu0 0
  %4834 = vmatpush1.bf16.msra.mxu0 0
  %4835 = vmatprep.subr.bf16.mxu0 0
  %4836 = vmatpush1.bf16.msra.mxu0 0
  %4837 = vmatprep.subr.bf16.mxu0 0
  %4838 = vmatpush1.bf16.msra.mxu0 0
  %4839 = vmatprep.subr.bf16.mxu0 0
  %4840 = vmatpush1.bf16.msra.mxu0 0
  %4841 = vmatprep.subr.bf16.mxu0 0
  %4842 = vmatpush1.bf16.msra.mxu0 0
  %4843 = vmatprep.subr.bf16.mxu0 0
  %4844 = vmatpush1.bf16.msra.mxu0 0
  %4845 = vmatprep.subr.bf16.mxu0 0
  %4846 = vmatpush1.bf16.msra.mxu0 0
  %4847 = vmatprep.mubr.bf16.mxu0 0
  %4848 = vmatmul.mubr.bf16.gmra.mrb[0].mxu0 %v4792
  %v4849 = vpop.f32.mrb[0].mxu0
  %v4850 = vadd.f32 0.0, %v4849
  %v4851 = vpop.f32.mrb[0].mxu0
  %v4852 = vpop.f32.mrb[0].mxu0
  %v4853 = vadd.f32 0.0, %v4852
  %v4854 = vpop.f32.mrb[0].mxu0
  %4855 = vmatprep.mubr.bf16.mxu0 0
  %4856 = vmatmul.mubr.bf16.gmra.mrb[0].mxu0 %v4795
  %v4857 = vpop.f32.mrb[0].mxu0
  %v4858 = vadd.f32 0.0, %v4857
  %v4859 = vpop.f32.mrb[0].mxu0
  %v4860 = vpop.f32.mrb[0].mxu0
  %v4861 = vadd.f32 0.0, %v4860
  %v4862 = vpop.f32.mrb[0].mxu0
  %4863 = vmatprep.mubr.bf16.mxu0 0
  %4864 = vmatmul.mubr.bf16.gmra.mrb[0].mxu0 %v4798
  %v4865 = vpop.f32.mrb[0].mxu0
  %v4866 = vadd.f32 0.0, %v4865
  %v4867 = vpop.f32.mrb[0].mxu0
  %v4868 = vpop.f32.mrb[0].mxu0
  %v4869 = vadd.f32 0.0, %v4868
  %v4870 = vpop.f32.mrb[0].mxu0
  %4871 = vmatprep.mubr.bf16.mxu0 0
  %4872 = vmatmul.mubr.bf16.gmra.mrb[0].mxu0 %v4801
  %v4873 = vpop.f32.mrb[0].mxu0
  %v4874 = vadd.f32 0.0, %v4873
  %v4875 = vpop.f32.mrb[0].mxu0
  %v4876 = vpop.f32.mrb[0].mxu0
  %v4877 = vadd.f32 0.0, %v4876
  %v4878 = vpop.f32.mrb[0].mxu0
  %4879 = vmatprep.mubr.bf16.mxu0 0
  %4880 = vmatmul.mubr.bf16.gmra.mrb[0].mxu0 %v4804
  %v4881 = vpop.f32.mrb[0].mxu0
  %v4882 = vadd.f32 0.0, %v4881
  %v4883 = vpop.f32.mrb[0].mxu0
  %v4884 = vpop.f32.mrb[0].mxu0
  %v4885 = vadd.f32 0.0, %v4884
  %v4886 = vpop.f32.mrb[0].mxu0
  %4887 = vmatprep.mubr.bf16.mxu0 0
  %4888 = vmatmul.mubr.bf16.gmra.mrb[0].mxu0 %v4807
  %v4889 = vpop.f32.mrb[0].mxu0
  %v4890 = vadd.f32 0.0, %v4889
  %v4891 = vpop.f32.mrb[0].mxu0
  %v4892 = vpop.f32.mrb[0].mxu0
  %v4893 = vadd.f32 0.0, %v4892
  %v4894 = vpop.f32.mrb[0].mxu0
  %4895 = vmatprep.mubr.bf16.mxu0 0
  %4896 = vmatmul.mubr.bf16.gmra.mrb[0].mxu0 %v4810
  %v4897 = vpop.f32.mrb[0].mxu0
  %v4898 = vadd.f32 0.0, %v4897
  %v4899 = vpop.f32.mrb[0].mxu0
  %v4900 = vpop.f32.mrb[0].mxu0
  %v4901 = vadd.f32 0.0, %v4900
  %v4902 = vpop.f32.mrb[0].mxu0
  %4903 = vmatprep.mubr.bf16.mxu0 0
  %4904 = vmatmul.mubr.bf16.gmra.mrb[0].mxu0 %v4813
  %v4905 = vpop.f32.mrb[0].mxu0
  %v4906 = vadd.f32 0.0, %v4905
  %v4907 = vpop.f32.mrb[0].mxu0
  %v4908 = vpop.f32.mrb[0].mxu0
  %v4909 = vadd.f32 0.0, %v4908
  %v4910 = vpop.f32.mrb[0].mxu0
  %4911 = vdwg.mxu0
  %v4912 = vpack.c.bf16 %v4853, %v4850
  %v4913 = vpack.c.bf16 %v4861, %v4858
  %v4914 = vpack.c.bf16 %v4869, %v4866
  %v4915 = vpack.c.bf16 %v4877, %v4874
  %v4916 = vpack.c.bf16 %v4885, %v4882
  %v4917 = vpack.c.bf16 %v4893, %v4890
  %v4918 = vpack.c.bf16 %v4901, %v4898
  %v4919 = vpack.c.bf16 %v4909, %v4906
  %v4920 = vld [vmem:[%s10] sm:$0xf]
  %v4921 = vld [vmem:[%s10 + $0x4] sm:$0xf]
  %v4922 = vld [vmem:[%s10 + $0x8] sm:$0xf]
  %v4923 = vld [vmem:[%s10 + $0xc] sm:$0xf]
  %v4924 = vld [vmem:[%s10 + $0x10] sm:$0xf]
  %v4925 = vld [vmem:[%s10 + $0x14] sm:$0xf]
  %v4926 = vld [vmem:[%s10 + $0x18] sm:$0xf]
  %v4927 = vld [vmem:[%s10 + $0x1c] sm:$0xf]
  %s4928 = scalar_lea.vmem %s9, 32
  %v4929 = vld [vmem:[%s4928] sm:$0xf]
  %v4930 = vld [vmem:[%s4928 + $0x4] sm:$0xf]
  %v4931 = vld [vmem:[%s4928 + $0x8] sm:$0xf]
  %v4932 = vld [vmem:[%s4928 + $0xc] sm:$0xf]
  %v4933 = vld [vmem:[%s4928 + $0x10] sm:$0xf]
  %v4934 = vld [vmem:[%s4928 + $0x14] sm:$0xf]
  %v4935 = vld [vmem:[%s4928 + $0x18] sm:$0xf]
  %v4936 = vld [vmem:[%s4928 + $0x1c] sm:$0xf]
  %v4945 = vunpack.c.l.b16 %v4929
  %v4946 = vunpack.c.l.b16 %v4930
  %v4947 = vunpack.c.l.b16 %v4931
  %v4948 = vunpack.c.l.b16 %v4932
  %v4949 = vunpack.c.l.b16 %v4933
  %v4950 = vunpack.c.l.b16 %v4934
  %v4951 = vunpack.c.l.b16 %v4935
  %v4952 = vunpack.c.l.b16 %v4936
  %v4953 = vpack.c.b16 %v4946, %v4945
  %v4954 = vpack.c.b16 %v4948, %v4947
  %v4955 = vpack.c.b16 %v4950, %v4949
  %v4956 = vpack.c.b16 %v4952, %v4951
  %4961 = vmatprep.subr.bf16.mxu0 0
  %4962 = vmatpush1.bf16.msra.mxu0 %v4953
  %4963 = vmatprep.subr.bf16.mxu0 0
  %4964 = vmatpush1.bf16.msra.mxu0 %v4954
  %4965 = vmatprep.subr.bf16.mxu0 0
  %4966 = vmatpush1.bf16.msra.mxu0 %v4955
  %4967 = vmatprep.subr.bf16.mxu0 0
  %4968 = vmatpush1.bf16.msra.mxu0 %v4956
  %4969 = vmatprep.subr.bf16.mxu0 0
  %4970 = vmatpush1.bf16.msra.mxu0 0
  %4971 = vmatprep.subr.bf16.mxu0 0
  %4972 = vmatpush1.bf16.msra.mxu0 0
  %4973 = vmatprep.subr.bf16.mxu0 0
  %4974 = vmatpush1.bf16.msra.mxu0 0
  %4975 = vmatprep.subr.bf16.mxu0 0
  %4976 = vmatpush1.bf16.msra.mxu0 0
  %4977 = vmatprep.subr.bf16.mxu0 0
  %4978 = vmatpush1.bf16.msra.mxu0 0
  %4979 = vmatprep.subr.bf16.mxu0 0
  %4980 = vmatpush1.bf16.msra.mxu0 0
  %4981 = vmatprep.subr.bf16.mxu0 0
  %4982 = vmatpush1.bf16.msra.mxu0 0
  %4983 = vmatprep.subr.bf16.mxu0 0
  %4984 = vmatpush1.bf16.msra.mxu0 0
  %4985 = vmatprep.subr.bf16.mxu0 0
  %4986 = vmatpush1.bf16.msra.mxu0 0
  %4987 = vmatprep.subr.bf16.mxu0 0
  %4988 = vmatpush1.bf16.msra.mxu0 0
  %4989 = vmatprep.subr.bf16.mxu0 0
  %4990 = vmatpush1.bf16.msra.mxu0 0
  %4991 = vmatprep.subr.bf16.mxu0 0
  %4992 = vmatpush1.bf16.msra.mxu0 0
  %4993 = vmatprep.mubr.bf16.mxu0 0
  %4994 = vmatmul.mubr.bf16.gmra.mrb[0].mxu0 %v4792
  %v4995 = vpop.f32.mrb[0].mxu0
  %v4996 = vadd.f32 0.0, %v4995
  %v4997 = vpop.f32.mrb[0].mxu0
  %v4998 = vpop.f32.mrb[0].mxu0
  %v4999 = vadd.f32 0.0, %v4998
  %v5000 = vpop.f32.mrb[0].mxu0
  %5001 = vmatprep.mubr.bf16.mxu0 0
  %5002 = vmatmul.mubr.bf16.gmra.mrb[0].mxu0 %v4795
  %v5003 = vpop.f32.mrb[0].mxu0
  %v5004 = vadd.f32 0.0, %v5003
  %v5005 = vpop.f32.mrb[0].mxu0
  %v5006 = vpop.f32.mrb[0].mxu0
  %v5007 = vadd.f32 0.0, %v5006
  %v5008 = vpop.f32.mrb[0].mxu0
  %5009 = vmatprep.mubr.bf16.mxu0 0
  %5010 = vmatmul.mubr.bf16.gmra.mrb[0].mxu0 %v4798
  %v5011 = vpop.f32.mrb[0].mxu0
  %v5012 = vadd.f32 0.0, %v5011
  %v5013 = vpop.f32.mrb[0].mxu0
  %v5014 = vpop.f32.mrb[0].mxu0
  %v5015 = vadd.f32 0.0, %v5014
  %v5016 = vpop.f32.mrb[0].mxu0
  %5017 = vmatprep.mubr.bf16.mxu0 0
  %5018 = vmatmul.mubr.bf16.gmra.mrb[0].mxu0 %v4801
  %v5019 = vpop.f32.mrb[0].mxu0
  %v5020 = vadd.f32 0.0, %v5019
  %v5021 = vpop.f32.mrb[0].mxu0
  %v5022 = vpop.f32.mrb[0].mxu0
  %v5023 = vadd.f32 0.0, %v5022
  %v5024 = vpop.f32.mrb[0].mxu0
  %5025 = vmatprep.mubr.bf16.mxu0 0
  %5026 = vmatmul.mubr.bf16.gmra.mrb[0].mxu0 %v4804
  %v5027 = vpop.f32.mrb[0].mxu0
  %v5028 = vadd.f32 0.0, %v5027
  %v5029 = vpop.f32.mrb[0].mxu0
  %v5030 = vpop.f32.mrb[0].mxu0
  %v5031 = vadd.f32 0.0, %v5030
  %v5032 = vpop.f32.mrb[0].mxu0
  %5033 = vmatprep.mubr.bf16.mxu0 0
  %5034 = vmatmul.mubr.bf16.gmra.mrb[0].mxu0 %v4807
  %v5035 = vpop.f32.mrb[0].mxu0
  %v5036 = vadd.f32 0.0, %v5035
  %v5037 = vpop.f32.mrb[0].mxu0
  %v5038 = vpop.f32.mrb[0].mxu0
  %v5039 = vadd.f32 0.0, %v5038
  %v5040 = vpop.f32.mrb[0].mxu0
  %5041 = vmatprep.mubr.bf16.mxu0 0
  %5042 = vmatmul.mubr.bf16.gmra.mrb[0].mxu0 %v4810
  %v5043 = vpop.f32.mrb[0].mxu0
  %v5044 = vadd.f32 0.0, %v5043
  %v5045 = vpop.f32.mrb[0].mxu0
  %v5046 = vpop.f32.mrb[0].mxu0
  %v5047 = vadd.f32 0.0, %v5046
  %v5048 = vpop.f32.mrb[0].mxu0
  %5049 = vmatprep.mubr.bf16.mxu0 0
  %5050 = vmatmul.mubr.bf16.gmra.mrb[0].mxu0 %v4813
  %v5051 = vpop.f32.mrb[0].mxu0
  %v5052 = vadd.f32 0.0, %v5051
  %v5053 = vpop.f32.mrb[0].mxu0
  %v5054 = vpop.f32.mrb[0].mxu0
  %v5055 = vadd.f32 0.0, %v5054
  %v5056 = vpop.f32.mrb[0].mxu0
  %5057 = vdwg.mxu0
  %v5058 = vpack.c.bf16 %v4999, %v4996
  %v5059 = vpack.c.bf16 %v5007, %v5004
  %v5060 = vpack.c.bf16 %v5015, %v5012
  %v5061 = vpack.c.bf16 %v5023, %v5020
  %v5062 = vpack.c.bf16 %v5031, %v5028
  %v5063 = vpack.c.bf16 %v5039, %v5036
  %v5064 = vpack.c.bf16 %v5047, %v5044
  %v5065 = vpack.c.bf16 %v5055, %v5052
  %s5066 = scalar_lea.vmem %s10, 32
  %v5067 = vld [vmem:[%s5066] sm:$0xf]
  %v5068 = vld [vmem:[%s5066 + $0x4] sm:$0xf]
  %v5069 = vld [vmem:[%s5066 + $0x8] sm:$0xf]
  %v5070 = vld [vmem:[%s5066 + $0xc] sm:$0xf]
  %v5071 = vld [vmem:[%s5066 + $0x10] sm:$0xf]
  %v5072 = vld [vmem:[%s5066 + $0x14] sm:$0xf]
  %v5073 = vld [vmem:[%s5066 + $0x18] sm:$0xf]
  %v5074 = vld [vmem:[%s5066 + $0x1c] sm:$0xf]
  %v5083 = vunpack.c.l.b16 %v5067
  %v5084 = vunpack.c.l.b16 %v5068
  %v5085 = vunpack.c.l.b16 %v5069
  %v5086 = vunpack.c.l.b16 %v5070
  %v5087 = vunpack.c.l.b16 %v5071
  %v5088 = vunpack.c.l.b16 %v5072
  %v5089 = vunpack.c.l.b16 %v5073
  %v5090 = vunpack.c.l.b16 %v5074
  %v5091 = vpack.c.b16 %v5084, %v5083
  %v5092 = vpack.c.b16 %v5086, %v5085
  %v5093 = vpack.c.b16 %v5088, %v5087
  %v5094 = vpack.c.b16 %v5090, %v5089
  %5099 = vmatprep.subr.bf16.mxu0 0
  %5100 = vmatpush1.bf16.msra.mxu0 %v5058
  %5101 = vmatprep.subr.bf16.mxu0 0
  %5102 = vmatpush1.bf16.msra.mxu0 %v5059
  %5103 = vmatprep.subr.bf16.mxu0 0
  %5104 = vmatpush1.bf16.msra.mxu0 %v5060
  %5105 = vmatprep.subr.bf16.mxu0 0
  %5106 = vmatpush1.bf16.msra.mxu0 %v5061
  %5107 = vmatprep.subr.bf16.mxu0 0
  %5108 = vmatpush1.bf16.msra.mxu0 %v5062
  %5109 = vmatprep.subr.bf16.mxu0 0
  %5110 = vmatpush1.bf16.msra.mxu0 %v5063
  %5111 = vmatprep.subr.bf16.mxu0 0
  %5112 = vmatpush1.bf16.msra.mxu0 %v5064
  %5113 = vmatprep.subr.bf16.mxu0 0
  %5114 = vmatpush1.bf16.msra.mxu0 %v5065
  %5115 = vmatprep.subr.bf16.mxu0 0
  %5116 = vmatpush1.bf16.msra.mxu0 0
  %5117 = vmatprep.subr.bf16.mxu0 0
  %5118 = vmatpush1.bf16.msra.mxu0 0
  %5119 = vmatprep.subr.bf16.mxu0 0
  %5120 = vmatpush1.bf16.msra.mxu0 0
  %5121 = vmatprep.subr.bf16.mxu0 0
  %5122 = vmatpush1.bf16.msra.mxu0 0
  %5123 = vmatprep.subr.bf16.mxu0 0
  %5124 = vmatpush1.bf16.msra.mxu0 0
  %5125 = vmatprep.subr.bf16.mxu0 0
  %5126 = vmatpush1.bf16.msra.mxu0 0
  %5127 = vmatprep.subr.bf16.mxu0 0
  %5128 = vmatpush1.bf16.msra.mxu0 0
  %5129 = vmatprep.subr.bf16.mxu0 0
  %5130 = vmatpush1.bf16.msra.mxu0 0
  %5131 = vmatprep.mubr.bf16.mxu0 0
  %5132 = vmatmul.mubr.bf16.gmra.mrb[0].mxu0 %v5091
  %v5133 = vpop.f32.mrb[0].mxu0
  %v5134 = vadd.f32 0.0, %v5133
  %v5135 = vpop.f32.mrb[0].mxu0
  %v5136 = vpop.f32.mrb[0].mxu0
  %v5137 = vadd.f32 0.0, %v5136
  %v5138 = vpop.f32.mrb[0].mxu0
  %5139 = vmatprep.mubr.bf16.mxu0 0
  %5140 = vmatmul.mubr.bf16.gmra.mrb[0].mxu0 %v5092
  %v5141 = vpop.f32.mrb[0].mxu0
  %v5142 = vadd.f32 0.0, %v5141
  %v5143 = vpop.f32.mrb[0].mxu0
  %v5144 = vpop.f32.mrb[0].mxu0
  %v5145 = vadd.f32 0.0, %v5144
  %v5146 = vpop.f32.mrb[0].mxu0
  %5147 = vmatprep.mubr.bf16.mxu0 0
  %5148 = vmatmul.mubr.bf16.gmra.mrb[0].mxu0 %v5093
  %v5149 = vpop.f32.mrb[0].mxu0
  %v5150 = vadd.f32 0.0, %v5149
  %v5151 = vpop.f32.mrb[0].mxu0
  %v5152 = vpop.f32.mrb[0].mxu0
  %v5153 = vadd.f32 0.0, %v5152
  %v5154 = vpop.f32.mrb[0].mxu0
  %5155 = vmatprep.mubr.bf16.mxu0 0
  %5156 = vmatmul.mubr.bf16.gmra.mrb[0].mxu0 %v5094
  %v5157 = vpop.f32.mrb[0].mxu0
  %v5158 = vadd.f32 0.0, %v5157
  %v5159 = vpop.f32.mrb[0].mxu0
  %v5160 = vpop.f32.mrb[0].mxu0
  %v5161 = vadd.f32 0.0, %v5160
  %v5162 = vpop.f32.mrb[0].mxu0
  %5163 = vdwg.mxu0
  %v5172 = vunpack.c.l.b16 %v4920
  %v5173 = vunpack.c.l.b16 %v4921
  %v5174 = vunpack.c.l.b16 %v4922
  %v5175 = vunpack.c.l.b16 %v4923
  %v5176 = vunpack.c.l.b16 %v4924
  %v5177 = vunpack.c.l.b16 %v4925
  %v5178 = vunpack.c.l.b16 %v4926
  %v5179 = vunpack.c.l.b16 %v4927
  %v5180 = vpack.c.b16 %v5173, %v5172
  %v5181 = vpack.c.b16 %v5175, %v5174
  %v5182 = vpack.c.b16 %v5177, %v5176
  %v5183 = vpack.c.b16 %v5179, %v5178
  %5188 = vmatprep.subr.bf16.mxu0 0
  %5189 = vmatpush1.bf16.msra.mxu0 %v4912
  %5190 = vmatprep.subr.bf16.mxu0 0
  %5191 = vmatpush1.bf16.msra.mxu0 %v4913
  %5192 = vmatprep.subr.bf16.mxu0 0
  %5193 = vmatpush1.bf16.msra.mxu0 %v4914
  %5194 = vmatprep.subr.bf16.mxu0 0
  %5195 = vmatpush1.bf16.msra.mxu0 %v4915
  %5196 = vmatprep.subr.bf16.mxu0 0
  %5197 = vmatpush1.bf16.msra.mxu0 %v4916
  %5198 = vmatprep.subr.bf16.mxu0 0
  %5199 = vmatpush1.bf16.msra.mxu0 %v4917
  %5200 = vmatprep.subr.bf16.mxu0 0
  %5201 = vmatpush1.bf16.msra.mxu0 %v4918
  %5202 = vmatprep.subr.bf16.mxu0 0
  %5203 = vmatpush1.bf16.msra.mxu0 %v4919
  %5204 = vmatprep.subr.bf16.mxu0 0
  %5205 = vmatpush1.bf16.msra.mxu0 0
  %5206 = vmatprep.subr.bf16.mxu0 0
  %5207 = vmatpush1.bf16.msra.mxu0 0
  %5208 = vmatprep.subr.bf16.mxu0 0
  %5209 = vmatpush1.bf16.msra.mxu0 0
  %5210 = vmatprep.subr.bf16.mxu0 0
  %5211 = vmatpush1.bf16.msra.mxu0 0
  %5212 = vmatprep.subr.bf16.mxu0 0
  %5213 = vmatpush1.bf16.msra.mxu0 0
  %5214 = vmatprep.subr.bf16.mxu0 0
  %5215 = vmatpush1.bf16.msra.mxu0 0
  %5216 = vmatprep.subr.bf16.mxu0 0
  %5217 = vmatpush1.bf16.msra.mxu0 0
  %5218 = vmatprep.subr.bf16.mxu0 0
  %5219 = vmatpush1.bf16.msra.mxu0 0
  %5220 = vmatprep.mubr.bf16.mxu0 0
  %5221 = vmatmul.mubr.bf16.gmra.mrb[0].mxu0 %v5180
  %v5222 = vpop.f32.mrb[0].mxu0
  %v5223 = vadd.f32 %v5134, %v5222
  %v5224 = vpop.f32.mrb[0].mxu0
  %v5225 = vpop.f32.mrb[0].mxu0
  %v5226 = vadd.f32 %v5137, %v5225
  %v5227 = vpop.f32.mrb[0].mxu0
  %5228 = vmatprep.mubr.bf16.mxu0 0
  %5229 = vmatmul.mubr.bf16.gmra.mrb[0].mxu0 %v5181
  %v5230 = vpop.f32.mrb[0].mxu0
  %v5231 = vadd.f32 %v5142, %v5230
  %v5232 = vpop.f32.mrb[0].mxu0
  %v5233 = vpop.f32.mrb[0].mxu0
  %v5234 = vadd.f32 %v5145, %v5233
  %v5235 = vpop.f32.mrb[0].mxu0
  %5236 = vmatprep.mubr.bf16.mxu0 0
  %5237 = vmatmul.mubr.bf16.gmra.mrb[0].mxu0 %v5182
  %v5238 = vpop.f32.mrb[0].mxu0
  %v5239 = vadd.f32 %v5150, %v5238
  %v5240 = vpop.f32.mrb[0].mxu0
  %v5241 = vpop.f32.mrb[0].mxu0
  %v5242 = vadd.f32 %v5153, %v5241
  %v5243 = vpop.f32.mrb[0].mxu0
  %5244 = vmatprep.mubr.bf16.mxu0 0
  %5245 = vmatmul.mubr.bf16.gmra.mrb[0].mxu0 %v5183
  %v5246 = vpop.f32.mrb[0].mxu0
  %v5247 = vadd.f32 %v5158, %v5246
  %v5248 = vpop.f32.mrb[0].mxu0
  %v5249 = vpop.f32.mrb[0].mxu0
  %v5250 = vadd.f32 %v5161, %v5249
  %v5251 = vpop.f32.mrb[0].mxu0
  %5252 = vdwg.mxu0
  %s5253 = scalar_lea.vmem %s9, 64
  %v5254 = vld [vmem:[%s5253] sm:$0xf]
  %v5255 = vld [vmem:[%s5253 + $0x4] sm:$0xf]
  %v5256 = vld [vmem:[%s5253 + $0x8] sm:$0xf]
  %v5257 = vld [vmem:[%s5253 + $0xc] sm:$0xf]
  %v5258 = vld [vmem:[%s5253 + $0x10] sm:$0xf]
  %v5259 = vld [vmem:[%s5253 + $0x14] sm:$0xf]
  %v5260 = vld [vmem:[%s5253 + $0x18] sm:$0xf]
  %v5261 = vld [vmem:[%s5253 + $0x1c] sm:$0xf]
  %v5270 = vunpack.c.l.b16 %v5254
  %v5271 = vunpack.c.l.b16 %v5255
  %v5272 = vunpack.c.l.b16 %v5256
  %v5273 = vunpack.c.l.b16 %v5257
  %v5274 = vunpack.c.l.b16 %v5258
  %v5275 = vunpack.c.l.b16 %v5259
  %v5276 = vunpack.c.l.b16 %v5260
  %v5277 = vunpack.c.l.b16 %v5261
  %v5278 = vpack.c.b16 %v5271, %v5270
  %v5279 = vpack.c.b16 %v5273, %v5272
  %v5280 = vpack.c.b16 %v5275, %v5274
  %v5281 = vpack.c.b16 %v5277, %v5276
  %5286 = vmatprep.subr.bf16.mxu0 0
  %5287 = vmatpush1.bf16.msra.mxu0 %v5278
  %5288 = vmatprep.subr.bf16.mxu0 0
  %5289 = vmatpush1.bf16.msra.mxu0 %v5279
  %5290 = vmatprep.subr.bf16.mxu0 0
  %5291 = vmatpush1.bf16.msra.mxu0 %v5280
  %5292 = vmatprep.subr.bf16.mxu0 0
  %5293 = vmatpush1.bf16.msra.mxu0 %v5281
  %5294 = vmatprep.subr.bf16.mxu0 0
  %5295 = vmatpush1.bf16.msra.mxu0 0
  %5296 = vmatprep.subr.bf16.mxu0 0
  %5297 = vmatpush1.bf16.msra.mxu0 0
  %5298 = vmatprep.subr.bf16.mxu0 0
  %5299 = vmatpush1.bf16.msra.mxu0 0
  %5300 = vmatprep.subr.bf16.mxu0 0
  %5301 = vmatpush1.bf16.msra.mxu0 0
  %5302 = vmatprep.subr.bf16.mxu0 0
  %5303 = vmatpush1.bf16.msra.mxu0 0
  %5304 = vmatprep.subr.bf16.mxu0 0
  %5305 = vmatpush1.bf16.msra.mxu0 0
  %5306 = vmatprep.subr.bf16.mxu0 0
  %5307 = vmatpush1.bf16.msra.mxu0 0
  %5308 = vmatprep.subr.bf16.mxu0 0
  %5309 = vmatpush1.bf16.msra.mxu0 0
  %5310 = vmatprep.subr.bf16.mxu0 0
  %5311 = vmatpush1.bf16.msra.mxu0 0
  %5312 = vmatprep.subr.bf16.mxu0 0
  %5313 = vmatpush1.bf16.msra.mxu0 0
  %5314 = vmatprep.subr.bf16.mxu0 0
  %5315 = vmatpush1.bf16.msra.mxu0 0
  %5316 = vmatprep.subr.bf16.mxu0 0
  %5317 = vmatpush1.bf16.msra.mxu0 0
  %5318 = vmatprep.mubr.bf16.mxu0 0
  %5319 = vmatmul.mubr.bf16.gmra.mrb[0].mxu0 %v4792
  %v5320 = vpop.f32.mrb[0].mxu0
  %v5321 = vadd.f32 0.0, %v5320
  %v5322 = vpop.f32.mrb[0].mxu0
  %v5323 = vpop.f32.mrb[0].mxu0
  %v5324 = vadd.f32 0.0, %v5323
  %v5325 = vpop.f32.mrb[0].mxu0
  %5326 = vmatprep.mubr.bf16.mxu0 0
  %5327 = vmatmul.mubr.bf16.gmra.mrb[0].mxu0 %v4795
  %v5328 = vpop.f32.mrb[0].mxu0
  %v5329 = vadd.f32 0.0, %v5328
  %v5330 = vpop.f32.mrb[0].mxu0
  %v5331 = vpop.f32.mrb[0].mxu0
  %v5332 = vadd.f32 0.0, %v5331
  %v5333 = vpop.f32.mrb[0].mxu0
  %5334 = vmatprep.mubr.bf16.mxu0 0
  %5335 = vmatmul.mubr.bf16.gmra.mrb[0].mxu0 %v4798
  %v5336 = vpop.f32.mrb[0].mxu0
  %v5337 = vadd.f32 0.0, %v5336
  %v5338 = vpop.f32.mrb[0].mxu0
  %v5339 = vpop.f32.mrb[0].mxu0
  %v5340 = vadd.f32 0.0, %v5339
  %v5341 = vpop.f32.mrb[0].mxu0
  %5342 = vmatprep.mubr.bf16.mxu0 0
  %5343 = vmatmul.mubr.bf16.gmra.mrb[0].mxu0 %v4801
  %v5344 = vpop.f32.mrb[0].mxu0
  %v5345 = vadd.f32 0.0, %v5344
  %v5346 = vpop.f32.mrb[0].mxu0
  %v5347 = vpop.f32.mrb[0].mxu0
  %v5348 = vadd.f32 0.0, %v5347
  %v5349 = vpop.f32.mrb[0].mxu0
  %5350 = vmatprep.mubr.bf16.mxu0 0
  %5351 = vmatmul.mubr.bf16.gmra.mrb[0].mxu0 %v4804
  %v5352 = vpop.f32.mrb[0].mxu0
  %v5353 = vadd.f32 0.0, %v5352
  %v5354 = vpop.f32.mrb[0].mxu0
  %v5355 = vpop.f32.mrb[0].mxu0
  %v5356 = vadd.f32 0.0, %v5355
  %v5357 = vpop.f32.mrb[0].mxu0
  %5358 = vmatprep.mubr.bf16.mxu0 0
  %5359 = vmatmul.mubr.bf16.gmra.mrb[0].mxu0 %v4807
  %v5360 = vpop.f32.mrb[0].mxu0
  %v5361 = vadd.f32 0.0, %v5360
  %v5362 = vpop.f32.mrb[0].mxu0
  %v5363 = vpop.f32.mrb[0].mxu0
  %v5364 = vadd.f32 0.0, %v5363
  %v5365 = vpop.f32.mrb[0].mxu0
  %5366 = vmatprep.mubr.bf16.mxu0 0
  %5367 = vmatmul.mubr.bf16.gmra.mrb[0].mxu0 %v4810
  %v5368 = vpop.f32.mrb[0].mxu0
  %v5369 = vadd.f32 0.0, %v5368
  %v5370 = vpop.f32.mrb[0].mxu0
  %v5371 = vpop.f32.mrb[0].mxu0
  %v5372 = vadd.f32 0.0, %v5371
  %v5373 = vpop.f32.mrb[0].mxu0
  %5374 = vmatprep.mubr.bf16.mxu0 0
  %5375 = vmatmul.mubr.bf16.gmra.mrb[0].mxu0 %v4813
  %v5376 = vpop.f32.mrb[0].mxu0
  %v5377 = vadd.f32 0.0, %v5376
  %v5378 = vpop.f32.mrb[0].mxu0
  %v5379 = vpop.f32.mrb[0].mxu0
  %v5380 = vadd.f32 0.0, %v5379
  %v5381 = vpop.f32.mrb[0].mxu0
  %5382 = vdwg.mxu0
  %v5383 = vpack.c.bf16 %v5324, %v5321
  %v5384 = vpack.c.bf16 %v5332, %v5329
  %v5385 = vpack.c.bf16 %v5340, %v5337
  %v5386 = vpack.c.bf16 %v5348, %v5345
  %v5387 = vpack.c.bf16 %v5356, %v5353
  %v5388 = vpack.c.bf16 %v5364, %v5361
  %v5389 = vpack.c.bf16 %v5372, %v5369
  %v5390 = vpack.c.bf16 %v5380, %v5377
  %s5391 = scalar_lea.vmem %s10, 64
  %v5392 = vld [vmem:[%s5391] sm:$0xf]
  %v5393 = vld [vmem:[%s5391 + $0x4] sm:$0xf]
  %v5394 = vld [vmem:[%s5391 + $0x8] sm:$0xf]
  %v5395 = vld [vmem:[%s5391 + $0xc] sm:$0xf]
  %v5396 = vld [vmem:[%s5391 + $0x10] sm:$0xf]
  %v5397 = vld [vmem:[%s5391 + $0x14] sm:$0xf]
  %v5398 = vld [vmem:[%s5391 + $0x18] sm:$0xf]
  %v5399 = vld [vmem:[%s5391 + $0x1c] sm:$0xf]
  %v5408 = vunpack.c.l.b16 %v5392
  %v5409 = vunpack.c.l.b16 %v5393
  %v5410 = vunpack.c.l.b16 %v5394
  %v5411 = vunpack.c.l.b16 %v5395
  %v5412 = vunpack.c.l.b16 %v5396
  %v5413 = vunpack.c.l.b16 %v5397
  %v5414 = vunpack.c.l.b16 %v5398
  %v5415 = vunpack.c.l.b16 %v5399
  %v5416 = vpack.c.b16 %v5409, %v5408
  %v5417 = vpack.c.b16 %v5411, %v5410
  %v5418 = vpack.c.b16 %v5413, %v5412
  %v5419 = vpack.c.b16 %v5415, %v5414
  %5424 = vmatprep.subr.bf16.mxu0 0
  %5425 = vmatpush1.bf16.msra.mxu0 %v5383
  %5426 = vmatprep.subr.bf16.mxu0 0
  %5427 = vmatpush1.bf16.msra.mxu0 %v5384
  %5428 = vmatprep.subr.bf16.mxu0 0
  %5429 = vmatpush1.bf16.msra.mxu0 %v5385
  %5430 = vmatprep.subr.bf16.mxu0 0
  %5431 = vmatpush1.bf16.msra.mxu0 %v5386
  %5432 = vmatprep.subr.bf16.mxu0 0
  %5433 = vmatpush1.bf16.msra.mxu0 %v5387
  %5434 = vmatprep.subr.bf16.mxu0 0
  %5435 = vmatpush1.bf16.msra.mxu0 %v5388
  %5436 = vmatprep.subr.bf16.mxu0 0
  %5437 = vmatpush1.bf16.msra.mxu0 %v5389
  %5438 = vmatprep.subr.bf16.mxu0 0
  %5439 = vmatpush1.bf16.msra.mxu0 %v5390
  %5440 = vmatprep.subr.bf16.mxu0 0
  %5441 = vmatpush1.bf16.msra.mxu0 0
  %5442 = vmatprep.subr.bf16.mxu0 0
  %5443 = vmatpush1.bf16.msra.mxu0 0
  %5444 = vmatprep.subr.bf16.mxu0 0
  %5445 = vmatpush1.bf16.msra.mxu0 0
  %5446 = vmatprep.subr.bf16.mxu0 0
  %5447 = vmatpush1.bf16.msra.mxu0 0
  %5448 = vmatprep.subr.bf16.mxu0 0
  %5449 = vmatpush1.bf16.msra.mxu0 0
  %5450 = vmatprep.subr.bf16.mxu0 0
  %5451 = vmatpush1.bf16.msra.mxu0 0
  %5452 = vmatprep.subr.bf16.mxu0 0
  %5453 = vmatpush1.bf16.msra.mxu0 0
  %5454 = vmatprep.subr.bf16.mxu0 0
  %5455 = vmatpush1.bf16.msra.mxu0 0
  %5456 = vmatprep.mubr.bf16.mxu0 0
  %5457 = vmatmul.mubr.bf16.gmra.mrb[0].mxu0 %v5416
  %v5458 = vpop.f32.mrb[0].mxu0
  %v5459 = vadd.f32 0.0, %v5458
  %v5460 = vpop.f32.mrb[0].mxu0
  %v5461 = vpop.f32.mrb[0].mxu0
  %v5462 = vadd.f32 0.0, %v5461
  %v5463 = vpop.f32.mrb[0].mxu0
  %5464 = vmatprep.mubr.bf16.mxu0 0
  %5465 = vmatmul.mubr.bf16.gmra.mrb[0].mxu0 %v5417
  %v5466 = vpop.f32.mrb[0].mxu0
  %v5467 = vadd.f32 0.0, %v5466
  %v5468 = vpop.f32.mrb[0].mxu0
  %v5469 = vpop.f32.mrb[0].mxu0
  %v5470 = vadd.f32 0.0, %v5469
  %v5471 = vpop.f32.mrb[0].mxu0
  %5472 = vmatprep.mubr.bf16.mxu0 0
  %5473 = vmatmul.mubr.bf16.gmra.mrb[0].mxu0 %v5418
  %v5474 = vpop.f32.mrb[0].mxu0
  %v5475 = vadd.f32 0.0, %v5474
  %v5476 = vpop.f32.mrb[0].mxu0
  %v5477 = vpop.f32.mrb[0].mxu0
  %v5478 = vadd.f32 0.0, %v5477
  %v5479 = vpop.f32.mrb[0].mxu0
  %5480 = vmatprep.mubr.bf16.mxu0 0
  %5481 = vmatmul.mubr.bf16.gmra.mrb[0].mxu0 %v5419
  %v5482 = vpop.f32.mrb[0].mxu0
  %v5483 = vadd.f32 0.0, %v5482
  %v5484 = vpop.f32.mrb[0].mxu0
  %v5485 = vpop.f32.mrb[0].mxu0
  %v5486 = vadd.f32 0.0, %v5485
  %v5487 = vpop.f32.mrb[0].mxu0
  %5488 = vdwg.mxu0
  %v5489 = vadd.f32 %v5223, %v5459
  %v5490 = vadd.f32 %v5226, %v5462
  %v5491 = vadd.f32 %v5231, %v5467
  %v5492 = vadd.f32 %v5234, %v5470
  %v5493 = vadd.f32 %v5239, %v5475
  %v5494 = vadd.f32 %v5242, %v5478
  %v5495 = vadd.f32 %v5247, %v5483
  %v5496 = vadd.f32 %v5250, %v5486
  %s5497 = scalar_lea.vmem %s9, 96
  %v5498 = vld [vmem:[%s5497] sm:$0xf]
  %v5499 = vld [vmem:[%s5497 + $0x4] sm:$0xf]
  %v5500 = vld [vmem:[%s5497 + $0x8] sm:$0xf]
  %v5501 = vld [vmem:[%s5497 + $0xc] sm:$0xf]
  %v5502 = vld [vmem:[%s5497 + $0x10] sm:$0xf]
  %v5503 = vld [vmem:[%s5497 + $0x14] sm:$0xf]
  %v5504 = vld [vmem:[%s5497 + $0x18] sm:$0xf]
  %v5505 = vld [vmem:[%s5497 + $0x1c] sm:$0xf]
  %v5514 = vunpack.c.l.b16 %v5498
  %v5515 = vunpack.c.l.b16 %v5499
  %v5516 = vunpack.c.l.b16 %v5500
  %v5517 = vunpack.c.l.b16 %v5501
  %v5518 = vunpack.c.l.b16 %v5502
  %v5519 = vunpack.c.l.b16 %v5503
  %v5520 = vunpack.c.l.b16 %v5504
  %v5521 = vunpack.c.l.b16 %v5505
  %v5522 = vpack.c.b16 %v5515, %v5514
  %v5523 = vpack.c.b16 %v5517, %v5516
  %v5524 = vpack.c.b16 %v5519, %v5518
  %v5525 = vpack.c.b16 %v5521, %v5520
  %5530 = vmatprep.subr.bf16.mxu0 0
  %5531 = vmatpush1.bf16.msra.mxu0 %v5522
  %5532 = vmatprep.subr.bf16.mxu0 0
  %5533 = vmatpush1.bf16.msra.mxu0 %v5523
  %5534 = vmatprep.subr.bf16.mxu0 0
  %5535 = vmatpush1.bf16.msra.mxu0 %v5524
  %5536 = vmatprep.subr.bf16.mxu0 0
  %5537 = vmatpush1.bf16.msra.mxu0 %v5525
  %5538 = vmatprep.subr.bf16.mxu0 0
  %5539 = vmatpush1.bf16.msra.mxu0 0
  %5540 = vmatprep.subr.bf16.mxu0 0
  %5541 = vmatpush1.bf16.msra.mxu0 0
  %5542 = vmatprep.subr.bf16.mxu0 0
  %5543 = vmatpush1.bf16.msra.mxu0 0
  %5544 = vmatprep.subr.bf16.mxu0 0
  %5545 = vmatpush1.bf16.msra.mxu0 0
  %5546 = vmatprep.subr.bf16.mxu0 0
  %5547 = vmatpush1.bf16.msra.mxu0 0
  %5548 = vmatprep.subr.bf16.mxu0 0
  %5549 = vmatpush1.bf16.msra.mxu0 0
  %5550 = vmatprep.subr.bf16.mxu0 0
  %5551 = vmatpush1.bf16.msra.mxu0 0
  %5552 = vmatprep.subr.bf16.mxu0 0
  %5553 = vmatpush1.bf16.msra.mxu0 0
  %5554 = vmatprep.subr.bf16.mxu0 0
  %5555 = vmatpush1.bf16.msra.mxu0 0
  %5556 = vmatprep.subr.bf16.mxu0 0
  %5557 = vmatpush1.bf16.msra.mxu0 0
  %5558 = vmatprep.subr.bf16.mxu0 0
  %5559 = vmatpush1.bf16.msra.mxu0 0
  %5560 = vmatprep.subr.bf16.mxu0 0
  %5561 = vmatpush1.bf16.msra.mxu0 0
  %5562 = vmatprep.mubr.bf16.mxu0 0
  %5563 = vmatmul.mubr.bf16.gmra.mrb[0].mxu0 %v4792
  %v5564 = vpop.f32.mrb[0].mxu0
  %v5565 = vadd.f32 0.0, %v5564
  %v5566 = vpop.f32.mrb[0].mxu0
  %v5567 = vpop.f32.mrb[0].mxu0
  %v5568 = vadd.f32 0.0, %v5567
  %v5569 = vpop.f32.mrb[0].mxu0
  %5570 = vmatprep.mubr.bf16.mxu0 0
  %5571 = vmatmul.mubr.bf16.gmra.mrb[0].mxu0 %v4795
  %v5572 = vpop.f32.mrb[0].mxu0
  %v5573 = vadd.f32 0.0, %v5572
  %v5574 = vpop.f32.mrb[0].mxu0
  %v5575 = vpop.f32.mrb[0].mxu0
  %v5576 = vadd.f32 0.0, %v5575
  %v5577 = vpop.f32.mrb[0].mxu0
  %5578 = vmatprep.mubr.bf16.mxu0 0
  %5579 = vmatmul.mubr.bf16.gmra.mrb[0].mxu0 %v4798
  %v5580 = vpop.f32.mrb[0].mxu0
  %v5581 = vadd.f32 0.0, %v5580
  %v5582 = vpop.f32.mrb[0].mxu0
  %v5583 = vpop.f32.mrb[0].mxu0
  %v5584 = vadd.f32 0.0, %v5583
  %v5585 = vpop.f32.mrb[0].mxu0
  %5586 = vmatprep.mubr.bf16.mxu0 0
  %5587 = vmatmul.mubr.bf16.gmra.mrb[0].mxu0 %v4801
  %v5588 = vpop.f32.mrb[0].mxu0
  %v5589 = vadd.f32 0.0, %v5588
  %v5590 = vpop.f32.mrb[0].mxu0
  %v5591 = vpop.f32.mrb[0].mxu0
  %v5592 = vadd.f32 0.0, %v5591
  %v5593 = vpop.f32.mrb[0].mxu0
  %5594 = vmatprep.mubr.bf16.mxu0 0
  %5595 = vmatmul.mubr.bf16.gmra.mrb[0].mxu0 %v4804
  %v5596 = vpop.f32.mrb[0].mxu0
  %v5597 = vadd.f32 0.0, %v5596
  %v5598 = vpop.f32.mrb[0].mxu0
  %v5599 = vpop.f32.mrb[0].mxu0
  %v5600 = vadd.f32 0.0, %v5599
  %v5601 = vpop.f32.mrb[0].mxu0
  %5602 = vmatprep.mubr.bf16.mxu0 0
  %5603 = vmatmul.mubr.bf16.gmra.mrb[0].mxu0 %v4807
  %v5604 = vpop.f32.mrb[0].mxu0
  %v5605 = vadd.f32 0.0, %v5604
  %v5606 = vpop.f32.mrb[0].mxu0
  %v5607 = vpop.f32.mrb[0].mxu0
  %v5608 = vadd.f32 0.0, %v5607
  %v5609 = vpop.f32.mrb[0].mxu0
  %5610 = vmatprep.mubr.bf16.mxu0 0
  %5611 = vmatmul.mubr.bf16.gmra.mrb[0].mxu0 %v4810
  %v5612 = vpop.f32.mrb[0].mxu0
  %v5613 = vadd.f32 0.0, %v5612
  %v5614 = vpop.f32.mrb[0].mxu0
  %v5615 = vpop.f32.mrb[0].mxu0
  %v5616 = vadd.f32 0.0, %v5615
  %v5617 = vpop.f32.mrb[0].mxu0
  %5618 = vmatprep.mubr.bf16.mxu0 0
  %5619 = vmatmul.mubr.bf16.gmra.mrb[0].mxu0 %v4813
  %v5620 = vpop.f32.mrb[0].mxu0
  %v5621 = vadd.f32 0.0, %v5620
  %v5622 = vpop.f32.mrb[0].mxu0
  %v5623 = vpop.f32.mrb[0].mxu0
  %v5624 = vadd.f32 0.0, %v5623
  %v5625 = vpop.f32.mrb[0].mxu0
  %5626 = vdwg.mxu0
  %v5627 = vpack.c.bf16 %v5568, %v5565
  %v5628 = vpack.c.bf16 %v5576, %v5573
  %v5629 = vpack.c.bf16 %v5584, %v5581
  %v5630 = vpack.c.bf16 %v5592, %v5589
  %v5631 = vpack.c.bf16 %v5600, %v5597
  %v5632 = vpack.c.bf16 %v5608, %v5605
  %v5633 = vpack.c.bf16 %v5616, %v5613
  %v5634 = vpack.c.bf16 %v5624, %v5621
  %s5635 = scalar_lea.vmem %s10, 96
  %v5636 = vld [vmem:[%s5635] sm:$0xf]
  %v5637 = vld [vmem:[%s5635 + $0x4] sm:$0xf]
  %v5638 = vld [vmem:[%s5635 + $0x8] sm:$0xf]
  %v5639 = vld [vmem:[%s5635 + $0xc] sm:$0xf]
  %v5640 = vld [vmem:[%s5635 + $0x10] sm:$0xf]
  %v5641 = vld [vmem:[%s5635 + $0x14] sm:$0xf]
  %v5642 = vld [vmem:[%s5635 + $0x18] sm:$0xf]
  %v5643 = vld [vmem:[%s5635 + $0x1c] sm:$0xf]
  %v5652 = vunpack.c.l.b16 %v5636
  %v5653 = vunpack.c.l.b16 %v5637
  %v5654 = vunpack.c.l.b16 %v5638
  %v5655 = vunpack.c.l.b16 %v5639
  %v5656 = vunpack.c.l.b16 %v5640
  %v5657 = vunpack.c.l.b16 %v5641
  %v5658 = vunpack.c.l.b16 %v5642
  %v5659 = vunpack.c.l.b16 %v5643
  %v5660 = vpack.c.b16 %v5653, %v5652
  %v5661 = vpack.c.b16 %v5655, %v5654
  %v5662 = vpack.c.b16 %v5657, %v5656
  %v5663 = vpack.c.b16 %v5659, %v5658
  %5668 = vmatprep.subr.bf16.mxu0 0
  %5669 = vmatpush1.bf16.msra.mxu0 %v5627
  %5670 = vmatprep.subr.bf16.mxu0 0
  %5671 = vmatpush1.bf16.msra.mxu0 %v5628
  %5672 = vmatprep.subr.bf16.mxu0 0
  %5673 = vmatpush1.bf16.msra.mxu0 %v5629
  %5674 = vmatprep.subr.bf16.mxu0 0
  %5675 = vmatpush1.bf16.msra.mxu0 %v5630
  %5676 = vmatprep.subr.bf16.mxu0 0
  %5677 = vmatpush1.bf16.msra.mxu0 %v5631
  %5678 = vmatprep.subr.bf16.mxu0 0
  %5679 = vmatpush1.bf16.msra.mxu0 %v5632
  %5680 = vmatprep.subr.bf16.mxu0 0
  %5681 = vmatpush1.bf16.msra.mxu0 %v5633
  %5682 = vmatprep.subr.bf16.mxu0 0
  %5683 = vmatpush1.bf16.msra.mxu0 %v5634
  %5684 = vmatprep.subr.bf16.mxu0 0
  %5685 = vmatpush1.bf16.msra.mxu0 0
  %5686 = vmatprep.subr.bf16.mxu0 0
  %5687 = vmatpush1.bf16.msra.mxu0 0
  %5688 = vmatprep.subr.bf16.mxu0 0
  %5689 = vmatpush1.bf16.msra.mxu0 0
  %5690 = vmatprep.subr.bf16.mxu0 0
  %5691 = vmatpush1.bf16.msra.mxu0 0
  %5692 = vmatprep.subr.bf16.mxu0 0
  %5693 = vmatpush1.bf16.msra.mxu0 0
  %5694 = vmatprep.subr.bf16.mxu0 0
  %5695 = vmatpush1.bf16.msra.mxu0 0
  %5696 = vmatprep.subr.bf16.mxu0 0
  %5697 = vmatpush1.bf16.msra.mxu0 0
  %5698 = vmatprep.subr.bf16.mxu0 0
  %5699 = vmatpush1.bf16.msra.mxu0 0
  %5700 = vmatprep.mubr.bf16.mxu0 0
  %5701 = vmatmul.mubr.bf16.gmra.mrb[0].mxu0 %v5660
  %v5702 = vpop.f32.mrb[0].mxu0
  %v5703 = vadd.f32 0.0, %v5702
  %v5704 = vpop.f32.mrb[0].mxu0
  %v5705 = vpop.f32.mrb[0].mxu0
  %v5706 = vadd.f32 0.0, %v5705
  %v5707 = vpop.f32.mrb[0].mxu0
  %5708 = vmatprep.mubr.bf16.mxu0 0
  %5709 = vmatmul.mubr.bf16.gmra.mrb[0].mxu0 %v5661
  %v5710 = vpop.f32.mrb[0].mxu0
  %v5711 = vadd.f32 0.0, %v5710
  %v5712 = vpop.f32.mrb[0].mxu0
  %v5713 = vpop.f32.mrb[0].mxu0
  %v5714 = vadd.f32 0.0, %v5713
  %v5715 = vpop.f32.mrb[0].mxu0
  %5716 = vmatprep.mubr.bf16.mxu0 0
  %5717 = vmatmul.mubr.bf16.gmra.mrb[0].mxu0 %v5662
  %v5718 = vpop.f32.mrb[0].mxu0
  %v5719 = vadd.f32 0.0, %v5718
  %v5720 = vpop.f32.mrb[0].mxu0
  %v5721 = vpop.f32.mrb[0].mxu0
  %v5722 = vadd.f32 0.0, %v5721
  %v5723 = vpop.f32.mrb[0].mxu0
  %5724 = vmatprep.mubr.bf16.mxu0 0
  %5725 = vmatmul.mubr.bf16.gmra.mrb[0].mxu0 %v5663
  %v5726 = vpop.f32.mrb[0].mxu0
  %v5727 = vadd.f32 0.0, %v5726
  %v5728 = vpop.f32.mrb[0].mxu0
  %v5729 = vpop.f32.mrb[0].mxu0
  %v5730 = vadd.f32 0.0, %v5729
  %v5731 = vpop.f32.mrb[0].mxu0
  %5732 = vdwg.mxu0
  %v5733 = vadd.f32 %v5489, %v5703
  %v5734 = vadd.f32 %v5490, %v5706
  %v5735 = vadd.f32 %v5491, %v5711
  %v5736 = vadd.f32 %v5492, %v5714
  %v5737 = vadd.f32 %v5493, %v5719
  %v5738 = vadd.f32 %v5494, %v5722
  %v5739 = vadd.f32 %v5495, %v5727
  %v5740 = vadd.f32 %v5496, %v5730
  %v5741 = vadd.f32 %v5733, %v4737
  %v5742 = vadd.f32 %v5734, %v4740
  %v5743 = vadd.f32 %v5735, %v4743
  %v5744 = vadd.f32 %v5736, %v4746
  %v5745 = vadd.f32 %v5737, %v4749
  %v5746 = vadd.f32 %v5738, %v4752
  %v5747 = vadd.f32 %v5739, %v4755
  %v5748 = vadd.f32 %v5740, %v4758
  %v5749 = vmax.f32 %v5741, 0.0
  %v5750 = vmax.f32 %v5742, 0.0
  %v5751 = vmax.f32 %v5743, 0.0
  %v5752 = vmax.f32 %v5744, 0.0
  %v5753 = vmax.f32 %v5745, 0.0
  %v5754 = vmax.f32 %v5746, 0.0
  %v5755 = vmax.f32 %v5747, 0.0
  %v5756 = vmax.f32 %v5748, 0.0
  %v5757 = vld [vmem:[%s11] sm:$0xff]
  %v5758 = vld [vmem:[%s11 + $0x8] sm:$0xff]
  %v5759 = vld [vmem:[%s11 + $0x10] sm:$0xff]
  %v5760 = vld [vmem:[%s11 + $0x18] sm:$0xff]
  %s5761 = scalar_lea.vmem %s11, 32
  %v5762 = vld [vmem:[%s5761] sm:$0xff]
  %v5763 = vld [vmem:[%s5761 + $0x8] sm:$0xff]
  %v5764 = vld [vmem:[%s5761 + $0x10] sm:$0xff]
  %v5765 = vld [vmem:[%s5761 + $0x18] sm:$0xff]
  %vm5766 = vcmask 261120
  %v5768 = vsel %vm5766, %v5750, 0
  %5770 = vmatprep.subr.mxu0 0.0
  %5771 = vmatpush1.msra.mxu0 %v5762
  %5772 = vmatprep.subr.mxu0 0.0
  %5773 = vmatpush1.msra.mxu0 %v5763
  %5774 = vmatprep.subr.mxu0 0.0
  %5775 = vmatpush1.msra.mxu0 %v5764
  %5776 = vmatprep.subr.mxu0 0.0
  %5777 = vmatpush1.msra.mxu0 %v5765
  %5778 = vmatprep.subr.mxu0 0.0
  %5779 = vmatpush1.msra.mxu0 0.0
  %5780 = vmatprep.subr.mxu0 0.0
  %5781 = vmatpush1.msra.mxu0 0.0
  %5782 = vmatprep.subr.mxu0 0.0
  %5783 = vmatpush1.msra.mxu0 0.0
  %5784 = vmatprep.subr.mxu0 0.0
  %5785 = vmatpush1.msra.mxu0 0.0
  %5786 = vmatprep.subr.mxu0 0.0
  %5787 = vmatpush1.msra.mxu0 0.0
  %5788 = vmatprep.subr.mxu0 0.0
  %5789 = vmatpush1.msra.mxu0 0.0
  %5790 = vmatprep.subr.mxu0 0.0
  %5791 = vmatpush1.msra.mxu0 0.0
  %5792 = vmatprep.subr.mxu0 0.0
  %5793 = vmatpush1.msra.mxu0 0.0
  %5794 = vmatprep.subr.mxu0 0.0
  %5795 = vmatpush1.msra.mxu0 0.0
  %5796 = vmatprep.subr.mxu0 0.0
  %5797 = vmatpush1.msra.mxu0 0.0
  %5798 = vmatprep.subr.mxu0 0.0
  %5799 = vmatpush1.msra.mxu0 0.0
  %5800 = vmatprep.subr.mxu0 0.0
  %5801 = vmatpush1.msra.mxu0 0.0
  %5802 = vmatprep.subr.mxu0 0.0
  %5803 = vmatpush1.msra.mxu0 0.0
  %5804 = vmatprep.subr.mxu0 0.0
  %5805 = vmatpush1.msra.mxu0 0.0
  %5806 = vmatprep.subr.mxu0 0.0
  %5807 = vmatpush1.msra.mxu0 0.0
  %5808 = vmatprep.subr.mxu0 0.0
  %5809 = vmatpush1.msra.mxu0 0.0
  %5810 = vmatprep.subr.mxu0 0.0
  %5811 = vmatpush1.msra.mxu0 0.0
  %5812 = vmatprep.subr.mxu0 0.0
  %5813 = vmatpush1.msra.mxu0 0.0
  %5814 = vmatprep.subr.mxu0 0.0
  %5815 = vmatpush1.msra.mxu0 0.0
  %5816 = vmatprep.subr.mxu0 0.0
  %5817 = vmatpush1.msra.mxu0 0.0
  %5818 = vmatprep.subr.mxu0 0.0
  %5819 = vmatpush1.msra.mxu0 0.0
  %5820 = vmatprep.subr.mxu0 0.0
  %5821 = vmatpush1.msra.mxu0 0.0
  %5822 = vmatprep.subr.mxu0 0.0
  %5823 = vmatpush1.msra.mxu0 0.0
  %5824 = vmatprep.subr.mxu0 0.0
  %5825 = vmatpush1.msra.mxu0 0.0
  %5826 = vmatprep.subr.mxu0 0.0
  %5827 = vmatpush1.msra.mxu0 0.0
  %5828 = vmatprep.subr.mxu0 0.0
  %5829 = vmatpush1.msra.mxu0 0.0
  %5830 = vmatprep.subr.mxu0 0.0
  %5831 = vmatpush1.msra.mxu0 0.0
  %5832 = vmatprep.subr.mxu0 0.0
  %5833 = vmatpush1.msra.mxu0 0.0
  %5834 = vmatprep.mubr.f32.mxu0 0.0
  %5835 = vmatmul.mubr.f32.gmra.mrb[0].mxu0 %v5768
  %v5836 = vpop.f32.mrb[0].mxu0
  %v5837 = vadd.f32 0.0, %v5836
  %v5838 = vpop.f32.mrb[0].mxu0
  %5839 = vdwg.mxu0
  %v5841 = vsel %vm5766, %v5749, 0
  %5843 = vmatprep.subr.mxu0 0.0
  %5844 = vmatpush1.msra.mxu0 %v5757
  %5845 = vmatprep.subr.mxu0 0.0
  %5846 = vmatpush1.msra.mxu0 %v5758
  %5847 = vmatprep.subr.mxu0 0.0
  %5848 = vmatpush1.msra.mxu0 %v5759
  %5849 = vmatprep.subr.mxu0 0.0
  %5850 = vmatpush1.msra.mxu0 %v5760
  %5851 = vmatprep.subr.mxu0 0.0
  %5852 = vmatpush1.msra.mxu0 0.0
  %5853 = vmatprep.subr.mxu0 0.0
  %5854 = vmatpush1.msra.mxu0 0.0
  %5855 = vmatprep.subr.mxu0 0.0
  %5856 = vmatpush1.msra.mxu0 0.0
  %5857 = vmatprep.subr.mxu0 0.0
  %5858 = vmatpush1.msra.mxu0 0.0
  %5859 = vmatprep.subr.mxu0 0.0
  %5860 = vmatpush1.msra.mxu0 0.0
  %5861 = vmatprep.subr.mxu0 0.0
  %5862 = vmatpush1.msra.mxu0 0.0
  %5863 = vmatprep.subr.mxu0 0.0
  %5864 = vmatpush1.msra.mxu0 0.0
  %5865 = vmatprep.subr.mxu0 0.0
  %5866 = vmatpush1.msra.mxu0 0.0
  %5867 = vmatprep.subr.mxu0 0.0
  %5868 = vmatpush1.msra.mxu0 0.0
  %5869 = vmatprep.subr.mxu0 0.0
  %5870 = vmatpush1.msra.mxu0 0.0
  %5871 = vmatprep.subr.mxu0 0.0
  %5872 = vmatpush1.msra.mxu0 0.0
  %5873 = vmatprep.subr.mxu0 0.0
  %5874 = vmatpush1.msra.mxu0 0.0
  %5875 = vmatprep.subr.mxu0 0.0
  %5876 = vmatpush1.msra.mxu0 0.0
  %5877 = vmatprep.subr.mxu0 0.0
  %5878 = vmatpush1.msra.mxu0 0.0
  %5879 = vmatprep.subr.mxu0 0.0
  %5880 = vmatpush1.msra.mxu0 0.0
  %5881 = vmatprep.subr.mxu0 0.0
  %5882 = vmatpush1.msra.mxu0 0.0
  %5883 = vmatprep.subr.mxu0 0.0
  %5884 = vmatpush1.msra.mxu0 0.0
  %5885 = vmatprep.subr.mxu0 0.0
  %5886 = vmatpush1.msra.mxu0 0.0
  %5887 = vmatprep.subr.mxu0 0.0
  %5888 = vmatpush1.msra.mxu0 0.0
  %5889 = vmatprep.subr.mxu0 0.0
  %5890 = vmatpush1.msra.mxu0 0.0
  %5891 = vmatprep.subr.mxu0 0.0
  %5892 = vmatpush1.msra.mxu0 0.0
  %5893 = vmatprep.subr.mxu0 0.0
  %5894 = vmatpush1.msra.mxu0 0.0
  %5895 = vmatprep.subr.mxu0 0.0
  %5896 = vmatpush1.msra.mxu0 0.0
  %5897 = vmatprep.subr.mxu0 0.0
  %5898 = vmatpush1.msra.mxu0 0.0
  %5899 = vmatprep.subr.mxu0 0.0
  %5900 = vmatpush1.msra.mxu0 0.0
  %5901 = vmatprep.subr.mxu0 0.0
  %5902 = vmatpush1.msra.mxu0 0.0
  %5903 = vmatprep.subr.mxu0 0.0
  %5904 = vmatpush1.msra.mxu0 0.0
  %5905 = vmatprep.subr.mxu0 0.0
  %5906 = vmatpush1.msra.mxu0 0.0
  %5907 = vmatprep.mubr.f32.mxu0 0.0
  %5908 = vmatmul.mubr.f32.gmra.mrb[0].mxu0 %v5841
  %v5909 = vpop.f32.mrb[0].mxu0
  %v5910 = vadd.f32 %v5837, %v5909
  %v5911 = vpop.f32.mrb[0].mxu0
  %5912 = vdwg.mxu0
  %s5913 = scalar_lea.vmem %s11, 64
  %v5914 = vld [vmem:[%s5913] sm:$0xff]
  %v5915 = vld [vmem:[%s5913 + $0x8] sm:$0xff]
  %v5916 = vld [vmem:[%s5913 + $0x10] sm:$0xff]
  %v5917 = vld [vmem:[%s5913 + $0x18] sm:$0xff]
  %v5919 = vsel %vm5766, %v5751, 0
  %5921 = vmatprep.subr.mxu0 0.0
  %5922 = vmatpush1.msra.mxu0 %v5914
  %5923 = vmatprep.subr.mxu0 0.0
  %5924 = vmatpush1.msra.mxu0 %v5915
  %5925 = vmatprep.subr.mxu0 0.0
  %5926 = vmatpush1.msra.mxu0 %v5916
  %5927 = vmatprep.subr.mxu0 0.0
  %5928 = vmatpush1.msra.mxu0 %v5917
  %5929 = vmatprep.subr.mxu0 0.0
  %5930 = vmatpush1.msra.mxu0 0.0
  %5931 = vmatprep.subr.mxu0 0.0
  %5932 = vmatpush1.msra.mxu0 0.0
  %5933 = vmatprep.subr.mxu0 0.0
  %5934 = vmatpush1.msra.mxu0 0.0
  %5935 = vmatprep.subr.mxu0 0.0
  %5936 = vmatpush1.msra.mxu0 0.0
  %5937 = vmatprep.subr.mxu0 0.0
  %5938 = vmatpush1.msra.mxu0 0.0
  %5939 = vmatprep.subr.mxu0 0.0
  %5940 = vmatpush1.msra.mxu0 0.0
  %5941 = vmatprep.subr.mxu0 0.0
  %5942 = vmatpush1.msra.mxu0 0.0
  %5943 = vmatprep.subr.mxu0 0.0
  %5944 = vmatpush1.msra.mxu0 0.0
  %5945 = vmatprep.subr.mxu0 0.0
  %5946 = vmatpush1.msra.mxu0 0.0
  %5947 = vmatprep.subr.mxu0 0.0
  %5948 = vmatpush1.msra.mxu0 0.0
  %5949 = vmatprep.subr.mxu0 0.0
  %5950 = vmatpush1.msra.mxu0 0.0
  %5951 = vmatprep.subr.mxu0 0.0
  %5952 = vmatpush1.msra.mxu0 0.0
  %5953 = vmatprep.subr.mxu0 0.0
  %5954 = vmatpush1.msra.mxu0 0.0
  %5955 = vmatprep.subr.mxu0 0.0
  %5956 = vmatpush1.msra.mxu0 0.0
  %5957 = vmatprep.subr.mxu0 0.0
  %5958 = vmatpush1.msra.mxu0 0.0
  %5959 = vmatprep.subr.mxu0 0.0
  %5960 = vmatpush1.msra.mxu0 0.0
  %5961 = vmatprep.subr.mxu0 0.0
  %5962 = vmatpush1.msra.mxu0 0.0
  %5963 = vmatprep.subr.mxu0 0.0
  %5964 = vmatpush1.msra.mxu0 0.0
  %5965 = vmatprep.subr.mxu0 0.0
  %5966 = vmatpush1.msra.mxu0 0.0
  %5967 = vmatprep.subr.mxu0 0.0
  %5968 = vmatpush1.msra.mxu0 0.0
  %5969 = vmatprep.subr.mxu0 0.0
  %5970 = vmatpush1.msra.mxu0 0.0
  %5971 = vmatprep.subr.mxu0 0.0
  %5972 = vmatpush1.msra.mxu0 0.0
  %5973 = vmatprep.subr.mxu0 0.0
  %5974 = vmatpush1.msra.mxu0 0.0
  %5975 = vmatprep.subr.mxu0 0.0
  %5976 = vmatpush1.msra.mxu0 0.0
  %5977 = vmatprep.subr.mxu0 0.0
  %5978 = vmatpush1.msra.mxu0 0.0
  %5979 = vmatprep.subr.mxu0 0.0
  %5980 = vmatpush1.msra.mxu0 0.0
  %5981 = vmatprep.subr.mxu0 0.0
  %5982 = vmatpush1.msra.mxu0 0.0
  %5983 = vmatprep.subr.mxu0 0.0
  %5984 = vmatpush1.msra.mxu0 0.0
  %5985 = vmatprep.mubr.f32.mxu0 0.0
  %5986 = vmatmul.mubr.f32.gmra.mrb[0].mxu0 %v5919
  %v5987 = vpop.f32.mrb[0].mxu0
  %v5988 = vadd.f32 0.0, %v5987
  %v5989 = vpop.f32.mrb[0].mxu0
  %5990 = vdwg.mxu0
  %v5991 = vadd.f32 %v5910, %v5988
  %s5992 = scalar_lea.vmem %s11, 96
  %v5993 = vld [vmem:[%s5992] sm:$0xff]
  %v5994 = vld [vmem:[%s5992 + $0x8] sm:$0xff]
  %v5995 = vld [vmem:[%s5992 + $0x10] sm:$0xff]
  %v5996 = vld [vmem:[%s5992 + $0x18] sm:$0xff]
  %v5998 = vsel %vm5766, %v5752, 0
  %6000 = vmatprep.subr.mxu0 0.0
  %6001 = vmatpush1.msra.mxu0 %v5993
  %6002 = vmatprep.subr.mxu0 0.0
  %6003 = vmatpush1.msra.mxu0 %v5994
  %6004 = vmatprep.subr.mxu0 0.0
  %6005 = vmatpush1.msra.mxu0 %v5995
  %6006 = vmatprep.subr.mxu0 0.0
  %6007 = vmatpush1.msra.mxu0 %v5996
  %6008 = vmatprep.subr.mxu0 0.0
  %6009 = vmatpush1.msra.mxu0 0.0
  %6010 = vmatprep.subr.mxu0 0.0
  %6011 = vmatpush1.msra.mxu0 0.0
  %6012 = vmatprep.subr.mxu0 0.0
  %6013 = vmatpush1.msra.mxu0 0.0
  %6014 = vmatprep.subr.mxu0 0.0
  %6015 = vmatpush1.msra.mxu0 0.0
  %6016 = vmatprep.subr.mxu0 0.0
  %6017 = vmatpush1.msra.mxu0 0.0
  %6018 = vmatprep.subr.mxu0 0.0
  %6019 = vmatpush1.msra.mxu0 0.0
  %6020 = vmatprep.subr.mxu0 0.0
  %6021 = vmatpush1.msra.mxu0 0.0
  %6022 = vmatprep.subr.mxu0 0.0
  %6023 = vmatpush1.msra.mxu0 0.0
  %6024 = vmatprep.subr.mxu0 0.0
  %6025 = vmatpush1.msra.mxu0 0.0
  %6026 = vmatprep.subr.mxu0 0.0
  %6027 = vmatpush1.msra.mxu0 0.0
  %6028 = vmatprep.subr.mxu0 0.0
  %6029 = vmatpush1.msra.mxu0 0.0
  %6030 = vmatprep.subr.mxu0 0.0
  %6031 = vmatpush1.msra.mxu0 0.0
  %6032 = vmatprep.subr.mxu0 0.0
  %6033 = vmatpush1.msra.mxu0 0.0
  %6034 = vmatprep.subr.mxu0 0.0
  %6035 = vmatpush1.msra.mxu0 0.0
  %6036 = vmatprep.subr.mxu0 0.0
  %6037 = vmatpush1.msra.mxu0 0.0
  %6038 = vmatprep.subr.mxu0 0.0
  %6039 = vmatpush1.msra.mxu0 0.0
  %6040 = vmatprep.subr.mxu0 0.0
  %6041 = vmatpush1.msra.mxu0 0.0
  %6042 = vmatprep.subr.mxu0 0.0
  %6043 = vmatpush1.msra.mxu0 0.0
  %6044 = vmatprep.subr.mxu0 0.0
  %6045 = vmatpush1.msra.mxu0 0.0
  %6046 = vmatprep.subr.mxu0 0.0
  %6047 = vmatpush1.msra.mxu0 0.0
  %6048 = vmatprep.subr.mxu0 0.0
  %6049 = vmatpush1.msra.mxu0 0.0
  %6050 = vmatprep.subr.mxu0 0.0
  %6051 = vmatpush1.msra.mxu0 0.0
  %6052 = vmatprep.subr.mxu0 0.0
  %6053 = vmatpush1.msra.mxu0 0.0
  %6054 = vmatprep.subr.mxu0 0.0
  %6055 = vmatpush1.msra.mxu0 0.0
  %6056 = vmatprep.subr.mxu0 0.0
  %6057 = vmatpush1.msra.mxu0 0.0
  %6058 = vmatprep.subr.mxu0 0.0
  %6059 = vmatpush1.msra.mxu0 0.0
  %6060 = vmatprep.subr.mxu0 0.0
  %6061 = vmatpush1.msra.mxu0 0.0
  %6062 = vmatprep.subr.mxu0 0.0
  %6063 = vmatpush1.msra.mxu0 0.0
  %6064 = vmatprep.mubr.f32.mxu0 0.0
  %6065 = vmatmul.mubr.f32.gmra.mrb[0].mxu0 %v5998
  %v6066 = vpop.f32.mrb[0].mxu0
  %v6067 = vadd.f32 0.0, %v6066
  %v6068 = vpop.f32.mrb[0].mxu0
  %6069 = vdwg.mxu0
  %v6070 = vadd.f32 %v5991, %v6067
  %s6071 = scalar_lea.vmem %s11, 128
  %v6072 = vld [vmem:[%s6071] sm:$0xff]
  %v6073 = vld [vmem:[%s6071 + $0x8] sm:$0xff]
  %v6074 = vld [vmem:[%s6071 + $0x10] sm:$0xff]
  %v6075 = vld [vmem:[%s6071 + $0x18] sm:$0xff]
  %v6077 = vsel %vm5766, %v5753, 0
  %6079 = vmatprep.subr.mxu0 0.0
  %6080 = vmatpush1.msra.mxu0 %v6072
  %6081 = vmatprep.subr.mxu0 0.0
  %6082 = vmatpush1.msra.mxu0 %v6073
  %6083 = vmatprep.subr.mxu0 0.0
  %6084 = vmatpush1.msra.mxu0 %v6074
  %6085 = vmatprep.subr.mxu0 0.0
  %6086 = vmatpush1.msra.mxu0 %v6075
  %6087 = vmatprep.subr.mxu0 0.0
  %6088 = vmatpush1.msra.mxu0 0.0
  %6089 = vmatprep.subr.mxu0 0.0
  %6090 = vmatpush1.msra.mxu0 0.0
  %6091 = vmatprep.subr.mxu0 0.0
  %6092 = vmatpush1.msra.mxu0 0.0
  %6093 = vmatprep.subr.mxu0 0.0
  %6094 = vmatpush1.msra.mxu0 0.0
  %6095 = vmatprep.subr.mxu0 0.0
  %6096 = vmatpush1.msra.mxu0 0.0
  %6097 = vmatprep.subr.mxu0 0.0
  %6098 = vmatpush1.msra.mxu0 0.0
  %6099 = vmatprep.subr.mxu0 0.0
  %6100 = vmatpush1.msra.mxu0 0.0
  %6101 = vmatprep.subr.mxu0 0.0
  %6102 = vmatpush1.msra.mxu0 0.0
  %6103 = vmatprep.subr.mxu0 0.0
  %6104 = vmatpush1.msra.mxu0 0.0
  %6105 = vmatprep.subr.mxu0 0.0
  %6106 = vmatpush1.msra.mxu0 0.0
  %6107 = vmatprep.subr.mxu0 0.0
  %6108 = vmatpush1.msra.mxu0 0.0
  %6109 = vmatprep.subr.mxu0 0.0
  %6110 = vmatpush1.msra.mxu0 0.0
  %6111 = vmatprep.subr.mxu0 0.0
  %6112 = vmatpush1.msra.mxu0 0.0
  %6113 = vmatprep.subr.mxu0 0.0
  %6114 = vmatpush1.msra.mxu0 0.0
  %6115 = vmatprep.subr.mxu0 0.0
  %6116 = vmatpush1.msra.mxu0 0.0
  %6117 = vmatprep.subr.mxu0 0.0
  %6118 = vmatpush1.msra.mxu0 0.0
  %6119 = vmatprep.subr.mxu0 0.0
  %6120 = vmatpush1.msra.mxu0 0.0
  %6121 = vmatprep.subr.mxu0 0.0
  %6122 = vmatpush1.msra.mxu0 0.0
  %6123 = vmatprep.subr.mxu0 0.0
  %6124 = vmatpush1.msra.mxu0 0.0
  %6125 = vmatprep.subr.mxu0 0.0
  %6126 = vmatpush1.msra.mxu0 0.0
  %6127 = vmatprep.subr.mxu0 0.0
  %6128 = vmatpush1.msra.mxu0 0.0
  %6129 = vmatprep.subr.mxu0 0.0
  %6130 = vmatpush1.msra.mxu0 0.0
  %6131 = vmatprep.subr.mxu0 0.0
  %6132 = vmatpush1.msra.mxu0 0.0
  %6133 = vmatprep.subr.mxu0 0.0
  %6134 = vmatpush1.msra.mxu0 0.0
  %6135 = vmatprep.subr.mxu0 0.0
  %6136 = vmatpush1.msra.mxu0 0.0
  %6137 = vmatprep.subr.mxu0 0.0
  %6138 = vmatpush1.msra.mxu0 0.0
  %6139 = vmatprep.subr.mxu0 0.0
  %6140 = vmatpush1.msra.mxu0 0.0
  %6141 = vmatprep.subr.mxu0 0.0
  %6142 = vmatpush1.msra.mxu0 0.0
  %6143 = vmatprep.mubr.f32.mxu0 0.0
  %6144 = vmatmul.mubr.f32.gmra.mrb[0].mxu0 %v6077
  %v6145 = vpop.f32.mrb[0].mxu0
  %v6146 = vadd.f32 0.0, %v6145
  %v6147 = vpop.f32.mrb[0].mxu0
  %6148 = vdwg.mxu0
  %v6149 = vadd.f32 %v6070, %v6146
  %s6150 = scalar_lea.vmem %s11, 160
  %v6151 = vld [vmem:[%s6150] sm:$0xff]
  %v6152 = vld [vmem:[%s6150 + $0x8] sm:$0xff]
  %v6153 = vld [vmem:[%s6150 + $0x10] sm:$0xff]
  %v6154 = vld [vmem:[%s6150 + $0x18] sm:$0xff]
  %v6156 = vsel %vm5766, %v5754, 0
  %6158 = vmatprep.subr.mxu0 0.0
  %6159 = vmatpush1.msra.mxu0 %v6151
  %6160 = vmatprep.subr.mxu0 0.0
  %6161 = vmatpush1.msra.mxu0 %v6152
  %6162 = vmatprep.subr.mxu0 0.0
  %6163 = vmatpush1.msra.mxu0 %v6153
  %6164 = vmatprep.subr.mxu0 0.0
  %6165 = vmatpush1.msra.mxu0 %v6154
  %6166 = vmatprep.subr.mxu0 0.0
  %6167 = vmatpush1.msra.mxu0 0.0
  %6168 = vmatprep.subr.mxu0 0.0
  %6169 = vmatpush1.msra.mxu0 0.0
  %6170 = vmatprep.subr.mxu0 0.0
  %6171 = vmatpush1.msra.mxu0 0.0
  %6172 = vmatprep.subr.mxu0 0.0
  %6173 = vmatpush1.msra.mxu0 0.0
  %6174 = vmatprep.subr.mxu0 0.0
  %6175 = vmatpush1.msra.mxu0 0.0
  %6176 = vmatprep.subr.mxu0 0.0
  %6177 = vmatpush1.msra.mxu0 0.0
  %6178 = vmatprep.subr.mxu0 0.0
  %6179 = vmatpush1.msra.mxu0 0.0
  %6180 = vmatprep.subr.mxu0 0.0
  %6181 = vmatpush1.msra.mxu0 0.0
  %6182 = vmatprep.subr.mxu0 0.0
  %6183 = vmatpush1.msra.mxu0 0.0
  %6184 = vmatprep.subr.mxu0 0.0
  %6185 = vmatpush1.msra.mxu0 0.0
  %6186 = vmatprep.subr.mxu0 0.0
  %6187 = vmatpush1.msra.mxu0 0.0
  %6188 = vmatprep.subr.mxu0 0.0
  %6189 = vmatpush1.msra.mxu0 0.0
  %6190 = vmatprep.subr.mxu0 0.0
  %6191 = vmatpush1.msra.mxu0 0.0
  %6192 = vmatprep.subr.mxu0 0.0
  %6193 = vmatpush1.msra.mxu0 0.0
  %6194 = vmatprep.subr.mxu0 0.0
  %6195 = vmatpush1.msra.mxu0 0.0
  %6196 = vmatprep.subr.mxu0 0.0
  %6197 = vmatpush1.msra.mxu0 0.0
  %6198 = vmatprep.subr.mxu0 0.0
  %6199 = vmatpush1.msra.mxu0 0.0
  %6200 = vmatprep.subr.mxu0 0.0
  %6201 = vmatpush1.msra.mxu0 0.0
  %6202 = vmatprep.subr.mxu0 0.0
  %6203 = vmatpush1.msra.mxu0 0.0
  %6204 = vmatprep.subr.mxu0 0.0
  %6205 = vmatpush1.msra.mxu0 0.0
  %6206 = vmatprep.subr.mxu0 0.0
  %6207 = vmatpush1.msra.mxu0 0.0
  %6208 = vmatprep.subr.mxu0 0.0
  %6209 = vmatpush1.msra.mxu0 0.0
  %6210 = vmatprep.subr.mxu0 0.0
  %6211 = vmatpush1.msra.mxu0 0.0
  %6212 = vmatprep.subr.mxu0 0.0
  %6213 = vmatpush1.msra.mxu0 0.0
  %6214 = vmatprep.subr.mxu0 0.0
  %6215 = vmatpush1.msra.mxu0 0.0
  %6216 = vmatprep.subr.mxu0 0.0
  %6217 = vmatpush1.msra.mxu0 0.0
  %6218 = vmatprep.subr.mxu0 0.0
  %6219 = vmatpush1.msra.mxu0 0.0
  %6220 = vmatprep.subr.mxu0 0.0
  %6221 = vmatpush1.msra.mxu0 0.0
  %6222 = vmatprep.mubr.f32.mxu0 0.0
  %6223 = vmatmul.mubr.f32.gmra.mrb[0].mxu0 %v6156
  %v6224 = vpop.f32.mrb[0].mxu0
  %v6225 = vadd.f32 0.0, %v6224
  %v6226 = vpop.f32.mrb[0].mxu0
  %6227 = vdwg.mxu0
  %v6228 = vadd.f32 %v6149, %v6225
  %s6229 = scalar_lea.vmem %s11, 192
  %v6230 = vld [vmem:[%s6229] sm:$0xff]
  %v6231 = vld [vmem:[%s6229 + $0x8] sm:$0xff]
  %v6232 = vld [vmem:[%s6229 + $0x10] sm:$0xff]
  %v6233 = vld [vmem:[%s6229 + $0x18] sm:$0xff]
  %v6235 = vsel %vm5766, %v5755, 0
  %6237 = vmatprep.subr.mxu0 0.0
  %6238 = vmatpush1.msra.mxu0 %v6230
  %6239 = vmatprep.subr.mxu0 0.0
  %6240 = vmatpush1.msra.mxu0 %v6231
  %6241 = vmatprep.subr.mxu0 0.0
  %6242 = vmatpush1.msra.mxu0 %v6232
  %6243 = vmatprep.subr.mxu0 0.0
  %6244 = vmatpush1.msra.mxu0 %v6233
  %6245 = vmatprep.subr.mxu0 0.0
  %6246 = vmatpush1.msra.mxu0 0.0
  %6247 = vmatprep.subr.mxu0 0.0
  %6248 = vmatpush1.msra.mxu0 0.0
  %6249 = vmatprep.subr.mxu0 0.0
  %6250 = vmatpush1.msra.mxu0 0.0
  %6251 = vmatprep.subr.mxu0 0.0
  %6252 = vmatpush1.msra.mxu0 0.0
  %6253 = vmatprep.subr.mxu0 0.0
  %6254 = vmatpush1.msra.mxu0 0.0
  %6255 = vmatprep.subr.mxu0 0.0
  %6256 = vmatpush1.msra.mxu0 0.0
  %6257 = vmatprep.subr.mxu0 0.0
  %6258 = vmatpush1.msra.mxu0 0.0
  %6259 = vmatprep.subr.mxu0 0.0
  %6260 = vmatpush1.msra.mxu0 0.0
  %6261 = vmatprep.subr.mxu0 0.0
  %6262 = vmatpush1.msra.mxu0 0.0
  %6263 = vmatprep.subr.mxu0 0.0
  %6264 = vmatpush1.msra.mxu0 0.0
  %6265 = vmatprep.subr.mxu0 0.0
  %6266 = vmatpush1.msra.mxu0 0.0
  %6267 = vmatprep.subr.mxu0 0.0
  %6268 = vmatpush1.msra.mxu0 0.0
  %6269 = vmatprep.subr.mxu0 0.0
  %6270 = vmatpush1.msra.mxu0 0.0
  %6271 = vmatprep.subr.mxu0 0.0
  %6272 = vmatpush1.msra.mxu0 0.0
  %6273 = vmatprep.subr.mxu0 0.0
  %6274 = vmatpush1.msra.mxu0 0.0
  %6275 = vmatprep.subr.mxu0 0.0
  %6276 = vmatpush1.msra.mxu0 0.0
  %6277 = vmatprep.subr.mxu0 0.0
  %6278 = vmatpush1.msra.mxu0 0.0
  %6279 = vmatprep.subr.mxu0 0.0
  %6280 = vmatpush1.msra.mxu0 0.0
  %6281 = vmatprep.subr.mxu0 0.0
  %6282 = vmatpush1.msra.mxu0 0.0
  %6283 = vmatprep.subr.mxu0 0.0
  %6284 = vmatpush1.msra.mxu0 0.0
  %6285 = vmatprep.subr.mxu0 0.0
  %6286 = vmatpush1.msra.mxu0 0.0
  %6287 = vmatprep.subr.mxu0 0.0
  %6288 = vmatpush1.msra.mxu0 0.0
  %6289 = vmatprep.subr.mxu0 0.0
  %6290 = vmatpush1.msra.mxu0 0.0
  %6291 = vmatprep.subr.mxu0 0.0
  %6292 = vmatpush1.msra.mxu0 0.0
  %6293 = vmatprep.subr.mxu0 0.0
  %6294 = vmatpush1.msra.mxu0 0.0
  %6295 = vmatprep.subr.mxu0 0.0
  %6296 = vmatpush1.msra.mxu0 0.0
  %6297 = vmatprep.subr.mxu0 0.0
  %6298 = vmatpush1.msra.mxu0 0.0
  %6299 = vmatprep.subr.mxu0 0.0
  %6300 = vmatpush1.msra.mxu0 0.0
  %6301 = vmatprep.mubr.f32.mxu0 0.0
  %6302 = vmatmul.mubr.f32.gmra.mrb[0].mxu0 %v6235
  %v6303 = vpop.f32.mrb[0].mxu0
  %v6304 = vadd.f32 0.0, %v6303
  %v6305 = vpop.f32.mrb[0].mxu0
  %6306 = vdwg.mxu0
  %v6307 = vadd.f32 %v6228, %v6304
  %s6308 = scalar_lea.vmem %s11, 224
  %v6309 = vld [vmem:[%s6308] sm:$0xff]
  %v6310 = vld [vmem:[%s6308 + $0x8] sm:$0xff]
  %v6311 = vld [vmem:[%s6308 + $0x10] sm:$0xff]
  %v6312 = vld [vmem:[%s6308 + $0x18] sm:$0xff]
  %v6314 = vsel %vm5766, %v5756, 0
  %6316 = vmatprep.subr.mxu0 0.0
  %6317 = vmatpush1.msra.mxu0 %v6309
  %6318 = vmatprep.subr.mxu0 0.0
  %6319 = vmatpush1.msra.mxu0 %v6310
  %6320 = vmatprep.subr.mxu0 0.0
  %6321 = vmatpush1.msra.mxu0 %v6311
  %6322 = vmatprep.subr.mxu0 0.0
  %6323 = vmatpush1.msra.mxu0 %v6312
  %6324 = vmatprep.subr.mxu0 0.0
  %6325 = vmatpush1.msra.mxu0 0.0
  %6326 = vmatprep.subr.mxu0 0.0
  %6327 = vmatpush1.msra.mxu0 0.0
  %6328 = vmatprep.subr.mxu0 0.0
  %6329 = vmatpush1.msra.mxu0 0.0
  %6330 = vmatprep.subr.mxu0 0.0
  %6331 = vmatpush1.msra.mxu0 0.0
  %6332 = vmatprep.subr.mxu0 0.0
  %6333 = vmatpush1.msra.mxu0 0.0
  %6334 = vmatprep.subr.mxu0 0.0
  %6335 = vmatpush1.msra.mxu0 0.0
  %6336 = vmatprep.subr.mxu0 0.0
  %6337 = vmatpush1.msra.mxu0 0.0
  %6338 = vmatprep.subr.mxu0 0.0
  %6339 = vmatpush1.msra.mxu0 0.0
  %6340 = vmatprep.subr.mxu0 0.0
  %6341 = vmatpush1.msra.mxu0 0.0
  %6342 = vmatprep.subr.mxu0 0.0
  %6343 = vmatpush1.msra.mxu0 0.0
  %6344 = vmatprep.subr.mxu0 0.0
  %6345 = vmatpush1.msra.mxu0 0.0
  %6346 = vmatprep.subr.mxu0 0.0
  %6347 = vmatpush1.msra.mxu0 0.0
  %6348 = vmatprep.subr.mxu0 0.0
  %6349 = vmatpush1.msra.mxu0 0.0
  %6350 = vmatprep.subr.mxu0 0.0
  %6351 = vmatpush1.msra.mxu0 0.0
  %6352 = vmatprep.subr.mxu0 0.0
  %6353 = vmatpush1.msra.mxu0 0.0
  %6354 = vmatprep.subr.mxu0 0.0
  %6355 = vmatpush1.msra.mxu0 0.0
  %6356 = vmatprep.subr.mxu0 0.0
  %6357 = vmatpush1.msra.mxu0 0.0
  %6358 = vmatprep.subr.mxu0 0.0
  %6359 = vmatpush1.msra.mxu0 0.0
  %6360 = vmatprep.subr.mxu0 0.0
  %6361 = vmatpush1.msra.mxu0 0.0
  %6362 = vmatprep.subr.mxu0 0.0
  %6363 = vmatpush1.msra.mxu0 0.0
  %6364 = vmatprep.subr.mxu0 0.0
  %6365 = vmatpush1.msra.mxu0 0.0
  %6366 = vmatprep.subr.mxu0 0.0
  %6367 = vmatpush1.msra.mxu0 0.0
  %6368 = vmatprep.subr.mxu0 0.0
  %6369 = vmatpush1.msra.mxu0 0.0
  %6370 = vmatprep.subr.mxu0 0.0
  %6371 = vmatpush1.msra.mxu0 0.0
  %6372 = vmatprep.subr.mxu0 0.0
  %6373 = vmatpush1.msra.mxu0 0.0
  %6374 = vmatprep.subr.mxu0 0.0
  %6375 = vmatpush1.msra.mxu0 0.0
  %6376 = vmatprep.subr.mxu0 0.0
  %6377 = vmatpush1.msra.mxu0 0.0
  %6378 = vmatprep.subr.mxu0 0.0
  %6379 = vmatpush1.msra.mxu0 0.0
  %6380 = vmatprep.mubr.f32.mxu0 0.0
  %6381 = vmatmul.mubr.f32.gmra.mrb[0].mxu0 %v6314
  %v6382 = vpop.f32.mrb[0].mxu0
  %v6383 = vadd.f32 0.0, %v6382
  %v6384 = vpop.f32.mrb[0].mxu0
  %6385 = vdwg.mxu0
  %v6386 = vadd.f32 %v6307, %v6383
  %v6387 = vld [vmem:[%s12] sm:$0x1]
  %v6389 = vlaneseq
  %v6390 = vshrl.u32 %v6389, 7
  %v6391 = vsub.s32 0, %v6390
  %v6392 = vrot.slane %v6387, %v6391
  %v6394 = vadd.f32 %v6386, %v6392
  %vm6395 = vcmask 130048
  %6396 = vst.msk [vmem:[%s13] sm:$0xff] %vm6395, %v6394
  // Predicated region
  $region54: #{forward.1} parent=0 // pred_check
    _
  $region55: #{forward.1} parent=0 // pred_check_branch
    %6398 = sbr.rel (0) target = $region57
  $region56: #{forward.1} parent=0 // pred_region
    _
  $region57: #{forward.1} parent=0 // pred_fallthru
    _
  // Predicated region
  $region58: #{forward.1} parent=0 // pred_check
    _
  $region59: #{forward.1} parent=0 // pred_check_branch
    %6400 = sbr.rel (0) target = $region61
  $region60: #{forward.1} parent=0 // pred_region
    _
  $region61: #{forward.1} parent=0 // pred_fallthru
    _

</llo_original>
